<compile_context>
chip_gen: v5e
topology: v5e:2x2
jax: 0.10.0
libtpu: 0.0.40
codegen_flags: <defaults>
</compile_context>

<pallas_src>
import functools

import jax
import jax.numpy as jnp
from jax.experimental import pallas as pl
from jax.experimental.pallas import tpu as pltpu


def _stack_kernel(*refs, N, H, W, PAD, CP, Ks, eps, slope):
    nb = len(Ks)
    x_ref = refs[0]
    w_refs = refs[1:1 + nb]
    p_refs = refs[1 + nb:1 + 2 * nb]
    o_ref = refs[1 + 2 * nb]
    act = refs[2 + 2 * nb]          # VMEM scratch (N, H+2*PAD, W+2*PAD, CP) f32

    NHW = N * H * W

    # Zero the halo once for the whole stack, place the input in the interior.
    act[...] = jnp.zeros_like(act)
    act[:, PAD:PAD + H, PAD:PAD + W, :] = x_ref[...]

    for bi, K in enumerate(Ks):
        w_ref = w_refs[bi]
        p_ref = p_refs[bi]
        off = PAD - (K - 1) // 2

        # Conv2d (stride 1, padding='same') as K*K shifted lane-dense
        # (NHW,128) @ (128,128) bf16 matmuls accumulated in f32.
        # For K == 1 this is a single interior matmul (no halo, no loop).
        acc = jnp.zeros((NHW, CP), jnp.float32)
        for dy in range(K):
            for dx in range(K):
                patch = act[:, off + dy:off + dy + H, off + dx:off + dx + W, :]
                patch = patch.reshape(NHW, CP).astype(jnp.bfloat16)
                acc = acc + jnp.dot(patch, w_ref[dy * K + dx],
                                    preferred_element_type=jnp.float32)

        acc = acc + p_ref[0:1, :]                         # conv bias (1, CP)

        # BatchNorm2d (training mode): biased batch stats over N*H*W, in f32.
        # One-pass variance (acc is f32, so E[x^2]-E[x]^2 is numerically fine).
        m = jnp.mean(acc, axis=0, keepdims=True)
        v = jnp.mean(acc * acc, axis=0, keepdims=True) - m * m
        v = jnp.maximum(v, 0.0)
        y = (acc - m) * (p_ref[1:2, :] * jax.lax.rsqrt(v + eps)) + p_ref[2:3, :]

        # LeakyReLU(negative_slope=0.1)
        y = jnp.where(y > 0, y, slope * y)

        if bi + 1 < nb:
            # Feed the next block: write back into the scratch interior
            # (halo stays zero, so 'same' padding is preserved for free).
            act[:, PAD:PAD + H, PAD:PAD + W, :] = y.reshape(N, H, W, CP)
        else:
            # Final lane-dense store: (NHW, 128) fills full vregs.
            o_ref[...] = y.astype(o_ref.dtype)


def yolo_block_stack(x_nchw, params, *, eps=1e-5, slope=0.1):
    """Forward pass of YoloBlockStack. Input/output are NCHW like PyTorch."""
    if not params:
        return x_nchw

    N, _, H, W = x_nchw.shape
    CP = 128                                   # lane-width channel padding
    Ks = tuple(int(w.shape[0]) for (w, _, _, _) in params)
    PAD = max((k - 1) // 2 for k in Ks)        # 'same' halo for the kxk blocks
    cout_last = int(params[-1][0].shape[-1])

    # NCHW -> NHWC, pad channels to 128 ONCE for the whole fused stack.
    x = jnp.transpose(x_nchw, (0, 2, 3, 1)).astype(jnp.float32)
    cin0 = x.shape[-1]
    x = jnp.pad(x, ((0, 0), (0, 0), (0, 0), (0, CP - cin0)))

    w_list, p_list = [], []
    flops = 0
    for (w, b, g, bt) in params:
        K = int(w.shape[0]); cin = int(w.shape[2]); cout = int(w.shape[3])
        # Zero-padded weights (K*K, 128, 128); padded in/out channels stay
        # exactly zero through conv+BN+LeakyReLU (gamma/beta/bias padded = 0).
        wp = jnp.zeros((K * K, CP, CP), jnp.float32)
        wp = wp.at[:, :cin, :cout].set(w.reshape(K * K, cin, cout))
        w_list.append(wp.astype(jnp.bfloat16))          # bf16 MXU operands
        p = jnp.zeros((3, CP), jnp.float32)              # [bias; gamma; beta]
        p = p.at[0, :cout].set(b).at[1, :cout].set(g).at[2, :cout].set(bt)
        p_list.append(p)
        flops += 2 * N * H * W * K * K * CP * CP

    bytes_accessed = (x.size * 4 + N * H * W * CP * 4
                      + sum(wl.size * 2 for wl in w_list)
                      + sum(pp.size * 4 for pp in p_list))

    kern = functools.partial(_stack_kernel, N=N, H=H, W=W, PAD=PAD, CP=CP,
                             Ks=Ks, eps=eps, slope=slope)
    vmem = pl.BlockSpec(memory_space=pltpu.MemorySpace.VMEM)
    out = pl.pallas_call(
        kern,
        out_shape=jax.ShapeDtypeStruct((N * H * W, CP), jnp.float32),
        in_specs=[vmem] * (1 + 2 * len(params)),
        out_specs=vmem,
        scratch_shapes=[
            pltpu.VMEM((N, H + 2 * PAD, W + 2 * PAD, CP), jnp.float32),
        ],
        compiler_params=pltpu.CompilerParams(vmem_limit_bytes=32 * 1024 * 1024),
        cost_estimate=pl.CostEstimate(flops=flops,
                                      transcendentals=len(params) * CP,
                                      bytes_accessed=bytes_accessed),
    )(x, *w_list, *p_list)

    out = out.reshape(N, H, W, CP)[..., :cout_last]
    return jnp.transpose(out, (0, 3, 1, 2))              # NHWC -> NCHW


def make_stack_params(key, in_channels, out_channels, kernel_size, num):
    """Deterministic parameter init mirroring YoloBlockStack.__init__."""
    cfgs = []
    if num <= 0:
        return []
    cfgs.append((in_channels, out_channels, 1))
    for i in range(2, num + 1):
        if i % 2 == 0:
            cfgs.append((out_channels, out_channels // 4, 1))
        else:
            cfgs.append((out_channels // 4, out_channels, kernel_size))

    params = []
    for (cin, cout, k) in cfgs:
        key, kw, kb = jax.random.split(key, 3)
        fan_in = cin * k * k
        bound = 1.0 / (fan_in ** 0.5)
        w = jax.random.uniform(kw, (k, k, cin, cout), jnp.float32, -bound, bound)
        b = jax.random.uniform(kb, (cout,), jnp.float32, -bound, bound)
        gamma = jnp.ones((cout,), jnp.float32)   # BatchNorm2d default weight
        beta = jnp.zeros((cout,), jnp.float32)   # BatchNorm2d default bias
        params.append((w, b, gamma, beta))
    return params


if __name__ == "__main__":
    key = jax.random.PRNGKey(0)
    k_x, k_p = jax.random.split(key)

    # YoloBlockStack(in_channels=4, out_channels=8, kernel_size=3, num=3)
    in_channels, out_channels, kernel_size, num = 4, 8, 3, 3
    N, H, W = 2, 16, 16

    x = jax.random.normal(k_x, (N, in_channels, H, W), jnp.float32)
    params = make_stack_params(k_p, in_channels, out_channels, kernel_size, num)

    out = yolo_block_stack(x, params)
    jax.block_until_ready(out)
    assert out.shape == (N, out_channels, H, W), out.shape
    print("KERNEL_OK")
</pallas_src>

<mosaic_0001>
module attributes {stable_mosaic.version = 11 : i64} {
  func.func @_stack_kernel(%arg0: memref<2x16x16x128xf32, #tpu.memory_space<vmem>>, %arg1: memref<1x128x128xbf16, #tpu.memory_space<vmem>>, %arg2: memref<1x128x128xbf16, #tpu.memory_space<vmem>>, %arg3: memref<9x128x128xbf16, #tpu.memory_space<vmem>>, %arg4: memref<3x128xf32, #tpu.memory_space<vmem>>, %arg5: memref<3x128xf32, #tpu.memory_space<vmem>>, %arg6: memref<3x128xf32, #tpu.memory_space<vmem>>, %arg7: memref<512x128xf32, #tpu.memory_space<vmem>>, %arg8: memref<2x18x18x128xf32, #tpu.memory_space<vmem>>) attributes {dimension_semantics = [], scalar_prefetch = 0 : i64, scratch_operands = 1 : i64, tpu.core_type = #tpu.core_type<tc>} {
    %cst = arith.constant 0.000000e+00 : f32
    %0 = vector.broadcast %cst : f32 to vector<2x18x18x128xf32>
    %c0 = arith.constant 0 : index
    %c0_0 = arith.constant 0 : index
    %c0_1 = arith.constant 0 : index
    %c0_2 = arith.constant 0 : index
    %1 = vector.load %arg8[%c0, %c0_0, %c0_1, %c0_2] : memref<2x18x18x128xf32, #tpu.memory_space<vmem>>, vector<2x18x18x128xf32>
    tpu.vector_store %arg8[%c0, %c0_0, %c0_1, %c0_2], %0 {strides = array<i32>} : memref<2x18x18x128xf32, #tpu.memory_space<vmem>>, vector<2x18x18x128xf32>,
    %c0_3 = arith.constant 0 : index
    %c0_4 = arith.constant 0 : index
    %c0_5 = arith.constant 0 : index
    %c0_6 = arith.constant 0 : index
    %2 = vector.load %arg0[%c0_3, %c0_4, %c0_5, %c0_6] : memref<2x16x16x128xf32, #tpu.memory_space<vmem>>, vector<2x16x16x128xf32>
    %c0_7 = arith.constant 0 : index
    %c1 = arith.constant 1 : index
    %c1_8 = arith.constant 1 : index
    %c0_9 = arith.constant 0 : index
    %3 = vector.load %arg8[%c0_7, %c1, %c1_8, %c0_9] : memref<2x18x18x128xf32, #tpu.memory_space<vmem>>, vector<2x16x16x128xf32>
    tpu.vector_store %arg8[%c0_7, %c1, %c1_8, %c0_9], %2 {strides = array<i32>} : memref<2x18x18x128xf32, #tpu.memory_space<vmem>>, vector<2x16x16x128xf32>,
    %cst_10 = arith.constant 0.000000e+00 : f32
    %4 = vector.broadcast %cst_10 : f32 to vector<512x128xf32>
    %c0_11 = arith.constant 0 : index
    %c1_12 = arith.constant 1 : index
    %c1_13 = arith.constant 1 : index
    %c0_14 = arith.constant 0 : index
    %5 = vector.load %arg8[%c0_11, %c1_12, %c1_13, %c0_14] : memref<2x18x18x128xf32, #tpu.memory_space<vmem>>, vector<2x16x16x128xf32>
    %6 = vector.shape_cast %5 : vector<2x16x16x128xf32> to vector<512x128xf32>
    %7 = arith.truncf %6 : vector<512x128xf32> to vector<512x128xbf16>
    %c0_15 = arith.constant 0 : index
    %c0_16 = arith.constant 0 : index
    %c0_17 = arith.constant 0 : index
    %8 = vector.load %arg1[%c0_15, %c0_16, %c0_17] : memref<1x128x128xbf16, #tpu.memory_space<vmem>>, vector<1x128x128xbf16>
    %9 = vector.shape_cast %8 : vector<1x128x128xbf16> to vector<128x128xbf16>
    %cst_18 = arith.constant dense<0.000000e+00> : vector<512x128xf32>
    %10 = tpu.matmul %7, %9, %cst_18 {dimension_numbers = #tpu.dot_dimension_numbers<[1], [0], [0], [1], [0, 0, 1, 1], [], []>} : vector<512x128xbf16>, vector<128x128xbf16>, vector<512x128xf32> -> vector<512x128xf32>
    %11 = arith.addf %4, %10 : vector<512x128xf32>
    %c0_19 = arith.constant 0 : index
    %c0_20 = arith.constant 0 : index
    %12 = vector.load %arg4[%c0_19, %c0_20] : memref<3x128xf32, #tpu.memory_space<vmem>>, vector<1x128xf32>
    %13 = vector.broadcast %12 : vector<1x128xf32> to vector<512x128xf32>
    %14 = arith.addf %11, %13 : vector<512x128xf32>
    %cst_21 = arith.constant dense<0.000000e+00> : vector<128xf32>
    %15 = vector.multi_reduction <add>, %14, %cst_21 [0] : vector<512x128xf32> to vector<128xf32>
    %16 = vector.shape_cast %15 : vector<128xf32> to vector<1x128xf32>
    %cst_22 = arith.constant 5.120000e+02 : f32
    %17 = vector.broadcast %cst_22 : f32 to vector<1x128xf32>
    %18 = arith.divf %16, %17 : vector<1x128xf32>
    %19 = arith.mulf %14, %14 : vector<512x128xf32>
    %cst_23 = arith.constant dense<0.000000e+00> : vector<128xf32>
    %20 = vector.multi_reduction <add>, %19, %cst_23 [0] : vector<512x128xf32> to vector<128xf32>
    %21 = vector.shape_cast %20 : vector<128xf32> to vector<1x128xf32>
    %cst_24 = arith.constant 5.120000e+02 : f32
    %22 = vector.broadcast %cst_24 : f32 to vector<1x128xf32>
    %23 = arith.divf %21, %22 : vector<1x128xf32>
    %24 = arith.mulf %18, %18 : vector<1x128xf32>
    %25 = arith.subf %23, %24 : vector<1x128xf32>
    %cst_25 = arith.constant 0.000000e+00 : f32
    %26 = vector.broadcast %cst_25 : f32 to vector<1x128xf32>
    %27 = arith.maximumf %25, %26 : vector<1x128xf32>
    %28 = vector.broadcast %18 : vector<1x128xf32> to vector<512x128xf32>
    %29 = arith.subf %14, %28 : vector<512x128xf32>
    %c1_26 = arith.constant 1 : index
    %c0_27 = arith.constant 0 : index
    %30 = vector.load %arg4[%c1_26, %c0_27] : memref<3x128xf32, #tpu.memory_space<vmem>>, vector<1x128xf32>
    %cst_28 = arith.constant 9.99999974E-6 : f32
    %31 = vector.broadcast %cst_28 : f32 to vector<1x128xf32>
    %32 = arith.addf %27, %31 : vector<1x128xf32>
    %33 = math.rsqrt %32 : vector<1x128xf32>
    %34 = arith.mulf %30, %33 : vector<1x128xf32>
    %35 = vector.broadcast %34 : vector<1x128xf32> to vector<512x128xf32>
    %36 = arith.mulf %29, %35 : vector<512x128xf32>
    %c2 = arith.constant 2 : index
    %c0_29 = arith.constant 0 : index
    %37 = vector.load %arg4[%c2, %c0_29] : memref<3x128xf32, #tpu.memory_space<vmem>>, vector<1x128xf32>
    %38 = vector.broadcast %37 : vector<1x128xf32> to vector<512x128xf32>
    %39 = arith.addf %36, %38 : vector<512x128xf32>
    %cst_30 = arith.constant 0.000000e+00 : f32
    %40 = vector.broadcast %cst_30 : f32 to vector<512x128xf32>
    %41 = arith.cmpf ogt, %39, %40 : vector<512x128xf32>
    %cst_31 = arith.constant 1.000000e-01 : f32
    %42 = vector.broadcast %cst_31 : f32 to vector<512x128xf32>
    %43 = arith.mulf %42, %39 : vector<512x128xf32>
    %44 = arith.select %41, %39, %43 : vector<512x128xi1>, vector<512x128xf32>
    %45 = vector.shape_cast %44 : vector<512x128xf32> to vector<2x16x16x128xf32>
    %c0_32 = arith.constant 0 : index
    %c1_33 = arith.constant 1 : index
    %c1_34 = arith.constant 1 : index
    %c0_35 = arith.constant 0 : index
    %46 = vector.load %arg8[%c0_32, %c1_33, %c1_34, %c0_35] : memref<2x18x18x128xf32, #tpu.memory_space<vmem>>, vector<2x16x16x128xf32>
    tpu.vector_store %arg8[%c0_32, %c1_33, %c1_34, %c0_35], %45 {strides = array<i32>} : memref<2x18x18x128xf32, #tpu.memory_space<vmem>>, vector<2x16x16x128xf32>,
    %cst_36 = arith.constant 0.000000e+00 : f32
    %47 = vector.broadcast %cst_36 : f32 to vector<512x128xf32>
    %c0_37 = arith.constant 0 : index
    %c1_38 = arith.constant 1 : index
    %c1_39 = arith.constant 1 : index
    %c0_40 = arith.constant 0 : index
    %48 = vector.load %arg8[%c0_37, %c1_38, %c1_39, %c0_40] : memref<2x18x18x128xf32, #tpu.memory_space<vmem>>, vector<2x16x16x128xf32>
    %49 = vector.shape_cast %48 : vector<2x16x16x128xf32> to vector<512x128xf32>
    %50 = arith.truncf %49 : vector<512x128xf32> to vector<512x128xbf16>
    %c0_41 = arith.constant 0 : index
    %c0_42 = arith.constant 0 : index
    %c0_43 = arith.constant 0 : index
    %51 = vector.load %arg2[%c0_41, %c0_42, %c0_43] : memref<1x128x128xbf16, #tpu.memory_space<vmem>>, vector<1x128x128xbf16>
    %52 = vector.shape_cast %51 : vector<1x128x128xbf16> to vector<128x128xbf16>
    %cst_44 = arith.constant dense<0.000000e+00> : vector<512x128xf32>
    %53 = tpu.matmul %50, %52, %cst_44 {dimension_numbers = #tpu.dot_dimension_numbers<[1], [0], [0], [1], [0, 0, 1, 1], [], []>} : vector<512x128xbf16>, vector<128x128xbf16>, vector<512x128xf32> -> vector<512x128xf32>
    %54 = arith.addf %47, %53 : vector<512x128xf32>
    %c0_45 = arith.constant 0 : index
    %c0_46 = arith.constant 0 : index
    %55 = vector.load %arg5[%c0_45, %c0_46] : memref<3x128xf32, #tpu.memory_space<vmem>>, vector<1x128xf32>
    %56 = vector.broadcast %55 : vector<1x128xf32> to vector<512x128xf32>
    %57 = arith.addf %54, %56 : vector<512x128xf32>
    %cst_47 = arith.constant dense<0.000000e+00> : vector<128xf32>
    %58 = vector.multi_reduction <add>, %57, %cst_47 [0] : vector<512x128xf32> to vector<128xf32>
    %59 = vector.shape_cast %58 : vector<128xf32> to vector<1x128xf32>
    %cst_48 = arith.constant 5.120000e+02 : f32
    %60 = vector.broadcast %cst_48 : f32 to vector<1x128xf32>
    %61 = arith.divf %59, %60 : vector<1x128xf32>
    %62 = arith.mulf %57, %57 : vector<512x128xf32>
    %cst_49 = arith.constant dense<0.000000e+00> : vector<128xf32>
    %63 = vector.multi_reduction <add>, %62, %cst_49 [0] : vector<512x128xf32> to vector<128xf32>
    %64 = vector.shape_cast %63 : vector<128xf32> to vector<1x128xf32>
    %cst_50 = arith.constant 5.120000e+02 : f32
    %65 = vector.broadcast %cst_50 : f32 to vector<1x128xf32>
    %66 = arith.divf %64, %65 : vector<1x128xf32>
    %67 = arith.mulf %61, %61 : vector<1x128xf32>
    %68 = arith.subf %66, %67 : vector<1x128xf32>
    %cst_51 = arith.constant 0.000000e+00 : f32
    %69 = vector.broadcast %cst_51 : f32 to vector<1x128xf32>
    %70 = arith.maximumf %68, %69 : vector<1x128xf32>
    %71 = vector.broadcast %61 : vector<1x128xf32> to vector<512x128xf32>
    %72 = arith.subf %57, %71 : vector<512x128xf32>
    %c1_52 = arith.constant 1 : index
    %c0_53 = arith.constant 0 : index
    %73 = vector.load %arg5[%c1_52, %c0_53] : memref<3x128xf32, #tpu.memory_space<vmem>>, vector<1x128xf32>
    %cst_54 = arith.constant 9.99999974E-6 : f32
    %74 = vector.broadcast %cst_54 : f32 to vector<1x128xf32>
    %75 = arith.addf %70, %74 : vector<1x128xf32>
    %76 = math.rsqrt %75 : vector<1x128xf32>
    %77 = arith.mulf %73, %76 : vector<1x128xf32>
    %78 = vector.broadcast %77 : vector<1x128xf32> to vector<512x128xf32>
    %79 = arith.mulf %72, %78 : vector<512x128xf32>
    %c2_55 = arith.constant 2 : index
    %c0_56 = arith.constant 0 : index
    %80 = vector.load %arg5[%c2_55, %c0_56] : memref<3x128xf32, #tpu.memory_space<vmem>>, vector<1x128xf32>
    %81 = vector.broadcast %80 : vector<1x128xf32> to vector<512x128xf32>
    %82 = arith.addf %79, %81 : vector<512x128xf32>
    %cst_57 = arith.constant 0.000000e+00 : f32
    %83 = vector.broadcast %cst_57 : f32 to vector<512x128xf32>
    %84 = arith.cmpf ogt, %82, %83 : vector<512x128xf32>
    %cst_58 = arith.constant 1.000000e-01 : f32
    %85 = vector.broadcast %cst_58 : f32 to vector<512x128xf32>
    %86 = arith.mulf %85, %82 : vector<512x128xf32>
    %87 = arith.select %84, %82, %86 : vector<512x128xi1>, vector<512x128xf32>
    %88 = vector.shape_cast %87 : vector<512x128xf32> to vector<2x16x16x128xf32>
    %c0_59 = arith.constant 0 : index
    %c1_60 = arith.constant 1 : index
    %c1_61 = arith.constant 1 : index
    %c0_62 = arith.constant 0 : index
    %89 = vector.load %arg8[%c0_59, %c1_60, %c1_61, %c0_62] : memref<2x18x18x128xf32, #tpu.memory_space<vmem>>, vector<2x16x16x128xf32>
    tpu.vector_store %arg8[%c0_59, %c1_60, %c1_61, %c0_62], %88 {strides = array<i32>} : memref<2x18x18x128xf32, #tpu.memory_space<vmem>>, vector<2x16x16x128xf32>,
    %cst_63 = arith.constant 0.000000e+00 : f32
    %90 = vector.broadcast %cst_63 : f32 to vector<512x128xf32>
    %c0_64 = arith.constant 0 : index
    %c0_65 = arith.constant 0 : index
    %c0_66 = arith.constant 0 : index
    %c0_67 = arith.constant 0 : index
    %91 = vector.load %arg8[%c0_64, %c0_65, %c0_66, %c0_67] : memref<2x18x18x128xf32, #tpu.memory_space<vmem>>, vector<2x16x16x128xf32>
    %92 = vector.shape_cast %91 : vector<2x16x16x128xf32> to vector<512x128xf32>
    %93 = arith.truncf %92 : vector<512x128xf32> to vector<512x128xbf16>
    %c0_68 = arith.constant 0 : index
    %c0_69 = arith.constant 0 : index
    %c0_70 = arith.constant 0 : index
    %94 = vector.load %arg3[%c0_68, %c0_69, %c0_70] : memref<9x128x128xbf16, #tpu.memory_space<vmem>>, vector<1x128x128xbf16>
    %95 = vector.shape_cast %94 : vector<1x128x128xbf16> to vector<128x128xbf16>
    %cst_71 = arith.constant dense<0.000000e+00> : vector<512x128xf32>
    %96 = tpu.matmul %93, %95, %cst_71 {dimension_numbers = #tpu.dot_dimension_numbers<[1], [0], [0], [1], [0, 0, 1, 1], [], []>} : vector<512x128xbf16>, vector<128x128xbf16>, vector<512x128xf32> -> vector<512x128xf32>
    %97 = arith.addf %90, %96 : vector<512x128xf32>
    %c0_72 = arith.constant 0 : index
    %c0_73 = arith.constant 0 : index
    %c1_74 = arith.constant 1 : index
    %c0_75 = arith.constant 0 : index
    %98 = vector.load %arg8[%c0_72, %c0_73, %c1_74, %c0_75] : memref<2x18x18x128xf32, #tpu.memory_space<vmem>>, vector<2x16x16x128xf32>
    %99 = vector.shape_cast %98 : vector<2x16x16x128xf32> to vector<512x128xf32>
    %100 = arith.truncf %99 : vector<512x128xf32> to vector<512x128xbf16>
    %c1_76 = arith.constant 1 : index
    %c0_77 = arith.constant 0 : index
    %c0_78 = arith.constant 0 : index
    %101 = vector.load %arg3[%c1_76, %c0_77, %c0_78] : memref<9x128x128xbf16, #tpu.memory_space<vmem>>, vector<1x128x128xbf16>
    %102 = vector.shape_cast %101 : vector<1x128x128xbf16> to vector<128x128xbf16>
    %cst_79 = arith.constant dense<0.000000e+00> : vector<512x128xf32>
    %103 = tpu.matmul %100, %102, %cst_79 {dimension_numbers = #tpu.dot_dimension_numbers<[1], [0], [0], [1], [0, 0, 1, 1], [], []>} : vector<512x128xbf16>, vector<128x128xbf16>, vector<512x128xf32> -> vector<512x128xf32>
    %104 = arith.addf %97, %103 : vector<512x128xf32>
    %c0_80 = arith.constant 0 : index
    %c0_81 = arith.constant 0 : index
    %c2_82 = arith.constant 2 : index
    %c0_83 = arith.constant 0 : index
    %105 = vector.load %arg8[%c0_80, %c0_81, %c2_82, %c0_83] : memref<2x18x18x128xf32, #tpu.memory_space<vmem>>, vector<2x16x16x128xf32>
    %106 = vector.shape_cast %105 : vector<2x16x16x128xf32> to vector<512x128xf32>
    %107 = arith.truncf %106 : vector<512x128xf32> to vector<512x128xbf16>
    %c2_84 = arith.constant 2 : index
    %c0_85 = arith.constant 0 : index
    %c0_86 = arith.constant 0 : index
    %108 = vector.load %arg3[%c2_84, %c0_85, %c0_86] : memref<9x128x128xbf16, #tpu.memory_space<vmem>>, vector<1x128x128xbf16>
    %109 = vector.shape_cast %108 : vector<1x128x128xbf16> to vector<128x128xbf16>
    %cst_87 = arith.constant dense<0.000000e+00> : vector<512x128xf32>
    %110 = tpu.matmul %107, %109, %cst_87 {dimension_numbers = #tpu.dot_dimension_numbers<[1], [0], [0], [1], [0, 0, 1, 1], [], []>} : vector<512x128xbf16>, vector<128x128xbf16>, vector<512x128xf32> -> vector<512x128xf32>
    %111 = arith.addf %104, %110 : vector<512x128xf32>
    %c0_88 = arith.constant 0 : index
    %c1_89 = arith.constant 1 : index
    %c0_90 = arith.constant 0 : index
    %c0_91 = arith.constant 0 : index
    %112 = vector.load %arg8[%c0_88, %c1_89, %c0_90, %c0_91] : memref<2x18x18x128xf32, #tpu.memory_space<vmem>>, vector<2x16x16x128xf32>
    %113 = vector.shape_cast %112 : vector<2x16x16x128xf32> to vector<512x128xf32>
    %114 = arith.truncf %113 : vector<512x128xf32> to vector<512x128xbf16>
    %c3 = arith.constant 3 : index
    %c0_92 = arith.constant 0 : index
    %c0_93 = arith.constant 0 : index
    %115 = vector.load %arg3[%c3, %c0_92, %c0_93] : memref<9x128x128xbf16, #tpu.memory_space<vmem>>, vector<1x128x128xbf16>
    %116 = vector.shape_cast %115 : vector<1x128x128xbf16> to vector<128x128xbf16>
    %cst_94 = arith.constant dense<0.000000e+00> : vector<512x128xf32>
    %117 = tpu.matmul %114, %116, %cst_94 {dimension_numbers = #tpu.dot_dimension_numbers<[1], [0], [0], [1], [0, 0, 1, 1], [], []>} : vector<512x128xbf16>, vector<128x128xbf16>, vector<512x128xf32> -> vector<512x128xf32>
    %118 = arith.addf %111, %117 : vector<512x128xf32>
    %c0_95 = arith.constant 0 : index
    %c1_96 = arith.constant 1 : index
    %c1_97 = arith.constant 1 : index
    %c0_98 = arith.constant 0 : index
    %119 = vector.load %arg8[%c0_95, %c1_96, %c1_97, %c0_98] : memref<2x18x18x128xf32, #tpu.memory_space<vmem>>, vector<2x16x16x128xf32>
    %120 = vector.shape_cast %119 : vector<2x16x16x128xf32> to vector<512x128xf32>
    %121 = arith.truncf %120 : vector<512x128xf32> to vector<512x128xbf16>
    %c4 = arith.constant 4 : index
    %c0_99 = arith.constant 0 : index
    %c0_100 = arith.constant 0 : index
    %122 = vector.load %arg3[%c4, %c0_99, %c0_100] : memref<9x128x128xbf16, #tpu.memory_space<vmem>>, vector<1x128x128xbf16>
    %123 = vector.shape_cast %122 : vector<1x128x128xbf16> to vector<128x128xbf16>
    %cst_101 = arith.constant dense<0.000000e+00> : vector<512x128xf32>
    %124 = tpu.matmul %121, %123, %cst_101 {dimension_numbers = #tpu.dot_dimension_numbers<[1], [0], [0], [1], [0, 0, 1, 1], [], []>} : vector<512x128xbf16>, vector<128x128xbf16>, vector<512x128xf32> -> vector<512x128xf32>
    %125 = arith.addf %118, %124 : vector<512x128xf32>
    %c0_102 = arith.constant 0 : index
    %c1_103 = arith.constant 1 : index
    %c2_104 = arith.constant 2 : index
    %c0_105 = arith.constant 0 : index
    %126 = vector.load %arg8[%c0_102, %c1_103, %c2_104, %c0_105] : memref<2x18x18x128xf32, #tpu.memory_space<vmem>>, vector<2x16x16x128xf32>
    %127 = vector.shape_cast %126 : vector<2x16x16x128xf32> to vector<512x128xf32>
    %128 = arith.truncf %127 : vector<512x128xf32> to vector<512x128xbf16>
    %c5 = arith.constant 5 : index
    %c0_106 = arith.constant 0 : index
    %c0_107 = arith.constant 0 : index
    %129 = vector.load %arg3[%c5, %c0_106, %c0_107] : memref<9x128x128xbf16, #tpu.memory_space<vmem>>, vector<1x128x128xbf16>
    %130 = vector.shape_cast %129 : vector<1x128x128xbf16> to vector<128x128xbf16>
    %cst_108 = arith.constant dense<0.000000e+00> : vector<512x128xf32>
    %131 = tpu.matmul %128, %130, %cst_108 {dimension_numbers = #tpu.dot_dimension_numbers<[1], [0], [0], [1], [0, 0, 1, 1], [], []>} : vector<512x128xbf16>, vector<128x128xbf16>, vector<512x128xf32> -> vector<512x128xf32>
    %132 = arith.addf %125, %131 : vector<512x128xf32>
    %c0_109 = arith.constant 0 : index
    %c2_110 = arith.constant 2 : index
    %c0_111 = arith.constant 0 : index
    %c0_112 = arith.constant 0 : index
    %133 = vector.load %arg8[%c0_109, %c2_110, %c0_111, %c0_112] : memref<2x18x18x128xf32, #tpu.memory_space<vmem>>, vector<2x16x16x128xf32>
    %134 = vector.shape_cast %133 : vector<2x16x16x128xf32> to vector<512x128xf32>
    %135 = arith.truncf %134 : vector<512x128xf32> to vector<512x128xbf16>
    %c6 = arith.constant 6 : index
    %c0_113 = arith.constant 0 : index
    %c0_114 = arith.constant 0 : index
    %136 = vector.load %arg3[%c6, %c0_113, %c0_114] : memref<9x128x128xbf16, #tpu.memory_space<vmem>>, vector<1x128x128xbf16>
    %137 = vector.shape_cast %136 : vector<1x128x128xbf16> to vector<128x128xbf16>
    %cst_115 = arith.constant dense<0.000000e+00> : vector<512x128xf32>
    %138 = tpu.matmul %135, %137, %cst_115 {dimension_numbers = #tpu.dot_dimension_numbers<[1], [0], [0], [1], [0, 0, 1, 1], [], []>} : vector<512x128xbf16>, vector<128x128xbf16>, vector<512x128xf32> -> vector<512x128xf32>
    %139 = arith.addf %132, %138 : vector<512x128xf32>
    %c0_116 = arith.constant 0 : index
    %c2_117 = arith.constant 2 : index
    %c1_118 = arith.constant 1 : index
    %c0_119 = arith.constant 0 : index
    %140 = vector.load %arg8[%c0_116, %c2_117, %c1_118, %c0_119] : memref<2x18x18x128xf32, #tpu.memory_space<vmem>>, vector<2x16x16x128xf32>
    %141 = vector.shape_cast %140 : vector<2x16x16x128xf32> to vector<512x128xf32>
    %142 = arith.truncf %141 : vector<512x128xf32> to vector<512x128xbf16>
    %c7 = arith.constant 7 : index
    %c0_120 = arith.constant 0 : index
    %c0_121 = arith.constant 0 : index
    %143 = vector.load %arg3[%c7, %c0_120, %c0_121] : memref<9x128x128xbf16, #tpu.memory_space<vmem>>, vector<1x128x128xbf16>
    %144 = vector.shape_cast %143 : vector<1x128x128xbf16> to vector<128x128xbf16>
    %cst_122 = arith.constant dense<0.000000e+00> : vector<512x128xf32>
    %145 = tpu.matmul %142, %144, %cst_122 {dimension_numbers = #tpu.dot_dimension_numbers<[1], [0], [0], [1], [0, 0, 1, 1], [], []>} : vector<512x128xbf16>, vector<128x128xbf16>, vector<512x128xf32> -> vector<512x128xf32>
    %146 = arith.addf %139, %145 : vector<512x128xf32>
    %c0_123 = arith.constant 0 : index
    %c2_124 = arith.constant 2 : index
    %c2_125 = arith.constant 2 : index
    %c0_126 = arith.constant 0 : index
    %147 = vector.load %arg8[%c0_123, %c2_124, %c2_125, %c0_126] : memref<2x18x18x128xf32, #tpu.memory_space<vmem>>, vector<2x16x16x128xf32>
    %148 = vector.shape_cast %147 : vector<2x16x16x128xf32> to vector<512x128xf32>
    %149 = arith.truncf %148 : vector<512x128xf32> to vector<512x128xbf16>
    %c8 = arith.constant 8 : index
    %c0_127 = arith.constant 0 : index
    %c0_128 = arith.constant 0 : index
    %150 = vector.load %arg3[%c8, %c0_127, %c0_128] : memref<9x128x128xbf16, #tpu.memory_space<vmem>>, vector<1x128x128xbf16>
    %151 = vector.shape_cast %150 : vector<1x128x128xbf16> to vector<128x128xbf16>
    %cst_129 = arith.constant dense<0.000000e+00> : vector<512x128xf32>
    %152 = tpu.matmul %149, %151, %cst_129 {dimension_numbers = #tpu.dot_dimension_numbers<[1], [0], [0], [1], [0, 0, 1, 1], [], []>} : vector<512x128xbf16>, vector<128x128xbf16>, vector<512x128xf32> -> vector<512x128xf32>
    %153 = arith.addf %146, %152 : vector<512x128xf32>
    %c0_130 = arith.constant 0 : index
    %c0_131 = arith.constant 0 : index
    %154 = vector.load %arg6[%c0_130, %c0_131] : memref<3x128xf32, #tpu.memory_space<vmem>>, vector<1x128xf32>
    %155 = vector.broadcast %154 : vector<1x128xf32> to vector<512x128xf32>
    %156 = arith.addf %153, %155 : vector<512x128xf32>
    %cst_132 = arith.constant dense<0.000000e+00> : vector<128xf32>
    %157 = vector.multi_reduction <add>, %156, %cst_132 [0] : vector<512x128xf32> to vector<128xf32>
    %158 = vector.shape_cast %157 : vector<128xf32> to vector<1x128xf32>
    %cst_133 = arith.constant 5.120000e+02 : f32
    %159 = vector.broadcast %cst_133 : f32 to vector<1x128xf32>
    %160 = arith.divf %158, %159 : vector<1x128xf32>
    %161 = arith.mulf %156, %156 : vector<512x128xf32>
    %cst_134 = arith.constant dense<0.000000e+00> : vector<128xf32>
    %162 = vector.multi_reduction <add>, %161, %cst_134 [0] : vector<512x128xf32> to vector<128xf32>
    %163 = vector.shape_cast %162 : vector<128xf32> to vector<1x128xf32>
    %cst_135 = arith.constant 5.120000e+02 : f32
    %164 = vector.broadcast %cst_135 : f32 to vector<1x128xf32>
    %165 = arith.divf %163, %164 : vector<1x128xf32>
    %166 = arith.mulf %160, %160 : vector<1x128xf32>
    %167 = arith.subf %165, %166 : vector<1x128xf32>
    %cst_136 = arith.constant 0.000000e+00 : f32
    %168 = vector.broadcast %cst_136 : f32 to vector<1x128xf32>
    %169 = arith.maximumf %167, %168 : vector<1x128xf32>
    %170 = vector.broadcast %160 : vector<1x128xf32> to vector<512x128xf32>
    %171 = arith.subf %156, %170 : vector<512x128xf32>
    %c1_137 = arith.constant 1 : index
    %c0_138 = arith.constant 0 : index
    %172 = vector.load %arg6[%c1_137, %c0_138] : memref<3x128xf32, #tpu.memory_space<vmem>>, vector<1x128xf32>
    %cst_139 = arith.constant 9.99999974E-6 : f32
    %173 = vector.broadcast %cst_139 : f32 to vector<1x128xf32>
    %174 = arith.addf %169, %173 : vector<1x128xf32>
    %175 = math.rsqrt %174 : vector<1x128xf32>
    %176 = arith.mulf %172, %175 : vector<1x128xf32>
    %177 = vector.broadcast %176 : vector<1x128xf32> to vector<512x128xf32>
    %178 = arith.mulf %171, %177 : vector<512x128xf32>
    %c2_140 = arith.constant 2 : index
    %c0_141 = arith.constant 0 : index
    %179 = vector.load %arg6[%c2_140, %c0_141] : memref<3x128xf32, #tpu.memory_space<vmem>>, vector<1x128xf32>
    %180 = vector.broadcast %179 : vector<1x128xf32> to vector<512x128xf32>
    %181 = arith.addf %178, %180 : vector<512x128xf32>
    %cst_142 = arith.constant 0.000000e+00 : f32
    %182 = vector.broadcast %cst_142 : f32 to vector<512x128xf32>
    %183 = arith.cmpf ogt, %181, %182 : vector<512x128xf32>
    %cst_143 = arith.constant 1.000000e-01 : f32
    %184 = vector.broadcast %cst_143 : f32 to vector<512x128xf32>
    %185 = arith.mulf %184, %181 : vector<512x128xf32>
    %186 = arith.select %183, %181, %185 : vector<512x128xi1>, vector<512x128xf32>
    %c0_144 = arith.constant 0 : index
    %c0_145 = arith.constant 0 : index
    %187 = vector.load %arg7[%c0_144, %c0_145] : memref<512x128xf32, #tpu.memory_space<vmem>>, vector<512x128xf32>
    tpu.vector_store %arg7[%c0_144, %c0_145], %186 {strides = array<i32>} : memref<512x128xf32, #tpu.memory_space<vmem>>, vector<512x128xf32>,
    return
  }
}

</mosaic_0001>

<llo_original>
// kernel: tpu_custom_call.1
$region0: #{tpu_custom_call.1}
  #allocation0 [shape = 'u32[]', space=smem, size = 0x4, offset = 0x4, fixed_abs, tag = 'smem constant byte address 0x4 - core index']
  #allocation1 [shape = 'u32[72,128]{1,0:T(1,128)}', space=vmem, size = 0x9000, scoped, tag = 'internal scratch']
  #allocation2 [shape = 'f32[2,18,18,128]{3,2,1,0:T(8,128)}', space=vmem, size = 0x6c000, scoped, tag = 'scratch operand']
  %s0 = inlined_call_operand.hbm [shape: f32[2,16,16,128], index: 0, kind: input, shape index: {}]
  %s1 = inlined_call_operand.hbm [shape: bf16[1,128,128], index: 1, kind: input, shape index: {}]
  %s2 = inlined_call_operand.hbm [shape: bf16[1,128,128], index: 2, kind: input, shape index: {}]
  %s3 = inlined_call_operand.hbm [shape: bf16[9,128,128], index: 3, kind: input, shape index: {}]
  %s4 = inlined_call_operand.hbm [shape: f32[3,128], index: 4, kind: input, shape index: {}]
  %s5 = inlined_call_operand.vmem [shape: f32[3,128], index: 5, kind: input, shape index: {}]
  %s6 = inlined_call_operand.hbm [shape: f32[3,128], index: 6, kind: input, shape index: {}]
  %s7 = inlined_call_operand.hbm [shape: f32[512,128], index: 7, kind: output, shape index: {}]
  %s8 = sld [smem:[#allocation0]]
  $region62: #{tpu_custom_call.1} parent=0
    _
  %s10 = ssub.s32 1, %s8
  %s11 = scalar_select 0, %s10, %s8
  $region1: #{tpu_custom_call.1} parent=0
    #allocation3 [shape = 'u8[262144]{0}', space=vmem, size = 0x40000, scoped, tag = 'input window, operand 0, single buffered']
    #allocation4 [shape = 's32[1]{0}', space=sflag, size = 0x4, scoped, tag = 'scoped memory for tpu_custom_call.1']
    #allocation5 [shape = 's32[1]{0}', space=sflag, size = 0x4, scoped, tag = 'scoped memory for tpu_custom_call.1']
    #allocation6 [shape = 'u8[32768]{0}', space=vmem, size = 0x8000, scoped, tag = 'input window, operand 1, single buffered']
    #allocation7 [shape = 's32[1]{0}', space=sflag, size = 0x4, scoped, tag = 'scoped memory for tpu_custom_call.1']
    #allocation8 [shape = 'u8[32768]{0}', space=vmem, size = 0x8000, scoped, tag = 'input window, operand 2, single buffered']
    #allocation9 [shape = 'u8[294912]{0}', space=vmem, size = 0x48000, scoped, tag = 'input window, operand 3, single buffered']
    #allocation10 [shape = 's32[1]{0}', space=sflag, size = 0x4, scoped, tag = 'scoped memory for tpu_custom_call.1']
    #allocation11 [shape = 'u8[2048]{0}', space=vmem, size = 0x800, scoped, tag = 'input window, operand 4, single buffered']
    #allocation12 [shape = 'u8[2048]{0}', space=vmem, size = 0x800, scoped, tag = 'input window, operand 6, single buffered']
    #allocation13 [shape = 's32[1]{0}', space=sflag, size = 0x4, scoped, tag = 'scoped memory for tpu_custom_call.1']
    #allocation14 [shape = 'u8[262144]{0}', space=vmem, size = 0x40000, scoped, tag = 'output window, operand 0, single buffered']
    %12 = vsyncpa [#allocation4], 0
    %13 = vsyncpa [#allocation7], 0
    %14 = vsyncpa [#allocation10], 0
    %15 = vsyncpa [#allocation13], 0
    %16 = vsyncpa [#allocation5], 0
    // Predicated region
    $region2: #{tpu_custom_call.1} parent=1 // pred_check
      _
    $region3: #{tpu_custom_call.1} parent=1 // pred_check_branch
      %18 = sbr.rel (0) target = $region5
    $region4: #{tpu_custom_call.1} parent=1 // pred_region
      %20 = vsyncadd [#allocation4], 0
      %s21 = sshll.u32 %s0, 4
      %s22 = int_to_ptr.hbm [resolvable:$true] %s21
      %s23 = sshll.u32 [#allocation3], 4
      %s24 = int_to_ptr.vmem [resolvable:$true] %s23
      %29 = dma.hbm_to_vmem [thread:$0]  %s22, 8192, %s24, [#allocation4], 128, 128, 8
    $region5: #{tpu_custom_call.1} parent=1 // pred_fallthru
      _
    // Predicated region
    $region6: #{tpu_custom_call.1} parent=1 // pred_check
      _
    $region7: #{tpu_custom_call.1} parent=1 // pred_check_branch
      %31 = sbr.rel (0) target = $region9
    $region8: #{tpu_custom_call.1} parent=1 // pred_region
      %33 = vsyncadd [#allocation7], 0
      %s34 = sshll.u32 %s1, 4
      %s35 = int_to_ptr.hbm [resolvable:$true] %s34
      %s36 = sshll.u32 [#allocation6], 4
      %s37 = int_to_ptr.vmem [resolvable:$true] %s36
      %42 = dma.hbm_to_vmem [thread:$0]  %s35, 1024, %s37, [#allocation7], 64, 64, 4
    $region9: #{tpu_custom_call.1} parent=1 // pred_fallthru
      _
    // Predicated region
    $region10: #{tpu_custom_call.1} parent=1 // pred_check
      _
    $region11: #{tpu_custom_call.1} parent=1 // pred_check_branch
      %44 = sbr.rel (0) target = $region13
    $region12: #{tpu_custom_call.1} parent=1 // pred_region
      %46 = vsyncadd [#allocation7], 0
      %s47 = sshll.u32 %s2, 4
      %s48 = int_to_ptr.hbm [resolvable:$true] %s47
      %s49 = sshll.u32 [#allocation8], 4
      %s50 = int_to_ptr.vmem [resolvable:$true] %s49
      %55 = dma.hbm_to_vmem [thread:$0]  %s48, 1024, %s50, [#allocation7], 64, 64, 4
    $region13: #{tpu_custom_call.1} parent=1 // pred_fallthru
      _
    // Predicated region
    $region14: #{tpu_custom_call.1} parent=1 // pred_check
      _
    $region15: #{tpu_custom_call.1} parent=1 // pred_check_branch
      %57 = sbr.rel (0) target = $region17
    $region16: #{tpu_custom_call.1} parent=1 // pred_region
      %59 = vsyncadd [#allocation10], 0
      %s60 = sshll.u32 %s3, 4
      %s61 = int_to_ptr.hbm [resolvable:$true] %s60
      %s62 = sshll.u32 [#allocation9], 4
      %s63 = int_to_ptr.vmem [resolvable:$true] %s62
      %68 = dma.hbm_to_vmem [thread:$0]  %s61, 9216, %s63, [#allocation10], 64, 64, 4
    $region17: #{tpu_custom_call.1} parent=1 // pred_fallthru
      _
    // Predicated region
    $region18: #{tpu_custom_call.1} parent=1 // pred_check
      _
    $region19: #{tpu_custom_call.1} parent=1 // pred_check_branch
      %70 = sbr.rel (0) target = $region21
    $region20: #{tpu_custom_call.1} parent=1 // pred_region
      %72 = vsyncadd [#allocation10], 0
      %s74 = sshll.u32 %s4, 4
      %s75 = int_to_ptr.hbm [resolvable:$true] %s74
      %s76 = sshll.u32 [#allocation11], 4
      %s77 = int_to_ptr.vmem [resolvable:$true] %s76
      %79 = dma.hbm_to_vmem [thread:$0]  %s75, 64, %s77, [#allocation10]
    $region21: #{tpu_custom_call.1} parent=1 // pred_fallthru
      _
    // Predicated region
    $region22: #{tpu_custom_call.1} parent=1 // pred_check
      _
    $region23: #{tpu_custom_call.1} parent=1 // pred_check_branch
      %81 = sbr.rel (0) target = $region25
    $region24: #{tpu_custom_call.1} parent=1 // pred_region
      _
    $region25: #{tpu_custom_call.1} parent=1 // pred_fallthru
      _
    // Predicated region
    $region26: #{tpu_custom_call.1} parent=1 // pred_check
      _
    $region27: #{tpu_custom_call.1} parent=1 // pred_check_branch
      %83 = sbr.rel (0) target = $region29
    $region28: #{tpu_custom_call.1} parent=1 // pred_region
      %85 = vsyncadd [#allocation13], 0
      %s87 = sshll.u32 %s6, 4
      %s88 = int_to_ptr.hbm [resolvable:$true] %s87
      %s89 = sshll.u32 [#allocation12], 4
      %s90 = int_to_ptr.vmem [resolvable:$true] %s89
      %92 = dma.hbm_to_vmem [thread:$0]  %s88, 64, %s90, [#allocation13]
    $region29: #{tpu_custom_call.1} parent=1 // pred_fallthru
      _
    // Predicated region
    $region30: #{tpu_custom_call.1} parent=1 // pred_check
      _
    $region31: #{tpu_custom_call.1} parent=1 // pred_check_branch
      %94 = sbr.rel (0) target = $region33
    $region32: #{tpu_custom_call.1} parent=1 // pred_region
      %96 = dma.done [#allocation4], 8192
    $region33: #{tpu_custom_call.1} parent=1 // pred_fallthru
      _
    // Predicated region
    $region34: #{tpu_custom_call.1} parent=1 // pred_check
      _
    $region35: #{tpu_custom_call.1} parent=1 // pred_check_branch
      %98 = sbr.rel (0) target = $region37
    $region36: #{tpu_custom_call.1} parent=1 // pred_region
      %100 = dma.done [#allocation7], 1024
    $region37: #{tpu_custom_call.1} parent=1 // pred_fallthru
      _
    // Predicated region
    $region38: #{tpu_custom_call.1} parent=1 // pred_check
      _
    $region39: #{tpu_custom_call.1} parent=1 // pred_check_branch
      %102 = sbr.rel (0) target = $region41
    $region40: #{tpu_custom_call.1} parent=1 // pred_region
      %104 = dma.done [#allocation7], 1024
    $region41: #{tpu_custom_call.1} parent=1 // pred_fallthru
      _
    // Predicated region
    $region42: #{tpu_custom_call.1} parent=1 // pred_check
      _
    $region43: #{tpu_custom_call.1} parent=1 // pred_check_branch
      %106 = sbr.rel (0) target = $region45
    $region44: #{tpu_custom_call.1} parent=1 // pred_region
      %108 = dma.done [#allocation10], 9216
    $region45: #{tpu_custom_call.1} parent=1 // pred_fallthru
      _
    // Predicated region
    $region46: #{tpu_custom_call.1} parent=1 // pred_check
      _
    $region47: #{tpu_custom_call.1} parent=1 // pred_check_branch
      %110 = sbr.rel (0) target = $region49
    $region48: #{tpu_custom_call.1} parent=1 // pred_region
      %112 = dma.done [#allocation10], 64
    $region49: #{tpu_custom_call.1} parent=1 // pred_fallthru
      _
    // Predicated region
    $region50: #{tpu_custom_call.1} parent=1 // pred_check
      _
    $region51: #{tpu_custom_call.1} parent=1 // pred_check_branch
      %114 = sbr.rel (0) target = $region53
    $region52: #{tpu_custom_call.1} parent=1 // pred_region
      %116 = dma.done [#allocation13], 64
    $region53: #{tpu_custom_call.1} parent=1 // pred_fallthru
      _
    %117 = vst [vmem:[#allocation2] sm:$0xff] 0.0
    %118 = vst [vmem:[#allocation2 + $0x8] sm:$0xff] 0.0
    %119 = vst [vmem:[#allocation2 + $0x10] sm:$0x3] 0.0
    %120 = vst [vmem:[#allocation2 + $0x18] sm:$0xff] 0.0
    %121 = vst [vmem:[#allocation2 + $0x20] sm:$0xff] 0.0
    %122 = vst [vmem:[#allocation2 + $0x28] sm:$0x3] 0.0
    %123 = vst [vmem:[#allocation2 + $0x30] sm:$0xff] 0.0
    %124 = vst [vmem:[#allocation2 + $0x38] sm:$0xff] 0.0
    %125 = vst [vmem:[#allocation2 + $0x40] sm:$0x3] 0.0
    %126 = vst [vmem:[#allocation2 + $0x48] sm:$0xff] 0.0
    %127 = vst [vmem:[#allocation2 + $0x50] sm:$0xff] 0.0
    %128 = vst [vmem:[#allocation2 + $0x58] sm:$0x3] 0.0
    %129 = vst [vmem:[#allocation2 + $0x60] sm:$0xff] 0.0
    %130 = vst [vmem:[#allocation2 + $0x68] sm:$0xff] 0.0
    %131 = vst [vmem:[#allocation2 + $0x70] sm:$0x3] 0.0
    %132 = vst [vmem:[#allocation2 + $0x78] sm:$0xff] 0.0
    %133 = vst [vmem:[#allocation2 + $0x80] sm:$0xff] 0.0
    %134 = vst [vmem:[#allocation2 + $0x88] sm:$0x3] 0.0
    %135 = vst [vmem:[#allocation2 + $0x90] sm:$0xff] 0.0
    %136 = vst [vmem:[#allocation2 + $0x98] sm:$0xff] 0.0
    %137 = vst [vmem:[#allocation2 + $0xa0] sm:$0x3] 0.0
    %138 = vst [vmem:[#allocation2 + $0xa8] sm:$0xff] 0.0
    %139 = vst [vmem:[#allocation2 + $0xb0] sm:$0xff] 0.0
    %140 = vst [vmem:[#allocation2 + $0xb8] sm:$0x3] 0.0
    %141 = vst [vmem:[#allocation2 + $0xc0] sm:$0xff] 0.0
    %142 = vst [vmem:[#allocation2 + $0xc8] sm:$0xff] 0.0
    %143 = vst [vmem:[#allocation2 + $0xd0] sm:$0x3] 0.0
    %144 = vst [vmem:[#allocation2 + $0xd8] sm:$0xff] 0.0
    %145 = vst [vmem:[#allocation2 + $0xe0] sm:$0xff] 0.0
    %146 = vst [vmem:[#allocation2 + $0xe8] sm:$0x3] 0.0
    %147 = vst [vmem:[#allocation2 + $0xf0] sm:$0xff] 0.0
    %148 = vst [vmem:[#allocation2 + $0xf8] sm:$0xff] 0.0
    %149 = vst [vmem:[#allocation2 + $0x100] sm:$0x3] 0.0
    %150 = vst [vmem:[#allocation2 + $0x108] sm:$0xff] 0.0
    %151 = vst [vmem:[#allocation2 + $0x110] sm:$0xff] 0.0
    %152 = vst [vmem:[#allocation2 + $0x118] sm:$0x3] 0.0
    %153 = vst [vmem:[#allocation2 + $0x120] sm:$0xff] 0.0
    %154 = vst [vmem:[#allocation2 + $0x128] sm:$0xff] 0.0
    %155 = vst [vmem:[#allocation2 + $0x130] sm:$0x3] 0.0
    %156 = vst [vmem:[#allocation2 + $0x138] sm:$0xff] 0.0
    %157 = vst [vmem:[#allocation2 + $0x140] sm:$0xff] 0.0
    %158 = vst [vmem:[#allocation2 + $0x148] sm:$0x3] 0.0
    %159 = vst [vmem:[#allocation2 + $0x150] sm:$0xff] 0.0
    %160 = vst [vmem:[#allocation2 + $0x158] sm:$0xff] 0.0
    %161 = vst [vmem:[#allocation2 + $0x160] sm:$0x3] 0.0
    %162 = vst [vmem:[#allocation2 + $0x168] sm:$0xff] 0.0
    %163 = vst [vmem:[#allocation2 + $0x170] sm:$0xff] 0.0
    %164 = vst [vmem:[#allocation2 + $0x178] sm:$0x3] 0.0
    %165 = vst [vmem:[#allocation2 + $0x180] sm:$0xff] 0.0
    %166 = vst [vmem:[#allocation2 + $0x188] sm:$0xff] 0.0
    %167 = vst [vmem:[#allocation2 + $0x190] sm:$0x3] 0.0
    %168 = vst [vmem:[#allocation2 + $0x198] sm:$0xff] 0.0
    %169 = vst [vmem:[#allocation2 + $0x1a0] sm:$0xff] 0.0
    %170 = vst [vmem:[#allocation2 + $0x1a8] sm:$0x3] 0.0
    %171 = vst [vmem:[#allocation2 + $0x1b0] sm:$0xff] 0.0
    %172 = vst [vmem:[#allocation2 + $0x1b8] sm:$0xff] 0.0
    %173 = vst [vmem:[#allocation2 + $0x1c0] sm:$0x3] 0.0
    %174 = vst [vmem:[#allocation2 + $0x1c8] sm:$0xff] 0.0
    %175 = vst [vmem:[#allocation2 + $0x1d0] sm:$0xff] 0.0
    %176 = vst [vmem:[#allocation2 + $0x1d8] sm:$0x3] 0.0
    %177 = vst [vmem:[#allocation2 + $0x1e0] sm:$0xff] 0.0
    %178 = vst [vmem:[#allocation2 + $0x1e8] sm:$0xff] 0.0
    %179 = vst [vmem:[#allocation2 + $0x1f0] sm:$0x3] 0.0
    %180 = vst [vmem:[#allocation2 + $0x1f8] sm:$0xff] 0.0
    %181 = vst [vmem:[#allocation2 + $0x200] sm:$0xff] 0.0
    %182 = vst [vmem:[#allocation2 + $0x208] sm:$0x3] 0.0
    %183 = vst [vmem:[#allocation2 + $0x210] sm:$0xff] 0.0
    %184 = vst [vmem:[#allocation2 + $0x218] sm:$0xff] 0.0
    %185 = vst [vmem:[#allocation2 + $0x220] sm:$0x3] 0.0
    %186 = vst [vmem:[#allocation2 + $0x228] sm:$0xff] 0.0
    %187 = vst [vmem:[#allocation2 + $0x230] sm:$0xff] 0.0
    %188 = vst [vmem:[#allocation2 + $0x238] sm:$0x3] 0.0
    %189 = vst [vmem:[#allocation2 + $0x240] sm:$0xff] 0.0
    %190 = vst [vmem:[#allocation2 + $0x248] sm:$0xff] 0.0
    %191 = vst [vmem:[#allocation2 + $0x250] sm:$0x3] 0.0
    %192 = vst [vmem:[#allocation2 + $0x258] sm:$0xff] 0.0
    %193 = vst [vmem:[#allocation2 + $0x260] sm:$0xff] 0.0
    %194 = vst [vmem:[#allocation2 + $0x268] sm:$0x3] 0.0
    %195 = vst [vmem:[#allocation2 + $0x270] sm:$0xff] 0.0
    %196 = vst [vmem:[#allocation2 + $0x278] sm:$0xff] 0.0
    %197 = vst [vmem:[#allocation2 + $0x280] sm:$0x3] 0.0
    %198 = vst [vmem:[#allocation2 + $0x288] sm:$0xff] 0.0
    %199 = vst [vmem:[#allocation2 + $0x290] sm:$0xff] 0.0
    %200 = vst [vmem:[#allocation2 + $0x298] sm:$0x3] 0.0
    %201 = vst [vmem:[#allocation2 + $0x2a0] sm:$0xff] 0.0
    %202 = vst [vmem:[#allocation2 + $0x2a8] sm:$0xff] 0.0
    %203 = vst [vmem:[#allocation2 + $0x2b0] sm:$0x3] 0.0
    %204 = vst [vmem:[#allocation2 + $0x2b8] sm:$0xff] 0.0
    %205 = vst [vmem:[#allocation2 + $0x2c0] sm:$0xff] 0.0
    %206 = vst [vmem:[#allocation2 + $0x2c8] sm:$0x3] 0.0
    %207 = vst [vmem:[#allocation2 + $0x2d0] sm:$0xff] 0.0
    %208 = vst [vmem:[#allocation2 + $0x2d8] sm:$0xff] 0.0
    %209 = vst [vmem:[#allocation2 + $0x2e0] sm:$0x3] 0.0
    %210 = vst [vmem:[#allocation2 + $0x2e8] sm:$0xff] 0.0
    %211 = vst [vmem:[#allocation2 + $0x2f0] sm:$0xff] 0.0
    %212 = vst [vmem:[#allocation2 + $0x2f8] sm:$0x3] 0.0
    %213 = vst [vmem:[#allocation2 + $0x300] sm:$0xff] 0.0
    %214 = vst [vmem:[#allocation2 + $0x308] sm:$0xff] 0.0
    %215 = vst [vmem:[#allocation2 + $0x310] sm:$0x3] 0.0
    %216 = vst [vmem:[#allocation2 + $0x318] sm:$0xff] 0.0
    %217 = vst [vmem:[#allocation2 + $0x320] sm:$0xff] 0.0
    %218 = vst [vmem:[#allocation2 + $0x328] sm:$0x3] 0.0
    %219 = vst [vmem:[#allocation2 + $0x330] sm:$0xff] 0.0
    %220 = vst [vmem:[#allocation2 + $0x338] sm:$0xff] 0.0
    %221 = vst [vmem:[#allocation2 + $0x340] sm:$0x3] 0.0
    %222 = vst [vmem:[#allocation2 + $0x348] sm:$0xff] 0.0
    %223 = vst [vmem:[#allocation2 + $0x350] sm:$0xff] 0.0
    %224 = vst [vmem:[#allocation2 + $0x358] sm:$0x3] 0.0
    %v225 = vld [vmem:[#allocation3] sm:$0xff]
    %v226 = vld [vmem:[#allocation3 + $0x8] sm:$0xff]
    %v227 = vld [vmem:[#allocation3 + $0x10] sm:$0xff]
    %v228 = vld [vmem:[#allocation3 + $0x18] sm:$0xff]
    %v229 = vld [vmem:[#allocation3 + $0x20] sm:$0xff]
    %v230 = vld [vmem:[#allocation3 + $0x28] sm:$0xff]
    %v231 = vld [vmem:[#allocation3 + $0x30] sm:$0xff]
    %v232 = vld [vmem:[#allocation3 + $0x38] sm:$0xff]
    %v233 = vld [vmem:[#allocation3 + $0x40] sm:$0xff]
    %v234 = vld [vmem:[#allocation3 + $0x48] sm:$0xff]
    %v235 = vld [vmem:[#allocation3 + $0x50] sm:$0xff]
    %v236 = vld [vmem:[#allocation3 + $0x58] sm:$0xff]
    %v237 = vld [vmem:[#allocation3 + $0x60] sm:$0xff]
    %v238 = vld [vmem:[#allocation3 + $0x68] sm:$0xff]
    %v239 = vld [vmem:[#allocation3 + $0x70] sm:$0xff]
    %v240 = vld [vmem:[#allocation3 + $0x78] sm:$0xff]
    %v241 = vld [vmem:[#allocation3 + $0x80] sm:$0xff]
    %v242 = vld [vmem:[#allocation3 + $0x88] sm:$0xff]
    %v243 = vld [vmem:[#allocation3 + $0x90] sm:$0xff]
    %v244 = vld [vmem:[#allocation3 + $0x98] sm:$0xff]
    %v245 = vld [vmem:[#allocation3 + $0xa0] sm:$0xff]
    %v246 = vld [vmem:[#allocation3 + $0xa8] sm:$0xff]
    %v247 = vld [vmem:[#allocation3 + $0xb0] sm:$0xff]
    %v248 = vld [vmem:[#allocation3 + $0xb8] sm:$0xff]
    %v249 = vld [vmem:[#allocation3 + $0xc0] sm:$0xff]
    %v250 = vld [vmem:[#allocation3 + $0xc8] sm:$0xff]
    %v251 = vld [vmem:[#allocation3 + $0xd0] sm:$0xff]
    %v252 = vld [vmem:[#allocation3 + $0xd8] sm:$0xff]
    %v253 = vld [vmem:[#allocation3 + $0xe0] sm:$0xff]
    %v254 = vld [vmem:[#allocation3 + $0xe8] sm:$0xff]
    %v255 = vld [vmem:[#allocation3 + $0xf0] sm:$0xff]
    %v256 = vld [vmem:[#allocation3 + $0xf8] sm:$0xff]
    %v257 = vld [vmem:[#allocation3 + $0x100] sm:$0xff]
    %v258 = vld [vmem:[#allocation3 + $0x108] sm:$0xff]
    %v259 = vld [vmem:[#allocation3 + $0x110] sm:$0xff]
    %v260 = vld [vmem:[#allocation3 + $0x118] sm:$0xff]
    %v261 = vld [vmem:[#allocation3 + $0x120] sm:$0xff]
    %v262 = vld [vmem:[#allocation3 + $0x128] sm:$0xff]
    %v263 = vld [vmem:[#allocation3 + $0x130] sm:$0xff]
    %v264 = vld [vmem:[#allocation3 + $0x138] sm:$0xff]
    %v265 = vld [vmem:[#allocation3 + $0x140] sm:$0xff]
    %v266 = vld [vmem:[#allocation3 + $0x148] sm:$0xff]
    %v267 = vld [vmem:[#allocation3 + $0x150] sm:$0xff]
    %v268 = vld [vmem:[#allocation3 + $0x158] sm:$0xff]
    %v269 = vld [vmem:[#allocation3 + $0x160] sm:$0xff]
    %v270 = vld [vmem:[#allocation3 + $0x168] sm:$0xff]
    %v271 = vld [vmem:[#allocation3 + $0x170] sm:$0xff]
    %v272 = vld [vmem:[#allocation3 + $0x178] sm:$0xff]
    %v273 = vld [vmem:[#allocation3 + $0x180] sm:$0xff]
    %v274 = vld [vmem:[#allocation3 + $0x188] sm:$0xff]
    %v275 = vld [vmem:[#allocation3 + $0x190] sm:$0xff]
    %v276 = vld [vmem:[#allocation3 + $0x198] sm:$0xff]
    %v277 = vld [vmem:[#allocation3 + $0x1a0] sm:$0xff]
    %v278 = vld [vmem:[#allocation3 + $0x1a8] sm:$0xff]
    %v279 = vld [vmem:[#allocation3 + $0x1b0] sm:$0xff]
    %v280 = vld [vmem:[#allocation3 + $0x1b8] sm:$0xff]
    %v281 = vld [vmem:[#allocation3 + $0x1c0] sm:$0xff]
    %v282 = vld [vmem:[#allocation3 + $0x1c8] sm:$0xff]
    %v283 = vld [vmem:[#allocation3 + $0x1d0] sm:$0xff]
    %v284 = vld [vmem:[#allocation3 + $0x1d8] sm:$0xff]
    %v285 = vld [vmem:[#allocation3 + $0x1e0] sm:$0xff]
    %v286 = vld [vmem:[#allocation3 + $0x1e8] sm:$0xff]
    %v287 = vld [vmem:[#allocation3 + $0x1f0] sm:$0xff]
    %v288 = vld [vmem:[#allocation3 + $0x1f8] sm:$0xff]
    %s289 = scalar_lea.vmem [#allocation2], 24
    %290 = vst [vmem:[%s289 + $0x1] sm:$0xff] %v225
    %291 = vst [vmem:[%s289 + $0x9] sm:$0xff] %v226
    %292 = vst [vmem:[%s289 + $0x19] sm:$0xff] %v227
    %293 = vst [vmem:[%s289 + $0x21] sm:$0xff] %v228
    %294 = vst [vmem:[%s289 + $0x31] sm:$0xff] %v229
    %295 = vst [vmem:[%s289 + $0x39] sm:$0xff] %v230
    %296 = vst [vmem:[%s289 + $0x49] sm:$0xff] %v231
    %297 = vst [vmem:[%s289 + $0x51] sm:$0xff] %v232
    %298 = vst [vmem:[%s289 + $0x61] sm:$0xff] %v233
    %299 = vst [vmem:[%s289 + $0x69] sm:$0xff] %v234
    %300 = vst [vmem:[%s289 + $0x79] sm:$0xff] %v235
    %301 = vst [vmem:[%s289 + $0x81] sm:$0xff] %v236
    %302 = vst [vmem:[%s289 + $0x91] sm:$0xff] %v237
    %303 = vst [vmem:[%s289 + $0x99] sm:$0xff] %v238
    %304 = vst [vmem:[%s289 + $0xa9] sm:$0xff] %v239
    %305 = vst [vmem:[%s289 + $0xb1] sm:$0xff] %v240
    %306 = vst [vmem:[%s289 + $0xc1] sm:$0xff] %v241
    %307 = vst [vmem:[%s289 + $0xc9] sm:$0xff] %v242
    %308 = vst [vmem:[%s289 + $0xd9] sm:$0xff] %v243
    %309 = vst [vmem:[%s289 + $0xe1] sm:$0xff] %v244
    %310 = vst [vmem:[%s289 + $0xf1] sm:$0xff] %v245
    %311 = vst [vmem:[%s289 + $0xf9] sm:$0xff] %v246
    %312 = vst [vmem:[%s289 + $0x109] sm:$0xff] %v247
    %313 = vst [vmem:[%s289 + $0x111] sm:$0xff] %v248
    %314 = vst [vmem:[%s289 + $0x121] sm:$0xff] %v249
    %315 = vst [vmem:[%s289 + $0x129] sm:$0xff] %v250
    %316 = vst [vmem:[%s289 + $0x139] sm:$0xff] %v251
    %317 = vst [vmem:[%s289 + $0x141] sm:$0xff] %v252
    %318 = vst [vmem:[%s289 + $0x151] sm:$0xff] %v253
    %319 = vst [vmem:[%s289 + $0x159] sm:$0xff] %v254
    %320 = vst [vmem:[%s289 + $0x169] sm:$0xff] %v255
    %321 = vst [vmem:[%s289 + $0x171] sm:$0xff] %v256
    %322 = vst [vmem:[%s289 + $0x1b1] sm:$0xff] %v257
    %323 = vst [vmem:[%s289 + $0x1b9] sm:$0xff] %v258
    %324 = vst [vmem:[%s289 + $0x1c9] sm:$0xff] %v259
    %325 = vst [vmem:[%s289 + $0x1d1] sm:$0xff] %v260
    %326 = vst [vmem:[%s289 + $0x1e1] sm:$0xff] %v261
    %327 = vst [vmem:[%s289 + $0x1e9] sm:$0xff] %v262
    %328 = vst [vmem:[%s289 + $0x1f9] sm:$0xff] %v263
    %329 = vst [vmem:[%s289 + $0x201] sm:$0xff] %v264
    %330 = vst [vmem:[%s289 + $0x211] sm:$0xff] %v265
    %331 = vst [vmem:[%s289 + $0x219] sm:$0xff] %v266
    %332 = vst [vmem:[%s289 + $0x229] sm:$0xff] %v267
    %333 = vst [vmem:[%s289 + $0x231] sm:$0xff] %v268
    %334 = vst [vmem:[%s289 + $0x241] sm:$0xff] %v269
    %335 = vst [vmem:[%s289 + $0x249] sm:$0xff] %v270
    %336 = vst [vmem:[%s289 + $0x259] sm:$0xff] %v271
    %337 = vst [vmem:[%s289 + $0x261] sm:$0xff] %v272
    %338 = vst [vmem:[%s289 + $0x271] sm:$0xff] %v273
    %339 = vst [vmem:[%s289 + $0x279] sm:$0xff] %v274
    %340 = vst [vmem:[%s289 + $0x289] sm:$0xff] %v275
    %341 = vst [vmem:[%s289 + $0x291] sm:$0xff] %v276
    %342 = vst [vmem:[%s289 + $0x2a1] sm:$0xff] %v277
    %343 = vst [vmem:[%s289 + $0x2a9] sm:$0xff] %v278
    %344 = vst [vmem:[%s289 + $0x2b9] sm:$0xff] %v279
    %345 = vst [vmem:[%s289 + $0x2c1] sm:$0xff] %v280
    %346 = vst [vmem:[%s289 + $0x2d1] sm:$0xff] %v281
    %347 = vst [vmem:[%s289 + $0x2d9] sm:$0xff] %v282
    %348 = vst [vmem:[%s289 + $0x2e9] sm:$0xff] %v283
    %349 = vst [vmem:[%s289 + $0x2f1] sm:$0xff] %v284
    %350 = vst [vmem:[%s289 + $0x301] sm:$0xff] %v285
    %351 = vst [vmem:[%s289 + $0x309] sm:$0xff] %v286
    %352 = vst [vmem:[%s289 + $0x319] sm:$0xff] %v287
    %353 = vst [vmem:[%s289 + $0x321] sm:$0xff] %v288
    %v354 = vld [vmem:[%s289 + $0x1] sm:$0xff]
    %v355 = vld [vmem:[%s289 + $0x9] sm:$0xff]
    %v356 = vld [vmem:[%s289 + $0x19] sm:$0xff]
    %v357 = vld [vmem:[%s289 + $0x21] sm:$0xff]
    %v358 = vld [vmem:[%s289 + $0x31] sm:$0xff]
    %v359 = vld [vmem:[%s289 + $0x39] sm:$0xff]
    %v360 = vld [vmem:[%s289 + $0x49] sm:$0xff]
    %v361 = vld [vmem:[%s289 + $0x51] sm:$0xff]
    %v362 = vld [vmem:[%s289 + $0x61] sm:$0xff]
    %v363 = vld [vmem:[%s289 + $0x69] sm:$0xff]
    %v364 = vld [vmem:[%s289 + $0x79] sm:$0xff]
    %v365 = vld [vmem:[%s289 + $0x81] sm:$0xff]
    %v366 = vld [vmem:[%s289 + $0x91] sm:$0xff]
    %v367 = vld [vmem:[%s289 + $0x99] sm:$0xff]
    %v368 = vld [vmem:[%s289 + $0xa9] sm:$0xff]
    %v369 = vld [vmem:[%s289 + $0xb1] sm:$0xff]
    %v370 = vld [vmem:[%s289 + $0xc1] sm:$0xff]
    %v371 = vld [vmem:[%s289 + $0xc9] sm:$0xff]
    %v372 = vld [vmem:[%s289 + $0xd9] sm:$0xff]
    %v373 = vld [vmem:[%s289 + $0xe1] sm:$0xff]
    %v374 = vld [vmem:[%s289 + $0xf1] sm:$0xff]
    %v375 = vld [vmem:[%s289 + $0xf9] sm:$0xff]
    %v376 = vld [vmem:[%s289 + $0x109] sm:$0xff]
    %v377 = vld [vmem:[%s289 + $0x111] sm:$0xff]
    %v378 = vld [vmem:[%s289 + $0x121] sm:$0xff]
    %v379 = vld [vmem:[%s289 + $0x129] sm:$0xff]
    %v380 = vld [vmem:[%s289 + $0x139] sm:$0xff]
    %v381 = vld [vmem:[%s289 + $0x141] sm:$0xff]
    %v382 = vld [vmem:[%s289 + $0x151] sm:$0xff]
    %v383 = vld [vmem:[%s289 + $0x159] sm:$0xff]
    %v384 = vld [vmem:[%s289 + $0x169] sm:$0xff]
    %v385 = vld [vmem:[%s289 + $0x171] sm:$0xff]
    %v386 = vld [vmem:[%s289 + $0x1b1] sm:$0xff]
    %v387 = vld [vmem:[%s289 + $0x1b9] sm:$0xff]
    %v388 = vld [vmem:[%s289 + $0x1c9] sm:$0xff]
    %v389 = vld [vmem:[%s289 + $0x1d1] sm:$0xff]
    %v390 = vld [vmem:[%s289 + $0x1e1] sm:$0xff]
    %v391 = vld [vmem:[%s289 + $0x1e9] sm:$0xff]
    %v392 = vld [vmem:[%s289 + $0x1f9] sm:$0xff]
    %v393 = vld [vmem:[%s289 + $0x201] sm:$0xff]
    %v394 = vld [vmem:[%s289 + $0x211] sm:$0xff]
    %v395 = vld [vmem:[%s289 + $0x219] sm:$0xff]
    %v396 = vld [vmem:[%s289 + $0x229] sm:$0xff]
    %v397 = vld [vmem:[%s289 + $0x231] sm:$0xff]
    %v398 = vld [vmem:[%s289 + $0x241] sm:$0xff]
    %v399 = vld [vmem:[%s289 + $0x249] sm:$0xff]
    %v400 = vld [vmem:[%s289 + $0x259] sm:$0xff]
    %v401 = vld [vmem:[%s289 + $0x261] sm:$0xff]
    %v402 = vld [vmem:[%s289 + $0x271] sm:$0xff]
    %v403 = vld [vmem:[%s289 + $0x279] sm:$0xff]
    %v404 = vld [vmem:[%s289 + $0x289] sm:$0xff]
    %v405 = vld [vmem:[%s289 + $0x291] sm:$0xff]
    %v406 = vld [vmem:[%s289 + $0x2a1] sm:$0xff]
    %v407 = vld [vmem:[%s289 + $0x2a9] sm:$0xff]
    %v408 = vld [vmem:[%s289 + $0x2b9] sm:$0xff]
    %v409 = vld [vmem:[%s289 + $0x2c1] sm:$0xff]
    %v410 = vld [vmem:[%s289 + $0x2d1] sm:$0xff]
    %v411 = vld [vmem:[%s289 + $0x2d9] sm:$0xff]
    %v412 = vld [vmem:[%s289 + $0x2e9] sm:$0xff]
    %v413 = vld [vmem:[%s289 + $0x2f1] sm:$0xff]
    %v414 = vld [vmem:[%s289 + $0x301] sm:$0xff]
    %v415 = vld [vmem:[%s289 + $0x309] sm:$0xff]
    %v416 = vld [vmem:[%s289 + $0x319] sm:$0xff]
    %v417 = vld [vmem:[%s289 + $0x321] sm:$0xff]
    %v418 = vpack.c.bf16 %v355, %v354
    %v419 = vpack.c.bf16 %v357, %v356
    %v420 = vpack.c.bf16 %v359, %v358
    %v421 = vpack.c.bf16 %v361, %v360
    %v422 = vpack.c.bf16 %v363, %v362
    %v423 = vpack.c.bf16 %v365, %v364
    %v424 = vpack.c.bf16 %v367, %v366
    %v425 = vpack.c.bf16 %v369, %v368
    %v426 = vpack.c.bf16 %v371, %v370
    %v427 = vpack.c.bf16 %v373, %v372
    %v428 = vpack.c.bf16 %v375, %v374
    %v429 = vpack.c.bf16 %v377, %v376
    %v430 = vpack.c.bf16 %v379, %v378
    %v431 = vpack.c.bf16 %v381, %v380
    %v432 = vpack.c.bf16 %v383, %v382
    %v433 = vpack.c.bf16 %v385, %v384
    %v434 = vpack.c.bf16 %v387, %v386
    %v435 = vpack.c.bf16 %v389, %v388
    %v436 = vpack.c.bf16 %v391, %v390
    %v437 = vpack.c.bf16 %v393, %v392
    %v438 = vpack.c.bf16 %v395, %v394
    %v439 = vpack.c.bf16 %v397, %v396
    %v440 = vpack.c.bf16 %v399, %v398
    %v441 = vpack.c.bf16 %v401, %v400
    %v442 = vpack.c.bf16 %v403, %v402
    %v443 = vpack.c.bf16 %v405, %v404
    %v444 = vpack.c.bf16 %v407, %v406
    %v445 = vpack.c.bf16 %v409, %v408
    %v446 = vpack.c.bf16 %v411, %v410
    %v447 = vpack.c.bf16 %v413, %v412
    %v448 = vpack.c.bf16 %v415, %v414
    %v449 = vpack.c.bf16 %v417, %v416
    %v450 = vld [vmem:[#allocation6] sm:$0xf]
    %v451 = vld [vmem:[#allocation6 + $0x4] sm:$0xf]
    %v452 = vld [vmem:[#allocation6 + $0x8] sm:$0xf]
    %v453 = vld [vmem:[#allocation6 + $0xc] sm:$0xf]
    %v454 = vld [vmem:[#allocation6 + $0x10] sm:$0xf]
    %v455 = vld [vmem:[#allocation6 + $0x14] sm:$0xf]
    %v456 = vld [vmem:[#allocation6 + $0x18] sm:$0xf]
    %v457 = vld [vmem:[#allocation6 + $0x1c] sm:$0xf]
    %v458 = vld [vmem:[#allocation6 + $0x20] sm:$0xf]
    %v459 = vld [vmem:[#allocation6 + $0x24] sm:$0xf]
    %v460 = vld [vmem:[#allocation6 + $0x28] sm:$0xf]
    %v461 = vld [vmem:[#allocation6 + $0x2c] sm:$0xf]
    %v462 = vld [vmem:[#allocation6 + $0x30] sm:$0xf]
    %v463 = vld [vmem:[#allocation6 + $0x34] sm:$0xf]
    %v464 = vld [vmem:[#allocation6 + $0x38] sm:$0xf]
    %v465 = vld [vmem:[#allocation6 + $0x3c] sm:$0xf]
    %v466 = vld [vmem:[#allocation11] sm:$0x1]
    %v467 = vperm.slane %v466, 0
    %v484 = vunpack.c.l.b16 %v450
    %v485 = vunpack.c.l.b16 %v451
    %v486 = vunpack.c.l.b16 %v452
    %v487 = vunpack.c.l.b16 %v453
    %v488 = vunpack.c.l.b16 %v454
    %v489 = vunpack.c.l.b16 %v455
    %v490 = vunpack.c.l.b16 %v456
    %v491 = vunpack.c.l.b16 %v457
    %v492 = vunpack.c.l.b16 %v458
    %v493 = vunpack.c.l.b16 %v459
    %v494 = vunpack.c.l.b16 %v460
    %v495 = vunpack.c.l.b16 %v461
    %v496 = vunpack.c.l.b16 %v462
    %v497 = vunpack.c.l.b16 %v463
    %v498 = vunpack.c.l.b16 %v464
    %v499 = vunpack.c.l.b16 %v465
    %v500 = vpack.c.b16 %v485, %v484
    %v501 = vpack.c.b16 %v487, %v486
    %v502 = vpack.c.b16 %v489, %v488
    %v503 = vpack.c.b16 %v491, %v490
    %v504 = vpack.c.b16 %v493, %v492
    %v505 = vpack.c.b16 %v495, %v494
    %v506 = vpack.c.b16 %v497, %v496
    %v507 = vpack.c.b16 %v499, %v498
    %516 = vmatpush.bf16.msra.mxu0 %v507
    %517 = vmatpush.bf16.msra.mxu0 %v506
    %518 = vmatpush.bf16.msra.mxu0 %v505
    %519 = vmatpush.bf16.msra.mxu0 %v504
    %520 = vmatpush.bf16.msra.mxu0 %v503
    %521 = vmatpush.bf16.msra.mxu0 %v502
    %522 = vmatpush.bf16.msra.mxu0 %v501
    %523 = vmatpush.bf16.msra.mxu0 %v500
    %524 = vmatmul.bf16.gmra.mxu0 %v418
    %v525 = vpop.f32.mrf.mxu0
    %v526 = vadd.f32 %v467, %v525
    %v527 = vpop.f32.mrf.mxu0
    %v528 = vadd.f32 %v467, %v527
    %529 = vmatmul.bf16.gmra.mxu0 %v419
    %v530 = vpop.f32.mrf.mxu0
    %v531 = vadd.f32 %v467, %v530
    %v532 = vpop.f32.mrf.mxu0
    %v533 = vadd.f32 %v467, %v532
    %534 = vmatmul.bf16.gmra.mxu0 %v420
    %v535 = vpop.f32.mrf.mxu0
    %v536 = vadd.f32 %v467, %v535
    %v537 = vpop.f32.mrf.mxu0
    %v538 = vadd.f32 %v467, %v537
    %539 = vmatmul.bf16.gmra.mxu0 %v421
    %v540 = vpop.f32.mrf.mxu0
    %v541 = vadd.f32 %v467, %v540
    %v542 = vpop.f32.mrf.mxu0
    %v543 = vadd.f32 %v467, %v542
    %544 = vmatmul.bf16.gmra.mxu0 %v422
    %v545 = vpop.f32.mrf.mxu0
    %v546 = vadd.f32 %v467, %v545
    %v547 = vpop.f32.mrf.mxu0
    %v548 = vadd.f32 %v467, %v547
    %549 = vmatmul.bf16.gmra.mxu0 %v423
    %v550 = vpop.f32.mrf.mxu0
    %v551 = vadd.f32 %v467, %v550
    %v552 = vpop.f32.mrf.mxu0
    %v553 = vadd.f32 %v467, %v552
    %554 = vmatmul.bf16.gmra.mxu0 %v424
    %v555 = vpop.f32.mrf.mxu0
    %v556 = vadd.f32 %v467, %v555
    %v557 = vpop.f32.mrf.mxu0
    %v558 = vadd.f32 %v467, %v557
    %559 = vmatmul.bf16.gmra.mxu0 %v425
    %v560 = vpop.f32.mrf.mxu0
    %v561 = vadd.f32 %v467, %v560
    %v562 = vpop.f32.mrf.mxu0
    %v563 = vadd.f32 %v467, %v562
    %564 = vmatmul.bf16.gmra.mxu0 %v426
    %v565 = vpop.f32.mrf.mxu0
    %v566 = vadd.f32 %v467, %v565
    %v567 = vpop.f32.mrf.mxu0
    %v568 = vadd.f32 %v467, %v567
    %569 = vmatmul.bf16.gmra.mxu0 %v427
    %v570 = vpop.f32.mrf.mxu0
    %v571 = vadd.f32 %v467, %v570
    %v572 = vpop.f32.mrf.mxu0
    %v573 = vadd.f32 %v467, %v572
    %574 = vmatmul.bf16.gmra.mxu0 %v428
    %v575 = vpop.f32.mrf.mxu0
    %v576 = vadd.f32 %v467, %v575
    %v577 = vpop.f32.mrf.mxu0
    %v578 = vadd.f32 %v467, %v577
    %579 = vmatmul.bf16.gmra.mxu0 %v429
    %v580 = vpop.f32.mrf.mxu0
    %v581 = vadd.f32 %v467, %v580
    %v582 = vpop.f32.mrf.mxu0
    %v583 = vadd.f32 %v467, %v582
    %584 = vmatmul.bf16.gmra.mxu0 %v430
    %v585 = vpop.f32.mrf.mxu0
    %v586 = vadd.f32 %v467, %v585
    %v587 = vpop.f32.mrf.mxu0
    %v588 = vadd.f32 %v467, %v587
    %589 = vmatmul.bf16.gmra.mxu0 %v431
    %v590 = vpop.f32.mrf.mxu0
    %v591 = vadd.f32 %v467, %v590
    %v592 = vpop.f32.mrf.mxu0
    %v593 = vadd.f32 %v467, %v592
    %594 = vmatmul.bf16.gmra.mxu0 %v432
    %v595 = vpop.f32.mrf.mxu0
    %v596 = vadd.f32 %v467, %v595
    %v597 = vpop.f32.mrf.mxu0
    %v598 = vadd.f32 %v467, %v597
    %599 = vmatmul.bf16.gmra.mxu0 %v433
    %v600 = vpop.f32.mrf.mxu0
    %v601 = vadd.f32 %v467, %v600
    %v602 = vpop.f32.mrf.mxu0
    %v603 = vadd.f32 %v467, %v602
    %604 = vmatmul.bf16.gmra.mxu0 %v434
    %v605 = vpop.f32.mrf.mxu0
    %v606 = vadd.f32 %v467, %v605
    %v607 = vpop.f32.mrf.mxu0
    %v608 = vadd.f32 %v467, %v607
    %609 = vmatmul.bf16.gmra.mxu0 %v435
    %v610 = vpop.f32.mrf.mxu0
    %v611 = vadd.f32 %v467, %v610
    %v612 = vpop.f32.mrf.mxu0
    %v613 = vadd.f32 %v467, %v612
    %614 = vmatmul.bf16.gmra.mxu0 %v436
    %v615 = vpop.f32.mrf.mxu0
    %v616 = vadd.f32 %v467, %v615
    %v617 = vpop.f32.mrf.mxu0
    %v618 = vadd.f32 %v467, %v617
    %619 = vmatmul.bf16.gmra.mxu0 %v437
    %v620 = vpop.f32.mrf.mxu0
    %v621 = vadd.f32 %v467, %v620
    %v622 = vpop.f32.mrf.mxu0
    %v623 = vadd.f32 %v467, %v622
    %624 = vmatmul.bf16.gmra.mxu0 %v438
    %v625 = vpop.f32.mrf.mxu0
    %v626 = vadd.f32 %v467, %v625
    %v627 = vpop.f32.mrf.mxu0
    %v628 = vadd.f32 %v467, %v627
    %629 = vmatmul.bf16.gmra.mxu0 %v439
    %v630 = vpop.f32.mrf.mxu0
    %v631 = vadd.f32 %v467, %v630
    %v632 = vpop.f32.mrf.mxu0
    %v633 = vadd.f32 %v467, %v632
    %634 = vmatmul.bf16.gmra.mxu0 %v440
    %v635 = vpop.f32.mrf.mxu0
    %v636 = vadd.f32 %v467, %v635
    %v637 = vpop.f32.mrf.mxu0
    %v638 = vadd.f32 %v467, %v637
    %639 = vmatmul.bf16.gmra.mxu0 %v441
    %v640 = vpop.f32.mrf.mxu0
    %v641 = vadd.f32 %v467, %v640
    %v642 = vpop.f32.mrf.mxu0
    %v643 = vadd.f32 %v467, %v642
    %644 = vmatmul.bf16.gmra.mxu0 %v442
    %v645 = vpop.f32.mrf.mxu0
    %v646 = vadd.f32 %v467, %v645
    %v647 = vpop.f32.mrf.mxu0
    %v648 = vadd.f32 %v467, %v647
    %649 = vmatmul.bf16.gmra.mxu0 %v443
    %v650 = vpop.f32.mrf.mxu0
    %v651 = vadd.f32 %v467, %v650
    %v652 = vpop.f32.mrf.mxu0
    %v653 = vadd.f32 %v467, %v652
    %654 = vmatmul.bf16.gmra.mxu0 %v444
    %v655 = vpop.f32.mrf.mxu0
    %v656 = vadd.f32 %v467, %v655
    %v657 = vpop.f32.mrf.mxu0
    %v658 = vadd.f32 %v467, %v657
    %659 = vmatmul.bf16.gmra.mxu0 %v445
    %v660 = vpop.f32.mrf.mxu0
    %v661 = vadd.f32 %v467, %v660
    %v662 = vpop.f32.mrf.mxu0
    %v663 = vadd.f32 %v467, %v662
    %664 = vmatmul.bf16.gmra.mxu0 %v446
    %v665 = vpop.f32.mrf.mxu0
    %v666 = vadd.f32 %v467, %v665
    %v667 = vpop.f32.mrf.mxu0
    %v668 = vadd.f32 %v467, %v667
    %669 = vmatmul.bf16.gmra.mxu0 %v447
    %v670 = vpop.f32.mrf.mxu0
    %v671 = vadd.f32 %v467, %v670
    %v672 = vpop.f32.mrf.mxu0
    %v673 = vadd.f32 %v467, %v672
    %674 = vmatmul.bf16.gmra.mxu0 %v448
    %v675 = vpop.f32.mrf.mxu0
    %v676 = vadd.f32 %v467, %v675
    %v677 = vpop.f32.mrf.mxu0
    %v678 = vadd.f32 %v467, %v677
    %679 = vmatmul.bf16.gmra.mxu0 %v449
    %v680 = vpop.f32.mrf.mxu0
    %v681 = vadd.f32 %v467, %v680
    %v682 = vpop.f32.mrf.mxu0
    %v683 = vadd.f32 %v467, %v682
    %684 = vdwg.mxu0
    %v685 = vadd.f32 %v526, %v528
    %v686 = vadd.f32 %v685, %v531
    %v687 = vadd.f32 %v686, %v533
    %v688 = vadd.f32 %v687, %v536
    %v689 = vadd.f32 %v688, %v538
    %v690 = vadd.f32 %v689, %v541
    %v691 = vadd.f32 %v690, %v543
    %v692 = vadd.f32 %v691, %v546
    %v693 = vadd.f32 %v692, %v548
    %v694 = vadd.f32 %v693, %v551
    %v695 = vadd.f32 %v694, %v553
    %v696 = vadd.f32 %v695, %v556
    %v697 = vadd.f32 %v696, %v558
    %v698 = vadd.f32 %v697, %v561
    %v699 = vadd.f32 %v698, %v563
    %v700 = vadd.f32 %v699, %v566
    %v701 = vadd.f32 %v700, %v568
    %v702 = vadd.f32 %v701, %v571
    %v703 = vadd.f32 %v702, %v573
    %v704 = vadd.f32 %v703, %v576
    %v705 = vadd.f32 %v704, %v578
    %v706 = vadd.f32 %v705, %v581
    %v707 = vadd.f32 %v706, %v583
    %v708 = vadd.f32 %v707, %v586
    %v709 = vadd.f32 %v708, %v588
    %v710 = vadd.f32 %v709, %v591
    %v711 = vadd.f32 %v710, %v593
    %v712 = vadd.f32 %v711, %v596
    %v713 = vadd.f32 %v712, %v598
    %v714 = vadd.f32 %v713, %v601
    %v715 = vadd.f32 %v714, %v603
    %v716 = vadd.f32 %v715, %v606
    %v717 = vadd.f32 %v716, %v608
    %v718 = vadd.f32 %v717, %v611
    %v719 = vadd.f32 %v718, %v613
    %v720 = vadd.f32 %v719, %v616
    %v721 = vadd.f32 %v720, %v618
    %v722 = vadd.f32 %v721, %v621
    %v723 = vadd.f32 %v722, %v623
    %v724 = vadd.f32 %v723, %v626
    %v725 = vadd.f32 %v724, %v628
    %v726 = vadd.f32 %v725, %v631
    %v727 = vadd.f32 %v726, %v633
    %v728 = vadd.f32 %v727, %v636
    %v729 = vadd.f32 %v728, %v638
    %v730 = vadd.f32 %v729, %v641
    %v731 = vadd.f32 %v730, %v643
    %v732 = vadd.f32 %v731, %v646
    %v733 = vadd.f32 %v732, %v648
    %v734 = vadd.f32 %v733, %v651
    %v735 = vadd.f32 %v734, %v653
    %v736 = vadd.f32 %v735, %v656
    %v737 = vadd.f32 %v736, %v658
    %v738 = vadd.f32 %v737, %v661
    %v739 = vadd.f32 %v738, %v663
    %v740 = vadd.f32 %v739, %v666
    %v741 = vadd.f32 %v740, %v668
    %v742 = vadd.f32 %v741, %v671
    %v743 = vadd.f32 %v742, %v673
    %v744 = vadd.f32 %v743, %v676
    %v745 = vadd.f32 %v744, %v678
    %v746 = vadd.f32 %v745, %v681
    %v747 = vadd.f32 %v746, %v683
    %v748 = vrot.slane %v747, 4
    %v749 = vadd.f32 %v747, %v748
    %v750 = vrot.slane %v749, 2
    %v751 = vadd.f32 %v749, %v750
    %v752 = vrot.slane %v751, 1
    %v753 = vadd.f32 %v751, %v752
    %v754 = vrcp.pop 512.0
    %v755 = vmul.f32 512.0, %v754
    %v756 = vsub.f32 1.0, %v755
    %v757 = vmul.f32 %v754, %v756
    %v758 = vadd.f32 %v754, %v757
    %vm759 = vweird.f32 %v754
    %v760 = vsel %vm759, %v754, %v758
    %v761 = vmul.f32 %v753, %v760
    %v762 = vmul.f32 %v526, %v526
    %v763 = vmul.f32 %v528, %v528
    %v764 = vmul.f32 %v531, %v531
    %v765 = vmul.f32 %v533, %v533
    %v766 = vmul.f32 %v536, %v536
    %v767 = vmul.f32 %v538, %v538
    %v768 = vmul.f32 %v541, %v541
    %v769 = vmul.f32 %v543, %v543
    %v770 = vmul.f32 %v546, %v546
    %v771 = vmul.f32 %v548, %v548
    %v772 = vmul.f32 %v551, %v551
    %v773 = vmul.f32 %v553, %v553
    %v774 = vmul.f32 %v556, %v556
    %v775 = vmul.f32 %v558, %v558
    %v776 = vmul.f32 %v561, %v561
    %v777 = vmul.f32 %v563, %v563
    %v778 = vmul.f32 %v566, %v566
    %v779 = vmul.f32 %v568, %v568
    %v780 = vmul.f32 %v571, %v571
    %v781 = vmul.f32 %v573, %v573
    %v782 = vmul.f32 %v576, %v576
    %v783 = vmul.f32 %v578, %v578
    %v784 = vmul.f32 %v581, %v581
    %v785 = vmul.f32 %v583, %v583
    %v786 = vmul.f32 %v586, %v586
    %v787 = vmul.f32 %v588, %v588
    %v788 = vmul.f32 %v591, %v591
    %v789 = vmul.f32 %v593, %v593
    %v790 = vmul.f32 %v596, %v596
    %v791 = vmul.f32 %v598, %v598
    %v792 = vmul.f32 %v601, %v601
    %v793 = vmul.f32 %v603, %v603
    %v794 = vmul.f32 %v606, %v606
    %v795 = vmul.f32 %v608, %v608
    %v796 = vmul.f32 %v611, %v611
    %v797 = vmul.f32 %v613, %v613
    %v798 = vmul.f32 %v616, %v616
    %v799 = vmul.f32 %v618, %v618
    %v800 = vmul.f32 %v621, %v621
    %v801 = vmul.f32 %v623, %v623
    %v802 = vmul.f32 %v626, %v626
    %v803 = vmul.f32 %v628, %v628
    %v804 = vmul.f32 %v631, %v631
    %v805 = vmul.f32 %v633, %v633
    %v806 = vmul.f32 %v636, %v636
    %v807 = vmul.f32 %v638, %v638
    %v808 = vmul.f32 %v641, %v641
    %v809 = vmul.f32 %v643, %v643
    %v810 = vmul.f32 %v646, %v646
    %v811 = vmul.f32 %v648, %v648
    %v812 = vmul.f32 %v651, %v651
    %v813 = vmul.f32 %v653, %v653
    %v814 = vmul.f32 %v656, %v656
    %v815 = vmul.f32 %v658, %v658
    %v816 = vmul.f32 %v661, %v661
    %v817 = vmul.f32 %v663, %v663
    %v818 = vmul.f32 %v666, %v666
    %v819 = vmul.f32 %v668, %v668
    %v820 = vmul.f32 %v671, %v671
    %v821 = vmul.f32 %v673, %v673
    %v822 = vmul.f32 %v676, %v676
    %v823 = vmul.f32 %v678, %v678
    %v824 = vmul.f32 %v681, %v681
    %v825 = vmul.f32 %v683, %v683
    %v826 = vadd.f32 %v762, %v763
    %v827 = vadd.f32 %v826, %v764
    %v828 = vadd.f32 %v827, %v765
    %v829 = vadd.f32 %v828, %v766
    %v830 = vadd.f32 %v829, %v767
    %v831 = vadd.f32 %v830, %v768
    %v832 = vadd.f32 %v831, %v769
    %v833 = vadd.f32 %v832, %v770
    %v834 = vadd.f32 %v833, %v771
    %v835 = vadd.f32 %v834, %v772
    %v836 = vadd.f32 %v835, %v773
    %v837 = vadd.f32 %v836, %v774
    %v838 = vadd.f32 %v837, %v775
    %v839 = vadd.f32 %v838, %v776
    %v840 = vadd.f32 %v839, %v777
    %v841 = vadd.f32 %v840, %v778
    %v842 = vadd.f32 %v841, %v779
    %v843 = vadd.f32 %v842, %v780
    %v844 = vadd.f32 %v843, %v781
    %v845 = vadd.f32 %v844, %v782
    %v846 = vadd.f32 %v845, %v783
    %v847 = vadd.f32 %v846, %v784
    %v848 = vadd.f32 %v847, %v785
    %v849 = vadd.f32 %v848, %v786
    %v850 = vadd.f32 %v849, %v787
    %v851 = vadd.f32 %v850, %v788
    %v852 = vadd.f32 %v851, %v789
    %v853 = vadd.f32 %v852, %v790
    %v854 = vadd.f32 %v853, %v791
    %v855 = vadd.f32 %v854, %v792
    %v856 = vadd.f32 %v855, %v793
    %v857 = vadd.f32 %v856, %v794
    %v858 = vadd.f32 %v857, %v795
    %v859 = vadd.f32 %v858, %v796
    %v860 = vadd.f32 %v859, %v797
    %v861 = vadd.f32 %v860, %v798
    %v862 = vadd.f32 %v861, %v799
    %v863 = vadd.f32 %v862, %v800
    %v864 = vadd.f32 %v863, %v801
    %v865 = vadd.f32 %v864, %v802
    %v866 = vadd.f32 %v865, %v803
    %v867 = vadd.f32 %v866, %v804
    %v868 = vadd.f32 %v867, %v805
    %v869 = vadd.f32 %v868, %v806
    %v870 = vadd.f32 %v869, %v807
    %v871 = vadd.f32 %v870, %v808
    %v872 = vadd.f32 %v871, %v809
    %v873 = vadd.f32 %v872, %v810
    %v874 = vadd.f32 %v873, %v811
    %v875 = vadd.f32 %v874, %v812
    %v876 = vadd.f32 %v875, %v813
    %v877 = vadd.f32 %v876, %v814
    %v878 = vadd.f32 %v877, %v815
    %v879 = vadd.f32 %v878, %v816
    %v880 = vadd.f32 %v879, %v817
    %v881 = vadd.f32 %v880, %v818
    %v882 = vadd.f32 %v881, %v819
    %v883 = vadd.f32 %v882, %v820
    %v884 = vadd.f32 %v883, %v821
    %v885 = vadd.f32 %v884, %v822
    %v886 = vadd.f32 %v885, %v823
    %v887 = vadd.f32 %v886, %v824
    %v888 = vadd.f32 %v887, %v825
    %v889 = vrot.slane %v888, 4
    %v890 = vadd.f32 %v888, %v889
    %v891 = vrot.slane %v890, 2
    %v892 = vadd.f32 %v890, %v891
    %v893 = vrot.slane %v892, 1
    %v894 = vadd.f32 %v892, %v893
    %v895 = vmul.f32 %v894, %v760
    %v896 = vmul.f32 %v761, %v761
    %v897 = vsub.f32 %v895, %v896
    %v898 = vmax.f32 %v897, 0.0
    %v899 = vsub.f32 %v526, %v761
    %v900 = vsub.f32 %v528, %v761
    %v901 = vsub.f32 %v531, %v761
    %v902 = vsub.f32 %v533, %v761
    %v903 = vsub.f32 %v536, %v761
    %v904 = vsub.f32 %v538, %v761
    %v905 = vsub.f32 %v541, %v761
    %v906 = vsub.f32 %v543, %v761
    %v907 = vsub.f32 %v546, %v761
    %v908 = vsub.f32 %v548, %v761
    %v909 = vsub.f32 %v551, %v761
    %v910 = vsub.f32 %v553, %v761
    %v911 = vsub.f32 %v556, %v761
    %v912 = vsub.f32 %v558, %v761
    %v913 = vsub.f32 %v561, %v761
    %v914 = vsub.f32 %v563, %v761
    %v915 = vsub.f32 %v566, %v761
    %v916 = vsub.f32 %v568, %v761
    %v917 = vsub.f32 %v571, %v761
    %v918 = vsub.f32 %v573, %v761
    %v919 = vsub.f32 %v576, %v761
    %v920 = vsub.f32 %v578, %v761
    %v921 = vsub.f32 %v581, %v761
    %v922 = vsub.f32 %v583, %v761
    %v923 = vsub.f32 %v586, %v761
    %v924 = vsub.f32 %v588, %v761
    %v925 = vsub.f32 %v591, %v761
    %v926 = vsub.f32 %v593, %v761
    %v927 = vsub.f32 %v596, %v761
    %v928 = vsub.f32 %v598, %v761
    %v929 = vsub.f32 %v601, %v761
    %v930 = vsub.f32 %v603, %v761
    %v931 = vsub.f32 %v606, %v761
    %v932 = vsub.f32 %v608, %v761
    %v933 = vsub.f32 %v611, %v761
    %v934 = vsub.f32 %v613, %v761
    %v935 = vsub.f32 %v616, %v761
    %v936 = vsub.f32 %v618, %v761
    %v937 = vsub.f32 %v621, %v761
    %v938 = vsub.f32 %v623, %v761
    %v939 = vsub.f32 %v626, %v761
    %v940 = vsub.f32 %v628, %v761
    %v941 = vsub.f32 %v631, %v761
    %v942 = vsub.f32 %v633, %v761
    %v943 = vsub.f32 %v636, %v761
    %v944 = vsub.f32 %v638, %v761
    %v945 = vsub.f32 %v641, %v761
    %v946 = vsub.f32 %v643, %v761
    %v947 = vsub.f32 %v646, %v761
    %v948 = vsub.f32 %v648, %v761
    %v949 = vsub.f32 %v651, %v761
    %v950 = vsub.f32 %v653, %v761
    %v951 = vsub.f32 %v656, %v761
    %v952 = vsub.f32 %v658, %v761
    %v953 = vsub.f32 %v661, %v761
    %v954 = vsub.f32 %v663, %v761
    %v955 = vsub.f32 %v666, %v761
    %v956 = vsub.f32 %v668, %v761
    %v957 = vsub.f32 %v671, %v761
    %v958 = vsub.f32 %v673, %v761
    %v959 = vsub.f32 %v676, %v761
    %v960 = vsub.f32 %v678, %v761
    %v961 = vsub.f32 %v681, %v761
    %v962 = vsub.f32 %v683, %v761
    %v963 = vld [vmem:[#allocation11 + $0x1] sm:$0x1]
    %v964 = vadd.f32 %v898, 1e-05
    %v965 = vrsqrt.pop %v964
    %v966 = vmul.f32 %v965, %v964
    %v967 = vmul.f32 %v966, %v965
    %v968 = vmul.f32 0.5, %v967
    %v969 = vsub.f32 1.5, %v968
    %v970 = vmul.f32 %v965, %v969
    %vm971 = vweird.f32 %v964
    %vm972 = vweird.f32 %v965
    %vm973 = vmor %vm971, %vm972
    %v974 = vsel %vm973, %v965, %v970
    %v975 = vmul.f32 %v963, %v974
    %v976 = vperm.slane %v975, 0
    %v977 = vmul.f32 %v899, %v976
    %v978 = vmul.f32 %v900, %v976
    %v979 = vmul.f32 %v901, %v976
    %v980 = vmul.f32 %v902, %v976
    %v981 = vmul.f32 %v903, %v976
    %v982 = vmul.f32 %v904, %v976
    %v983 = vmul.f32 %v905, %v976
    %v984 = vmul.f32 %v906, %v976
    %v985 = vmul.f32 %v907, %v976
    %v986 = vmul.f32 %v908, %v976
    %v987 = vmul.f32 %v909, %v976
    %v988 = vmul.f32 %v910, %v976
    %v989 = vmul.f32 %v911, %v976
    %v990 = vmul.f32 %v912, %v976
    %v991 = vmul.f32 %v913, %v976
    %v992 = vmul.f32 %v914, %v976
    %v993 = vmul.f32 %v915, %v976
    %v994 = vmul.f32 %v916, %v976
    %v995 = vmul.f32 %v917, %v976
    %v996 = vmul.f32 %v918, %v976
    %v997 = vmul.f32 %v919, %v976
    %v998 = vmul.f32 %v920, %v976
    %v999 = vmul.f32 %v921, %v976
    %v1000 = vmul.f32 %v922, %v976
    %v1001 = vmul.f32 %v923, %v976
    %v1002 = vmul.f32 %v924, %v976
    %v1003 = vmul.f32 %v925, %v976
    %v1004 = vmul.f32 %v926, %v976
    %v1005 = vmul.f32 %v927, %v976
    %v1006 = vmul.f32 %v928, %v976
    %v1007 = vmul.f32 %v929, %v976
    %v1008 = vmul.f32 %v930, %v976
    %v1009 = vmul.f32 %v931, %v976
    %v1010 = vmul.f32 %v932, %v976
    %v1011 = vmul.f32 %v933, %v976
    %v1012 = vmul.f32 %v934, %v976
    %v1013 = vmul.f32 %v935, %v976
    %v1014 = vmul.f32 %v936, %v976
    %v1015 = vmul.f32 %v937, %v976
    %v1016 = vmul.f32 %v938, %v976
    %v1017 = vmul.f32 %v939, %v976
    %v1018 = vmul.f32 %v940, %v976
    %v1019 = vmul.f32 %v941, %v976
    %v1020 = vmul.f32 %v942, %v976
    %v1021 = vmul.f32 %v943, %v976
    %v1022 = vmul.f32 %v944, %v976
    %v1023 = vmul.f32 %v945, %v976
    %v1024 = vmul.f32 %v946, %v976
    %v1025 = vmul.f32 %v947, %v976
    %v1026 = vmul.f32 %v948, %v976
    %v1027 = vmul.f32 %v949, %v976
    %v1028 = vmul.f32 %v950, %v976
    %v1029 = vmul.f32 %v951, %v976
    %v1030 = vmul.f32 %v952, %v976
    %v1031 = vmul.f32 %v953, %v976
    %v1032 = vmul.f32 %v954, %v976
    %v1033 = vmul.f32 %v955, %v976
    %v1034 = vmul.f32 %v956, %v976
    %v1035 = vmul.f32 %v957, %v976
    %v1036 = vmul.f32 %v958, %v976
    %v1037 = vmul.f32 %v959, %v976
    %v1038 = vmul.f32 %v960, %v976
    %v1039 = vmul.f32 %v961, %v976
    %v1040 = vmul.f32 %v962, %v976
    %v1041 = vld [vmem:[#allocation11 + $0x2] sm:$0x1]
    %v1042 = vperm.slane %v1041, 0
    %v1043 = vadd.f32 %v977, %v1042
    %v1044 = vadd.f32 %v978, %v1042
    %v1045 = vadd.f32 %v979, %v1042
    %v1046 = vadd.f32 %v980, %v1042
    %v1047 = vadd.f32 %v981, %v1042
    %v1048 = vadd.f32 %v982, %v1042
    %v1049 = vadd.f32 %v983, %v1042
    %v1050 = vadd.f32 %v984, %v1042
    %v1051 = vadd.f32 %v985, %v1042
    %v1052 = vadd.f32 %v986, %v1042
    %v1053 = vadd.f32 %v987, %v1042
    %v1054 = vadd.f32 %v988, %v1042
    %v1055 = vadd.f32 %v989, %v1042
    %v1056 = vadd.f32 %v990, %v1042
    %v1057 = vadd.f32 %v991, %v1042
    %v1058 = vadd.f32 %v992, %v1042
    %v1059 = vadd.f32 %v993, %v1042
    %v1060 = vadd.f32 %v994, %v1042
    %v1061 = vadd.f32 %v995, %v1042
    %v1062 = vadd.f32 %v996, %v1042
    %v1063 = vadd.f32 %v997, %v1042
    %v1064 = vadd.f32 %v998, %v1042
    %v1065 = vadd.f32 %v999, %v1042
    %v1066 = vadd.f32 %v1000, %v1042
    %v1067 = vadd.f32 %v1001, %v1042
    %v1068 = vadd.f32 %v1002, %v1042
    %v1069 = vadd.f32 %v1003, %v1042
    %v1070 = vadd.f32 %v1004, %v1042
    %v1071 = vadd.f32 %v1005, %v1042
    %v1072 = vadd.f32 %v1006, %v1042
    %v1073 = vadd.f32 %v1007, %v1042
    %v1074 = vadd.f32 %v1008, %v1042
    %v1075 = vadd.f32 %v1009, %v1042
    %v1076 = vadd.f32 %v1010, %v1042
    %v1077 = vadd.f32 %v1011, %v1042
    %v1078 = vadd.f32 %v1012, %v1042
    %v1079 = vadd.f32 %v1013, %v1042
    %v1080 = vadd.f32 %v1014, %v1042
    %v1081 = vadd.f32 %v1015, %v1042
    %v1082 = vadd.f32 %v1016, %v1042
    %v1083 = vadd.f32 %v1017, %v1042
    %v1084 = vadd.f32 %v1018, %v1042
    %v1085 = vadd.f32 %v1019, %v1042
    %v1086 = vadd.f32 %v1020, %v1042
    %v1087 = vadd.f32 %v1021, %v1042
    %v1088 = vadd.f32 %v1022, %v1042
    %v1089 = vadd.f32 %v1023, %v1042
    %v1090 = vadd.f32 %v1024, %v1042
    %v1091 = vadd.f32 %v1025, %v1042
    %v1092 = vadd.f32 %v1026, %v1042
    %v1093 = vadd.f32 %v1027, %v1042
    %v1094 = vadd.f32 %v1028, %v1042
    %v1095 = vadd.f32 %v1029, %v1042
    %v1096 = vadd.f32 %v1030, %v1042
    %v1097 = vadd.f32 %v1031, %v1042
    %v1098 = vadd.f32 %v1032, %v1042
    %v1099 = vadd.f32 %v1033, %v1042
    %v1100 = vadd.f32 %v1034, %v1042
    %v1101 = vadd.f32 %v1035, %v1042
    %v1102 = vadd.f32 %v1036, %v1042
    %v1103 = vadd.f32 %v1037, %v1042
    %v1104 = vadd.f32 %v1038, %v1042
    %v1105 = vadd.f32 %v1039, %v1042
    %v1106 = vadd.f32 %v1040, %v1042
    %vm1107 = vcmp.gt.f32.partialorder %v1043, 0.0
    %vm1108 = vcmp.gt.f32.partialorder %v1044, 0.0
    %vm1109 = vcmp.gt.f32.partialorder %v1045, 0.0
    %vm1110 = vcmp.gt.f32.partialorder %v1046, 0.0
    %vm1111 = vcmp.gt.f32.partialorder %v1047, 0.0
    %vm1112 = vcmp.gt.f32.partialorder %v1048, 0.0
    %vm1113 = vcmp.gt.f32.partialorder %v1049, 0.0
    %vm1114 = vcmp.gt.f32.partialorder %v1050, 0.0
    %vm1115 = vcmp.gt.f32.partialorder %v1051, 0.0
    %vm1116 = vcmp.gt.f32.partialorder %v1052, 0.0
    %vm1117 = vcmp.gt.f32.partialorder %v1053, 0.0
    %vm1118 = vcmp.gt.f32.partialorder %v1054, 0.0
    %vm1119 = vcmp.gt.f32.partialorder %v1055, 0.0
    %vm1120 = vcmp.gt.f32.partialorder %v1056, 0.0
    %vm1121 = vcmp.gt.f32.partialorder %v1057, 0.0
    %vm1122 = vcmp.gt.f32.partialorder %v1058, 0.0
    %vm1123 = vcmp.gt.f32.partialorder %v1059, 0.0
    %vm1124 = vcmp.gt.f32.partialorder %v1060, 0.0
    %vm1125 = vcmp.gt.f32.partialorder %v1061, 0.0
    %vm1126 = vcmp.gt.f32.partialorder %v1062, 0.0
    %vm1127 = vcmp.gt.f32.partialorder %v1063, 0.0
    %vm1128 = vcmp.gt.f32.partialorder %v1064, 0.0
    %vm1129 = vcmp.gt.f32.partialorder %v1065, 0.0
    %vm1130 = vcmp.gt.f32.partialorder %v1066, 0.0
    %vm1131 = vcmp.gt.f32.partialorder %v1067, 0.0
    %vm1132 = vcmp.gt.f32.partialorder %v1068, 0.0
    %vm1133 = vcmp.gt.f32.partialorder %v1069, 0.0
    %vm1134 = vcmp.gt.f32.partialorder %v1070, 0.0
    %vm1135 = vcmp.gt.f32.partialorder %v1071, 0.0
    %vm1136 = vcmp.gt.f32.partialorder %v1072, 0.0
    %vm1137 = vcmp.gt.f32.partialorder %v1073, 0.0
    %vm1138 = vcmp.gt.f32.partialorder %v1074, 0.0
    %vm1139 = vcmp.gt.f32.partialorder %v1075, 0.0
    %vm1140 = vcmp.gt.f32.partialorder %v1076, 0.0
    %vm1141 = vcmp.gt.f32.partialorder %v1077, 0.0
    %vm1142 = vcmp.gt.f32.partialorder %v1078, 0.0
    %vm1143 = vcmp.gt.f32.partialorder %v1079, 0.0
    %vm1144 = vcmp.gt.f32.partialorder %v1080, 0.0
    %vm1145 = vcmp.gt.f32.partialorder %v1081, 0.0
    %vm1146 = vcmp.gt.f32.partialorder %v1082, 0.0
    %vm1147 = vcmp.gt.f32.partialorder %v1083, 0.0
    %vm1148 = vcmp.gt.f32.partialorder %v1084, 0.0
    %vm1149 = vcmp.gt.f32.partialorder %v1085, 0.0
    %vm1150 = vcmp.gt.f32.partialorder %v1086, 0.0
    %vm1151 = vcmp.gt.f32.partialorder %v1087, 0.0
    %vm1152 = vcmp.gt.f32.partialorder %v1088, 0.0
    %vm1153 = vcmp.gt.f32.partialorder %v1089, 0.0
    %vm1154 = vcmp.gt.f32.partialorder %v1090, 0.0
    %vm1155 = vcmp.gt.f32.partialorder %v1091, 0.0
    %vm1156 = vcmp.gt.f32.partialorder %v1092, 0.0
    %vm1157 = vcmp.gt.f32.partialorder %v1093, 0.0
    %vm1158 = vcmp.gt.f32.partialorder %v1094, 0.0
    %vm1159 = vcmp.gt.f32.partialorder %v1095, 0.0
    %vm1160 = vcmp.gt.f32.partialorder %v1096, 0.0
    %vm1161 = vcmp.gt.f32.partialorder %v1097, 0.0
    %vm1162 = vcmp.gt.f32.partialorder %v1098, 0.0
    %vm1163 = vcmp.gt.f32.partialorder %v1099, 0.0
    %vm1164 = vcmp.gt.f32.partialorder %v1100, 0.0
    %vm1165 = vcmp.gt.f32.partialorder %v1101, 0.0
    %vm1166 = vcmp.gt.f32.partialorder %v1102, 0.0
    %vm1167 = vcmp.gt.f32.partialorder %v1103, 0.0
    %vm1168 = vcmp.gt.f32.partialorder %v1104, 0.0
    %vm1169 = vcmp.gt.f32.partialorder %v1105, 0.0
    %vm1170 = vcmp.gt.f32.partialorder %v1106, 0.0
    %v1171 = vmul.f32 %v1043, 0.1
    %v1172 = vmul.f32 %v1044, 0.1
    %v1173 = vmul.f32 %v1045, 0.1
    %v1174 = vmul.f32 %v1046, 0.1
    %v1175 = vmul.f32 %v1047, 0.1
    %v1176 = vmul.f32 %v1048, 0.1
    %v1177 = vmul.f32 %v1049, 0.1
    %v1178 = vmul.f32 %v1050, 0.1
    %v1179 = vmul.f32 %v1051, 0.1
    %v1180 = vmul.f32 %v1052, 0.1
    %v1181 = vmul.f32 %v1053, 0.1
    %v1182 = vmul.f32 %v1054, 0.1
    %v1183 = vmul.f32 %v1055, 0.1
    %v1184 = vmul.f32 %v1056, 0.1
    %v1185 = vmul.f32 %v1057, 0.1
    %v1186 = vmul.f32 %v1058, 0.1
    %v1187 = vmul.f32 %v1059, 0.1
    %v1188 = vmul.f32 %v1060, 0.1
    %v1189 = vmul.f32 %v1061, 0.1
    %v1190 = vmul.f32 %v1062, 0.1
    %v1191 = vmul.f32 %v1063, 0.1
    %v1192 = vmul.f32 %v1064, 0.1
    %v1193 = vmul.f32 %v1065, 0.1
    %v1194 = vmul.f32 %v1066, 0.1
    %v1195 = vmul.f32 %v1067, 0.1
    %v1196 = vmul.f32 %v1068, 0.1
    %v1197 = vmul.f32 %v1069, 0.1
    %v1198 = vmul.f32 %v1070, 0.1
    %v1199 = vmul.f32 %v1071, 0.1
    %v1200 = vmul.f32 %v1072, 0.1
    %v1201 = vmul.f32 %v1073, 0.1
    %v1202 = vmul.f32 %v1074, 0.1
    %v1203 = vmul.f32 %v1075, 0.1
    %v1204 = vmul.f32 %v1076, 0.1
    %v1205 = vmul.f32 %v1077, 0.1
    %v1206 = vmul.f32 %v1078, 0.1
    %v1207 = vmul.f32 %v1079, 0.1
    %v1208 = vmul.f32 %v1080, 0.1
    %v1209 = vmul.f32 %v1081, 0.1
    %v1210 = vmul.f32 %v1082, 0.1
    %v1211 = vmul.f32 %v1083, 0.1
    %v1212 = vmul.f32 %v1084, 0.1
    %v1213 = vmul.f32 %v1085, 0.1
    %v1214 = vmul.f32 %v1086, 0.1
    %v1215 = vmul.f32 %v1087, 0.1
    %v1216 = vmul.f32 %v1088, 0.1
    %v1217 = vmul.f32 %v1089, 0.1
    %v1218 = vmul.f32 %v1090, 0.1
    %v1219 = vmul.f32 %v1091, 0.1
    %v1220 = vmul.f32 %v1092, 0.1
    %v1221 = vmul.f32 %v1093, 0.1
    %v1222 = vmul.f32 %v1094, 0.1
    %v1223 = vmul.f32 %v1095, 0.1
    %v1224 = vmul.f32 %v1096, 0.1
    %v1225 = vmul.f32 %v1097, 0.1
    %v1226 = vmul.f32 %v1098, 0.1
    %v1227 = vmul.f32 %v1099, 0.1
    %v1228 = vmul.f32 %v1100, 0.1
    %v1229 = vmul.f32 %v1101, 0.1
    %v1230 = vmul.f32 %v1102, 0.1
    %v1231 = vmul.f32 %v1103, 0.1
    %v1232 = vmul.f32 %v1104, 0.1
    %v1233 = vmul.f32 %v1105, 0.1
    %v1234 = vmul.f32 %v1106, 0.1
    %v1235 = vsel %vm1107, %v1043, %v1171
    %v1236 = vsel %vm1108, %v1044, %v1172
    %v1237 = vsel %vm1109, %v1045, %v1173
    %v1238 = vsel %vm1110, %v1046, %v1174
    %v1239 = vsel %vm1111, %v1047, %v1175
    %v1240 = vsel %vm1112, %v1048, %v1176
    %v1241 = vsel %vm1113, %v1049, %v1177
    %v1242 = vsel %vm1114, %v1050, %v1178
    %v1243 = vsel %vm1115, %v1051, %v1179
    %v1244 = vsel %vm1116, %v1052, %v1180
    %v1245 = vsel %vm1117, %v1053, %v1181
    %v1246 = vsel %vm1118, %v1054, %v1182
    %v1247 = vsel %vm1119, %v1055, %v1183
    %v1248 = vsel %vm1120, %v1056, %v1184
    %v1249 = vsel %vm1121, %v1057, %v1185
    %v1250 = vsel %vm1122, %v1058, %v1186
    %v1251 = vsel %vm1123, %v1059, %v1187
    %v1252 = vsel %vm1124, %v1060, %v1188
    %v1253 = vsel %vm1125, %v1061, %v1189
    %v1254 = vsel %vm1126, %v1062, %v1190
    %v1255 = vsel %vm1127, %v1063, %v1191
    %v1256 = vsel %vm1128, %v1064, %v1192
    %v1257 = vsel %vm1129, %v1065, %v1193
    %v1258 = vsel %vm1130, %v1066, %v1194
    %v1259 = vsel %vm1131, %v1067, %v1195
    %v1260 = vsel %vm1132, %v1068, %v1196
    %v1261 = vsel %vm1133, %v1069, %v1197
    %v1262 = vsel %vm1134, %v1070, %v1198
    %v1263 = vsel %vm1135, %v1071, %v1199
    %v1264 = vsel %vm1136, %v1072, %v1200
    %v1265 = vsel %vm1137, %v1073, %v1201
    %v1266 = vsel %vm1138, %v1074, %v1202
    %v1267 = vsel %vm1139, %v1075, %v1203
    %v1268 = vsel %vm1140, %v1076, %v1204
    %v1269 = vsel %vm1141, %v1077, %v1205
    %v1270 = vsel %vm1142, %v1078, %v1206
    %v1271 = vsel %vm1143, %v1079, %v1207
    %v1272 = vsel %vm1144, %v1080, %v1208
    %v1273 = vsel %vm1145, %v1081, %v1209
    %v1274 = vsel %vm1146, %v1082, %v1210
    %v1275 = vsel %vm1147, %v1083, %v1211
    %v1276 = vsel %vm1148, %v1084, %v1212
    %v1277 = vsel %vm1149, %v1085, %v1213
    %v1278 = vsel %vm1150, %v1086, %v1214
    %v1279 = vsel %vm1151, %v1087, %v1215
    %v1280 = vsel %vm1152, %v1088, %v1216
    %v1281 = vsel %vm1153, %v1089, %v1217
    %v1282 = vsel %vm1154, %v1090, %v1218
    %v1283 = vsel %vm1155, %v1091, %v1219
    %v1284 = vsel %vm1156, %v1092, %v1220
    %v1285 = vsel %vm1157, %v1093, %v1221
    %v1286 = vsel %vm1158, %v1094, %v1222
    %v1287 = vsel %vm1159, %v1095, %v1223
    %v1288 = vsel %vm1160, %v1096, %v1224
    %v1289 = vsel %vm1161, %v1097, %v1225
    %v1290 = vsel %vm1162, %v1098, %v1226
    %v1291 = vsel %vm1163, %v1099, %v1227
    %v1292 = vsel %vm1164, %v1100, %v1228
    %v1293 = vsel %vm1165, %v1101, %v1229
    %v1294 = vsel %vm1166, %v1102, %v1230
    %v1295 = vsel %vm1167, %v1103, %v1231
    %v1296 = vsel %vm1168, %v1104, %v1232
    %v1297 = vsel %vm1169, %v1105, %v1233
    %v1298 = vsel %vm1170, %v1106, %v1234
    %1299 = vst [vmem:[%s289 + $0x1] sm:$0xff] %v1235
    %1300 = vst [vmem:[%s289 + $0x9] sm:$0xff] %v1236
    %1301 = vst [vmem:[%s289 + $0x19] sm:$0xff] %v1237
    %1302 = vst [vmem:[%s289 + $0x21] sm:$0xff] %v1238
    %1303 = vst [vmem:[%s289 + $0x31] sm:$0xff] %v1239
    %1304 = vst [vmem:[%s289 + $0x39] sm:$0xff] %v1240
    %1305 = vst [vmem:[%s289 + $0x49] sm:$0xff] %v1241
    %1306 = vst [vmem:[%s289 + $0x51] sm:$0xff] %v1242
    %1307 = vst [vmem:[%s289 + $0x61] sm:$0xff] %v1243
    %1308 = vst [vmem:[%s289 + $0x69] sm:$0xff] %v1244
    %1309 = vst [vmem:[%s289 + $0x79] sm:$0xff] %v1245
    %1310 = vst [vmem:[%s289 + $0x81] sm:$0xff] %v1246
    %1311 = vst [vmem:[%s289 + $0x91] sm:$0xff] %v1247
    %1312 = vst [vmem:[%s289 + $0x99] sm:$0xff] %v1248
    %1313 = vst [vmem:[%s289 + $0xa9] sm:$0xff] %v1249
    %1314 = vst [vmem:[%s289 + $0xb1] sm:$0xff] %v1250
    %1315 = vst [vmem:[%s289 + $0xc1] sm:$0xff] %v1251
    %1316 = vst [vmem:[%s289 + $0xc9] sm:$0xff] %v1252
    %1317 = vst [vmem:[%s289 + $0xd9] sm:$0xff] %v1253
    %1318 = vst [vmem:[%s289 + $0xe1] sm:$0xff] %v1254
    %1319 = vst [vmem:[%s289 + $0xf1] sm:$0xff] %v1255
    %1320 = vst [vmem:[%s289 + $0xf9] sm:$0xff] %v1256
    %1321 = vst [vmem:[%s289 + $0x109] sm:$0xff] %v1257
    %1322 = vst [vmem:[%s289 + $0x111] sm:$0xff] %v1258
    %1323 = vst [vmem:[%s289 + $0x121] sm:$0xff] %v1259
    %1324 = vst [vmem:[%s289 + $0x129] sm:$0xff] %v1260
    %1325 = vst [vmem:[%s289 + $0x139] sm:$0xff] %v1261
    %1326 = vst [vmem:[%s289 + $0x141] sm:$0xff] %v1262
    %1327 = vst [vmem:[%s289 + $0x151] sm:$0xff] %v1263
    %1328 = vst [vmem:[%s289 + $0x159] sm:$0xff] %v1264
    %1329 = vst [vmem:[%s289 + $0x169] sm:$0xff] %v1265
    %1330 = vst [vmem:[%s289 + $0x171] sm:$0xff] %v1266
    %1331 = vst [vmem:[%s289 + $0x1b1] sm:$0xff] %v1267
    %1332 = vst [vmem:[%s289 + $0x1b9] sm:$0xff] %v1268
    %1333 = vst [vmem:[%s289 + $0x1c9] sm:$0xff] %v1269
    %1334 = vst [vmem:[%s289 + $0x1d1] sm:$0xff] %v1270
    %1335 = vst [vmem:[%s289 + $0x1e1] sm:$0xff] %v1271
    %1336 = vst [vmem:[%s289 + $0x1e9] sm:$0xff] %v1272
    %1337 = vst [vmem:[%s289 + $0x1f9] sm:$0xff] %v1273
    %1338 = vst [vmem:[%s289 + $0x201] sm:$0xff] %v1274
    %1339 = vst [vmem:[%s289 + $0x211] sm:$0xff] %v1275
    %1340 = vst [vmem:[%s289 + $0x219] sm:$0xff] %v1276
    %1341 = vst [vmem:[%s289 + $0x229] sm:$0xff] %v1277
    %1342 = vst [vmem:[%s289 + $0x231] sm:$0xff] %v1278
    %1343 = vst [vmem:[%s289 + $0x241] sm:$0xff] %v1279
    %1344 = vst [vmem:[%s289 + $0x249] sm:$0xff] %v1280
    %1345 = vst [vmem:[%s289 + $0x259] sm:$0xff] %v1281
    %1346 = vst [vmem:[%s289 + $0x261] sm:$0xff] %v1282
    %1347 = vst [vmem:[%s289 + $0x271] sm:$0xff] %v1283
    %1348 = vst [vmem:[%s289 + $0x279] sm:$0xff] %v1284
    %1349 = vst [vmem:[%s289 + $0x289] sm:$0xff] %v1285
    %1350 = vst [vmem:[%s289 + $0x291] sm:$0xff] %v1286
    %1351 = vst [vmem:[%s289 + $0x2a1] sm:$0xff] %v1287
    %1352 = vst [vmem:[%s289 + $0x2a9] sm:$0xff] %v1288
    %1353 = vst [vmem:[%s289 + $0x2b9] sm:$0xff] %v1289
    %1354 = vst [vmem:[%s289 + $0x2c1] sm:$0xff] %v1290
    %1355 = vst [vmem:[%s289 + $0x2d1] sm:$0xff] %v1291
    %1356 = vst [vmem:[%s289 + $0x2d9] sm:$0xff] %v1292
    %1357 = vst [vmem:[%s289 + $0x2e9] sm:$0xff] %v1293
    %1358 = vst [vmem:[%s289 + $0x2f1] sm:$0xff] %v1294
    %1359 = vst [vmem:[%s289 + $0x301] sm:$0xff] %v1295
    %1360 = vst [vmem:[%s289 + $0x309] sm:$0xff] %v1296
    %1361 = vst [vmem:[%s289 + $0x319] sm:$0xff] %v1297
    %1362 = vst [vmem:[%s289 + $0x321] sm:$0xff] %v1298
    %v1363 = vld [vmem:[%s289 + $0x1] sm:$0xff]
    %v1364 = vld [vmem:[%s289 + $0x9] sm:$0xff]
    %v1365 = vld [vmem:[%s289 + $0x19] sm:$0xff]
    %v1366 = vld [vmem:[%s289 + $0x21] sm:$0xff]
    %v1367 = vld [vmem:[%s289 + $0x31] sm:$0xff]
    %v1368 = vld [vmem:[%s289 + $0x39] sm:$0xff]
    %v1369 = vld [vmem:[%s289 + $0x49] sm:$0xff]
    %v1370 = vld [vmem:[%s289 + $0x51] sm:$0xff]
    %v1371 = vld [vmem:[%s289 + $0x61] sm:$0xff]
    %v1372 = vld [vmem:[%s289 + $0x69] sm:$0xff]
    %v1373 = vld [vmem:[%s289 + $0x79] sm:$0xff]
    %v1374 = vld [vmem:[%s289 + $0x81] sm:$0xff]
    %v1375 = vld [vmem:[%s289 + $0x91] sm:$0xff]
    %v1376 = vld [vmem:[%s289 + $0x99] sm:$0xff]
    %v1377 = vld [vmem:[%s289 + $0xa9] sm:$0xff]
    %v1378 = vld [vmem:[%s289 + $0xb1] sm:$0xff]
    %v1379 = vld [vmem:[%s289 + $0xc1] sm:$0xff]
    %v1380 = vld [vmem:[%s289 + $0xc9] sm:$0xff]
    %v1381 = vld [vmem:[%s289 + $0xd9] sm:$0xff]
    %v1382 = vld [vmem:[%s289 + $0xe1] sm:$0xff]
    %v1383 = vld [vmem:[%s289 + $0xf1] sm:$0xff]
    %v1384 = vld [vmem:[%s289 + $0xf9] sm:$0xff]
    %v1385 = vld [vmem:[%s289 + $0x109] sm:$0xff]
    %v1386 = vld [vmem:[%s289 + $0x111] sm:$0xff]
    %v1387 = vld [vmem:[%s289 + $0x121] sm:$0xff]
    %v1388 = vld [vmem:[%s289 + $0x129] sm:$0xff]
    %v1389 = vld [vmem:[%s289 + $0x139] sm:$0xff]
    %v1390 = vld [vmem:[%s289 + $0x141] sm:$0xff]
    %v1391 = vld [vmem:[%s289 + $0x151] sm:$0xff]
    %v1392 = vld [vmem:[%s289 + $0x159] sm:$0xff]
    %v1393 = vld [vmem:[%s289 + $0x169] sm:$0xff]
    %v1394 = vld [vmem:[%s289 + $0x171] sm:$0xff]
    %v1395 = vld [vmem:[%s289 + $0x1b1] sm:$0xff]
    %v1396 = vld [vmem:[%s289 + $0x1b9] sm:$0xff]
    %v1397 = vld [vmem:[%s289 + $0x1c9] sm:$0xff]
    %v1398 = vld [vmem:[%s289 + $0x1d1] sm:$0xff]
    %v1399 = vld [vmem:[%s289 + $0x1e1] sm:$0xff]
    %v1400 = vld [vmem:[%s289 + $0x1e9] sm:$0xff]
    %v1401 = vld [vmem:[%s289 + $0x1f9] sm:$0xff]
    %v1402 = vld [vmem:[%s289 + $0x201] sm:$0xff]
    %v1403 = vld [vmem:[%s289 + $0x211] sm:$0xff]
    %v1404 = vld [vmem:[%s289 + $0x219] sm:$0xff]
    %v1405 = vld [vmem:[%s289 + $0x229] sm:$0xff]
    %v1406 = vld [vmem:[%s289 + $0x231] sm:$0xff]
    %v1407 = vld [vmem:[%s289 + $0x241] sm:$0xff]
    %v1408 = vld [vmem:[%s289 + $0x249] sm:$0xff]
    %v1409 = vld [vmem:[%s289 + $0x259] sm:$0xff]
    %v1410 = vld [vmem:[%s289 + $0x261] sm:$0xff]
    %v1411 = vld [vmem:[%s289 + $0x271] sm:$0xff]
    %v1412 = vld [vmem:[%s289 + $0x279] sm:$0xff]
    %v1413 = vld [vmem:[%s289 + $0x289] sm:$0xff]
    %v1414 = vld [vmem:[%s289 + $0x291] sm:$0xff]
    %v1415 = vld [vmem:[%s289 + $0x2a1] sm:$0xff]
    %v1416 = vld [vmem:[%s289 + $0x2a9] sm:$0xff]
    %v1417 = vld [vmem:[%s289 + $0x2b9] sm:$0xff]
    %v1418 = vld [vmem:[%s289 + $0x2c1] sm:$0xff]
    %v1419 = vld [vmem:[%s289 + $0x2d1] sm:$0xff]
    %v1420 = vld [vmem:[%s289 + $0x2d9] sm:$0xff]
    %v1421 = vld [vmem:[%s289 + $0x2e9] sm:$0xff]
    %v1422 = vld [vmem:[%s289 + $0x2f1] sm:$0xff]
    %v1423 = vld [vmem:[%s289 + $0x301] sm:$0xff]
    %v1424 = vld [vmem:[%s289 + $0x309] sm:$0xff]
    %v1425 = vld [vmem:[%s289 + $0x319] sm:$0xff]
    %v1426 = vld [vmem:[%s289 + $0x321] sm:$0xff]
    %v1427 = vpack.c.bf16 %v1364, %v1363
    %v1428 = vpack.c.bf16 %v1366, %v1365
    %v1429 = vpack.c.bf16 %v1368, %v1367
    %v1430 = vpack.c.bf16 %v1370, %v1369
    %v1431 = vpack.c.bf16 %v1372, %v1371
    %v1432 = vpack.c.bf16 %v1374, %v1373
    %v1433 = vpack.c.bf16 %v1376, %v1375
    %v1434 = vpack.c.bf16 %v1378, %v1377
    %v1435 = vpack.c.bf16 %v1380, %v1379
    %v1436 = vpack.c.bf16 %v1382, %v1381
    %v1437 = vpack.c.bf16 %v1384, %v1383
    %v1438 = vpack.c.bf16 %v1386, %v1385
    %v1439 = vpack.c.bf16 %v1388, %v1387
    %v1440 = vpack.c.bf16 %v1390, %v1389
    %v1441 = vpack.c.bf16 %v1392, %v1391
    %v1442 = vpack.c.bf16 %v1394, %v1393
    %v1443 = vpack.c.bf16 %v1396, %v1395
    %v1444 = vpack.c.bf16 %v1398, %v1397
    %v1445 = vpack.c.bf16 %v1400, %v1399
    %v1446 = vpack.c.bf16 %v1402, %v1401
    %v1447 = vpack.c.bf16 %v1404, %v1403
    %v1448 = vpack.c.bf16 %v1406, %v1405
    %v1449 = vpack.c.bf16 %v1408, %v1407
    %v1450 = vpack.c.bf16 %v1410, %v1409
    %v1451 = vpack.c.bf16 %v1412, %v1411
    %v1452 = vpack.c.bf16 %v1414, %v1413
    %v1453 = vpack.c.bf16 %v1416, %v1415
    %v1454 = vpack.c.bf16 %v1418, %v1417
    %v1455 = vpack.c.bf16 %v1420, %v1419
    %v1456 = vpack.c.bf16 %v1422, %v1421
    %v1457 = vpack.c.bf16 %v1424, %v1423
    %v1458 = vpack.c.bf16 %v1426, %v1425
    %v1459 = vld [vmem:[#allocation8] sm:$0xf]
    %v1460 = vld [vmem:[#allocation8 + $0x4] sm:$0xf]
    %v1461 = vld [vmem:[#allocation8 + $0x8] sm:$0xf]
    %v1462 = vld [vmem:[#allocation8 + $0xc] sm:$0xf]
    %v1463 = vld [vmem:[#allocation8 + $0x10] sm:$0xf]
    %v1464 = vld [vmem:[#allocation8 + $0x14] sm:$0xf]
    %v1465 = vld [vmem:[#allocation8 + $0x18] sm:$0xf]
    %v1466 = vld [vmem:[#allocation8 + $0x1c] sm:$0xf]
    %v1467 = vld [vmem:[#allocation8 + $0x20] sm:$0xf]
    %v1468 = vld [vmem:[#allocation8 + $0x24] sm:$0xf]
    %v1469 = vld [vmem:[#allocation8 + $0x28] sm:$0xf]
    %v1470 = vld [vmem:[#allocation8 + $0x2c] sm:$0xf]
    %v1471 = vld [vmem:[#allocation8 + $0x30] sm:$0xf]
    %v1472 = vld [vmem:[#allocation8 + $0x34] sm:$0xf]
    %v1473 = vld [vmem:[#allocation8 + $0x38] sm:$0xf]
    %v1474 = vld [vmem:[#allocation8 + $0x3c] sm:$0xf]
    %v1475 = vld [vmem:[%s5] sm:$0x1]
    %v1476 = vperm.slane %v1475, 0
    %v1493 = vunpack.c.l.b16 %v1459
    %v1494 = vunpack.c.l.b16 %v1460
    %v1495 = vunpack.c.l.b16 %v1461
    %v1496 = vunpack.c.l.b16 %v1462
    %v1497 = vunpack.c.l.b16 %v1463
    %v1498 = vunpack.c.l.b16 %v1464
    %v1499 = vunpack.c.l.b16 %v1465
    %v1500 = vunpack.c.l.b16 %v1466
    %v1501 = vunpack.c.l.b16 %v1467
    %v1502 = vunpack.c.l.b16 %v1468
    %v1503 = vunpack.c.l.b16 %v1469
    %v1504 = vunpack.c.l.b16 %v1470
    %v1505 = vunpack.c.l.b16 %v1471
    %v1506 = vunpack.c.l.b16 %v1472
    %v1507 = vunpack.c.l.b16 %v1473
    %v1508 = vunpack.c.l.b16 %v1474
    %v1509 = vpack.c.b16 %v1494, %v1493
    %v1510 = vpack.c.b16 %v1496, %v1495
    %v1511 = vpack.c.b16 %v1498, %v1497
    %v1512 = vpack.c.b16 %v1500, %v1499
    %v1513 = vpack.c.b16 %v1502, %v1501
    %v1514 = vpack.c.b16 %v1504, %v1503
    %v1515 = vpack.c.b16 %v1506, %v1505
    %v1516 = vpack.c.b16 %v1508, %v1507
    %1525 = vmatpush.bf16.msra.mxu0 %v1516
    %1526 = vmatpush.bf16.msra.mxu0 %v1515
    %1527 = vmatpush.bf16.msra.mxu0 %v1514
    %1528 = vmatpush.bf16.msra.mxu0 %v1513
    %1529 = vmatpush.bf16.msra.mxu0 %v1512
    %1530 = vmatpush.bf16.msra.mxu0 %v1511
    %1531 = vmatpush.bf16.msra.mxu0 %v1510
    %1532 = vmatpush.bf16.msra.mxu0 %v1509
    %1533 = vmatmul.bf16.gmra.mxu0 %v1427
    %v1534 = vpop.f32.mrf.mxu0
    %v1535 = vadd.f32 %v1476, %v1534
    %v1536 = vpop.f32.mrf.mxu0
    %v1537 = vadd.f32 %v1476, %v1536
    %1538 = vmatmul.bf16.gmra.mxu0 %v1428
    %v1539 = vpop.f32.mrf.mxu0
    %v1540 = vadd.f32 %v1476, %v1539
    %v1541 = vpop.f32.mrf.mxu0
    %v1542 = vadd.f32 %v1476, %v1541
    %1543 = vmatmul.bf16.gmra.mxu0 %v1429
    %v1544 = vpop.f32.mrf.mxu0
    %v1545 = vadd.f32 %v1476, %v1544
    %v1546 = vpop.f32.mrf.mxu0
    %v1547 = vadd.f32 %v1476, %v1546
    %1548 = vmatmul.bf16.gmra.mxu0 %v1430
    %v1549 = vpop.f32.mrf.mxu0
    %v1550 = vadd.f32 %v1476, %v1549
    %v1551 = vpop.f32.mrf.mxu0
    %v1552 = vadd.f32 %v1476, %v1551
    %1553 = vmatmul.bf16.gmra.mxu0 %v1431
    %v1554 = vpop.f32.mrf.mxu0
    %v1555 = vadd.f32 %v1476, %v1554
    %v1556 = vpop.f32.mrf.mxu0
    %v1557 = vadd.f32 %v1476, %v1556
    %1558 = vmatmul.bf16.gmra.mxu0 %v1432
    %v1559 = vpop.f32.mrf.mxu0
    %v1560 = vadd.f32 %v1476, %v1559
    %v1561 = vpop.f32.mrf.mxu0
    %v1562 = vadd.f32 %v1476, %v1561
    %1563 = vmatmul.bf16.gmra.mxu0 %v1433
    %v1564 = vpop.f32.mrf.mxu0
    %v1565 = vadd.f32 %v1476, %v1564
    %v1566 = vpop.f32.mrf.mxu0
    %v1567 = vadd.f32 %v1476, %v1566
    %1568 = vmatmul.bf16.gmra.mxu0 %v1434
    %v1569 = vpop.f32.mrf.mxu0
    %v1570 = vadd.f32 %v1476, %v1569
    %v1571 = vpop.f32.mrf.mxu0
    %v1572 = vadd.f32 %v1476, %v1571
    %1573 = vmatmul.bf16.gmra.mxu0 %v1435
    %v1574 = vpop.f32.mrf.mxu0
    %v1575 = vadd.f32 %v1476, %v1574
    %v1576 = vpop.f32.mrf.mxu0
    %v1577 = vadd.f32 %v1476, %v1576
    %1578 = vmatmul.bf16.gmra.mxu0 %v1436
    %v1579 = vpop.f32.mrf.mxu0
    %v1580 = vadd.f32 %v1476, %v1579
    %v1581 = vpop.f32.mrf.mxu0
    %v1582 = vadd.f32 %v1476, %v1581
    %1583 = vmatmul.bf16.gmra.mxu0 %v1437
    %v1584 = vpop.f32.mrf.mxu0
    %v1585 = vadd.f32 %v1476, %v1584
    %v1586 = vpop.f32.mrf.mxu0
    %v1587 = vadd.f32 %v1476, %v1586
    %1588 = vmatmul.bf16.gmra.mxu0 %v1438
    %v1589 = vpop.f32.mrf.mxu0
    %v1590 = vadd.f32 %v1476, %v1589
    %v1591 = vpop.f32.mrf.mxu0
    %v1592 = vadd.f32 %v1476, %v1591
    %1593 = vmatmul.bf16.gmra.mxu0 %v1439
    %v1594 = vpop.f32.mrf.mxu0
    %v1595 = vadd.f32 %v1476, %v1594
    %v1596 = vpop.f32.mrf.mxu0
    %v1597 = vadd.f32 %v1476, %v1596
    %1598 = vmatmul.bf16.gmra.mxu0 %v1440
    %v1599 = vpop.f32.mrf.mxu0
    %v1600 = vadd.f32 %v1476, %v1599
    %v1601 = vpop.f32.mrf.mxu0
    %v1602 = vadd.f32 %v1476, %v1601
    %1603 = vmatmul.bf16.gmra.mxu0 %v1441
    %v1604 = vpop.f32.mrf.mxu0
    %v1605 = vadd.f32 %v1476, %v1604
    %v1606 = vpop.f32.mrf.mxu0
    %v1607 = vadd.f32 %v1476, %v1606
    %1608 = vmatmul.bf16.gmra.mxu0 %v1442
    %v1609 = vpop.f32.mrf.mxu0
    %v1610 = vadd.f32 %v1476, %v1609
    %v1611 = vpop.f32.mrf.mxu0
    %v1612 = vadd.f32 %v1476, %v1611
    %1613 = vmatmul.bf16.gmra.mxu0 %v1443
    %v1614 = vpop.f32.mrf.mxu0
    %v1615 = vadd.f32 %v1476, %v1614
    %v1616 = vpop.f32.mrf.mxu0
    %v1617 = vadd.f32 %v1476, %v1616
    %1618 = vmatmul.bf16.gmra.mxu0 %v1444
    %v1619 = vpop.f32.mrf.mxu0
    %v1620 = vadd.f32 %v1476, %v1619
    %v1621 = vpop.f32.mrf.mxu0
    %v1622 = vadd.f32 %v1476, %v1621
    %1623 = vmatmul.bf16.gmra.mxu0 %v1445
    %v1624 = vpop.f32.mrf.mxu0
    %v1625 = vadd.f32 %v1476, %v1624
    %v1626 = vpop.f32.mrf.mxu0
    %v1627 = vadd.f32 %v1476, %v1626
    %1628 = vmatmul.bf16.gmra.mxu0 %v1446
    %v1629 = vpop.f32.mrf.mxu0
    %v1630 = vadd.f32 %v1476, %v1629
    %v1631 = vpop.f32.mrf.mxu0
    %v1632 = vadd.f32 %v1476, %v1631
    %1633 = vmatmul.bf16.gmra.mxu0 %v1447
    %v1634 = vpop.f32.mrf.mxu0
    %v1635 = vadd.f32 %v1476, %v1634
    %v1636 = vpop.f32.mrf.mxu0
    %v1637 = vadd.f32 %v1476, %v1636
    %1638 = vmatmul.bf16.gmra.mxu0 %v1448
    %v1639 = vpop.f32.mrf.mxu0
    %v1640 = vadd.f32 %v1476, %v1639
    %v1641 = vpop.f32.mrf.mxu0
    %v1642 = vadd.f32 %v1476, %v1641
    %1643 = vmatmul.bf16.gmra.mxu0 %v1449
    %v1644 = vpop.f32.mrf.mxu0
    %v1645 = vadd.f32 %v1476, %v1644
    %v1646 = vpop.f32.mrf.mxu0
    %v1647 = vadd.f32 %v1476, %v1646
    %1648 = vmatmul.bf16.gmra.mxu0 %v1450
    %v1649 = vpop.f32.mrf.mxu0
    %v1650 = vadd.f32 %v1476, %v1649
    %v1651 = vpop.f32.mrf.mxu0
    %v1652 = vadd.f32 %v1476, %v1651
    %1653 = vmatmul.bf16.gmra.mxu0 %v1451
    %v1654 = vpop.f32.mrf.mxu0
    %v1655 = vadd.f32 %v1476, %v1654
    %v1656 = vpop.f32.mrf.mxu0
    %v1657 = vadd.f32 %v1476, %v1656
    %1658 = vmatmul.bf16.gmra.mxu0 %v1452
    %v1659 = vpop.f32.mrf.mxu0
    %v1660 = vadd.f32 %v1476, %v1659
    %v1661 = vpop.f32.mrf.mxu0
    %v1662 = vadd.f32 %v1476, %v1661
    %1663 = vmatmul.bf16.gmra.mxu0 %v1453
    %v1664 = vpop.f32.mrf.mxu0
    %v1665 = vadd.f32 %v1476, %v1664
    %v1666 = vpop.f32.mrf.mxu0
    %v1667 = vadd.f32 %v1476, %v1666
    %1668 = vmatmul.bf16.gmra.mxu0 %v1454
    %v1669 = vpop.f32.mrf.mxu0
    %v1670 = vadd.f32 %v1476, %v1669
    %v1671 = vpop.f32.mrf.mxu0
    %v1672 = vadd.f32 %v1476, %v1671
    %1673 = vmatmul.bf16.gmra.mxu0 %v1455
    %v1674 = vpop.f32.mrf.mxu0
    %v1675 = vadd.f32 %v1476, %v1674
    %v1676 = vpop.f32.mrf.mxu0
    %v1677 = vadd.f32 %v1476, %v1676
    %1678 = vmatmul.bf16.gmra.mxu0 %v1456
    %v1679 = vpop.f32.mrf.mxu0
    %v1680 = vadd.f32 %v1476, %v1679
    %v1681 = vpop.f32.mrf.mxu0
    %v1682 = vadd.f32 %v1476, %v1681
    %1683 = vmatmul.bf16.gmra.mxu0 %v1457
    %v1684 = vpop.f32.mrf.mxu0
    %v1685 = vadd.f32 %v1476, %v1684
    %v1686 = vpop.f32.mrf.mxu0
    %v1687 = vadd.f32 %v1476, %v1686
    %1688 = vmatmul.bf16.gmra.mxu0 %v1458
    %v1689 = vpop.f32.mrf.mxu0
    %v1690 = vadd.f32 %v1476, %v1689
    %v1691 = vpop.f32.mrf.mxu0
    %v1692 = vadd.f32 %v1476, %v1691
    %1693 = vdwg.mxu0
    %v1694 = vadd.f32 %v1535, %v1537
    %v1695 = vadd.f32 %v1694, %v1540
    %v1696 = vadd.f32 %v1695, %v1542
    %v1697 = vadd.f32 %v1696, %v1545
    %v1698 = vadd.f32 %v1697, %v1547
    %v1699 = vadd.f32 %v1698, %v1550
    %v1700 = vadd.f32 %v1699, %v1552
    %v1701 = vadd.f32 %v1700, %v1555
    %v1702 = vadd.f32 %v1701, %v1557
    %v1703 = vadd.f32 %v1702, %v1560
    %v1704 = vadd.f32 %v1703, %v1562
    %v1705 = vadd.f32 %v1704, %v1565
    %v1706 = vadd.f32 %v1705, %v1567
    %v1707 = vadd.f32 %v1706, %v1570
    %v1708 = vadd.f32 %v1707, %v1572
    %v1709 = vadd.f32 %v1708, %v1575
    %v1710 = vadd.f32 %v1709, %v1577
    %v1711 = vadd.f32 %v1710, %v1580
    %v1712 = vadd.f32 %v1711, %v1582
    %v1713 = vadd.f32 %v1712, %v1585
    %v1714 = vadd.f32 %v1713, %v1587
    %v1715 = vadd.f32 %v1714, %v1590
    %v1716 = vadd.f32 %v1715, %v1592
    %v1717 = vadd.f32 %v1716, %v1595
    %v1718 = vadd.f32 %v1717, %v1597
    %v1719 = vadd.f32 %v1718, %v1600
    %v1720 = vadd.f32 %v1719, %v1602
    %v1721 = vadd.f32 %v1720, %v1605
    %v1722 = vadd.f32 %v1721, %v1607
    %v1723 = vadd.f32 %v1722, %v1610
    %v1724 = vadd.f32 %v1723, %v1612
    %v1725 = vadd.f32 %v1724, %v1615
    %v1726 = vadd.f32 %v1725, %v1617
    %v1727 = vadd.f32 %v1726, %v1620
    %v1728 = vadd.f32 %v1727, %v1622
    %v1729 = vadd.f32 %v1728, %v1625
    %v1730 = vadd.f32 %v1729, %v1627
    %v1731 = vadd.f32 %v1730, %v1630
    %v1732 = vadd.f32 %v1731, %v1632
    %v1733 = vadd.f32 %v1732, %v1635
    %v1734 = vadd.f32 %v1733, %v1637
    %v1735 = vadd.f32 %v1734, %v1640
    %v1736 = vadd.f32 %v1735, %v1642
    %v1737 = vadd.f32 %v1736, %v1645
    %v1738 = vadd.f32 %v1737, %v1647
    %v1739 = vadd.f32 %v1738, %v1650
    %v1740 = vadd.f32 %v1739, %v1652
    %v1741 = vadd.f32 %v1740, %v1655
    %v1742 = vadd.f32 %v1741, %v1657
    %v1743 = vadd.f32 %v1742, %v1660
    %v1744 = vadd.f32 %v1743, %v1662
    %v1745 = vadd.f32 %v1744, %v1665
    %v1746 = vadd.f32 %v1745, %v1667
    %v1747 = vadd.f32 %v1746, %v1670
    %v1748 = vadd.f32 %v1747, %v1672
    %v1749 = vadd.f32 %v1748, %v1675
    %v1750 = vadd.f32 %v1749, %v1677
    %v1751 = vadd.f32 %v1750, %v1680
    %v1752 = vadd.f32 %v1751, %v1682
    %v1753 = vadd.f32 %v1752, %v1685
    %v1754 = vadd.f32 %v1753, %v1687
    %v1755 = vadd.f32 %v1754, %v1690
    %v1756 = vadd.f32 %v1755, %v1692
    %v1757 = vrot.slane %v1756, 4
    %v1758 = vadd.f32 %v1756, %v1757
    %v1759 = vrot.slane %v1758, 2
    %v1760 = vadd.f32 %v1758, %v1759
    %v1761 = vrot.slane %v1760, 1
    %v1762 = vadd.f32 %v1760, %v1761
    %v1763 = vmul.f32 %v1762, %v760
    %v1764 = vmul.f32 %v1535, %v1535
    %v1765 = vmul.f32 %v1537, %v1537
    %v1766 = vmul.f32 %v1540, %v1540
    %v1767 = vmul.f32 %v1542, %v1542
    %v1768 = vmul.f32 %v1545, %v1545
    %v1769 = vmul.f32 %v1547, %v1547
    %v1770 = vmul.f32 %v1550, %v1550
    %v1771 = vmul.f32 %v1552, %v1552
    %v1772 = vmul.f32 %v1555, %v1555
    %v1773 = vmul.f32 %v1557, %v1557
    %v1774 = vmul.f32 %v1560, %v1560
    %v1775 = vmul.f32 %v1562, %v1562
    %v1776 = vmul.f32 %v1565, %v1565
    %v1777 = vmul.f32 %v1567, %v1567
    %v1778 = vmul.f32 %v1570, %v1570
    %v1779 = vmul.f32 %v1572, %v1572
    %v1780 = vmul.f32 %v1575, %v1575
    %v1781 = vmul.f32 %v1577, %v1577
    %v1782 = vmul.f32 %v1580, %v1580
    %v1783 = vmul.f32 %v1582, %v1582
    %v1784 = vmul.f32 %v1585, %v1585
    %v1785 = vmul.f32 %v1587, %v1587
    %v1786 = vmul.f32 %v1590, %v1590
    %v1787 = vmul.f32 %v1592, %v1592
    %v1788 = vmul.f32 %v1595, %v1595
    %v1789 = vmul.f32 %v1597, %v1597
    %v1790 = vmul.f32 %v1600, %v1600
    %v1791 = vmul.f32 %v1602, %v1602
    %v1792 = vmul.f32 %v1605, %v1605
    %v1793 = vmul.f32 %v1607, %v1607
    %v1794 = vmul.f32 %v1610, %v1610
    %v1795 = vmul.f32 %v1612, %v1612
    %v1796 = vmul.f32 %v1615, %v1615
    %v1797 = vmul.f32 %v1617, %v1617
    %v1798 = vmul.f32 %v1620, %v1620
    %v1799 = vmul.f32 %v1622, %v1622
    %v1800 = vmul.f32 %v1625, %v1625
    %v1801 = vmul.f32 %v1627, %v1627
    %v1802 = vmul.f32 %v1630, %v1630
    %v1803 = vmul.f32 %v1632, %v1632
    %v1804 = vmul.f32 %v1635, %v1635
    %v1805 = vmul.f32 %v1637, %v1637
    %v1806 = vmul.f32 %v1640, %v1640
    %v1807 = vmul.f32 %v1642, %v1642
    %v1808 = vmul.f32 %v1645, %v1645
    %v1809 = vmul.f32 %v1647, %v1647
    %v1810 = vmul.f32 %v1650, %v1650
    %v1811 = vmul.f32 %v1652, %v1652
    %v1812 = vmul.f32 %v1655, %v1655
    %v1813 = vmul.f32 %v1657, %v1657
    %v1814 = vmul.f32 %v1660, %v1660
    %v1815 = vmul.f32 %v1662, %v1662
    %v1816 = vmul.f32 %v1665, %v1665
    %v1817 = vmul.f32 %v1667, %v1667
    %v1818 = vmul.f32 %v1670, %v1670
    %v1819 = vmul.f32 %v1672, %v1672
    %v1820 = vmul.f32 %v1675, %v1675
    %v1821 = vmul.f32 %v1677, %v1677
    %v1822 = vmul.f32 %v1680, %v1680
    %v1823 = vmul.f32 %v1682, %v1682
    %v1824 = vmul.f32 %v1685, %v1685
    %v1825 = vmul.f32 %v1687, %v1687
    %v1826 = vmul.f32 %v1690, %v1690
    %v1827 = vmul.f32 %v1692, %v1692
    %v1828 = vadd.f32 %v1764, %v1765
    %v1829 = vadd.f32 %v1828, %v1766
    %v1830 = vadd.f32 %v1829, %v1767
    %v1831 = vadd.f32 %v1830, %v1768
    %v1832 = vadd.f32 %v1831, %v1769
    %v1833 = vadd.f32 %v1832, %v1770
    %v1834 = vadd.f32 %v1833, %v1771
    %v1835 = vadd.f32 %v1834, %v1772
    %v1836 = vadd.f32 %v1835, %v1773
    %v1837 = vadd.f32 %v1836, %v1774
    %v1838 = vadd.f32 %v1837, %v1775
    %v1839 = vadd.f32 %v1838, %v1776
    %v1840 = vadd.f32 %v1839, %v1777
    %v1841 = vadd.f32 %v1840, %v1778
    %v1842 = vadd.f32 %v1841, %v1779
    %v1843 = vadd.f32 %v1842, %v1780
    %v1844 = vadd.f32 %v1843, %v1781
    %v1845 = vadd.f32 %v1844, %v1782
    %v1846 = vadd.f32 %v1845, %v1783
    %v1847 = vadd.f32 %v1846, %v1784
    %v1848 = vadd.f32 %v1847, %v1785
    %v1849 = vadd.f32 %v1848, %v1786
    %v1850 = vadd.f32 %v1849, %v1787
    %v1851 = vadd.f32 %v1850, %v1788
    %v1852 = vadd.f32 %v1851, %v1789
    %v1853 = vadd.f32 %v1852, %v1790
    %v1854 = vadd.f32 %v1853, %v1791
    %v1855 = vadd.f32 %v1854, %v1792
    %v1856 = vadd.f32 %v1855, %v1793
    %v1857 = vadd.f32 %v1856, %v1794
    %v1858 = vadd.f32 %v1857, %v1795
    %v1859 = vadd.f32 %v1858, %v1796
    %v1860 = vadd.f32 %v1859, %v1797
    %v1861 = vadd.f32 %v1860, %v1798
    %v1862 = vadd.f32 %v1861, %v1799
    %v1863 = vadd.f32 %v1862, %v1800
    %v1864 = vadd.f32 %v1863, %v1801
    %v1865 = vadd.f32 %v1864, %v1802
    %v1866 = vadd.f32 %v1865, %v1803
    %v1867 = vadd.f32 %v1866, %v1804
    %v1868 = vadd.f32 %v1867, %v1805
    %v1869 = vadd.f32 %v1868, %v1806
    %v1870 = vadd.f32 %v1869, %v1807
    %v1871 = vadd.f32 %v1870, %v1808
    %v1872 = vadd.f32 %v1871, %v1809
    %v1873 = vadd.f32 %v1872, %v1810
    %v1874 = vadd.f32 %v1873, %v1811
    %v1875 = vadd.f32 %v1874, %v1812
    %v1876 = vadd.f32 %v1875, %v1813
    %v1877 = vadd.f32 %v1876, %v1814
    %v1878 = vadd.f32 %v1877, %v1815
    %v1879 = vadd.f32 %v1878, %v1816
    %v1880 = vadd.f32 %v1879, %v1817
    %v1881 = vadd.f32 %v1880, %v1818
    %v1882 = vadd.f32 %v1881, %v1819
    %v1883 = vadd.f32 %v1882, %v1820
    %v1884 = vadd.f32 %v1883, %v1821
    %v1885 = vadd.f32 %v1884, %v1822
    %v1886 = vadd.f32 %v1885, %v1823
    %v1887 = vadd.f32 %v1886, %v1824
    %v1888 = vadd.f32 %v1887, %v1825
    %v1889 = vadd.f32 %v1888, %v1826
    %v1890 = vadd.f32 %v1889, %v1827
    %v1891 = vrot.slane %v1890, 4
    %v1892 = vadd.f32 %v1890, %v1891
    %v1893 = vrot.slane %v1892, 2
    %v1894 = vadd.f32 %v1892, %v1893
    %v1895 = vrot.slane %v1894, 1
    %v1896 = vadd.f32 %v1894, %v1895
    %v1897 = vmul.f32 %v1896, %v760
    %v1898 = vmul.f32 %v1763, %v1763
    %v1899 = vsub.f32 %v1897, %v1898
    %v1900 = vmax.f32 %v1899, 0.0
    %v1901 = vsub.f32 %v1535, %v1763
    %v1902 = vsub.f32 %v1537, %v1763
    %v1903 = vsub.f32 %v1540, %v1763
    %v1904 = vsub.f32 %v1542, %v1763
    %v1905 = vsub.f32 %v1545, %v1763
    %v1906 = vsub.f32 %v1547, %v1763
    %v1907 = vsub.f32 %v1550, %v1763
    %v1908 = vsub.f32 %v1552, %v1763
    %v1909 = vsub.f32 %v1555, %v1763
    %v1910 = vsub.f32 %v1557, %v1763
    %v1911 = vsub.f32 %v1560, %v1763
    %v1912 = vsub.f32 %v1562, %v1763
    %v1913 = vsub.f32 %v1565, %v1763
    %v1914 = vsub.f32 %v1567, %v1763
    %v1915 = vsub.f32 %v1570, %v1763
    %v1916 = vsub.f32 %v1572, %v1763
    %v1917 = vsub.f32 %v1575, %v1763
    %v1918 = vsub.f32 %v1577, %v1763
    %v1919 = vsub.f32 %v1580, %v1763
    %v1920 = vsub.f32 %v1582, %v1763
    %v1921 = vsub.f32 %v1585, %v1763
    %v1922 = vsub.f32 %v1587, %v1763
    %v1923 = vsub.f32 %v1590, %v1763
    %v1924 = vsub.f32 %v1592, %v1763
    %v1925 = vsub.f32 %v1595, %v1763
    %v1926 = vsub.f32 %v1597, %v1763
    %v1927 = vsub.f32 %v1600, %v1763
    %v1928 = vsub.f32 %v1602, %v1763
    %v1929 = vsub.f32 %v1605, %v1763
    %v1930 = vsub.f32 %v1607, %v1763
    %v1931 = vsub.f32 %v1610, %v1763
    %v1932 = vsub.f32 %v1612, %v1763
    %v1933 = vsub.f32 %v1615, %v1763
    %v1934 = vsub.f32 %v1617, %v1763
    %v1935 = vsub.f32 %v1620, %v1763
    %v1936 = vsub.f32 %v1622, %v1763
    %v1937 = vsub.f32 %v1625, %v1763
    %v1938 = vsub.f32 %v1627, %v1763
    %v1939 = vsub.f32 %v1630, %v1763
    %v1940 = vsub.f32 %v1632, %v1763
    %v1941 = vsub.f32 %v1635, %v1763
    %v1942 = vsub.f32 %v1637, %v1763
    %v1943 = vsub.f32 %v1640, %v1763
    %v1944 = vsub.f32 %v1642, %v1763
    %v1945 = vsub.f32 %v1645, %v1763
    %v1946 = vsub.f32 %v1647, %v1763
    %v1947 = vsub.f32 %v1650, %v1763
    %v1948 = vsub.f32 %v1652, %v1763
    %v1949 = vsub.f32 %v1655, %v1763
    %v1950 = vsub.f32 %v1657, %v1763
    %v1951 = vsub.f32 %v1660, %v1763
    %v1952 = vsub.f32 %v1662, %v1763
    %v1953 = vsub.f32 %v1665, %v1763
    %v1954 = vsub.f32 %v1667, %v1763
    %v1955 = vsub.f32 %v1670, %v1763
    %v1956 = vsub.f32 %v1672, %v1763
    %v1957 = vsub.f32 %v1675, %v1763
    %v1958 = vsub.f32 %v1677, %v1763
    %v1959 = vsub.f32 %v1680, %v1763
    %v1960 = vsub.f32 %v1682, %v1763
    %v1961 = vsub.f32 %v1685, %v1763
    %v1962 = vsub.f32 %v1687, %v1763
    %v1963 = vsub.f32 %v1690, %v1763
    %v1964 = vsub.f32 %v1692, %v1763
    %v1965 = vld [vmem:[%s5 + $0x1] sm:$0x1]
    %v1966 = vadd.f32 %v1900, 1e-05
    %v1967 = vrsqrt.pop %v1966
    %v1968 = vmul.f32 %v1967, %v1966
    %v1969 = vmul.f32 %v1968, %v1967
    %v1970 = vmul.f32 0.5, %v1969
    %v1971 = vsub.f32 1.5, %v1970
    %v1972 = vmul.f32 %v1967, %v1971
    %vm1973 = vweird.f32 %v1966
    %vm1974 = vweird.f32 %v1967
    %vm1975 = vmor %vm1973, %vm1974
    %v1976 = vsel %vm1975, %v1967, %v1972
    %v1977 = vmul.f32 %v1965, %v1976
    %v1978 = vperm.slane %v1977, 0
    %v1979 = vmul.f32 %v1901, %v1978
    %v1980 = vmul.f32 %v1902, %v1978
    %v1981 = vmul.f32 %v1903, %v1978
    %v1982 = vmul.f32 %v1904, %v1978
    %v1983 = vmul.f32 %v1905, %v1978
    %v1984 = vmul.f32 %v1906, %v1978
    %v1985 = vmul.f32 %v1907, %v1978
    %v1986 = vmul.f32 %v1908, %v1978
    %v1987 = vmul.f32 %v1909, %v1978
    %v1988 = vmul.f32 %v1910, %v1978
    %v1989 = vmul.f32 %v1911, %v1978
    %v1990 = vmul.f32 %v1912, %v1978
    %v1991 = vmul.f32 %v1913, %v1978
    %v1992 = vmul.f32 %v1914, %v1978
    %v1993 = vmul.f32 %v1915, %v1978
    %v1994 = vmul.f32 %v1916, %v1978
    %v1995 = vmul.f32 %v1917, %v1978
    %v1996 = vmul.f32 %v1918, %v1978
    %v1997 = vmul.f32 %v1919, %v1978
    %v1998 = vmul.f32 %v1920, %v1978
    %v1999 = vmul.f32 %v1921, %v1978
    %v2000 = vmul.f32 %v1922, %v1978
    %v2001 = vmul.f32 %v1923, %v1978
    %v2002 = vmul.f32 %v1924, %v1978
    %v2003 = vmul.f32 %v1925, %v1978
    %v2004 = vmul.f32 %v1926, %v1978
    %v2005 = vmul.f32 %v1927, %v1978
    %v2006 = vmul.f32 %v1928, %v1978
    %v2007 = vmul.f32 %v1929, %v1978
    %v2008 = vmul.f32 %v1930, %v1978
    %v2009 = vmul.f32 %v1931, %v1978
    %v2010 = vmul.f32 %v1932, %v1978
    %v2011 = vmul.f32 %v1933, %v1978
    %v2012 = vmul.f32 %v1934, %v1978
    %v2013 = vmul.f32 %v1935, %v1978
    %v2014 = vmul.f32 %v1936, %v1978
    %v2015 = vmul.f32 %v1937, %v1978
    %v2016 = vmul.f32 %v1938, %v1978
    %v2017 = vmul.f32 %v1939, %v1978
    %v2018 = vmul.f32 %v1940, %v1978
    %v2019 = vmul.f32 %v1941, %v1978
    %v2020 = vmul.f32 %v1942, %v1978
    %v2021 = vmul.f32 %v1943, %v1978
    %v2022 = vmul.f32 %v1944, %v1978
    %v2023 = vmul.f32 %v1945, %v1978
    %v2024 = vmul.f32 %v1946, %v1978
    %v2025 = vmul.f32 %v1947, %v1978
    %v2026 = vmul.f32 %v1948, %v1978
    %v2027 = vmul.f32 %v1949, %v1978
    %v2028 = vmul.f32 %v1950, %v1978
    %v2029 = vmul.f32 %v1951, %v1978
    %v2030 = vmul.f32 %v1952, %v1978
    %v2031 = vmul.f32 %v1953, %v1978
    %v2032 = vmul.f32 %v1954, %v1978
    %v2033 = vmul.f32 %v1955, %v1978
    %v2034 = vmul.f32 %v1956, %v1978
    %v2035 = vmul.f32 %v1957, %v1978
    %v2036 = vmul.f32 %v1958, %v1978
    %v2037 = vmul.f32 %v1959, %v1978
    %v2038 = vmul.f32 %v1960, %v1978
    %v2039 = vmul.f32 %v1961, %v1978
    %v2040 = vmul.f32 %v1962, %v1978
    %v2041 = vmul.f32 %v1963, %v1978
    %v2042 = vmul.f32 %v1964, %v1978
    %v2043 = vld [vmem:[%s5 + $0x2] sm:$0x1]
    %v2044 = vperm.slane %v2043, 0
    %v2045 = vadd.f32 %v1979, %v2044
    %v2046 = vadd.f32 %v1980, %v2044
    %v2047 = vadd.f32 %v1981, %v2044
    %v2048 = vadd.f32 %v1982, %v2044
    %v2049 = vadd.f32 %v1983, %v2044
    %v2050 = vadd.f32 %v1984, %v2044
    %v2051 = vadd.f32 %v1985, %v2044
    %v2052 = vadd.f32 %v1986, %v2044
    %v2053 = vadd.f32 %v1987, %v2044
    %v2054 = vadd.f32 %v1988, %v2044
    %v2055 = vadd.f32 %v1989, %v2044
    %v2056 = vadd.f32 %v1990, %v2044
    %v2057 = vadd.f32 %v1991, %v2044
    %v2058 = vadd.f32 %v1992, %v2044
    %v2059 = vadd.f32 %v1993, %v2044
    %v2060 = vadd.f32 %v1994, %v2044
    %v2061 = vadd.f32 %v1995, %v2044
    %v2062 = vadd.f32 %v1996, %v2044
    %v2063 = vadd.f32 %v1997, %v2044
    %v2064 = vadd.f32 %v1998, %v2044
    %v2065 = vadd.f32 %v1999, %v2044
    %v2066 = vadd.f32 %v2000, %v2044
    %v2067 = vadd.f32 %v2001, %v2044
    %v2068 = vadd.f32 %v2002, %v2044
    %v2069 = vadd.f32 %v2003, %v2044
    %v2070 = vadd.f32 %v2004, %v2044
    %v2071 = vadd.f32 %v2005, %v2044
    %v2072 = vadd.f32 %v2006, %v2044
    %v2073 = vadd.f32 %v2007, %v2044
    %v2074 = vadd.f32 %v2008, %v2044
    %v2075 = vadd.f32 %v2009, %v2044
    %v2076 = vadd.f32 %v2010, %v2044
    %v2077 = vadd.f32 %v2011, %v2044
    %v2078 = vadd.f32 %v2012, %v2044
    %v2079 = vadd.f32 %v2013, %v2044
    %v2080 = vadd.f32 %v2014, %v2044
    %v2081 = vadd.f32 %v2015, %v2044
    %v2082 = vadd.f32 %v2016, %v2044
    %v2083 = vadd.f32 %v2017, %v2044
    %v2084 = vadd.f32 %v2018, %v2044
    %v2085 = vadd.f32 %v2019, %v2044
    %v2086 = vadd.f32 %v2020, %v2044
    %v2087 = vadd.f32 %v2021, %v2044
    %v2088 = vadd.f32 %v2022, %v2044
    %v2089 = vadd.f32 %v2023, %v2044
    %v2090 = vadd.f32 %v2024, %v2044
    %v2091 = vadd.f32 %v2025, %v2044
    %v2092 = vadd.f32 %v2026, %v2044
    %v2093 = vadd.f32 %v2027, %v2044
    %v2094 = vadd.f32 %v2028, %v2044
    %v2095 = vadd.f32 %v2029, %v2044
    %v2096 = vadd.f32 %v2030, %v2044
    %v2097 = vadd.f32 %v2031, %v2044
    %v2098 = vadd.f32 %v2032, %v2044
    %v2099 = vadd.f32 %v2033, %v2044
    %v2100 = vadd.f32 %v2034, %v2044
    %v2101 = vadd.f32 %v2035, %v2044
    %v2102 = vadd.f32 %v2036, %v2044
    %v2103 = vadd.f32 %v2037, %v2044
    %v2104 = vadd.f32 %v2038, %v2044
    %v2105 = vadd.f32 %v2039, %v2044
    %v2106 = vadd.f32 %v2040, %v2044
    %v2107 = vadd.f32 %v2041, %v2044
    %v2108 = vadd.f32 %v2042, %v2044
    %vm2109 = vcmp.gt.f32.partialorder %v2045, 0.0
    %vm2110 = vcmp.gt.f32.partialorder %v2046, 0.0
    %vm2111 = vcmp.gt.f32.partialorder %v2047, 0.0
    %vm2112 = vcmp.gt.f32.partialorder %v2048, 0.0
    %vm2113 = vcmp.gt.f32.partialorder %v2049, 0.0
    %vm2114 = vcmp.gt.f32.partialorder %v2050, 0.0
    %vm2115 = vcmp.gt.f32.partialorder %v2051, 0.0
    %vm2116 = vcmp.gt.f32.partialorder %v2052, 0.0
    %vm2117 = vcmp.gt.f32.partialorder %v2053, 0.0
    %vm2118 = vcmp.gt.f32.partialorder %v2054, 0.0
    %vm2119 = vcmp.gt.f32.partialorder %v2055, 0.0
    %vm2120 = vcmp.gt.f32.partialorder %v2056, 0.0
    %vm2121 = vcmp.gt.f32.partialorder %v2057, 0.0
    %vm2122 = vcmp.gt.f32.partialorder %v2058, 0.0
    %vm2123 = vcmp.gt.f32.partialorder %v2059, 0.0
    %vm2124 = vcmp.gt.f32.partialorder %v2060, 0.0
    %vm2125 = vcmp.gt.f32.partialorder %v2061, 0.0
    %vm2126 = vcmp.gt.f32.partialorder %v2062, 0.0
    %vm2127 = vcmp.gt.f32.partialorder %v2063, 0.0
    %vm2128 = vcmp.gt.f32.partialorder %v2064, 0.0
    %vm2129 = vcmp.gt.f32.partialorder %v2065, 0.0
    %vm2130 = vcmp.gt.f32.partialorder %v2066, 0.0
    %vm2131 = vcmp.gt.f32.partialorder %v2067, 0.0
    %vm2132 = vcmp.gt.f32.partialorder %v2068, 0.0
    %vm2133 = vcmp.gt.f32.partialorder %v2069, 0.0
    %vm2134 = vcmp.gt.f32.partialorder %v2070, 0.0
    %vm2135 = vcmp.gt.f32.partialorder %v2071, 0.0
    %vm2136 = vcmp.gt.f32.partialorder %v2072, 0.0
    %vm2137 = vcmp.gt.f32.partialorder %v2073, 0.0
    %vm2138 = vcmp.gt.f32.partialorder %v2074, 0.0
    %vm2139 = vcmp.gt.f32.partialorder %v2075, 0.0
    %vm2140 = vcmp.gt.f32.partialorder %v2076, 0.0
    %vm2141 = vcmp.gt.f32.partialorder %v2077, 0.0
    %vm2142 = vcmp.gt.f32.partialorder %v2078, 0.0
    %vm2143 = vcmp.gt.f32.partialorder %v2079, 0.0
    %vm2144 = vcmp.gt.f32.partialorder %v2080, 0.0
    %vm2145 = vcmp.gt.f32.partialorder %v2081, 0.0
    %vm2146 = vcmp.gt.f32.partialorder %v2082, 0.0
    %vm2147 = vcmp.gt.f32.partialorder %v2083, 0.0
    %vm2148 = vcmp.gt.f32.partialorder %v2084, 0.0
    %vm2149 = vcmp.gt.f32.partialorder %v2085, 0.0
    %vm2150 = vcmp.gt.f32.partialorder %v2086, 0.0
    %vm2151 = vcmp.gt.f32.partialorder %v2087, 0.0
    %vm2152 = vcmp.gt.f32.partialorder %v2088, 0.0
    %vm2153 = vcmp.gt.f32.partialorder %v2089, 0.0
    %vm2154 = vcmp.gt.f32.partialorder %v2090, 0.0
    %vm2155 = vcmp.gt.f32.partialorder %v2091, 0.0
    %vm2156 = vcmp.gt.f32.partialorder %v2092, 0.0
    %vm2157 = vcmp.gt.f32.partialorder %v2093, 0.0
    %vm2158 = vcmp.gt.f32.partialorder %v2094, 0.0
    %vm2159 = vcmp.gt.f32.partialorder %v2095, 0.0
    %vm2160 = vcmp.gt.f32.partialorder %v2096, 0.0
    %vm2161 = vcmp.gt.f32.partialorder %v2097, 0.0
    %vm2162 = vcmp.gt.f32.partialorder %v2098, 0.0
    %vm2163 = vcmp.gt.f32.partialorder %v2099, 0.0
    %vm2164 = vcmp.gt.f32.partialorder %v2100, 0.0
    %vm2165 = vcmp.gt.f32.partialorder %v2101, 0.0
    %vm2166 = vcmp.gt.f32.partialorder %v2102, 0.0
    %vm2167 = vcmp.gt.f32.partialorder %v2103, 0.0
    %vm2168 = vcmp.gt.f32.partialorder %v2104, 0.0
    %vm2169 = vcmp.gt.f32.partialorder %v2105, 0.0
    %vm2170 = vcmp.gt.f32.partialorder %v2106, 0.0
    %vm2171 = vcmp.gt.f32.partialorder %v2107, 0.0
    %vm2172 = vcmp.gt.f32.partialorder %v2108, 0.0
    %v2173 = vmul.f32 %v2045, 0.1
    %v2174 = vmul.f32 %v2046, 0.1
    %v2175 = vmul.f32 %v2047, 0.1
    %v2176 = vmul.f32 %v2048, 0.1
    %v2177 = vmul.f32 %v2049, 0.1
    %v2178 = vmul.f32 %v2050, 0.1
    %v2179 = vmul.f32 %v2051, 0.1
    %v2180 = vmul.f32 %v2052, 0.1
    %v2181 = vmul.f32 %v2053, 0.1
    %v2182 = vmul.f32 %v2054, 0.1
    %v2183 = vmul.f32 %v2055, 0.1
    %v2184 = vmul.f32 %v2056, 0.1
    %v2185 = vmul.f32 %v2057, 0.1
    %v2186 = vmul.f32 %v2058, 0.1
    %v2187 = vmul.f32 %v2059, 0.1
    %v2188 = vmul.f32 %v2060, 0.1
    %v2189 = vmul.f32 %v2061, 0.1
    %v2190 = vmul.f32 %v2062, 0.1
    %v2191 = vmul.f32 %v2063, 0.1
    %v2192 = vmul.f32 %v2064, 0.1
    %v2193 = vmul.f32 %v2065, 0.1
    %v2194 = vmul.f32 %v2066, 0.1
    %v2195 = vmul.f32 %v2067, 0.1
    %v2196 = vmul.f32 %v2068, 0.1
    %v2197 = vmul.f32 %v2069, 0.1
    %v2198 = vmul.f32 %v2070, 0.1
    %v2199 = vmul.f32 %v2071, 0.1
    %v2200 = vmul.f32 %v2072, 0.1
    %v2201 = vmul.f32 %v2073, 0.1
    %v2202 = vmul.f32 %v2074, 0.1
    %v2203 = vmul.f32 %v2075, 0.1
    %v2204 = vmul.f32 %v2076, 0.1
    %v2205 = vmul.f32 %v2077, 0.1
    %v2206 = vmul.f32 %v2078, 0.1
    %v2207 = vmul.f32 %v2079, 0.1
    %v2208 = vmul.f32 %v2080, 0.1
    %v2209 = vmul.f32 %v2081, 0.1
    %v2210 = vmul.f32 %v2082, 0.1
    %v2211 = vmul.f32 %v2083, 0.1
    %v2212 = vmul.f32 %v2084, 0.1
    %v2213 = vmul.f32 %v2085, 0.1
    %v2214 = vmul.f32 %v2086, 0.1
    %v2215 = vmul.f32 %v2087, 0.1
    %v2216 = vmul.f32 %v2088, 0.1
    %v2217 = vmul.f32 %v2089, 0.1
    %v2218 = vmul.f32 %v2090, 0.1
    %v2219 = vmul.f32 %v2091, 0.1
    %v2220 = vmul.f32 %v2092, 0.1
    %v2221 = vmul.f32 %v2093, 0.1
    %v2222 = vmul.f32 %v2094, 0.1
    %v2223 = vmul.f32 %v2095, 0.1
    %v2224 = vmul.f32 %v2096, 0.1
    %v2225 = vmul.f32 %v2097, 0.1
    %v2226 = vmul.f32 %v2098, 0.1
    %v2227 = vmul.f32 %v2099, 0.1
    %v2228 = vmul.f32 %v2100, 0.1
    %v2229 = vmul.f32 %v2101, 0.1
    %v2230 = vmul.f32 %v2102, 0.1
    %v2231 = vmul.f32 %v2103, 0.1
    %v2232 = vmul.f32 %v2104, 0.1
    %v2233 = vmul.f32 %v2105, 0.1
    %v2234 = vmul.f32 %v2106, 0.1
    %v2235 = vmul.f32 %v2107, 0.1
    %v2236 = vmul.f32 %v2108, 0.1
    %v2237 = vsel %vm2109, %v2045, %v2173
    %v2238 = vsel %vm2110, %v2046, %v2174
    %v2239 = vsel %vm2111, %v2047, %v2175
    %v2240 = vsel %vm2112, %v2048, %v2176
    %v2241 = vsel %vm2113, %v2049, %v2177
    %v2242 = vsel %vm2114, %v2050, %v2178
    %v2243 = vsel %vm2115, %v2051, %v2179
    %v2244 = vsel %vm2116, %v2052, %v2180
    %v2245 = vsel %vm2117, %v2053, %v2181
    %v2246 = vsel %vm2118, %v2054, %v2182
    %v2247 = vsel %vm2119, %v2055, %v2183
    %v2248 = vsel %vm2120, %v2056, %v2184
    %v2249 = vsel %vm2121, %v2057, %v2185
    %v2250 = vsel %vm2122, %v2058, %v2186
    %v2251 = vsel %vm2123, %v2059, %v2187
    %v2252 = vsel %vm2124, %v2060, %v2188
    %v2253 = vsel %vm2125, %v2061, %v2189
    %v2254 = vsel %vm2126, %v2062, %v2190
    %v2255 = vsel %vm2127, %v2063, %v2191
    %v2256 = vsel %vm2128, %v2064, %v2192
    %v2257 = vsel %vm2129, %v2065, %v2193
    %v2258 = vsel %vm2130, %v2066, %v2194
    %v2259 = vsel %vm2131, %v2067, %v2195
    %v2260 = vsel %vm2132, %v2068, %v2196
    %v2261 = vsel %vm2133, %v2069, %v2197
    %v2262 = vsel %vm2134, %v2070, %v2198
    %v2263 = vsel %vm2135, %v2071, %v2199
    %v2264 = vsel %vm2136, %v2072, %v2200
    %v2265 = vsel %vm2137, %v2073, %v2201
    %v2266 = vsel %vm2138, %v2074, %v2202
    %v2267 = vsel %vm2139, %v2075, %v2203
    %v2268 = vsel %vm2140, %v2076, %v2204
    %v2269 = vsel %vm2141, %v2077, %v2205
    %v2270 = vsel %vm2142, %v2078, %v2206
    %v2271 = vsel %vm2143, %v2079, %v2207
    %v2272 = vsel %vm2144, %v2080, %v2208
    %v2273 = vsel %vm2145, %v2081, %v2209
    %v2274 = vsel %vm2146, %v2082, %v2210
    %v2275 = vsel %vm2147, %v2083, %v2211
    %v2276 = vsel %vm2148, %v2084, %v2212
    %v2277 = vsel %vm2149, %v2085, %v2213
    %v2278 = vsel %vm2150, %v2086, %v2214
    %v2279 = vsel %vm2151, %v2087, %v2215
    %v2280 = vsel %vm2152, %v2088, %v2216
    %v2281 = vsel %vm2153, %v2089, %v2217
    %v2282 = vsel %vm2154, %v2090, %v2218
    %v2283 = vsel %vm2155, %v2091, %v2219
    %v2284 = vsel %vm2156, %v2092, %v2220
    %v2285 = vsel %vm2157, %v2093, %v2221
    %v2286 = vsel %vm2158, %v2094, %v2222
    %v2287 = vsel %vm2159, %v2095, %v2223
    %v2288 = vsel %vm2160, %v2096, %v2224
    %v2289 = vsel %vm2161, %v2097, %v2225
    %v2290 = vsel %vm2162, %v2098, %v2226
    %v2291 = vsel %vm2163, %v2099, %v2227
    %v2292 = vsel %vm2164, %v2100, %v2228
    %v2293 = vsel %vm2165, %v2101, %v2229
    %v2294 = vsel %vm2166, %v2102, %v2230
    %v2295 = vsel %vm2167, %v2103, %v2231
    %v2296 = vsel %vm2168, %v2104, %v2232
    %v2297 = vsel %vm2169, %v2105, %v2233
    %v2298 = vsel %vm2170, %v2106, %v2234
    %v2299 = vsel %vm2171, %v2107, %v2235
    %v2300 = vsel %vm2172, %v2108, %v2236
    %2301 = vst [vmem:[%s289 + $0x1] sm:$0xff] %v2237
    %2302 = vst [vmem:[%s289 + $0x9] sm:$0xff] %v2238
    %2303 = vst [vmem:[%s289 + $0x19] sm:$0xff] %v2239
    %2304 = vst [vmem:[%s289 + $0x21] sm:$0xff] %v2240
    %2305 = vst [vmem:[%s289 + $0x31] sm:$0xff] %v2241
    %2306 = vst [vmem:[%s289 + $0x39] sm:$0xff] %v2242
    %2307 = vst [vmem:[%s289 + $0x49] sm:$0xff] %v2243
    %2308 = vst [vmem:[%s289 + $0x51] sm:$0xff] %v2244
    %2309 = vst [vmem:[%s289 + $0x61] sm:$0xff] %v2245
    %2310 = vst [vmem:[%s289 + $0x69] sm:$0xff] %v2246
    %2311 = vst [vmem:[%s289 + $0x79] sm:$0xff] %v2247
    %2312 = vst [vmem:[%s289 + $0x81] sm:$0xff] %v2248
    %2313 = vst [vmem:[%s289 + $0x91] sm:$0xff] %v2249
    %2314 = vst [vmem:[%s289 + $0x99] sm:$0xff] %v2250
    %2315 = vst [vmem:[%s289 + $0xa9] sm:$0xff] %v2251
    %2316 = vst [vmem:[%s289 + $0xb1] sm:$0xff] %v2252
    %2317 = vst [vmem:[%s289 + $0xc1] sm:$0xff] %v2253
    %2318 = vst [vmem:[%s289 + $0xc9] sm:$0xff] %v2254
    %2319 = vst [vmem:[%s289 + $0xd9] sm:$0xff] %v2255
    %2320 = vst [vmem:[%s289 + $0xe1] sm:$0xff] %v2256
    %2321 = vst [vmem:[%s289 + $0xf1] sm:$0xff] %v2257
    %2322 = vst [vmem:[%s289 + $0xf9] sm:$0xff] %v2258
    %2323 = vst [vmem:[%s289 + $0x109] sm:$0xff] %v2259
    %2324 = vst [vmem:[%s289 + $0x111] sm:$0xff] %v2260
    %2325 = vst [vmem:[%s289 + $0x121] sm:$0xff] %v2261
    %2326 = vst [vmem:[%s289 + $0x129] sm:$0xff] %v2262
    %2327 = vst [vmem:[%s289 + $0x139] sm:$0xff] %v2263
    %2328 = vst [vmem:[%s289 + $0x141] sm:$0xff] %v2264
    %2329 = vst [vmem:[%s289 + $0x151] sm:$0xff] %v2265
    %2330 = vst [vmem:[%s289 + $0x159] sm:$0xff] %v2266
    %2331 = vst [vmem:[%s289 + $0x169] sm:$0xff] %v2267
    %2332 = vst [vmem:[%s289 + $0x171] sm:$0xff] %v2268
    %2333 = vst [vmem:[%s289 + $0x1b1] sm:$0xff] %v2269
    %2334 = vst [vmem:[%s289 + $0x1b9] sm:$0xff] %v2270
    %2335 = vst [vmem:[%s289 + $0x1c9] sm:$0xff] %v2271
    %2336 = vst [vmem:[%s289 + $0x1d1] sm:$0xff] %v2272
    %2337 = vst [vmem:[%s289 + $0x1e1] sm:$0xff] %v2273
    %2338 = vst [vmem:[%s289 + $0x1e9] sm:$0xff] %v2274
    %2339 = vst [vmem:[%s289 + $0x1f9] sm:$0xff] %v2275
    %2340 = vst [vmem:[%s289 + $0x201] sm:$0xff] %v2276
    %2341 = vst [vmem:[%s289 + $0x211] sm:$0xff] %v2277
    %2342 = vst [vmem:[%s289 + $0x219] sm:$0xff] %v2278
    %2343 = vst [vmem:[%s289 + $0x229] sm:$0xff] %v2279
    %2344 = vst [vmem:[%s289 + $0x231] sm:$0xff] %v2280
    %2345 = vst [vmem:[%s289 + $0x241] sm:$0xff] %v2281
    %2346 = vst [vmem:[%s289 + $0x249] sm:$0xff] %v2282
    %2347 = vst [vmem:[%s289 + $0x259] sm:$0xff] %v2283
    %2348 = vst [vmem:[%s289 + $0x261] sm:$0xff] %v2284
    %2349 = vst [vmem:[%s289 + $0x271] sm:$0xff] %v2285
    %2350 = vst [vmem:[%s289 + $0x279] sm:$0xff] %v2286
    %2351 = vst [vmem:[%s289 + $0x289] sm:$0xff] %v2287
    %2352 = vst [vmem:[%s289 + $0x291] sm:$0xff] %v2288
    %2353 = vst [vmem:[%s289 + $0x2a1] sm:$0xff] %v2289
    %2354 = vst [vmem:[%s289 + $0x2a9] sm:$0xff] %v2290
    %2355 = vst [vmem:[%s289 + $0x2b9] sm:$0xff] %v2291
    %2356 = vst [vmem:[%s289 + $0x2c1] sm:$0xff] %v2292
    %2357 = vst [vmem:[%s289 + $0x2d1] sm:$0xff] %v2293
    %2358 = vst [vmem:[%s289 + $0x2d9] sm:$0xff] %v2294
    %2359 = vst [vmem:[%s289 + $0x2e9] sm:$0xff] %v2295
    %2360 = vst [vmem:[%s289 + $0x2f1] sm:$0xff] %v2296
    %2361 = vst [vmem:[%s289 + $0x301] sm:$0xff] %v2297
    %2362 = vst [vmem:[%s289 + $0x309] sm:$0xff] %v2298
    %2363 = vst [vmem:[%s289 + $0x319] sm:$0xff] %v2299
    %2364 = vst [vmem:[%s289 + $0x321] sm:$0xff] %v2300
    %v2365 = vld [vmem:[#allocation2] sm:$0xff]
    %v2366 = vld [vmem:[#allocation2 + $0x8] sm:$0xff]
    %v2367 = vld [vmem:[#allocation2 + $0x18] sm:$0xff]
    %v2368 = vld [vmem:[#allocation2 + $0x20] sm:$0xff]
    %v2369 = vld [vmem:[#allocation2 + $0x30] sm:$0xff]
    %v2370 = vld [vmem:[#allocation2 + $0x38] sm:$0xff]
    %v2371 = vld [vmem:[#allocation2 + $0x48] sm:$0xff]
    %v2372 = vld [vmem:[#allocation2 + $0x50] sm:$0xff]
    %v2373 = vld [vmem:[#allocation2 + $0x60] sm:$0xff]
    %v2374 = vld [vmem:[#allocation2 + $0x68] sm:$0xff]
    %v2375 = vld [vmem:[#allocation2 + $0x78] sm:$0xff]
    %v2376 = vld [vmem:[#allocation2 + $0x80] sm:$0xff]
    %v2377 = vld [vmem:[#allocation2 + $0x90] sm:$0xff]
    %v2378 = vld [vmem:[#allocation2 + $0x98] sm:$0xff]
    %v2379 = vld [vmem:[#allocation2 + $0xa8] sm:$0xff]
    %v2380 = vld [vmem:[#allocation2 + $0xb0] sm:$0xff]
    %v2381 = vld [vmem:[#allocation2 + $0xc0] sm:$0xff]
    %v2382 = vld [vmem:[#allocation2 + $0xc8] sm:$0xff]
    %v2383 = vld [vmem:[#allocation2 + $0xd8] sm:$0xff]
    %v2384 = vld [vmem:[#allocation2 + $0xe0] sm:$0xff]
    %v2385 = vld [vmem:[#allocation2 + $0xf0] sm:$0xff]
    %v2386 = vld [vmem:[#allocation2 + $0xf8] sm:$0xff]
    %v2387 = vld [vmem:[#allocation2 + $0x108] sm:$0xff]
    %v2388 = vld [vmem:[#allocation2 + $0x110] sm:$0xff]
    %v2389 = vld [vmem:[#allocation2 + $0x120] sm:$0xff]
    %v2390 = vld [vmem:[#allocation2 + $0x128] sm:$0xff]
    %v2391 = vld [vmem:[#allocation2 + $0x138] sm:$0xff]
    %v2392 = vld [vmem:[#allocation2 + $0x140] sm:$0xff]
    %v2393 = vld [vmem:[#allocation2 + $0x150] sm:$0xff]
    %v2394 = vld [vmem:[#allocation2 + $0x158] sm:$0xff]
    %v2395 = vld [vmem:[#allocation2 + $0x168] sm:$0xff]
    %v2396 = vld [vmem:[#allocation2 + $0x170] sm:$0xff]
    %v2397 = vld [vmem:[#allocation2 + $0x1b0] sm:$0xff]
    %v2398 = vld [vmem:[#allocation2 + $0x1b8] sm:$0xff]
    %v2399 = vld [vmem:[#allocation2 + $0x1c8] sm:$0xff]
    %v2400 = vld [vmem:[#allocation2 + $0x1d0] sm:$0xff]
    %v2401 = vld [vmem:[#allocation2 + $0x1e0] sm:$0xff]
    %v2402 = vld [vmem:[#allocation2 + $0x1e8] sm:$0xff]
    %v2403 = vld [vmem:[#allocation2 + $0x1f8] sm:$0xff]
    %v2404 = vld [vmem:[#allocation2 + $0x200] sm:$0xff]
    %v2405 = vld [vmem:[#allocation2 + $0x210] sm:$0xff]
    %v2406 = vld [vmem:[#allocation2 + $0x218] sm:$0xff]
    %v2407 = vld [vmem:[#allocation2 + $0x228] sm:$0xff]
    %v2408 = vld [vmem:[#allocation2 + $0x230] sm:$0xff]
    %v2409 = vld [vmem:[#allocation2 + $0x240] sm:$0xff]
    %v2410 = vld [vmem:[#allocation2 + $0x248] sm:$0xff]
    %v2411 = vld [vmem:[#allocation2 + $0x258] sm:$0xff]
    %v2412 = vld [vmem:[#allocation2 + $0x260] sm:$0xff]
    %v2413 = vld [vmem:[#allocation2 + $0x270] sm:$0xff]
    %v2414 = vld [vmem:[#allocation2 + $0x278] sm:$0xff]
    %v2415 = vld [vmem:[#allocation2 + $0x288] sm:$0xff]
    %v2416 = vld [vmem:[#allocation2 + $0x290] sm:$0xff]
    %v2417 = vld [vmem:[#allocation2 + $0x2a0] sm:$0xff]
    %v2418 = vld [vmem:[#allocation2 + $0x2a8] sm:$0xff]
    %v2419 = vld [vmem:[#allocation2 + $0x2b8] sm:$0xff]
    %v2420 = vld [vmem:[#allocation2 + $0x2c0] sm:$0xff]
    %v2421 = vld [vmem:[#allocation2 + $0x2d0] sm:$0xff]
    %v2422 = vld [vmem:[#allocation2 + $0x2d8] sm:$0xff]
    %v2423 = vld [vmem:[#allocation2 + $0x2e8] sm:$0xff]
    %v2424 = vld [vmem:[#allocation2 + $0x2f0] sm:$0xff]
    %v2425 = vld [vmem:[#allocation2 + $0x300] sm:$0xff]
    %v2426 = vld [vmem:[#allocation2 + $0x308] sm:$0xff]
    %v2427 = vld [vmem:[#allocation2 + $0x318] sm:$0xff]
    %v2428 = vld [vmem:[#allocation2 + $0x320] sm:$0xff]
    %v2429 = vpack.c.bf16 %v2366, %v2365
    %v2430 = vpack.c.bf16 %v2368, %v2367
    %v2431 = vpack.c.bf16 %v2370, %v2369
    %v2432 = vpack.c.bf16 %v2372, %v2371
    %v2433 = vpack.c.bf16 %v2374, %v2373
    %v2434 = vpack.c.bf16 %v2376, %v2375
    %v2435 = vpack.c.bf16 %v2378, %v2377
    %v2436 = vpack.c.bf16 %v2380, %v2379
    %v2437 = vpack.c.bf16 %v2382, %v2381
    %v2438 = vpack.c.bf16 %v2384, %v2383
    %v2439 = vpack.c.bf16 %v2386, %v2385
    %v2440 = vpack.c.bf16 %v2388, %v2387
    %v2441 = vpack.c.bf16 %v2390, %v2389
    %v2442 = vpack.c.bf16 %v2392, %v2391
    %v2443 = vpack.c.bf16 %v2394, %v2393
    %v2444 = vpack.c.bf16 %v2396, %v2395
    %v2445 = vpack.c.bf16 %v2398, %v2397
    %v2446 = vpack.c.bf16 %v2400, %v2399
    %v2447 = vpack.c.bf16 %v2402, %v2401
    %v2448 = vpack.c.bf16 %v2404, %v2403
    %v2449 = vpack.c.bf16 %v2406, %v2405
    %v2450 = vpack.c.bf16 %v2408, %v2407
    %v2451 = vpack.c.bf16 %v2410, %v2409
    %v2452 = vpack.c.bf16 %v2412, %v2411
    %v2453 = vpack.c.bf16 %v2414, %v2413
    %v2454 = vpack.c.bf16 %v2416, %v2415
    %v2455 = vpack.c.bf16 %v2418, %v2417
    %v2456 = vpack.c.bf16 %v2420, %v2419
    %v2457 = vpack.c.bf16 %v2422, %v2421
    %v2458 = vpack.c.bf16 %v2424, %v2423
    %v2459 = vpack.c.bf16 %v2426, %v2425
    %v2460 = vpack.c.bf16 %v2428, %v2427
    %v2461 = vld [vmem:[#allocation9] sm:$0xf]
    %v2462 = vld [vmem:[#allocation9 + $0x4] sm:$0xf]
    %v2463 = vld [vmem:[#allocation9 + $0x8] sm:$0xf]
    %v2464 = vld [vmem:[#allocation9 + $0xc] sm:$0xf]
    %v2465 = vld [vmem:[#allocation9 + $0x10] sm:$0xf]
    %v2466 = vld [vmem:[#allocation9 + $0x14] sm:$0xf]
    %v2467 = vld [vmem:[#allocation9 + $0x18] sm:$0xf]
    %v2468 = vld [vmem:[#allocation9 + $0x1c] sm:$0xf]
    %v2469 = vld [vmem:[#allocation9 + $0x20] sm:$0xf]
    %v2470 = vld [vmem:[#allocation9 + $0x24] sm:$0xf]
    %v2471 = vld [vmem:[#allocation9 + $0x28] sm:$0xf]
    %v2472 = vld [vmem:[#allocation9 + $0x2c] sm:$0xf]
    %v2473 = vld [vmem:[#allocation9 + $0x30] sm:$0xf]
    %v2474 = vld [vmem:[#allocation9 + $0x34] sm:$0xf]
    %v2475 = vld [vmem:[#allocation9 + $0x38] sm:$0xf]
    %v2476 = vld [vmem:[#allocation9 + $0x3c] sm:$0xf]
    %v2477 = vld [vmem:[#allocation2 + $0x1] sm:$0xff]
    %v2478 = vld [vmem:[#allocation2 + $0x9] sm:$0xff]
    %v2479 = vld [vmem:[#allocation2 + $0x19] sm:$0xff]
    %v2480 = vld [vmem:[#allocation2 + $0x21] sm:$0xff]
    %v2481 = vld [vmem:[#allocation2 + $0x31] sm:$0xff]
    %v2482 = vld [vmem:[#allocation2 + $0x39] sm:$0xff]
    %v2483 = vld [vmem:[#allocation2 + $0x49] sm:$0xff]
    %v2484 = vld [vmem:[#allocation2 + $0x51] sm:$0xff]
    %v2485 = vld [vmem:[#allocation2 + $0x61] sm:$0xff]
    %v2486 = vld [vmem:[#allocation2 + $0x69] sm:$0xff]
    %v2487 = vld [vmem:[#allocation2 + $0x79] sm:$0xff]
    %v2488 = vld [vmem:[#allocation2 + $0x81] sm:$0xff]
    %v2489 = vld [vmem:[#allocation2 + $0x91] sm:$0xff]
    %v2490 = vld [vmem:[#allocation2 + $0x99] sm:$0xff]
    %v2491 = vld [vmem:[#allocation2 + $0xa9] sm:$0xff]
    %v2492 = vld [vmem:[#allocation2 + $0xb1] sm:$0xff]
    %v2493 = vld [vmem:[#allocation2 + $0xc1] sm:$0xff]
    %v2494 = vld [vmem:[#allocation2 + $0xc9] sm:$0xff]
    %v2495 = vld [vmem:[#allocation2 + $0xd9] sm:$0xff]
    %v2496 = vld [vmem:[#allocation2 + $0xe1] sm:$0xff]
    %v2497 = vld [vmem:[#allocation2 + $0xf1] sm:$0xff]
    %v2498 = vld [vmem:[#allocation2 + $0xf9] sm:$0xff]
    %v2499 = vld [vmem:[#allocation2 + $0x109] sm:$0xff]
    %v2500 = vld [vmem:[#allocation2 + $0x111] sm:$0xff]
    %v2501 = vld [vmem:[#allocation2 + $0x121] sm:$0xff]
    %v2502 = vld [vmem:[#allocation2 + $0x129] sm:$0xff]
    %v2503 = vld [vmem:[#allocation2 + $0x139] sm:$0xff]
    %v2504 = vld [vmem:[#allocation2 + $0x141] sm:$0xff]
    %v2505 = vld [vmem:[#allocation2 + $0x151] sm:$0xff]
    %v2506 = vld [vmem:[#allocation2 + $0x159] sm:$0xff]
    %v2507 = vld [vmem:[#allocation2 + $0x169] sm:$0xff]
    %v2508 = vld [vmem:[#allocation2 + $0x171] sm:$0xff]
    %v2509 = vld [vmem:[#allocation2 + $0x1b1] sm:$0xff]
    %v2510 = vld [vmem:[#allocation2 + $0x1b9] sm:$0xff]
    %v2511 = vld [vmem:[#allocation2 + $0x1c9] sm:$0xff]
    %v2512 = vld [vmem:[#allocation2 + $0x1d1] sm:$0xff]
    %v2513 = vld [vmem:[#allocation2 + $0x1e1] sm:$0xff]
    %v2514 = vld [vmem:[#allocation2 + $0x1e9] sm:$0xff]
    %v2515 = vld [vmem:[#allocation2 + $0x1f9] sm:$0xff]
    %v2516 = vld [vmem:[#allocation2 + $0x201] sm:$0xff]
    %v2517 = vld [vmem:[#allocation2 + $0x211] sm:$0xff]
    %v2518 = vld [vmem:[#allocation2 + $0x219] sm:$0xff]
    %v2519 = vld [vmem:[#allocation2 + $0x229] sm:$0xff]
    %v2520 = vld [vmem:[#allocation2 + $0x231] sm:$0xff]
    %v2521 = vld [vmem:[#allocation2 + $0x241] sm:$0xff]
    %v2522 = vld [vmem:[#allocation2 + $0x249] sm:$0xff]
    %v2523 = vld [vmem:[#allocation2 + $0x259] sm:$0xff]
    %v2524 = vld [vmem:[#allocation2 + $0x261] sm:$0xff]
    %v2525 = vld [vmem:[#allocation2 + $0x271] sm:$0xff]
    %v2526 = vld [vmem:[#allocation2 + $0x279] sm:$0xff]
    %v2527 = vld [vmem:[#allocation2 + $0x289] sm:$0xff]
    %v2528 = vld [vmem:[#allocation2 + $0x291] sm:$0xff]
    %v2529 = vld [vmem:[#allocation2 + $0x2a1] sm:$0xff]
    %v2530 = vld [vmem:[#allocation2 + $0x2a9] sm:$0xff]
    %v2531 = vld [vmem:[#allocation2 + $0x2b9] sm:$0xff]
    %v2532 = vld [vmem:[#allocation2 + $0x2c1] sm:$0xff]
    %v2533 = vld [vmem:[#allocation2 + $0x2d1] sm:$0xff]
    %v2534 = vld [vmem:[#allocation2 + $0x2d9] sm:$0xff]
    %v2535 = vld [vmem:[#allocation2 + $0x2e9] sm:$0xff]
    %v2536 = vld [vmem:[#allocation2 + $0x2f1] sm:$0xff]
    %v2537 = vld [vmem:[#allocation2 + $0x301] sm:$0xff]
    %v2538 = vld [vmem:[#allocation2 + $0x309] sm:$0xff]
    %v2539 = vld [vmem:[#allocation2 + $0x319] sm:$0xff]
    %v2540 = vld [vmem:[#allocation2 + $0x321] sm:$0xff]
    %v2541 = vpack.c.bf16 %v2478, %v2477
    %v2542 = vpack.c.bf16 %v2480, %v2479
    %v2543 = vpack.c.bf16 %v2482, %v2481
    %v2544 = vpack.c.bf16 %v2484, %v2483
    %v2545 = vpack.c.bf16 %v2486, %v2485
    %v2546 = vpack.c.bf16 %v2488, %v2487
    %v2547 = vpack.c.bf16 %v2490, %v2489
    %v2548 = vpack.c.bf16 %v2492, %v2491
    %v2549 = vpack.c.bf16 %v2494, %v2493
    %v2550 = vpack.c.bf16 %v2496, %v2495
    %v2551 = vpack.c.bf16 %v2498, %v2497
    %v2552 = vpack.c.bf16 %v2500, %v2499
    %v2553 = vpack.c.bf16 %v2502, %v2501
    %v2554 = vpack.c.bf16 %v2504, %v2503
    %v2555 = vpack.c.bf16 %v2506, %v2505
    %v2556 = vpack.c.bf16 %v2508, %v2507
    %v2557 = vpack.c.bf16 %v2510, %v2509
    %v2558 = vpack.c.bf16 %v2512, %v2511
    %v2559 = vpack.c.bf16 %v2514, %v2513
    %v2560 = vpack.c.bf16 %v2516, %v2515
    %v2561 = vpack.c.bf16 %v2518, %v2517
    %v2562 = vpack.c.bf16 %v2520, %v2519
    %v2563 = vpack.c.bf16 %v2522, %v2521
    %v2564 = vpack.c.bf16 %v2524, %v2523
    %v2565 = vpack.c.bf16 %v2526, %v2525
    %v2566 = vpack.c.bf16 %v2528, %v2527
    %v2567 = vpack.c.bf16 %v2530, %v2529
    %v2568 = vpack.c.bf16 %v2532, %v2531
    %v2569 = vpack.c.bf16 %v2534, %v2533
    %v2570 = vpack.c.bf16 %v2536, %v2535
    %v2571 = vpack.c.bf16 %v2538, %v2537
    %v2572 = vpack.c.bf16 %v2540, %v2539
    %s2573 = scalar_lea.vmem [#allocation9], 64
    %v2574 = vld [vmem:[%s2573] sm:$0xf]
    %v2575 = vld [vmem:[%s2573 + $0x4] sm:$0xf]
    %v2576 = vld [vmem:[%s2573 + $0x8] sm:$0xf]
    %v2577 = vld [vmem:[%s2573 + $0xc] sm:$0xf]
    %v2578 = vld [vmem:[%s2573 + $0x10] sm:$0xf]
    %v2579 = vld [vmem:[%s2573 + $0x14] sm:$0xf]
    %v2580 = vld [vmem:[%s2573 + $0x18] sm:$0xf]
    %v2581 = vld [vmem:[%s2573 + $0x1c] sm:$0xf]
    %v2582 = vld [vmem:[%s2573 + $0x20] sm:$0xf]
    %v2583 = vld [vmem:[%s2573 + $0x24] sm:$0xf]
    %v2584 = vld [vmem:[%s2573 + $0x28] sm:$0xf]
    %v2585 = vld [vmem:[%s2573 + $0x2c] sm:$0xf]
    %v2586 = vld [vmem:[%s2573 + $0x30] sm:$0xf]
    %v2587 = vld [vmem:[%s2573 + $0x34] sm:$0xf]
    %v2588 = vld [vmem:[%s2573 + $0x38] sm:$0xf]
    %v2589 = vld [vmem:[%s2573 + $0x3c] sm:$0xf]
    %v2606 = vunpack.c.l.b16 %v2574
    %v2607 = vunpack.c.l.b16 %v2575
    %v2608 = vunpack.c.l.b16 %v2576
    %v2609 = vunpack.c.l.b16 %v2577
    %v2610 = vunpack.c.l.b16 %v2578
    %v2611 = vunpack.c.l.b16 %v2579
    %v2612 = vunpack.c.l.b16 %v2580
    %v2613 = vunpack.c.l.b16 %v2581
    %v2614 = vunpack.c.l.b16 %v2582
    %v2615 = vunpack.c.l.b16 %v2583
    %v2616 = vunpack.c.l.b16 %v2584
    %v2617 = vunpack.c.l.b16 %v2585
    %v2618 = vunpack.c.l.b16 %v2586
    %v2619 = vunpack.c.l.b16 %v2587
    %v2620 = vunpack.c.l.b16 %v2588
    %v2621 = vunpack.c.l.b16 %v2589
    %v2622 = vpack.c.b16 %v2607, %v2606
    %v2623 = vpack.c.b16 %v2609, %v2608
    %v2624 = vpack.c.b16 %v2611, %v2610
    %v2625 = vpack.c.b16 %v2613, %v2612
    %v2626 = vpack.c.b16 %v2615, %v2614
    %v2627 = vpack.c.b16 %v2617, %v2616
    %v2628 = vpack.c.b16 %v2619, %v2618
    %v2629 = vpack.c.b16 %v2621, %v2620
    %2638 = vmatpush.bf16.msra.mxu0 %v2629
    %2639 = vmatpush.bf16.msra.mxu0 %v2628
    %2640 = vmatpush.bf16.msra.mxu0 %v2627
    %2641 = vmatpush.bf16.msra.mxu0 %v2626
    %2642 = vmatpush.bf16.msra.mxu0 %v2625
    %2643 = vmatpush.bf16.msra.mxu0 %v2624
    %2644 = vmatpush.bf16.msra.mxu0 %v2623
    %2645 = vmatpush.bf16.msra.mxu0 %v2622
    %2646 = vmatmul.bf16.gmra.mxu0 %v2541
    %v2647 = vpop.f32.mrf.mxu0
    %v2648 = vadd.f32 0.0, %v2647
    %v2649 = vpop.f32.mrf.mxu0
    %v2650 = vadd.f32 0.0, %v2649
    %2651 = vmatmul.bf16.gmra.mxu0 %v2542
    %v2652 = vpop.f32.mrf.mxu0
    %v2653 = vadd.f32 0.0, %v2652
    %v2654 = vpop.f32.mrf.mxu0
    %v2655 = vadd.f32 0.0, %v2654
    %2656 = vmatmul.bf16.gmra.mxu0 %v2543
    %v2657 = vpop.f32.mrf.mxu0
    %v2658 = vadd.f32 0.0, %v2657
    %v2659 = vpop.f32.mrf.mxu0
    %v2660 = vadd.f32 0.0, %v2659
    %2661 = vmatmul.bf16.gmra.mxu0 %v2544
    %v2662 = vpop.f32.mrf.mxu0
    %v2663 = vadd.f32 0.0, %v2662
    %v2664 = vpop.f32.mrf.mxu0
    %v2665 = vadd.f32 0.0, %v2664
    %2666 = vmatmul.bf16.gmra.mxu0 %v2545
    %v2667 = vpop.f32.mrf.mxu0
    %v2668 = vadd.f32 0.0, %v2667
    %v2669 = vpop.f32.mrf.mxu0
    %v2670 = vadd.f32 0.0, %v2669
    %2671 = vmatmul.bf16.gmra.mxu0 %v2546
    %v2672 = vpop.f32.mrf.mxu0
    %v2673 = vadd.f32 0.0, %v2672
    %v2674 = vpop.f32.mrf.mxu0
    %v2675 = vadd.f32 0.0, %v2674
    %2676 = vmatmul.bf16.gmra.mxu0 %v2547
    %v2677 = vpop.f32.mrf.mxu0
    %v2678 = vadd.f32 0.0, %v2677
    %v2679 = vpop.f32.mrf.mxu0
    %v2680 = vadd.f32 0.0, %v2679
    %2681 = vmatmul.bf16.gmra.mxu0 %v2548
    %v2682 = vpop.f32.mrf.mxu0
    %v2683 = vadd.f32 0.0, %v2682
    %v2684 = vpop.f32.mrf.mxu0
    %v2685 = vadd.f32 0.0, %v2684
    %2686 = vmatmul.bf16.gmra.mxu0 %v2549
    %v2687 = vpop.f32.mrf.mxu0
    %v2688 = vadd.f32 0.0, %v2687
    %v2689 = vpop.f32.mrf.mxu0
    %v2690 = vadd.f32 0.0, %v2689
    %2691 = vmatmul.bf16.gmra.mxu0 %v2550
    %v2692 = vpop.f32.mrf.mxu0
    %v2693 = vadd.f32 0.0, %v2692
    %v2694 = vpop.f32.mrf.mxu0
    %v2695 = vadd.f32 0.0, %v2694
    %2696 = vmatmul.bf16.gmra.mxu0 %v2551
    %v2697 = vpop.f32.mrf.mxu0
    %v2698 = vadd.f32 0.0, %v2697
    %v2699 = vpop.f32.mrf.mxu0
    %v2700 = vadd.f32 0.0, %v2699
    %2701 = vmatmul.bf16.gmra.mxu0 %v2552
    %v2702 = vpop.f32.mrf.mxu0
    %v2703 = vadd.f32 0.0, %v2702
    %v2704 = vpop.f32.mrf.mxu0
    %v2705 = vadd.f32 0.0, %v2704
    %2706 = vmatmul.bf16.gmra.mxu0 %v2553
    %v2707 = vpop.f32.mrf.mxu0
    %v2708 = vadd.f32 0.0, %v2707
    %v2709 = vpop.f32.mrf.mxu0
    %v2710 = vadd.f32 0.0, %v2709
    %2711 = vmatmul.bf16.gmra.mxu0 %v2554
    %v2712 = vpop.f32.mrf.mxu0
    %v2713 = vadd.f32 0.0, %v2712
    %v2714 = vpop.f32.mrf.mxu0
    %v2715 = vadd.f32 0.0, %v2714
    %2716 = vmatmul.bf16.gmra.mxu0 %v2555
    %v2717 = vpop.f32.mrf.mxu0
    %v2718 = vadd.f32 0.0, %v2717
    %v2719 = vpop.f32.mrf.mxu0
    %v2720 = vadd.f32 0.0, %v2719
    %2721 = vmatmul.bf16.gmra.mxu0 %v2556
    %v2722 = vpop.f32.mrf.mxu0
    %v2723 = vadd.f32 0.0, %v2722
    %v2724 = vpop.f32.mrf.mxu0
    %v2725 = vadd.f32 0.0, %v2724
    %2726 = vmatmul.bf16.gmra.mxu0 %v2557
    %v2727 = vpop.f32.mrf.mxu0
    %v2728 = vadd.f32 0.0, %v2727
    %v2729 = vpop.f32.mrf.mxu0
    %v2730 = vadd.f32 0.0, %v2729
    %2731 = vmatmul.bf16.gmra.mxu0 %v2558
    %v2732 = vpop.f32.mrf.mxu0
    %v2733 = vadd.f32 0.0, %v2732
    %v2734 = vpop.f32.mrf.mxu0
    %v2735 = vadd.f32 0.0, %v2734
    %2736 = vmatmul.bf16.gmra.mxu0 %v2559
    %v2737 = vpop.f32.mrf.mxu0
    %v2738 = vadd.f32 0.0, %v2737
    %v2739 = vpop.f32.mrf.mxu0
    %v2740 = vadd.f32 0.0, %v2739
    %2741 = vmatmul.bf16.gmra.mxu0 %v2560
    %v2742 = vpop.f32.mrf.mxu0
    %v2743 = vadd.f32 0.0, %v2742
    %v2744 = vpop.f32.mrf.mxu0
    %v2745 = vadd.f32 0.0, %v2744
    %2746 = vmatmul.bf16.gmra.mxu0 %v2561
    %v2747 = vpop.f32.mrf.mxu0
    %v2748 = vadd.f32 0.0, %v2747
    %v2749 = vpop.f32.mrf.mxu0
    %v2750 = vadd.f32 0.0, %v2749
    %2751 = vmatmul.bf16.gmra.mxu0 %v2562
    %v2752 = vpop.f32.mrf.mxu0
    %v2753 = vadd.f32 0.0, %v2752
    %v2754 = vpop.f32.mrf.mxu0
    %v2755 = vadd.f32 0.0, %v2754
    %2756 = vmatmul.bf16.gmra.mxu0 %v2563
    %v2757 = vpop.f32.mrf.mxu0
    %v2758 = vadd.f32 0.0, %v2757
    %v2759 = vpop.f32.mrf.mxu0
    %v2760 = vadd.f32 0.0, %v2759
    %2761 = vmatmul.bf16.gmra.mxu0 %v2564
    %v2762 = vpop.f32.mrf.mxu0
    %v2763 = vadd.f32 0.0, %v2762
    %v2764 = vpop.f32.mrf.mxu0
    %v2765 = vadd.f32 0.0, %v2764
    %2766 = vmatmul.bf16.gmra.mxu0 %v2565
    %v2767 = vpop.f32.mrf.mxu0
    %v2768 = vadd.f32 0.0, %v2767
    %v2769 = vpop.f32.mrf.mxu0
    %v2770 = vadd.f32 0.0, %v2769
    %2771 = vmatmul.bf16.gmra.mxu0 %v2566
    %v2772 = vpop.f32.mrf.mxu0
    %v2773 = vadd.f32 0.0, %v2772
    %v2774 = vpop.f32.mrf.mxu0
    %v2775 = vadd.f32 0.0, %v2774
    %2776 = vmatmul.bf16.gmra.mxu0 %v2567
    %v2777 = vpop.f32.mrf.mxu0
    %v2778 = vadd.f32 0.0, %v2777
    %v2779 = vpop.f32.mrf.mxu0
    %v2780 = vadd.f32 0.0, %v2779
    %2781 = vmatmul.bf16.gmra.mxu0 %v2568
    %v2782 = vpop.f32.mrf.mxu0
    %v2783 = vadd.f32 0.0, %v2782
    %v2784 = vpop.f32.mrf.mxu0
    %v2785 = vadd.f32 0.0, %v2784
    %2786 = vmatmul.bf16.gmra.mxu0 %v2569
    %v2787 = vpop.f32.mrf.mxu0
    %v2788 = vadd.f32 0.0, %v2787
    %v2789 = vpop.f32.mrf.mxu0
    %v2790 = vadd.f32 0.0, %v2789
    %2791 = vmatmul.bf16.gmra.mxu0 %v2570
    %v2792 = vpop.f32.mrf.mxu0
    %v2793 = vadd.f32 0.0, %v2792
    %v2794 = vpop.f32.mrf.mxu0
    %v2795 = vadd.f32 0.0, %v2794
    %2796 = vmatmul.bf16.gmra.mxu0 %v2571
    %v2797 = vpop.f32.mrf.mxu0
    %v2798 = vadd.f32 0.0, %v2797
    %v2799 = vpop.f32.mrf.mxu0
    %v2800 = vadd.f32 0.0, %v2799
    %2801 = vmatmul.bf16.gmra.mxu0 %v2572
    %v2802 = vpop.f32.mrf.mxu0
    %v2803 = vadd.f32 0.0, %v2802
    %v2804 = vpop.f32.mrf.mxu0
    %v2805 = vadd.f32 0.0, %v2804
    %2806 = vdwg.mxu0
    %v2823 = vunpack.c.l.b16 %v2461
    %v2824 = vunpack.c.l.b16 %v2462
    %v2825 = vunpack.c.l.b16 %v2463
    %v2826 = vunpack.c.l.b16 %v2464
    %v2827 = vunpack.c.l.b16 %v2465
    %v2828 = vunpack.c.l.b16 %v2466
    %v2829 = vunpack.c.l.b16 %v2467
    %v2830 = vunpack.c.l.b16 %v2468
    %v2831 = vunpack.c.l.b16 %v2469
    %v2832 = vunpack.c.l.b16 %v2470
    %v2833 = vunpack.c.l.b16 %v2471
    %v2834 = vunpack.c.l.b16 %v2472
    %v2835 = vunpack.c.l.b16 %v2473
    %v2836 = vunpack.c.l.b16 %v2474
    %v2837 = vunpack.c.l.b16 %v2475
    %v2838 = vunpack.c.l.b16 %v2476
    %v2839 = vpack.c.b16 %v2824, %v2823
    %v2840 = vpack.c.b16 %v2826, %v2825
    %v2841 = vpack.c.b16 %v2828, %v2827
    %v2842 = vpack.c.b16 %v2830, %v2829
    %v2843 = vpack.c.b16 %v2832, %v2831
    %v2844 = vpack.c.b16 %v2834, %v2833
    %v2845 = vpack.c.b16 %v2836, %v2835
    %v2846 = vpack.c.b16 %v2838, %v2837
    %2855 = vmatpush.bf16.msra.mxu0 %v2846
    %2856 = vmatpush.bf16.msra.mxu0 %v2845
    %2857 = vmatpush.bf16.msra.mxu0 %v2844
    %2858 = vmatpush.bf16.msra.mxu0 %v2843
    %2859 = vmatpush.bf16.msra.mxu0 %v2842
    %2860 = vmatpush.bf16.msra.mxu0 %v2841
    %2861 = vmatpush.bf16.msra.mxu0 %v2840
    %2862 = vmatpush.bf16.msra.mxu0 %v2839
    %2863 = vmatmul.bf16.gmra.mxu0 %v2429
    %v2864 = vpop.f32.mrf.mxu0
    %v2865 = vadd.f32 %v2648, %v2864
    %v2866 = vpop.f32.mrf.mxu0
    %v2867 = vadd.f32 %v2650, %v2866
    %2868 = vmatmul.bf16.gmra.mxu0 %v2430
    %v2869 = vpop.f32.mrf.mxu0
    %v2870 = vadd.f32 %v2653, %v2869
    %v2871 = vpop.f32.mrf.mxu0
    %v2872 = vadd.f32 %v2655, %v2871
    %2873 = vmatmul.bf16.gmra.mxu0 %v2431
    %v2874 = vpop.f32.mrf.mxu0
    %v2875 = vadd.f32 %v2658, %v2874
    %v2876 = vpop.f32.mrf.mxu0
    %v2877 = vadd.f32 %v2660, %v2876
    %2878 = vmatmul.bf16.gmra.mxu0 %v2432
    %v2879 = vpop.f32.mrf.mxu0
    %v2880 = vadd.f32 %v2663, %v2879
    %v2881 = vpop.f32.mrf.mxu0
    %v2882 = vadd.f32 %v2665, %v2881
    %2883 = vmatmul.bf16.gmra.mxu0 %v2433
    %v2884 = vpop.f32.mrf.mxu0
    %v2885 = vadd.f32 %v2668, %v2884
    %v2886 = vpop.f32.mrf.mxu0
    %v2887 = vadd.f32 %v2670, %v2886
    %2888 = vmatmul.bf16.gmra.mxu0 %v2434
    %v2889 = vpop.f32.mrf.mxu0
    %v2890 = vadd.f32 %v2673, %v2889
    %v2891 = vpop.f32.mrf.mxu0
    %v2892 = vadd.f32 %v2675, %v2891
    %2893 = vmatmul.bf16.gmra.mxu0 %v2435
    %v2894 = vpop.f32.mrf.mxu0
    %v2895 = vadd.f32 %v2678, %v2894
    %v2896 = vpop.f32.mrf.mxu0
    %v2897 = vadd.f32 %v2680, %v2896
    %2898 = vmatmul.bf16.gmra.mxu0 %v2436
    %v2899 = vpop.f32.mrf.mxu0
    %v2900 = vadd.f32 %v2683, %v2899
    %v2901 = vpop.f32.mrf.mxu0
    %v2902 = vadd.f32 %v2685, %v2901
    %2903 = vmatmul.bf16.gmra.mxu0 %v2437
    %v2904 = vpop.f32.mrf.mxu0
    %v2905 = vadd.f32 %v2688, %v2904
    %v2906 = vpop.f32.mrf.mxu0
    %v2907 = vadd.f32 %v2690, %v2906
    %2908 = vmatmul.bf16.gmra.mxu0 %v2438
    %v2909 = vpop.f32.mrf.mxu0
    %v2910 = vadd.f32 %v2693, %v2909
    %v2911 = vpop.f32.mrf.mxu0
    %v2912 = vadd.f32 %v2695, %v2911
    %2913 = vmatmul.bf16.gmra.mxu0 %v2439
    %v2914 = vpop.f32.mrf.mxu0
    %v2915 = vadd.f32 %v2698, %v2914
    %v2916 = vpop.f32.mrf.mxu0
    %v2917 = vadd.f32 %v2700, %v2916
    %2918 = vmatmul.bf16.gmra.mxu0 %v2440
    %v2919 = vpop.f32.mrf.mxu0
    %v2920 = vadd.f32 %v2703, %v2919
    %v2921 = vpop.f32.mrf.mxu0
    %v2922 = vadd.f32 %v2705, %v2921
    %2923 = vmatmul.bf16.gmra.mxu0 %v2441
    %v2924 = vpop.f32.mrf.mxu0
    %v2925 = vadd.f32 %v2708, %v2924
    %v2926 = vpop.f32.mrf.mxu0
    %v2927 = vadd.f32 %v2710, %v2926
    %2928 = vmatmul.bf16.gmra.mxu0 %v2442
    %v2929 = vpop.f32.mrf.mxu0
    %v2930 = vadd.f32 %v2713, %v2929
    %v2931 = vpop.f32.mrf.mxu0
    %v2932 = vadd.f32 %v2715, %v2931
    %2933 = vmatmul.bf16.gmra.mxu0 %v2443
    %v2934 = vpop.f32.mrf.mxu0
    %v2935 = vadd.f32 %v2718, %v2934
    %v2936 = vpop.f32.mrf.mxu0
    %v2937 = vadd.f32 %v2720, %v2936
    %2938 = vmatmul.bf16.gmra.mxu0 %v2444
    %v2939 = vpop.f32.mrf.mxu0
    %v2940 = vadd.f32 %v2723, %v2939
    %v2941 = vpop.f32.mrf.mxu0
    %v2942 = vadd.f32 %v2725, %v2941
    %2943 = vmatmul.bf16.gmra.mxu0 %v2445
    %v2944 = vpop.f32.mrf.mxu0
    %v2945 = vadd.f32 %v2728, %v2944
    %v2946 = vpop.f32.mrf.mxu0
    %v2947 = vadd.f32 %v2730, %v2946
    %2948 = vmatmul.bf16.gmra.mxu0 %v2446
    %v2949 = vpop.f32.mrf.mxu0
    %v2950 = vadd.f32 %v2733, %v2949
    %v2951 = vpop.f32.mrf.mxu0
    %v2952 = vadd.f32 %v2735, %v2951
    %2953 = vmatmul.bf16.gmra.mxu0 %v2447
    %v2954 = vpop.f32.mrf.mxu0
    %v2955 = vadd.f32 %v2738, %v2954
    %v2956 = vpop.f32.mrf.mxu0
    %v2957 = vadd.f32 %v2740, %v2956
    %2958 = vmatmul.bf16.gmra.mxu0 %v2448
    %v2959 = vpop.f32.mrf.mxu0
    %v2960 = vadd.f32 %v2743, %v2959
    %v2961 = vpop.f32.mrf.mxu0
    %v2962 = vadd.f32 %v2745, %v2961
    %2963 = vmatmul.bf16.gmra.mxu0 %v2449
    %v2964 = vpop.f32.mrf.mxu0
    %v2965 = vadd.f32 %v2748, %v2964
    %v2966 = vpop.f32.mrf.mxu0
    %v2967 = vadd.f32 %v2750, %v2966
    %2968 = vmatmul.bf16.gmra.mxu0 %v2450
    %v2969 = vpop.f32.mrf.mxu0
    %v2970 = vadd.f32 %v2753, %v2969
    %v2971 = vpop.f32.mrf.mxu0
    %v2972 = vadd.f32 %v2755, %v2971
    %2973 = vmatmul.bf16.gmra.mxu0 %v2451
    %v2974 = vpop.f32.mrf.mxu0
    %v2975 = vadd.f32 %v2758, %v2974
    %v2976 = vpop.f32.mrf.mxu0
    %v2977 = vadd.f32 %v2760, %v2976
    %2978 = vmatmul.bf16.gmra.mxu0 %v2452
    %v2979 = vpop.f32.mrf.mxu0
    %v2980 = vadd.f32 %v2763, %v2979
    %v2981 = vpop.f32.mrf.mxu0
    %v2982 = vadd.f32 %v2765, %v2981
    %2983 = vmatmul.bf16.gmra.mxu0 %v2453
    %v2984 = vpop.f32.mrf.mxu0
    %v2985 = vadd.f32 %v2768, %v2984
    %v2986 = vpop.f32.mrf.mxu0
    %v2987 = vadd.f32 %v2770, %v2986
    %2988 = vmatmul.bf16.gmra.mxu0 %v2454
    %v2989 = vpop.f32.mrf.mxu0
    %v2990 = vadd.f32 %v2773, %v2989
    %v2991 = vpop.f32.mrf.mxu0
    %v2992 = vadd.f32 %v2775, %v2991
    %2993 = vmatmul.bf16.gmra.mxu0 %v2455
    %v2994 = vpop.f32.mrf.mxu0
    %v2995 = vadd.f32 %v2778, %v2994
    %v2996 = vpop.f32.mrf.mxu0
    %v2997 = vadd.f32 %v2780, %v2996
    %2998 = vmatmul.bf16.gmra.mxu0 %v2456
    %v2999 = vpop.f32.mrf.mxu0
    %v3000 = vadd.f32 %v2783, %v2999
    %v3001 = vpop.f32.mrf.mxu0
    %v3002 = vadd.f32 %v2785, %v3001
    %3003 = vmatmul.bf16.gmra.mxu0 %v2457
    %v3004 = vpop.f32.mrf.mxu0
    %v3005 = vadd.f32 %v2788, %v3004
    %v3006 = vpop.f32.mrf.mxu0
    %v3007 = vadd.f32 %v2790, %v3006
    %3008 = vmatmul.bf16.gmra.mxu0 %v2458
    %v3009 = vpop.f32.mrf.mxu0
    %v3010 = vadd.f32 %v2793, %v3009
    %v3011 = vpop.f32.mrf.mxu0
    %v3012 = vadd.f32 %v2795, %v3011
    %3013 = vmatmul.bf16.gmra.mxu0 %v2459
    %v3014 = vpop.f32.mrf.mxu0
    %v3015 = vadd.f32 %v2798, %v3014
    %v3016 = vpop.f32.mrf.mxu0
    %v3017 = vadd.f32 %v2800, %v3016
    %3018 = vmatmul.bf16.gmra.mxu0 %v2460
    %v3019 = vpop.f32.mrf.mxu0
    %v3020 = vadd.f32 %v2803, %v3019
    %v3021 = vpop.f32.mrf.mxu0
    %v3022 = vadd.f32 %v2805, %v3021
    %3023 = vdwg.mxu0
    %v3024 = vld [vmem:[#allocation2 + $0x2] sm:$0xff]
    %v3025 = vld [vmem:[#allocation2 + $0xa] sm:$0xff]
    %v3026 = vld [vmem:[#allocation2 + $0x1a] sm:$0xff]
    %v3027 = vld [vmem:[#allocation2 + $0x22] sm:$0xff]
    %v3028 = vld [vmem:[#allocation2 + $0x32] sm:$0xff]
    %v3029 = vld [vmem:[#allocation2 + $0x3a] sm:$0xff]
    %v3030 = vld [vmem:[#allocation2 + $0x4a] sm:$0xff]
    %v3031 = vld [vmem:[#allocation2 + $0x52] sm:$0xff]
    %v3032 = vld [vmem:[#allocation2 + $0x62] sm:$0xff]
    %v3033 = vld [vmem:[#allocation2 + $0x6a] sm:$0xff]
    %v3034 = vld [vmem:[#allocation2 + $0x7a] sm:$0xff]
    %v3035 = vld [vmem:[#allocation2 + $0x82] sm:$0xff]
    %v3036 = vld [vmem:[#allocation2 + $0x92] sm:$0xff]
    %v3037 = vld [vmem:[#allocation2 + $0x9a] sm:$0xff]
    %v3038 = vld [vmem:[#allocation2 + $0xaa] sm:$0xff]
    %v3039 = vld [vmem:[#allocation2 + $0xb2] sm:$0xff]
    %v3040 = vld [vmem:[#allocation2 + $0xc2] sm:$0xff]
    %v3041 = vld [vmem:[#allocation2 + $0xca] sm:$0xff]
    %v3042 = vld [vmem:[#allocation2 + $0xda] sm:$0xff]
    %v3043 = vld [vmem:[#allocation2 + $0xe2] sm:$0xff]
    %v3044 = vld [vmem:[#allocation2 + $0xf2] sm:$0xff]
    %v3045 = vld [vmem:[#allocation2 + $0xfa] sm:$0xff]
    %v3046 = vld [vmem:[#allocation2 + $0x10a] sm:$0xff]
    %v3047 = vld [vmem:[#allocation2 + $0x112] sm:$0xff]
    %v3048 = vld [vmem:[#allocation2 + $0x122] sm:$0xff]
    %v3049 = vld [vmem:[#allocation2 + $0x12a] sm:$0xff]
    %v3050 = vld [vmem:[#allocation2 + $0x13a] sm:$0xff]
    %v3051 = vld [vmem:[#allocation2 + $0x142] sm:$0xff]
    %v3052 = vld [vmem:[#allocation2 + $0x152] sm:$0xff]
    %v3053 = vld [vmem:[#allocation2 + $0x15a] sm:$0xff]
    %v3054 = vld [vmem:[#allocation2 + $0x16a] sm:$0xff]
    %v3055 = vld [vmem:[#allocation2 + $0x172] sm:$0xff]
    %v3056 = vld [vmem:[#allocation2 + $0x1b2] sm:$0xff]
    %v3057 = vld [vmem:[#allocation2 + $0x1ba] sm:$0xff]
    %v3058 = vld [vmem:[#allocation2 + $0x1ca] sm:$0xff]
    %v3059 = vld [vmem:[#allocation2 + $0x1d2] sm:$0xff]
    %v3060 = vld [vmem:[#allocation2 + $0x1e2] sm:$0xff]
    %v3061 = vld [vmem:[#allocation2 + $0x1ea] sm:$0xff]
    %v3062 = vld [vmem:[#allocation2 + $0x1fa] sm:$0xff]
    %v3063 = vld [vmem:[#allocation2 + $0x202] sm:$0xff]
    %v3064 = vld [vmem:[#allocation2 + $0x212] sm:$0xff]
    %v3065 = vld [vmem:[#allocation2 + $0x21a] sm:$0xff]
    %v3066 = vld [vmem:[#allocation2 + $0x22a] sm:$0xff]
    %v3067 = vld [vmem:[#allocation2 + $0x232] sm:$0xff]
    %v3068 = vld [vmem:[#allocation2 + $0x242] sm:$0xff]
    %v3069 = vld [vmem:[#allocation2 + $0x24a] sm:$0xff]
    %v3070 = vld [vmem:[#allocation2 + $0x25a] sm:$0xff]
    %v3071 = vld [vmem:[#allocation2 + $0x262] sm:$0xff]
    %v3072 = vld [vmem:[#allocation2 + $0x272] sm:$0xff]
    %v3073 = vld [vmem:[#allocation2 + $0x27a] sm:$0xff]
    %v3074 = vld [vmem:[#allocation2 + $0x28a] sm:$0xff]
    %v3075 = vld [vmem:[#allocation2 + $0x292] sm:$0xff]
    %v3076 = vld [vmem:[#allocation2 + $0x2a2] sm:$0xff]
    %v3077 = vld [vmem:[#allocation2 + $0x2aa] sm:$0xff]
    %v3078 = vld [vmem:[#allocation2 + $0x2ba] sm:$0xff]
    %v3079 = vld [vmem:[#allocation2 + $0x2c2] sm:$0xff]
    %v3080 = vld [vmem:[#allocation2 + $0x2d2] sm:$0xff]
    %v3081 = vld [vmem:[#allocation2 + $0x2da] sm:$0xff]
    %v3082 = vld [vmem:[#allocation2 + $0x2ea] sm:$0xff]
    %v3083 = vld [vmem:[#allocation2 + $0x2f2] sm:$0xff]
    %v3084 = vld [vmem:[#allocation2 + $0x302] sm:$0xff]
    %v3085 = vld [vmem:[#allocation2 + $0x30a] sm:$0xff]
    %v3086 = vld [vmem:[#allocation2 + $0x31a] sm:$0xff]
    %v3087 = vld [vmem:[#allocation2 + $0x322] sm:$0xff]
    %v3088 = vpack.c.bf16 %v3025, %v3024
    %v3089 = vpack.c.bf16 %v3027, %v3026
    %v3090 = vpack.c.bf16 %v3029, %v3028
    %v3091 = vpack.c.bf16 %v3031, %v3030
    %v3092 = vpack.c.bf16 %v3033, %v3032
    %v3093 = vpack.c.bf16 %v3035, %v3034
    %v3094 = vpack.c.bf16 %v3037, %v3036
    %v3095 = vpack.c.bf16 %v3039, %v3038
    %v3096 = vpack.c.bf16 %v3041, %v3040
    %v3097 = vpack.c.bf16 %v3043, %v3042
    %v3098 = vpack.c.bf16 %v3045, %v3044
    %v3099 = vpack.c.bf16 %v3047, %v3046
    %v3100 = vpack.c.bf16 %v3049, %v3048
    %v3101 = vpack.c.bf16 %v3051, %v3050
    %v3102 = vpack.c.bf16 %v3053, %v3052
    %v3103 = vpack.c.bf16 %v3055, %v3054
    %v3104 = vpack.c.bf16 %v3057, %v3056
    %v3105 = vpack.c.bf16 %v3059, %v3058
    %v3106 = vpack.c.bf16 %v3061, %v3060
    %v3107 = vpack.c.bf16 %v3063, %v3062
    %v3108 = vpack.c.bf16 %v3065, %v3064
    %v3109 = vpack.c.bf16 %v3067, %v3066
    %v3110 = vpack.c.bf16 %v3069, %v3068
    %v3111 = vpack.c.bf16 %v3071, %v3070
    %v3112 = vpack.c.bf16 %v3073, %v3072
    %v3113 = vpack.c.bf16 %v3075, %v3074
    %v3114 = vpack.c.bf16 %v3077, %v3076
    %v3115 = vpack.c.bf16 %v3079, %v3078
    %v3116 = vpack.c.bf16 %v3081, %v3080
    %v3117 = vpack.c.bf16 %v3083, %v3082
    %v3118 = vpack.c.bf16 %v3085, %v3084
    %v3119 = vpack.c.bf16 %v3087, %v3086
    %s3120 = scalar_lea.vmem [#allocation9], 128
    %v3121 = vld [vmem:[%s3120] sm:$0xf]
    %v3122 = vld [vmem:[%s3120 + $0x4] sm:$0xf]
    %v3123 = vld [vmem:[%s3120 + $0x8] sm:$0xf]
    %v3124 = vld [vmem:[%s3120 + $0xc] sm:$0xf]
    %v3125 = vld [vmem:[%s3120 + $0x10] sm:$0xf]
    %v3126 = vld [vmem:[%s3120 + $0x14] sm:$0xf]
    %v3127 = vld [vmem:[%s3120 + $0x18] sm:$0xf]
    %v3128 = vld [vmem:[%s3120 + $0x1c] sm:$0xf]
    %v3129 = vld [vmem:[%s3120 + $0x20] sm:$0xf]
    %v3130 = vld [vmem:[%s3120 + $0x24] sm:$0xf]
    %v3131 = vld [vmem:[%s3120 + $0x28] sm:$0xf]
    %v3132 = vld [vmem:[%s3120 + $0x2c] sm:$0xf]
    %v3133 = vld [vmem:[%s3120 + $0x30] sm:$0xf]
    %v3134 = vld [vmem:[%s3120 + $0x34] sm:$0xf]
    %v3135 = vld [vmem:[%s3120 + $0x38] sm:$0xf]
    %v3136 = vld [vmem:[%s3120 + $0x3c] sm:$0xf]
    %v3153 = vunpack.c.l.b16 %v3121
    %v3154 = vunpack.c.l.b16 %v3122
    %v3155 = vunpack.c.l.b16 %v3123
    %v3156 = vunpack.c.l.b16 %v3124
    %v3157 = vunpack.c.l.b16 %v3125
    %v3158 = vunpack.c.l.b16 %v3126
    %v3159 = vunpack.c.l.b16 %v3127
    %v3160 = vunpack.c.l.b16 %v3128
    %v3161 = vunpack.c.l.b16 %v3129
    %v3162 = vunpack.c.l.b16 %v3130
    %v3163 = vunpack.c.l.b16 %v3131
    %v3164 = vunpack.c.l.b16 %v3132
    %v3165 = vunpack.c.l.b16 %v3133
    %v3166 = vunpack.c.l.b16 %v3134
    %v3167 = vunpack.c.l.b16 %v3135
    %v3168 = vunpack.c.l.b16 %v3136
    %v3169 = vpack.c.b16 %v3154, %v3153
    %v3170 = vpack.c.b16 %v3156, %v3155
    %v3171 = vpack.c.b16 %v3158, %v3157
    %v3172 = vpack.c.b16 %v3160, %v3159
    %v3173 = vpack.c.b16 %v3162, %v3161
    %v3174 = vpack.c.b16 %v3164, %v3163
    %v3175 = vpack.c.b16 %v3166, %v3165
    %v3176 = vpack.c.b16 %v3168, %v3167
    %3185 = vmatpush.bf16.msra.mxu0 %v3176
    %3186 = vmatpush.bf16.msra.mxu0 %v3175
    %3187 = vmatpush.bf16.msra.mxu0 %v3174
    %3188 = vmatpush.bf16.msra.mxu0 %v3173
    %3189 = vmatpush.bf16.msra.mxu0 %v3172
    %3190 = vmatpush.bf16.msra.mxu0 %v3171
    %3191 = vmatpush.bf16.msra.mxu0 %v3170
    %3192 = vmatpush.bf16.msra.mxu0 %v3169
    %3193 = vmatmul.bf16.gmra.mxu0 %v3088
    %v3194 = vpop.f32.mrf.mxu0
    %v3195 = vadd.f32 0.0, %v3194
    %v3196 = vpop.f32.mrf.mxu0
    %v3197 = vadd.f32 0.0, %v3196
    %3198 = vmatmul.bf16.gmra.mxu0 %v3089
    %v3199 = vpop.f32.mrf.mxu0
    %v3200 = vadd.f32 0.0, %v3199
    %v3201 = vpop.f32.mrf.mxu0
    %v3202 = vadd.f32 0.0, %v3201
    %3203 = vmatmul.bf16.gmra.mxu0 %v3090
    %v3204 = vpop.f32.mrf.mxu0
    %v3205 = vadd.f32 0.0, %v3204
    %v3206 = vpop.f32.mrf.mxu0
    %v3207 = vadd.f32 0.0, %v3206
    %3208 = vmatmul.bf16.gmra.mxu0 %v3091
    %v3209 = vpop.f32.mrf.mxu0
    %v3210 = vadd.f32 0.0, %v3209
    %v3211 = vpop.f32.mrf.mxu0
    %v3212 = vadd.f32 0.0, %v3211
    %3213 = vmatmul.bf16.gmra.mxu0 %v3092
    %v3214 = vpop.f32.mrf.mxu0
    %v3215 = vadd.f32 0.0, %v3214
    %v3216 = vpop.f32.mrf.mxu0
    %v3217 = vadd.f32 0.0, %v3216
    %3218 = vmatmul.bf16.gmra.mxu0 %v3093
    %v3219 = vpop.f32.mrf.mxu0
    %v3220 = vadd.f32 0.0, %v3219
    %v3221 = vpop.f32.mrf.mxu0
    %v3222 = vadd.f32 0.0, %v3221
    %3223 = vmatmul.bf16.gmra.mxu0 %v3094
    %v3224 = vpop.f32.mrf.mxu0
    %v3225 = vadd.f32 0.0, %v3224
    %v3226 = vpop.f32.mrf.mxu0
    %v3227 = vadd.f32 0.0, %v3226
    %3228 = vmatmul.bf16.gmra.mxu0 %v3095
    %v3229 = vpop.f32.mrf.mxu0
    %v3230 = vadd.f32 0.0, %v3229
    %v3231 = vpop.f32.mrf.mxu0
    %v3232 = vadd.f32 0.0, %v3231
    %3233 = vmatmul.bf16.gmra.mxu0 %v3096
    %v3234 = vpop.f32.mrf.mxu0
    %v3235 = vadd.f32 0.0, %v3234
    %v3236 = vpop.f32.mrf.mxu0
    %v3237 = vadd.f32 0.0, %v3236
    %3238 = vmatmul.bf16.gmra.mxu0 %v3097
    %v3239 = vpop.f32.mrf.mxu0
    %v3240 = vadd.f32 0.0, %v3239
    %v3241 = vpop.f32.mrf.mxu0
    %v3242 = vadd.f32 0.0, %v3241
    %3243 = vmatmul.bf16.gmra.mxu0 %v3098
    %v3244 = vpop.f32.mrf.mxu0
    %v3245 = vadd.f32 0.0, %v3244
    %v3246 = vpop.f32.mrf.mxu0
    %v3247 = vadd.f32 0.0, %v3246
    %3248 = vmatmul.bf16.gmra.mxu0 %v3099
    %v3249 = vpop.f32.mrf.mxu0
    %v3250 = vadd.f32 0.0, %v3249
    %v3251 = vpop.f32.mrf.mxu0
    %v3252 = vadd.f32 0.0, %v3251
    %3253 = vmatmul.bf16.gmra.mxu0 %v3100
    %v3254 = vpop.f32.mrf.mxu0
    %v3255 = vadd.f32 0.0, %v3254
    %v3256 = vpop.f32.mrf.mxu0
    %v3257 = vadd.f32 0.0, %v3256
    %3258 = vmatmul.bf16.gmra.mxu0 %v3101
    %v3259 = vpop.f32.mrf.mxu0
    %v3260 = vadd.f32 0.0, %v3259
    %v3261 = vpop.f32.mrf.mxu0
    %v3262 = vadd.f32 0.0, %v3261
    %3263 = vmatmul.bf16.gmra.mxu0 %v3102
    %v3264 = vpop.f32.mrf.mxu0
    %v3265 = vadd.f32 0.0, %v3264
    %v3266 = vpop.f32.mrf.mxu0
    %v3267 = vadd.f32 0.0, %v3266
    %3268 = vmatmul.bf16.gmra.mxu0 %v3103
    %v3269 = vpop.f32.mrf.mxu0
    %v3270 = vadd.f32 0.0, %v3269
    %v3271 = vpop.f32.mrf.mxu0
    %v3272 = vadd.f32 0.0, %v3271
    %3273 = vmatmul.bf16.gmra.mxu0 %v3104
    %v3274 = vpop.f32.mrf.mxu0
    %v3275 = vadd.f32 0.0, %v3274
    %v3276 = vpop.f32.mrf.mxu0
    %v3277 = vadd.f32 0.0, %v3276
    %3278 = vmatmul.bf16.gmra.mxu0 %v3105
    %v3279 = vpop.f32.mrf.mxu0
    %v3280 = vadd.f32 0.0, %v3279
    %v3281 = vpop.f32.mrf.mxu0
    %v3282 = vadd.f32 0.0, %v3281
    %3283 = vmatmul.bf16.gmra.mxu0 %v3106
    %v3284 = vpop.f32.mrf.mxu0
    %v3285 = vadd.f32 0.0, %v3284
    %v3286 = vpop.f32.mrf.mxu0
    %v3287 = vadd.f32 0.0, %v3286
    %3288 = vmatmul.bf16.gmra.mxu0 %v3107
    %v3289 = vpop.f32.mrf.mxu0
    %v3290 = vadd.f32 0.0, %v3289
    %v3291 = vpop.f32.mrf.mxu0
    %v3292 = vadd.f32 0.0, %v3291
    %3293 = vmatmul.bf16.gmra.mxu0 %v3108
    %v3294 = vpop.f32.mrf.mxu0
    %v3295 = vadd.f32 0.0, %v3294
    %v3296 = vpop.f32.mrf.mxu0
    %v3297 = vadd.f32 0.0, %v3296
    %3298 = vmatmul.bf16.gmra.mxu0 %v3109
    %v3299 = vpop.f32.mrf.mxu0
    %v3300 = vadd.f32 0.0, %v3299
    %v3301 = vpop.f32.mrf.mxu0
    %v3302 = vadd.f32 0.0, %v3301
    %3303 = vmatmul.bf16.gmra.mxu0 %v3110
    %v3304 = vpop.f32.mrf.mxu0
    %v3305 = vadd.f32 0.0, %v3304
    %v3306 = vpop.f32.mrf.mxu0
    %v3307 = vadd.f32 0.0, %v3306
    %3308 = vmatmul.bf16.gmra.mxu0 %v3111
    %v3309 = vpop.f32.mrf.mxu0
    %v3310 = vadd.f32 0.0, %v3309
    %v3311 = vpop.f32.mrf.mxu0
    %v3312 = vadd.f32 0.0, %v3311
    %3313 = vmatmul.bf16.gmra.mxu0 %v3112
    %v3314 = vpop.f32.mrf.mxu0
    %v3315 = vadd.f32 0.0, %v3314
    %v3316 = vpop.f32.mrf.mxu0
    %v3317 = vadd.f32 0.0, %v3316
    %3318 = vmatmul.bf16.gmra.mxu0 %v3113
    %v3319 = vpop.f32.mrf.mxu0
    %v3320 = vadd.f32 0.0, %v3319
    %v3321 = vpop.f32.mrf.mxu0
    %v3322 = vadd.f32 0.0, %v3321
    %3323 = vmatmul.bf16.gmra.mxu0 %v3114
    %v3324 = vpop.f32.mrf.mxu0
    %v3325 = vadd.f32 0.0, %v3324
    %v3326 = vpop.f32.mrf.mxu0
    %v3327 = vadd.f32 0.0, %v3326
    %3328 = vmatmul.bf16.gmra.mxu0 %v3115
    %v3329 = vpop.f32.mrf.mxu0
    %v3330 = vadd.f32 0.0, %v3329
    %v3331 = vpop.f32.mrf.mxu0
    %v3332 = vadd.f32 0.0, %v3331
    %3333 = vmatmul.bf16.gmra.mxu0 %v3116
    %v3334 = vpop.f32.mrf.mxu0
    %v3335 = vadd.f32 0.0, %v3334
    %v3336 = vpop.f32.mrf.mxu0
    %v3337 = vadd.f32 0.0, %v3336
    %3338 = vmatmul.bf16.gmra.mxu0 %v3117
    %v3339 = vpop.f32.mrf.mxu0
    %v3340 = vadd.f32 0.0, %v3339
    %v3341 = vpop.f32.mrf.mxu0
    %v3342 = vadd.f32 0.0, %v3341
    %3343 = vmatmul.bf16.gmra.mxu0 %v3118
    %v3344 = vpop.f32.mrf.mxu0
    %v3345 = vadd.f32 0.0, %v3344
    %v3346 = vpop.f32.mrf.mxu0
    %v3347 = vadd.f32 0.0, %v3346
    %3348 = vmatmul.bf16.gmra.mxu0 %v3119
    %v3349 = vpop.f32.mrf.mxu0
    %v3350 = vadd.f32 0.0, %v3349
    %v3351 = vpop.f32.mrf.mxu0
    %v3352 = vadd.f32 0.0, %v3351
    %3353 = vdwg.mxu0
    %v3354 = vadd.f32 %v2865, %v3195
    %v3355 = vadd.f32 %v2867, %v3197
    %v3356 = vadd.f32 %v2870, %v3200
    %v3357 = vadd.f32 %v2872, %v3202
    %v3358 = vadd.f32 %v2875, %v3205
    %v3359 = vadd.f32 %v2877, %v3207
    %v3360 = vadd.f32 %v2880, %v3210
    %v3361 = vadd.f32 %v2882, %v3212
    %v3362 = vadd.f32 %v2885, %v3215
    %v3363 = vadd.f32 %v2887, %v3217
    %v3364 = vadd.f32 %v2890, %v3220
    %v3365 = vadd.f32 %v2892, %v3222
    %v3366 = vadd.f32 %v2895, %v3225
    %v3367 = vadd.f32 %v2897, %v3227
    %v3368 = vadd.f32 %v2900, %v3230
    %v3369 = vadd.f32 %v2902, %v3232
    %v3370 = vadd.f32 %v2905, %v3235
    %v3371 = vadd.f32 %v2907, %v3237
    %v3372 = vadd.f32 %v2910, %v3240
    %v3373 = vadd.f32 %v2912, %v3242
    %v3374 = vadd.f32 %v2915, %v3245
    %v3375 = vadd.f32 %v2917, %v3247
    %v3376 = vadd.f32 %v2920, %v3250
    %v3377 = vadd.f32 %v2922, %v3252
    %v3378 = vadd.f32 %v2925, %v3255
    %v3379 = vadd.f32 %v2927, %v3257
    %v3380 = vadd.f32 %v2930, %v3260
    %v3381 = vadd.f32 %v2932, %v3262
    %v3382 = vadd.f32 %v2935, %v3265
    %v3383 = vadd.f32 %v2937, %v3267
    %v3384 = vadd.f32 %v2940, %v3270
    %v3385 = vadd.f32 %v2942, %v3272
    %v3386 = vadd.f32 %v2945, %v3275
    %v3387 = vadd.f32 %v2947, %v3277
    %v3388 = vadd.f32 %v2950, %v3280
    %v3389 = vadd.f32 %v2952, %v3282
    %v3390 = vadd.f32 %v2955, %v3285
    %v3391 = vadd.f32 %v2957, %v3287
    %v3392 = vadd.f32 %v2960, %v3290
    %v3393 = vadd.f32 %v2962, %v3292
    %v3394 = vadd.f32 %v2965, %v3295
    %v3395 = vadd.f32 %v2967, %v3297
    %v3396 = vadd.f32 %v2970, %v3300
    %v3397 = vadd.f32 %v2972, %v3302
    %v3398 = vadd.f32 %v2975, %v3305
    %v3399 = vadd.f32 %v2977, %v3307
    %v3400 = vadd.f32 %v2980, %v3310
    %v3401 = vadd.f32 %v2982, %v3312
    %v3402 = vadd.f32 %v2985, %v3315
    %v3403 = vadd.f32 %v2987, %v3317
    %v3404 = vadd.f32 %v2990, %v3320
    %v3405 = vadd.f32 %v2992, %v3322
    %v3406 = vadd.f32 %v2995, %v3325
    %v3407 = vadd.f32 %v2997, %v3327
    %v3408 = vadd.f32 %v3000, %v3330
    %v3409 = vadd.f32 %v3002, %v3332
    %v3410 = vadd.f32 %v3005, %v3335
    %v3411 = vadd.f32 %v3007, %v3337
    %v3412 = vadd.f32 %v3010, %v3340
    %v3413 = vadd.f32 %v3012, %v3342
    %v3414 = vadd.f32 %v3015, %v3345
    %v3415 = vadd.f32 %v3017, %v3347
    %v3416 = vadd.f32 %v3020, %v3350
    %v3417 = vadd.f32 %v3022, %v3352
    %v3418 = vld [vmem:[%s289] sm:$0xff]
    %v3419 = vld [vmem:[%s289 + $0x8] sm:$0xff]
    %v3420 = vld [vmem:[%s289 + $0x18] sm:$0xff]
    %v3421 = vld [vmem:[%s289 + $0x20] sm:$0xff]
    %v3422 = vld [vmem:[%s289 + $0x30] sm:$0xff]
    %v3423 = vld [vmem:[%s289 + $0x38] sm:$0xff]
    %v3424 = vld [vmem:[%s289 + $0x48] sm:$0xff]
    %v3425 = vld [vmem:[%s289 + $0x50] sm:$0xff]
    %v3426 = vld [vmem:[%s289 + $0x60] sm:$0xff]
    %v3427 = vld [vmem:[%s289 + $0x68] sm:$0xff]
    %v3428 = vld [vmem:[%s289 + $0x78] sm:$0xff]
    %v3429 = vld [vmem:[%s289 + $0x80] sm:$0xff]
    %v3430 = vld [vmem:[%s289 + $0x90] sm:$0xff]
    %v3431 = vld [vmem:[%s289 + $0x98] sm:$0xff]
    %v3432 = vld [vmem:[%s289 + $0xa8] sm:$0xff]
    %v3433 = vld [vmem:[%s289 + $0xb0] sm:$0xff]
    %v3434 = vld [vmem:[%s289 + $0xc0] sm:$0xff]
    %v3435 = vld [vmem:[%s289 + $0xc8] sm:$0xff]
    %v3436 = vld [vmem:[%s289 + $0xd8] sm:$0xff]
    %v3437 = vld [vmem:[%s289 + $0xe0] sm:$0xff]
    %v3438 = vld [vmem:[%s289 + $0xf0] sm:$0xff]
    %v3439 = vld [vmem:[%s289 + $0xf8] sm:$0xff]
    %v3440 = vld [vmem:[%s289 + $0x108] sm:$0xff]
    %v3441 = vld [vmem:[%s289 + $0x110] sm:$0xff]
    %v3442 = vld [vmem:[%s289 + $0x120] sm:$0xff]
    %v3443 = vld [vmem:[%s289 + $0x128] sm:$0xff]
    %v3444 = vld [vmem:[%s289 + $0x138] sm:$0xff]
    %v3445 = vld [vmem:[%s289 + $0x140] sm:$0xff]
    %v3446 = vld [vmem:[%s289 + $0x150] sm:$0xff]
    %v3447 = vld [vmem:[%s289 + $0x158] sm:$0xff]
    %v3448 = vld [vmem:[%s289 + $0x168] sm:$0xff]
    %v3449 = vld [vmem:[%s289 + $0x170] sm:$0xff]
    %v3450 = vld [vmem:[%s289 + $0x1b0] sm:$0xff]
    %v3451 = vld [vmem:[%s289 + $0x1b8] sm:$0xff]
    %v3452 = vld [vmem:[%s289 + $0x1c8] sm:$0xff]
    %v3453 = vld [vmem:[%s289 + $0x1d0] sm:$0xff]
    %v3454 = vld [vmem:[%s289 + $0x1e0] sm:$0xff]
    %v3455 = vld [vmem:[%s289 + $0x1e8] sm:$0xff]
    %v3456 = vld [vmem:[%s289 + $0x1f8] sm:$0xff]
    %v3457 = vld [vmem:[%s289 + $0x200] sm:$0xff]
    %v3458 = vld [vmem:[%s289 + $0x210] sm:$0xff]
    %v3459 = vld [vmem:[%s289 + $0x218] sm:$0xff]
    %v3460 = vld [vmem:[%s289 + $0x228] sm:$0xff]
    %v3461 = vld [vmem:[%s289 + $0x230] sm:$0xff]
    %v3462 = vld [vmem:[%s289 + $0x240] sm:$0xff]
    %v3463 = vld [vmem:[%s289 + $0x248] sm:$0xff]
    %v3464 = vld [vmem:[%s289 + $0x258] sm:$0xff]
    %v3465 = vld [vmem:[%s289 + $0x260] sm:$0xff]
    %v3466 = vld [vmem:[%s289 + $0x270] sm:$0xff]
    %v3467 = vld [vmem:[%s289 + $0x278] sm:$0xff]
    %v3468 = vld [vmem:[%s289 + $0x288] sm:$0xff]
    %v3469 = vld [vmem:[%s289 + $0x290] sm:$0xff]
    %v3470 = vld [vmem:[%s289 + $0x2a0] sm:$0xff]
    %v3471 = vld [vmem:[%s289 + $0x2a8] sm:$0xff]
    %v3472 = vld [vmem:[%s289 + $0x2b8] sm:$0xff]
    %v3473 = vld [vmem:[%s289 + $0x2c0] sm:$0xff]
    %v3474 = vld [vmem:[%s289 + $0x2d0] sm:$0xff]
    %v3475 = vld [vmem:[%s289 + $0x2d8] sm:$0xff]
    %v3476 = vld [vmem:[%s289 + $0x2e8] sm:$0xff]
    %v3477 = vld [vmem:[%s289 + $0x2f0] sm:$0xff]
    %v3478 = vld [vmem:[%s289 + $0x300] sm:$0xff]
    %v3479 = vld [vmem:[%s289 + $0x308] sm:$0xff]
    %v3480 = vld [vmem:[%s289 + $0x318] sm:$0xff]
    %v3481 = vld [vmem:[%s289 + $0x320] sm:$0xff]
    %v3482 = vpack.c.bf16 %v3419, %v3418
    %v3483 = vpack.c.bf16 %v3421, %v3420
    %v3484 = vpack.c.bf16 %v3423, %v3422
    %v3485 = vpack.c.bf16 %v3425, %v3424
    %v3486 = vpack.c.bf16 %v3427, %v3426
    %v3487 = vpack.c.bf16 %v3429, %v3428
    %v3488 = vpack.c.bf16 %v3431, %v3430
    %v3489 = vpack.c.bf16 %v3433, %v3432
    %v3490 = vpack.c.bf16 %v3435, %v3434
    %v3491 = vpack.c.bf16 %v3437, %v3436
    %v3492 = vpack.c.bf16 %v3439, %v3438
    %v3493 = vpack.c.bf16 %v3441, %v3440
    %v3494 = vpack.c.bf16 %v3443, %v3442
    %v3495 = vpack.c.bf16 %v3445, %v3444
    %v3496 = vpack.c.bf16 %v3447, %v3446
    %v3497 = vpack.c.bf16 %v3449, %v3448
    %v3498 = vpack.c.bf16 %v3451, %v3450
    %v3499 = vpack.c.bf16 %v3453, %v3452
    %v3500 = vpack.c.bf16 %v3455, %v3454
    %v3501 = vpack.c.bf16 %v3457, %v3456
    %v3502 = vpack.c.bf16 %v3459, %v3458
    %v3503 = vpack.c.bf16 %v3461, %v3460
    %v3504 = vpack.c.bf16 %v3463, %v3462
    %v3505 = vpack.c.bf16 %v3465, %v3464
    %v3506 = vpack.c.bf16 %v3467, %v3466
    %v3507 = vpack.c.bf16 %v3469, %v3468
    %v3508 = vpack.c.bf16 %v3471, %v3470
    %v3509 = vpack.c.bf16 %v3473, %v3472
    %v3510 = vpack.c.bf16 %v3475, %v3474
    %v3511 = vpack.c.bf16 %v3477, %v3476
    %v3512 = vpack.c.bf16 %v3479, %v3478
    %v3513 = vpack.c.bf16 %v3481, %v3480
    %s3514 = scalar_lea.vmem [#allocation9], 192
    %v3515 = vld [vmem:[%s3514] sm:$0xf]
    %v3516 = vld [vmem:[%s3514 + $0x4] sm:$0xf]
    %v3517 = vld [vmem:[%s3514 + $0x8] sm:$0xf]
    %v3518 = vld [vmem:[%s3514 + $0xc] sm:$0xf]
    %v3519 = vld [vmem:[%s3514 + $0x10] sm:$0xf]
    %v3520 = vld [vmem:[%s3514 + $0x14] sm:$0xf]
    %v3521 = vld [vmem:[%s3514 + $0x18] sm:$0xf]
    %v3522 = vld [vmem:[%s3514 + $0x1c] sm:$0xf]
    %v3523 = vld [vmem:[%s3514 + $0x20] sm:$0xf]
    %v3524 = vld [vmem:[%s3514 + $0x24] sm:$0xf]
    %v3525 = vld [vmem:[%s3514 + $0x28] sm:$0xf]
    %v3526 = vld [vmem:[%s3514 + $0x2c] sm:$0xf]
    %v3527 = vld [vmem:[%s3514 + $0x30] sm:$0xf]
    %v3528 = vld [vmem:[%s3514 + $0x34] sm:$0xf]
    %v3529 = vld [vmem:[%s3514 + $0x38] sm:$0xf]
    %v3530 = vld [vmem:[%s3514 + $0x3c] sm:$0xf]
    %v3547 = vunpack.c.l.b16 %v3515
    %v3548 = vunpack.c.l.b16 %v3516
    %v3549 = vunpack.c.l.b16 %v3517
    %v3550 = vunpack.c.l.b16 %v3518
    %v3551 = vunpack.c.l.b16 %v3519
    %v3552 = vunpack.c.l.b16 %v3520
    %v3553 = vunpack.c.l.b16 %v3521
    %v3554 = vunpack.c.l.b16 %v3522
    %v3555 = vunpack.c.l.b16 %v3523
    %v3556 = vunpack.c.l.b16 %v3524
    %v3557 = vunpack.c.l.b16 %v3525
    %v3558 = vunpack.c.l.b16 %v3526
    %v3559 = vunpack.c.l.b16 %v3527
    %v3560 = vunpack.c.l.b16 %v3528
    %v3561 = vunpack.c.l.b16 %v3529
    %v3562 = vunpack.c.l.b16 %v3530
    %v3563 = vpack.c.b16 %v3548, %v3547
    %v3564 = vpack.c.b16 %v3550, %v3549
    %v3565 = vpack.c.b16 %v3552, %v3551
    %v3566 = vpack.c.b16 %v3554, %v3553
    %v3567 = vpack.c.b16 %v3556, %v3555
    %v3568 = vpack.c.b16 %v3558, %v3557
    %v3569 = vpack.c.b16 %v3560, %v3559
    %v3570 = vpack.c.b16 %v3562, %v3561
    %3579 = vmatpush.bf16.msra.mxu0 %v3570
    %3580 = vmatpush.bf16.msra.mxu0 %v3569
    %3581 = vmatpush.bf16.msra.mxu0 %v3568
    %3582 = vmatpush.bf16.msra.mxu0 %v3567
    %3583 = vmatpush.bf16.msra.mxu0 %v3566
    %3584 = vmatpush.bf16.msra.mxu0 %v3565
    %3585 = vmatpush.bf16.msra.mxu0 %v3564
    %3586 = vmatpush.bf16.msra.mxu0 %v3563
    %3587 = vmatmul.bf16.gmra.mxu0 %v3482
    %v3588 = vpop.f32.mrf.mxu0
    %v3589 = vadd.f32 0.0, %v3588
    %v3590 = vpop.f32.mrf.mxu0
    %v3591 = vadd.f32 0.0, %v3590
    %3592 = vmatmul.bf16.gmra.mxu0 %v3483
    %v3593 = vpop.f32.mrf.mxu0
    %v3594 = vadd.f32 0.0, %v3593
    %v3595 = vpop.f32.mrf.mxu0
    %v3596 = vadd.f32 0.0, %v3595
    %3597 = vmatmul.bf16.gmra.mxu0 %v3484
    %v3598 = vpop.f32.mrf.mxu0
    %v3599 = vadd.f32 0.0, %v3598
    %v3600 = vpop.f32.mrf.mxu0
    %v3601 = vadd.f32 0.0, %v3600
    %3602 = vmatmul.bf16.gmra.mxu0 %v3485
    %v3603 = vpop.f32.mrf.mxu0
    %v3604 = vadd.f32 0.0, %v3603
    %v3605 = vpop.f32.mrf.mxu0
    %v3606 = vadd.f32 0.0, %v3605
    %3607 = vmatmul.bf16.gmra.mxu0 %v3486
    %v3608 = vpop.f32.mrf.mxu0
    %v3609 = vadd.f32 0.0, %v3608
    %v3610 = vpop.f32.mrf.mxu0
    %v3611 = vadd.f32 0.0, %v3610
    %3612 = vmatmul.bf16.gmra.mxu0 %v3487
    %v3613 = vpop.f32.mrf.mxu0
    %v3614 = vadd.f32 0.0, %v3613
    %v3615 = vpop.f32.mrf.mxu0
    %v3616 = vadd.f32 0.0, %v3615
    %3617 = vmatmul.bf16.gmra.mxu0 %v3488
    %v3618 = vpop.f32.mrf.mxu0
    %v3619 = vadd.f32 0.0, %v3618
    %v3620 = vpop.f32.mrf.mxu0
    %v3621 = vadd.f32 0.0, %v3620
    %3622 = vmatmul.bf16.gmra.mxu0 %v3489
    %v3623 = vpop.f32.mrf.mxu0
    %v3624 = vadd.f32 0.0, %v3623
    %v3625 = vpop.f32.mrf.mxu0
    %v3626 = vadd.f32 0.0, %v3625
    %3627 = vmatmul.bf16.gmra.mxu0 %v3490
    %v3628 = vpop.f32.mrf.mxu0
    %v3629 = vadd.f32 0.0, %v3628
    %v3630 = vpop.f32.mrf.mxu0
    %v3631 = vadd.f32 0.0, %v3630
    %3632 = vmatmul.bf16.gmra.mxu0 %v3491
    %v3633 = vpop.f32.mrf.mxu0
    %v3634 = vadd.f32 0.0, %v3633
    %v3635 = vpop.f32.mrf.mxu0
    %v3636 = vadd.f32 0.0, %v3635
    %3637 = vmatmul.bf16.gmra.mxu0 %v3492
    %v3638 = vpop.f32.mrf.mxu0
    %v3639 = vadd.f32 0.0, %v3638
    %v3640 = vpop.f32.mrf.mxu0
    %v3641 = vadd.f32 0.0, %v3640
    %3642 = vmatmul.bf16.gmra.mxu0 %v3493
    %v3643 = vpop.f32.mrf.mxu0
    %v3644 = vadd.f32 0.0, %v3643
    %v3645 = vpop.f32.mrf.mxu0
    %v3646 = vadd.f32 0.0, %v3645
    %3647 = vmatmul.bf16.gmra.mxu0 %v3494
    %v3648 = vpop.f32.mrf.mxu0
    %v3649 = vadd.f32 0.0, %v3648
    %v3650 = vpop.f32.mrf.mxu0
    %v3651 = vadd.f32 0.0, %v3650
    %3652 = vmatmul.bf16.gmra.mxu0 %v3495
    %v3653 = vpop.f32.mrf.mxu0
    %v3654 = vadd.f32 0.0, %v3653
    %v3655 = vpop.f32.mrf.mxu0
    %v3656 = vadd.f32 0.0, %v3655
    %3657 = vmatmul.bf16.gmra.mxu0 %v3496
    %v3658 = vpop.f32.mrf.mxu0
    %v3659 = vadd.f32 0.0, %v3658
    %v3660 = vpop.f32.mrf.mxu0
    %v3661 = vadd.f32 0.0, %v3660
    %3662 = vmatmul.bf16.gmra.mxu0 %v3497
    %v3663 = vpop.f32.mrf.mxu0
    %v3664 = vadd.f32 0.0, %v3663
    %v3665 = vpop.f32.mrf.mxu0
    %v3666 = vadd.f32 0.0, %v3665
    %3667 = vmatmul.bf16.gmra.mxu0 %v3498
    %v3668 = vpop.f32.mrf.mxu0
    %v3669 = vadd.f32 0.0, %v3668
    %v3670 = vpop.f32.mrf.mxu0
    %v3671 = vadd.f32 0.0, %v3670
    %3672 = vmatmul.bf16.gmra.mxu0 %v3499
    %v3673 = vpop.f32.mrf.mxu0
    %v3674 = vadd.f32 0.0, %v3673
    %v3675 = vpop.f32.mrf.mxu0
    %v3676 = vadd.f32 0.0, %v3675
    %3677 = vmatmul.bf16.gmra.mxu0 %v3500
    %v3678 = vpop.f32.mrf.mxu0
    %v3679 = vadd.f32 0.0, %v3678
    %v3680 = vpop.f32.mrf.mxu0
    %v3681 = vadd.f32 0.0, %v3680
    %3682 = vmatmul.bf16.gmra.mxu0 %v3501
    %v3683 = vpop.f32.mrf.mxu0
    %v3684 = vadd.f32 0.0, %v3683
    %v3685 = vpop.f32.mrf.mxu0
    %v3686 = vadd.f32 0.0, %v3685
    %3687 = vmatmul.bf16.gmra.mxu0 %v3502
    %v3688 = vpop.f32.mrf.mxu0
    %v3689 = vadd.f32 0.0, %v3688
    %v3690 = vpop.f32.mrf.mxu0
    %v3691 = vadd.f32 0.0, %v3690
    %3692 = vmatmul.bf16.gmra.mxu0 %v3503
    %v3693 = vpop.f32.mrf.mxu0
    %v3694 = vadd.f32 0.0, %v3693
    %v3695 = vpop.f32.mrf.mxu0
    %v3696 = vadd.f32 0.0, %v3695
    %3697 = vmatmul.bf16.gmra.mxu0 %v3504
    %v3698 = vpop.f32.mrf.mxu0
    %v3699 = vadd.f32 0.0, %v3698
    %v3700 = vpop.f32.mrf.mxu0
    %v3701 = vadd.f32 0.0, %v3700
    %3702 = vmatmul.bf16.gmra.mxu0 %v3505
    %v3703 = vpop.f32.mrf.mxu0
    %v3704 = vadd.f32 0.0, %v3703
    %v3705 = vpop.f32.mrf.mxu0
    %v3706 = vadd.f32 0.0, %v3705
    %3707 = vmatmul.bf16.gmra.mxu0 %v3506
    %v3708 = vpop.f32.mrf.mxu0
    %v3709 = vadd.f32 0.0, %v3708
    %v3710 = vpop.f32.mrf.mxu0
    %v3711 = vadd.f32 0.0, %v3710
    %3712 = vmatmul.bf16.gmra.mxu0 %v3507
    %v3713 = vpop.f32.mrf.mxu0
    %v3714 = vadd.f32 0.0, %v3713
    %v3715 = vpop.f32.mrf.mxu0
    %v3716 = vadd.f32 0.0, %v3715
    %3717 = vmatmul.bf16.gmra.mxu0 %v3508
    %v3718 = vpop.f32.mrf.mxu0
    %v3719 = vadd.f32 0.0, %v3718
    %v3720 = vpop.f32.mrf.mxu0
    %v3721 = vadd.f32 0.0, %v3720
    %3722 = vmatmul.bf16.gmra.mxu0 %v3509
    %v3723 = vpop.f32.mrf.mxu0
    %v3724 = vadd.f32 0.0, %v3723
    %v3725 = vpop.f32.mrf.mxu0
    %v3726 = vadd.f32 0.0, %v3725
    %3727 = vmatmul.bf16.gmra.mxu0 %v3510
    %v3728 = vpop.f32.mrf.mxu0
    %v3729 = vadd.f32 0.0, %v3728
    %v3730 = vpop.f32.mrf.mxu0
    %v3731 = vadd.f32 0.0, %v3730
    %3732 = vmatmul.bf16.gmra.mxu0 %v3511
    %v3733 = vpop.f32.mrf.mxu0
    %v3734 = vadd.f32 0.0, %v3733
    %v3735 = vpop.f32.mrf.mxu0
    %v3736 = vadd.f32 0.0, %v3735
    %3737 = vmatmul.bf16.gmra.mxu0 %v3512
    %v3738 = vpop.f32.mrf.mxu0
    %v3739 = vadd.f32 0.0, %v3738
    %v3740 = vpop.f32.mrf.mxu0
    %v3741 = vadd.f32 0.0, %v3740
    %3742 = vmatmul.bf16.gmra.mxu0 %v3513
    %v3743 = vpop.f32.mrf.mxu0
    %v3744 = vadd.f32 0.0, %v3743
    %v3745 = vpop.f32.mrf.mxu0
    %v3746 = vadd.f32 0.0, %v3745
    %3747 = vdwg.mxu0
    %v3748 = vadd.f32 %v3354, %v3589
    %v3749 = vadd.f32 %v3355, %v3591
    %v3750 = vadd.f32 %v3356, %v3594
    %v3751 = vadd.f32 %v3357, %v3596
    %v3752 = vadd.f32 %v3358, %v3599
    %v3753 = vadd.f32 %v3359, %v3601
    %v3754 = vadd.f32 %v3360, %v3604
    %v3755 = vadd.f32 %v3361, %v3606
    %v3756 = vadd.f32 %v3362, %v3609
    %v3757 = vadd.f32 %v3363, %v3611
    %v3758 = vadd.f32 %v3364, %v3614
    %v3759 = vadd.f32 %v3365, %v3616
    %v3760 = vadd.f32 %v3366, %v3619
    %v3761 = vadd.f32 %v3367, %v3621
    %v3762 = vadd.f32 %v3368, %v3624
    %v3763 = vadd.f32 %v3369, %v3626
    %v3764 = vadd.f32 %v3370, %v3629
    %v3765 = vadd.f32 %v3371, %v3631
    %v3766 = vadd.f32 %v3372, %v3634
    %v3767 = vadd.f32 %v3373, %v3636
    %v3768 = vadd.f32 %v3374, %v3639
    %v3769 = vadd.f32 %v3375, %v3641
    %v3770 = vadd.f32 %v3376, %v3644
    %v3771 = vadd.f32 %v3377, %v3646
    %v3772 = vadd.f32 %v3378, %v3649
    %v3773 = vadd.f32 %v3379, %v3651
    %v3774 = vadd.f32 %v3380, %v3654
    %v3775 = vadd.f32 %v3381, %v3656
    %v3776 = vadd.f32 %v3382, %v3659
    %v3777 = vadd.f32 %v3383, %v3661
    %v3778 = vadd.f32 %v3384, %v3664
    %v3779 = vadd.f32 %v3385, %v3666
    %v3780 = vadd.f32 %v3386, %v3669
    %v3781 = vadd.f32 %v3387, %v3671
    %v3782 = vadd.f32 %v3388, %v3674
    %v3783 = vadd.f32 %v3389, %v3676
    %v3784 = vadd.f32 %v3390, %v3679
    %v3785 = vadd.f32 %v3391, %v3681
    %v3786 = vadd.f32 %v3392, %v3684
    %v3787 = vadd.f32 %v3393, %v3686
    %v3788 = vadd.f32 %v3394, %v3689
    %v3789 = vadd.f32 %v3395, %v3691
    %v3790 = vadd.f32 %v3396, %v3694
    %v3791 = vadd.f32 %v3397, %v3696
    %v3792 = vadd.f32 %v3398, %v3699
    %v3793 = vadd.f32 %v3399, %v3701
    %v3794 = vadd.f32 %v3400, %v3704
    %v3795 = vadd.f32 %v3401, %v3706
    %v3796 = vadd.f32 %v3402, %v3709
    %v3797 = vadd.f32 %v3403, %v3711
    %v3798 = vadd.f32 %v3404, %v3714
    %v3799 = vadd.f32 %v3405, %v3716
    %v3800 = vadd.f32 %v3406, %v3719
    %v3801 = vadd.f32 %v3407, %v3721
    %v3802 = vadd.f32 %v3408, %v3724
    %v3803 = vadd.f32 %v3409, %v3726
    %v3804 = vadd.f32 %v3410, %v3729
    %v3805 = vadd.f32 %v3411, %v3731
    %v3806 = vadd.f32 %v3412, %v3734
    %v3807 = vadd.f32 %v3413, %v3736
    %v3808 = vadd.f32 %v3414, %v3739
    %v3809 = vadd.f32 %v3415, %v3741
    %v3810 = vadd.f32 %v3416, %v3744
    %v3811 = vadd.f32 %v3417, %v3746
    %v3812 = vld [vmem:[%s289 + $0x1] sm:$0xff]
    %v3813 = vld [vmem:[%s289 + $0x9] sm:$0xff]
    %v3814 = vld [vmem:[%s289 + $0x19] sm:$0xff]
    %v3815 = vld [vmem:[%s289 + $0x21] sm:$0xff]
    %v3816 = vld [vmem:[%s289 + $0x31] sm:$0xff]
    %v3817 = vld [vmem:[%s289 + $0x39] sm:$0xff]
    %v3818 = vld [vmem:[%s289 + $0x49] sm:$0xff]
    %v3819 = vld [vmem:[%s289 + $0x51] sm:$0xff]
    %v3820 = vld [vmem:[%s289 + $0x61] sm:$0xff]
    %v3821 = vld [vmem:[%s289 + $0x69] sm:$0xff]
    %v3822 = vld [vmem:[%s289 + $0x79] sm:$0xff]
    %v3823 = vld [vmem:[%s289 + $0x81] sm:$0xff]
    %v3824 = vld [vmem:[%s289 + $0x91] sm:$0xff]
    %v3825 = vld [vmem:[%s289 + $0x99] sm:$0xff]
    %v3826 = vld [vmem:[%s289 + $0xa9] sm:$0xff]
    %v3827 = vld [vmem:[%s289 + $0xb1] sm:$0xff]
    %v3828 = vld [vmem:[%s289 + $0xc1] sm:$0xff]
    %v3829 = vld [vmem:[%s289 + $0xc9] sm:$0xff]
    %v3830 = vld [vmem:[%s289 + $0xd9] sm:$0xff]
    %v3831 = vld [vmem:[%s289 + $0xe1] sm:$0xff]
    %v3832 = vld [vmem:[%s289 + $0xf1] sm:$0xff]
    %v3833 = vld [vmem:[%s289 + $0xf9] sm:$0xff]
    %v3834 = vld [vmem:[%s289 + $0x109] sm:$0xff]
    %v3835 = vld [vmem:[%s289 + $0x111] sm:$0xff]
    %v3836 = vld [vmem:[%s289 + $0x121] sm:$0xff]
    %v3837 = vld [vmem:[%s289 + $0x129] sm:$0xff]
    %v3838 = vld [vmem:[%s289 + $0x139] sm:$0xff]
    %v3839 = vld [vmem:[%s289 + $0x141] sm:$0xff]
    %v3840 = vld [vmem:[%s289 + $0x151] sm:$0xff]
    %v3841 = vld [vmem:[%s289 + $0x159] sm:$0xff]
    %v3842 = vld [vmem:[%s289 + $0x169] sm:$0xff]
    %v3843 = vld [vmem:[%s289 + $0x171] sm:$0xff]
    %v3844 = vld [vmem:[%s289 + $0x1b1] sm:$0xff]
    %v3845 = vld [vmem:[%s289 + $0x1b9] sm:$0xff]
    %v3846 = vld [vmem:[%s289 + $0x1c9] sm:$0xff]
    %v3847 = vld [vmem:[%s289 + $0x1d1] sm:$0xff]
    %v3848 = vld [vmem:[%s289 + $0x1e1] sm:$0xff]
    %v3849 = vld [vmem:[%s289 + $0x1e9] sm:$0xff]
    %v3850 = vld [vmem:[%s289 + $0x1f9] sm:$0xff]
    %v3851 = vld [vmem:[%s289 + $0x201] sm:$0xff]
    %v3852 = vld [vmem:[%s289 + $0x211] sm:$0xff]
    %v3853 = vld [vmem:[%s289 + $0x219] sm:$0xff]
    %v3854 = vld [vmem:[%s289 + $0x229] sm:$0xff]
    %v3855 = vld [vmem:[%s289 + $0x231] sm:$0xff]
    %v3856 = vld [vmem:[%s289 + $0x241] sm:$0xff]
    %v3857 = vld [vmem:[%s289 + $0x249] sm:$0xff]
    %v3858 = vld [vmem:[%s289 + $0x259] sm:$0xff]
    %v3859 = vld [vmem:[%s289 + $0x261] sm:$0xff]
    %v3860 = vld [vmem:[%s289 + $0x271] sm:$0xff]
    %v3861 = vld [vmem:[%s289 + $0x279] sm:$0xff]
    %v3862 = vld [vmem:[%s289 + $0x289] sm:$0xff]
    %v3863 = vld [vmem:[%s289 + $0x291] sm:$0xff]
    %v3864 = vld [vmem:[%s289 + $0x2a1] sm:$0xff]
    %v3865 = vld [vmem:[%s289 + $0x2a9] sm:$0xff]
    %v3866 = vld [vmem:[%s289 + $0x2b9] sm:$0xff]
    %v3867 = vld [vmem:[%s289 + $0x2c1] sm:$0xff]
    %v3868 = vld [vmem:[%s289 + $0x2d1] sm:$0xff]
    %v3869 = vld [vmem:[%s289 + $0x2d9] sm:$0xff]
    %v3870 = vld [vmem:[%s289 + $0x2e9] sm:$0xff]
    %v3871 = vld [vmem:[%s289 + $0x2f1] sm:$0xff]
    %v3872 = vld [vmem:[%s289 + $0x301] sm:$0xff]
    %v3873 = vld [vmem:[%s289 + $0x309] sm:$0xff]
    %v3874 = vld [vmem:[%s289 + $0x319] sm:$0xff]
    %v3875 = vld [vmem:[%s289 + $0x321] sm:$0xff]
    %v3876 = vpack.c.bf16 %v3813, %v3812
    %v3877 = vpack.c.bf16 %v3815, %v3814
    %v3878 = vpack.c.bf16 %v3817, %v3816
    %v3879 = vpack.c.bf16 %v3819, %v3818
    %v3880 = vpack.c.bf16 %v3821, %v3820
    %v3881 = vpack.c.bf16 %v3823, %v3822
    %v3882 = vpack.c.bf16 %v3825, %v3824
    %v3883 = vpack.c.bf16 %v3827, %v3826
    %v3884 = vpack.c.bf16 %v3829, %v3828
    %v3885 = vpack.c.bf16 %v3831, %v3830
    %v3886 = vpack.c.bf16 %v3833, %v3832
    %v3887 = vpack.c.bf16 %v3835, %v3834
    %v3888 = vpack.c.bf16 %v3837, %v3836
    %v3889 = vpack.c.bf16 %v3839, %v3838
    %v3890 = vpack.c.bf16 %v3841, %v3840
    %v3891 = vpack.c.bf16 %v3843, %v3842
    %v3892 = vpack.c.bf16 %v3845, %v3844
    %v3893 = vpack.c.bf16 %v3847, %v3846
    %v3894 = vpack.c.bf16 %v3849, %v3848
    %v3895 = vpack.c.bf16 %v3851, %v3850
    %v3896 = vpack.c.bf16 %v3853, %v3852
    %v3897 = vpack.c.bf16 %v3855, %v3854
    %v3898 = vpack.c.bf16 %v3857, %v3856
    %v3899 = vpack.c.bf16 %v3859, %v3858
    %v3900 = vpack.c.bf16 %v3861, %v3860
    %v3901 = vpack.c.bf16 %v3863, %v3862
    %v3902 = vpack.c.bf16 %v3865, %v3864
    %v3903 = vpack.c.bf16 %v3867, %v3866
    %v3904 = vpack.c.bf16 %v3869, %v3868
    %v3905 = vpack.c.bf16 %v3871, %v3870
    %v3906 = vpack.c.bf16 %v3873, %v3872
    %v3907 = vpack.c.bf16 %v3875, %v3874
    %s3908 = scalar_lea.vmem [#allocation9], 256
    %v3909 = vld [vmem:[%s3908] sm:$0xf]
    %v3910 = vld [vmem:[%s3908 + $0x4] sm:$0xf]
    %v3911 = vld [vmem:[%s3908 + $0x8] sm:$0xf]
    %v3912 = vld [vmem:[%s3908 + $0xc] sm:$0xf]
    %v3913 = vld [vmem:[%s3908 + $0x10] sm:$0xf]
    %v3914 = vld [vmem:[%s3908 + $0x14] sm:$0xf]
    %v3915 = vld [vmem:[%s3908 + $0x18] sm:$0xf]
    %v3916 = vld [vmem:[%s3908 + $0x1c] sm:$0xf]
    %v3917 = vld [vmem:[%s3908 + $0x20] sm:$0xf]
    %v3918 = vld [vmem:[%s3908 + $0x24] sm:$0xf]
    %v3919 = vld [vmem:[%s3908 + $0x28] sm:$0xf]
    %v3920 = vld [vmem:[%s3908 + $0x2c] sm:$0xf]
    %v3921 = vld [vmem:[%s3908 + $0x30] sm:$0xf]
    %v3922 = vld [vmem:[%s3908 + $0x34] sm:$0xf]
    %v3923 = vld [vmem:[%s3908 + $0x38] sm:$0xf]
    %v3924 = vld [vmem:[%s3908 + $0x3c] sm:$0xf]
    %v3941 = vunpack.c.l.b16 %v3909
    %v3942 = vunpack.c.l.b16 %v3910
    %v3943 = vunpack.c.l.b16 %v3911
    %v3944 = vunpack.c.l.b16 %v3912
    %v3945 = vunpack.c.l.b16 %v3913
    %v3946 = vunpack.c.l.b16 %v3914
    %v3947 = vunpack.c.l.b16 %v3915
    %v3948 = vunpack.c.l.b16 %v3916
    %v3949 = vunpack.c.l.b16 %v3917
    %v3950 = vunpack.c.l.b16 %v3918
    %v3951 = vunpack.c.l.b16 %v3919
    %v3952 = vunpack.c.l.b16 %v3920
    %v3953 = vunpack.c.l.b16 %v3921
    %v3954 = vunpack.c.l.b16 %v3922
    %v3955 = vunpack.c.l.b16 %v3923
    %v3956 = vunpack.c.l.b16 %v3924
    %v3957 = vpack.c.b16 %v3942, %v3941
    %v3958 = vpack.c.b16 %v3944, %v3943
    %v3959 = vpack.c.b16 %v3946, %v3945
    %v3960 = vpack.c.b16 %v3948, %v3947
    %v3961 = vpack.c.b16 %v3950, %v3949
    %v3962 = vpack.c.b16 %v3952, %v3951
    %v3963 = vpack.c.b16 %v3954, %v3953
    %v3964 = vpack.c.b16 %v3956, %v3955
    %3973 = vmatpush.bf16.msra.mxu0 %v3964
    %3974 = vmatpush.bf16.msra.mxu0 %v3963
    %3975 = vmatpush.bf16.msra.mxu0 %v3962
    %3976 = vmatpush.bf16.msra.mxu0 %v3961
    %3977 = vmatpush.bf16.msra.mxu0 %v3960
    %3978 = vmatpush.bf16.msra.mxu0 %v3959
    %3979 = vmatpush.bf16.msra.mxu0 %v3958
    %3980 = vmatpush.bf16.msra.mxu0 %v3957
    %3981 = vmatmul.bf16.gmra.mxu0 %v3876
    %v3982 = vpop.f32.mrf.mxu0
    %v3983 = vadd.f32 0.0, %v3982
    %v3984 = vpop.f32.mrf.mxu0
    %v3985 = vadd.f32 0.0, %v3984
    %3986 = vmatmul.bf16.gmra.mxu0 %v3877
    %v3987 = vpop.f32.mrf.mxu0
    %v3988 = vadd.f32 0.0, %v3987
    %v3989 = vpop.f32.mrf.mxu0
    %v3990 = vadd.f32 0.0, %v3989
    %3991 = vmatmul.bf16.gmra.mxu0 %v3878
    %v3992 = vpop.f32.mrf.mxu0
    %v3993 = vadd.f32 0.0, %v3992
    %v3994 = vpop.f32.mrf.mxu0
    %v3995 = vadd.f32 0.0, %v3994
    %3996 = vmatmul.bf16.gmra.mxu0 %v3879
    %v3997 = vpop.f32.mrf.mxu0
    %v3998 = vadd.f32 0.0, %v3997
    %v3999 = vpop.f32.mrf.mxu0
    %v4000 = vadd.f32 0.0, %v3999
    %4001 = vmatmul.bf16.gmra.mxu0 %v3880
    %v4002 = vpop.f32.mrf.mxu0
    %v4003 = vadd.f32 0.0, %v4002
    %v4004 = vpop.f32.mrf.mxu0
    %v4005 = vadd.f32 0.0, %v4004
    %4006 = vmatmul.bf16.gmra.mxu0 %v3881
    %v4007 = vpop.f32.mrf.mxu0
    %v4008 = vadd.f32 0.0, %v4007
    %v4009 = vpop.f32.mrf.mxu0
    %v4010 = vadd.f32 0.0, %v4009
    %4011 = vmatmul.bf16.gmra.mxu0 %v3882
    %v4012 = vpop.f32.mrf.mxu0
    %v4013 = vadd.f32 0.0, %v4012
    %v4014 = vpop.f32.mrf.mxu0
    %v4015 = vadd.f32 0.0, %v4014
    %4016 = vmatmul.bf16.gmra.mxu0 %v3883
    %v4017 = vpop.f32.mrf.mxu0
    %v4018 = vadd.f32 0.0, %v4017
    %v4019 = vpop.f32.mrf.mxu0
    %v4020 = vadd.f32 0.0, %v4019
    %4021 = vmatmul.bf16.gmra.mxu0 %v3884
    %v4022 = vpop.f32.mrf.mxu0
    %v4023 = vadd.f32 0.0, %v4022
    %v4024 = vpop.f32.mrf.mxu0
    %v4025 = vadd.f32 0.0, %v4024
    %4026 = vmatmul.bf16.gmra.mxu0 %v3885
    %v4027 = vpop.f32.mrf.mxu0
    %v4028 = vadd.f32 0.0, %v4027
    %v4029 = vpop.f32.mrf.mxu0
    %v4030 = vadd.f32 0.0, %v4029
    %4031 = vmatmul.bf16.gmra.mxu0 %v3886
    %v4032 = vpop.f32.mrf.mxu0
    %v4033 = vadd.f32 0.0, %v4032
    %v4034 = vpop.f32.mrf.mxu0
    %v4035 = vadd.f32 0.0, %v4034
    %4036 = vmatmul.bf16.gmra.mxu0 %v3887
    %v4037 = vpop.f32.mrf.mxu0
    %v4038 = vadd.f32 0.0, %v4037
    %v4039 = vpop.f32.mrf.mxu0
    %v4040 = vadd.f32 0.0, %v4039
    %4041 = vmatmul.bf16.gmra.mxu0 %v3888
    %v4042 = vpop.f32.mrf.mxu0
    %v4043 = vadd.f32 0.0, %v4042
    %v4044 = vpop.f32.mrf.mxu0
    %v4045 = vadd.f32 0.0, %v4044
    %4046 = vmatmul.bf16.gmra.mxu0 %v3889
    %v4047 = vpop.f32.mrf.mxu0
    %v4048 = vadd.f32 0.0, %v4047
    %v4049 = vpop.f32.mrf.mxu0
    %v4050 = vadd.f32 0.0, %v4049
    %4051 = vmatmul.bf16.gmra.mxu0 %v3890
    %v4052 = vpop.f32.mrf.mxu0
    %v4053 = vadd.f32 0.0, %v4052
    %v4054 = vpop.f32.mrf.mxu0
    %v4055 = vadd.f32 0.0, %v4054
    %4056 = vmatmul.bf16.gmra.mxu0 %v3891
    %v4057 = vpop.f32.mrf.mxu0
    %v4058 = vadd.f32 0.0, %v4057
    %v4059 = vpop.f32.mrf.mxu0
    %v4060 = vadd.f32 0.0, %v4059
    %4061 = vmatmul.bf16.gmra.mxu0 %v3892
    %v4062 = vpop.f32.mrf.mxu0
    %v4063 = vadd.f32 0.0, %v4062
    %v4064 = vpop.f32.mrf.mxu0
    %v4065 = vadd.f32 0.0, %v4064
    %4066 = vmatmul.bf16.gmra.mxu0 %v3893
    %v4067 = vpop.f32.mrf.mxu0
    %v4068 = vadd.f32 0.0, %v4067
    %v4069 = vpop.f32.mrf.mxu0
    %v4070 = vadd.f32 0.0, %v4069
    %4071 = vmatmul.bf16.gmra.mxu0 %v3894
    %v4072 = vpop.f32.mrf.mxu0
    %v4073 = vadd.f32 0.0, %v4072
    %v4074 = vpop.f32.mrf.mxu0
    %v4075 = vadd.f32 0.0, %v4074
    %4076 = vmatmul.bf16.gmra.mxu0 %v3895
    %v4077 = vpop.f32.mrf.mxu0
    %v4078 = vadd.f32 0.0, %v4077
    %v4079 = vpop.f32.mrf.mxu0
    %v4080 = vadd.f32 0.0, %v4079
    %4081 = vmatmul.bf16.gmra.mxu0 %v3896
    %v4082 = vpop.f32.mrf.mxu0
    %v4083 = vadd.f32 0.0, %v4082
    %v4084 = vpop.f32.mrf.mxu0
    %v4085 = vadd.f32 0.0, %v4084
    %4086 = vmatmul.bf16.gmra.mxu0 %v3897
    %v4087 = vpop.f32.mrf.mxu0
    %v4088 = vadd.f32 0.0, %v4087
    %v4089 = vpop.f32.mrf.mxu0
    %v4090 = vadd.f32 0.0, %v4089
    %4091 = vmatmul.bf16.gmra.mxu0 %v3898
    %v4092 = vpop.f32.mrf.mxu0
    %v4093 = vadd.f32 0.0, %v4092
    %v4094 = vpop.f32.mrf.mxu0
    %v4095 = vadd.f32 0.0, %v4094
    %4096 = vmatmul.bf16.gmra.mxu0 %v3899
    %v4097 = vpop.f32.mrf.mxu0
    %v4098 = vadd.f32 0.0, %v4097
    %v4099 = vpop.f32.mrf.mxu0
    %v4100 = vadd.f32 0.0, %v4099
    %4101 = vmatmul.bf16.gmra.mxu0 %v3900
    %v4102 = vpop.f32.mrf.mxu0
    %v4103 = vadd.f32 0.0, %v4102
    %v4104 = vpop.f32.mrf.mxu0
    %v4105 = vadd.f32 0.0, %v4104
    %4106 = vmatmul.bf16.gmra.mxu0 %v3901
    %v4107 = vpop.f32.mrf.mxu0
    %v4108 = vadd.f32 0.0, %v4107
    %v4109 = vpop.f32.mrf.mxu0
    %v4110 = vadd.f32 0.0, %v4109
    %4111 = vmatmul.bf16.gmra.mxu0 %v3902
    %v4112 = vpop.f32.mrf.mxu0
    %v4113 = vadd.f32 0.0, %v4112
    %v4114 = vpop.f32.mrf.mxu0
    %v4115 = vadd.f32 0.0, %v4114
    %4116 = vmatmul.bf16.gmra.mxu0 %v3903
    %v4117 = vpop.f32.mrf.mxu0
    %v4118 = vadd.f32 0.0, %v4117
    %v4119 = vpop.f32.mrf.mxu0
    %v4120 = vadd.f32 0.0, %v4119
    %4121 = vmatmul.bf16.gmra.mxu0 %v3904
    %v4122 = vpop.f32.mrf.mxu0
    %v4123 = vadd.f32 0.0, %v4122
    %v4124 = vpop.f32.mrf.mxu0
    %v4125 = vadd.f32 0.0, %v4124
    %4126 = vmatmul.bf16.gmra.mxu0 %v3905
    %v4127 = vpop.f32.mrf.mxu0
    %v4128 = vadd.f32 0.0, %v4127
    %v4129 = vpop.f32.mrf.mxu0
    %v4130 = vadd.f32 0.0, %v4129
    %4131 = vmatmul.bf16.gmra.mxu0 %v3906
    %v4132 = vpop.f32.mrf.mxu0
    %v4133 = vadd.f32 0.0, %v4132
    %v4134 = vpop.f32.mrf.mxu0
    %v4135 = vadd.f32 0.0, %v4134
    %4136 = vmatmul.bf16.gmra.mxu0 %v3907
    %v4137 = vpop.f32.mrf.mxu0
    %v4138 = vadd.f32 0.0, %v4137
    %v4139 = vpop.f32.mrf.mxu0
    %v4140 = vadd.f32 0.0, %v4139
    %4141 = vdwg.mxu0
    %v4142 = vadd.f32 %v3748, %v3983
    %v4143 = vadd.f32 %v3749, %v3985
    %v4144 = vadd.f32 %v3750, %v3988
    %v4145 = vadd.f32 %v3751, %v3990
    %v4146 = vadd.f32 %v3752, %v3993
    %v4147 = vadd.f32 %v3753, %v3995
    %v4148 = vadd.f32 %v3754, %v3998
    %v4149 = vadd.f32 %v3755, %v4000
    %v4150 = vadd.f32 %v3756, %v4003
    %v4151 = vadd.f32 %v3757, %v4005
    %v4152 = vadd.f32 %v3758, %v4008
    %v4153 = vadd.f32 %v3759, %v4010
    %v4154 = vadd.f32 %v3760, %v4013
    %v4155 = vadd.f32 %v3761, %v4015
    %v4156 = vadd.f32 %v3762, %v4018
    %v4157 = vadd.f32 %v3763, %v4020
    %v4158 = vadd.f32 %v3764, %v4023
    %v4159 = vadd.f32 %v3765, %v4025
    %v4160 = vadd.f32 %v3766, %v4028
    %v4161 = vadd.f32 %v3767, %v4030
    %v4162 = vadd.f32 %v3768, %v4033
    %v4163 = vadd.f32 %v3769, %v4035
    %v4164 = vadd.f32 %v3770, %v4038
    %v4165 = vadd.f32 %v3771, %v4040
    %v4166 = vadd.f32 %v3772, %v4043
    %v4167 = vadd.f32 %v3773, %v4045
    %v4168 = vadd.f32 %v3774, %v4048
    %v4169 = vadd.f32 %v3775, %v4050
    %v4170 = vadd.f32 %v3776, %v4053
    %v4171 = vadd.f32 %v3777, %v4055
    %v4172 = vadd.f32 %v3778, %v4058
    %v4173 = vadd.f32 %v3779, %v4060
    %v4174 = vadd.f32 %v3780, %v4063
    %v4175 = vadd.f32 %v3781, %v4065
    %v4176 = vadd.f32 %v3782, %v4068
    %v4177 = vadd.f32 %v3783, %v4070
    %v4178 = vadd.f32 %v3784, %v4073
    %v4179 = vadd.f32 %v3785, %v4075
    %v4180 = vadd.f32 %v3786, %v4078
    %v4181 = vadd.f32 %v3787, %v4080
    %v4182 = vadd.f32 %v3788, %v4083
    %v4183 = vadd.f32 %v3789, %v4085
    %v4184 = vadd.f32 %v3790, %v4088
    %v4185 = vadd.f32 %v3791, %v4090
    %v4186 = vadd.f32 %v3792, %v4093
    %v4187 = vadd.f32 %v3793, %v4095
    %v4188 = vadd.f32 %v3794, %v4098
    %v4189 = vadd.f32 %v3795, %v4100
    %v4190 = vadd.f32 %v3796, %v4103
    %v4191 = vadd.f32 %v3797, %v4105
    %v4192 = vadd.f32 %v3798, %v4108
    %v4193 = vadd.f32 %v3799, %v4110
    %v4194 = vadd.f32 %v3800, %v4113
    %v4195 = vadd.f32 %v3801, %v4115
    %v4196 = vadd.f32 %v3802, %v4118
    %v4197 = vadd.f32 %v3803, %v4120
    %v4198 = vadd.f32 %v3804, %v4123
    %v4199 = vadd.f32 %v3805, %v4125
    %v4200 = vadd.f32 %v3806, %v4128
    %v4201 = vadd.f32 %v3807, %v4130
    %v4202 = vadd.f32 %v3808, %v4133
    %v4203 = vadd.f32 %v3809, %v4135
    %v4204 = vadd.f32 %v3810, %v4138
    %v4205 = vadd.f32 %v3811, %v4140
    %v4206 = vld [vmem:[%s289 + $0x2] sm:$0xff]
    %v4207 = vld [vmem:[%s289 + $0xa] sm:$0xff]
    %v4208 = vld [vmem:[%s289 + $0x1a] sm:$0xff]
    %v4209 = vld [vmem:[%s289 + $0x22] sm:$0xff]
    %v4210 = vld [vmem:[%s289 + $0x32] sm:$0xff]
    %v4211 = vld [vmem:[%s289 + $0x3a] sm:$0xff]
    %v4212 = vld [vmem:[%s289 + $0x4a] sm:$0xff]
    %v4213 = vld [vmem:[%s289 + $0x52] sm:$0xff]
    %v4214 = vld [vmem:[%s289 + $0x62] sm:$0xff]
    %v4215 = vld [vmem:[%s289 + $0x6a] sm:$0xff]
    %v4216 = vld [vmem:[%s289 + $0x7a] sm:$0xff]
    %v4217 = vld [vmem:[%s289 + $0x82] sm:$0xff]
    %v4218 = vld [vmem:[%s289 + $0x92] sm:$0xff]
    %v4219 = vld [vmem:[%s289 + $0x9a] sm:$0xff]
    %v4220 = vld [vmem:[%s289 + $0xaa] sm:$0xff]
    %v4221 = vld [vmem:[%s289 + $0xb2] sm:$0xff]
    %v4222 = vld [vmem:[%s289 + $0xc2] sm:$0xff]
    %v4223 = vld [vmem:[%s289 + $0xca] sm:$0xff]
    %v4224 = vld [vmem:[%s289 + $0xda] sm:$0xff]
    %v4225 = vld [vmem:[%s289 + $0xe2] sm:$0xff]
    %v4226 = vld [vmem:[%s289 + $0xf2] sm:$0xff]
    %v4227 = vld [vmem:[%s289 + $0xfa] sm:$0xff]
    %v4228 = vld [vmem:[%s289 + $0x10a] sm:$0xff]
    %v4229 = vld [vmem:[%s289 + $0x112] sm:$0xff]
    %v4230 = vld [vmem:[%s289 + $0x122] sm:$0xff]
    %v4231 = vld [vmem:[%s289 + $0x12a] sm:$0xff]
    %v4232 = vld [vmem:[%s289 + $0x13a] sm:$0xff]
    %v4233 = vld [vmem:[%s289 + $0x142] sm:$0xff]
    %v4234 = vld [vmem:[%s289 + $0x152] sm:$0xff]
    %v4235 = vld [vmem:[%s289 + $0x15a] sm:$0xff]
    %v4236 = vld [vmem:[%s289 + $0x16a] sm:$0xff]
    %v4237 = vld [vmem:[%s289 + $0x172] sm:$0xff]
    %v4238 = vld [vmem:[%s289 + $0x1b2] sm:$0xff]
    %v4239 = vld [vmem:[%s289 + $0x1ba] sm:$0xff]
    %v4240 = vld [vmem:[%s289 + $0x1ca] sm:$0xff]
    %v4241 = vld [vmem:[%s289 + $0x1d2] sm:$0xff]
    %v4242 = vld [vmem:[%s289 + $0x1e2] sm:$0xff]
    %v4243 = vld [vmem:[%s289 + $0x1ea] sm:$0xff]
    %v4244 = vld [vmem:[%s289 + $0x1fa] sm:$0xff]
    %v4245 = vld [vmem:[%s289 + $0x202] sm:$0xff]
    %v4246 = vld [vmem:[%s289 + $0x212] sm:$0xff]
    %v4247 = vld [vmem:[%s289 + $0x21a] sm:$0xff]
    %v4248 = vld [vmem:[%s289 + $0x22a] sm:$0xff]
    %v4249 = vld [vmem:[%s289 + $0x232] sm:$0xff]
    %v4250 = vld [vmem:[%s289 + $0x242] sm:$0xff]
    %v4251 = vld [vmem:[%s289 + $0x24a] sm:$0xff]
    %v4252 = vld [vmem:[%s289 + $0x25a] sm:$0xff]
    %v4253 = vld [vmem:[%s289 + $0x262] sm:$0xff]
    %v4254 = vld [vmem:[%s289 + $0x272] sm:$0xff]
    %v4255 = vld [vmem:[%s289 + $0x27a] sm:$0xff]
    %v4256 = vld [vmem:[%s289 + $0x28a] sm:$0xff]
    %v4257 = vld [vmem:[%s289 + $0x292] sm:$0xff]
    %v4258 = vld [vmem:[%s289 + $0x2a2] sm:$0xff]
    %v4259 = vld [vmem:[%s289 + $0x2aa] sm:$0xff]
    %v4260 = vld [vmem:[%s289 + $0x2ba] sm:$0xff]
    %v4261 = vld [vmem:[%s289 + $0x2c2] sm:$0xff]
    %v4262 = vld [vmem:[%s289 + $0x2d2] sm:$0xff]
    %v4263 = vld [vmem:[%s289 + $0x2da] sm:$0xff]
    %v4264 = vld [vmem:[%s289 + $0x2ea] sm:$0xff]
    %v4265 = vld [vmem:[%s289 + $0x2f2] sm:$0xff]
    %v4266 = vld [vmem:[%s289 + $0x302] sm:$0xff]
    %v4267 = vld [vmem:[%s289 + $0x30a] sm:$0xff]
    %v4268 = vld [vmem:[%s289 + $0x31a] sm:$0xff]
    %v4269 = vld [vmem:[%s289 + $0x322] sm:$0xff]
    %v4270 = vpack.c.bf16 %v4207, %v4206
    %v4271 = vpack.c.bf16 %v4209, %v4208
    %v4272 = vpack.c.bf16 %v4211, %v4210
    %v4273 = vpack.c.bf16 %v4213, %v4212
    %v4274 = vpack.c.bf16 %v4215, %v4214
    %v4275 = vpack.c.bf16 %v4217, %v4216
    %v4276 = vpack.c.bf16 %v4219, %v4218
    %v4277 = vpack.c.bf16 %v4221, %v4220
    %v4278 = vpack.c.bf16 %v4223, %v4222
    %v4279 = vpack.c.bf16 %v4225, %v4224
    %v4280 = vpack.c.bf16 %v4227, %v4226
    %v4281 = vpack.c.bf16 %v4229, %v4228
    %v4282 = vpack.c.bf16 %v4231, %v4230
    %v4283 = vpack.c.bf16 %v4233, %v4232
    %v4284 = vpack.c.bf16 %v4235, %v4234
    %v4285 = vpack.c.bf16 %v4237, %v4236
    %v4286 = vpack.c.bf16 %v4239, %v4238
    %v4287 = vpack.c.bf16 %v4241, %v4240
    %v4288 = vpack.c.bf16 %v4243, %v4242
    %v4289 = vpack.c.bf16 %v4245, %v4244
    %v4290 = vpack.c.bf16 %v4247, %v4246
    %v4291 = vpack.c.bf16 %v4249, %v4248
    %v4292 = vpack.c.bf16 %v4251, %v4250
    %v4293 = vpack.c.bf16 %v4253, %v4252
    %v4294 = vpack.c.bf16 %v4255, %v4254
    %v4295 = vpack.c.bf16 %v4257, %v4256
    %v4296 = vpack.c.bf16 %v4259, %v4258
    %v4297 = vpack.c.bf16 %v4261, %v4260
    %v4298 = vpack.c.bf16 %v4263, %v4262
    %v4299 = vpack.c.bf16 %v4265, %v4264
    %v4300 = vpack.c.bf16 %v4267, %v4266
    %v4301 = vpack.c.bf16 %v4269, %v4268
    %s4302 = scalar_lea.vmem [#allocation9], 320
    %v4303 = vld [vmem:[%s4302] sm:$0xf]
    %v4304 = vld [vmem:[%s4302 + $0x4] sm:$0xf]
    %v4305 = vld [vmem:[%s4302 + $0x8] sm:$0xf]
    %v4306 = vld [vmem:[%s4302 + $0xc] sm:$0xf]
    %v4307 = vld [vmem:[%s4302 + $0x10] sm:$0xf]
    %v4308 = vld [vmem:[%s4302 + $0x14] sm:$0xf]
    %v4309 = vld [vmem:[%s4302 + $0x18] sm:$0xf]
    %v4310 = vld [vmem:[%s4302 + $0x1c] sm:$0xf]
    %v4311 = vld [vmem:[%s4302 + $0x20] sm:$0xf]
    %v4312 = vld [vmem:[%s4302 + $0x24] sm:$0xf]
    %v4313 = vld [vmem:[%s4302 + $0x28] sm:$0xf]
    %v4314 = vld [vmem:[%s4302 + $0x2c] sm:$0xf]
    %v4315 = vld [vmem:[%s4302 + $0x30] sm:$0xf]
    %v4316 = vld [vmem:[%s4302 + $0x34] sm:$0xf]
    %v4317 = vld [vmem:[%s4302 + $0x38] sm:$0xf]
    %v4318 = vld [vmem:[%s4302 + $0x3c] sm:$0xf]
    %v4335 = vunpack.c.l.b16 %v4303
    %v4336 = vunpack.c.l.b16 %v4304
    %v4337 = vunpack.c.l.b16 %v4305
    %v4338 = vunpack.c.l.b16 %v4306
    %v4339 = vunpack.c.l.b16 %v4307
    %v4340 = vunpack.c.l.b16 %v4308
    %v4341 = vunpack.c.l.b16 %v4309
    %v4342 = vunpack.c.l.b16 %v4310
    %v4343 = vunpack.c.l.b16 %v4311
    %v4344 = vunpack.c.l.b16 %v4312
    %v4345 = vunpack.c.l.b16 %v4313
    %v4346 = vunpack.c.l.b16 %v4314
    %v4347 = vunpack.c.l.b16 %v4315
    %v4348 = vunpack.c.l.b16 %v4316
    %v4349 = vunpack.c.l.b16 %v4317
    %v4350 = vunpack.c.l.b16 %v4318
    %v4351 = vpack.c.b16 %v4336, %v4335
    %v4352 = vpack.c.b16 %v4338, %v4337
    %v4353 = vpack.c.b16 %v4340, %v4339
    %v4354 = vpack.c.b16 %v4342, %v4341
    %v4355 = vpack.c.b16 %v4344, %v4343
    %v4356 = vpack.c.b16 %v4346, %v4345
    %v4357 = vpack.c.b16 %v4348, %v4347
    %v4358 = vpack.c.b16 %v4350, %v4349
    %4367 = vmatpush.bf16.msra.mxu0 %v4358
    %4368 = vmatpush.bf16.msra.mxu0 %v4357
    %4369 = vmatpush.bf16.msra.mxu0 %v4356
    %4370 = vmatpush.bf16.msra.mxu0 %v4355
    %4371 = vmatpush.bf16.msra.mxu0 %v4354
    %4372 = vmatpush.bf16.msra.mxu0 %v4353
    %4373 = vmatpush.bf16.msra.mxu0 %v4352
    %4374 = vmatpush.bf16.msra.mxu0 %v4351
    %4375 = vmatmul.bf16.gmra.mxu0 %v4270
    %v4376 = vpop.f32.mrf.mxu0
    %v4377 = vadd.f32 0.0, %v4376
    %v4378 = vpop.f32.mrf.mxu0
    %v4379 = vadd.f32 0.0, %v4378
    %4380 = vmatmul.bf16.gmra.mxu0 %v4271
    %v4381 = vpop.f32.mrf.mxu0
    %v4382 = vadd.f32 0.0, %v4381
    %v4383 = vpop.f32.mrf.mxu0
    %v4384 = vadd.f32 0.0, %v4383
    %4385 = vmatmul.bf16.gmra.mxu0 %v4272
    %v4386 = vpop.f32.mrf.mxu0
    %v4387 = vadd.f32 0.0, %v4386
    %v4388 = vpop.f32.mrf.mxu0
    %v4389 = vadd.f32 0.0, %v4388
    %4390 = vmatmul.bf16.gmra.mxu0 %v4273
    %v4391 = vpop.f32.mrf.mxu0
    %v4392 = vadd.f32 0.0, %v4391
    %v4393 = vpop.f32.mrf.mxu0
    %v4394 = vadd.f32 0.0, %v4393
    %4395 = vmatmul.bf16.gmra.mxu0 %v4274
    %v4396 = vpop.f32.mrf.mxu0
    %v4397 = vadd.f32 0.0, %v4396
    %v4398 = vpop.f32.mrf.mxu0
    %v4399 = vadd.f32 0.0, %v4398
    %4400 = vmatmul.bf16.gmra.mxu0 %v4275
    %v4401 = vpop.f32.mrf.mxu0
    %v4402 = vadd.f32 0.0, %v4401
    %v4403 = vpop.f32.mrf.mxu0
    %v4404 = vadd.f32 0.0, %v4403
    %4405 = vmatmul.bf16.gmra.mxu0 %v4276
    %v4406 = vpop.f32.mrf.mxu0
    %v4407 = vadd.f32 0.0, %v4406
    %v4408 = vpop.f32.mrf.mxu0
    %v4409 = vadd.f32 0.0, %v4408
    %4410 = vmatmul.bf16.gmra.mxu0 %v4277
    %v4411 = vpop.f32.mrf.mxu0
    %v4412 = vadd.f32 0.0, %v4411
    %v4413 = vpop.f32.mrf.mxu0
    %v4414 = vadd.f32 0.0, %v4413
    %4415 = vmatmul.bf16.gmra.mxu0 %v4278
    %v4416 = vpop.f32.mrf.mxu0
    %v4417 = vadd.f32 0.0, %v4416
    %v4418 = vpop.f32.mrf.mxu0
    %v4419 = vadd.f32 0.0, %v4418
    %4420 = vmatmul.bf16.gmra.mxu0 %v4279
    %v4421 = vpop.f32.mrf.mxu0
    %v4422 = vadd.f32 0.0, %v4421
    %v4423 = vpop.f32.mrf.mxu0
    %v4424 = vadd.f32 0.0, %v4423
    %4425 = vmatmul.bf16.gmra.mxu0 %v4280
    %v4426 = vpop.f32.mrf.mxu0
    %v4427 = vadd.f32 0.0, %v4426
    %v4428 = vpop.f32.mrf.mxu0
    %v4429 = vadd.f32 0.0, %v4428
    %4430 = vmatmul.bf16.gmra.mxu0 %v4281
    %v4431 = vpop.f32.mrf.mxu0
    %v4432 = vadd.f32 0.0, %v4431
    %v4433 = vpop.f32.mrf.mxu0
    %v4434 = vadd.f32 0.0, %v4433
    %4435 = vmatmul.bf16.gmra.mxu0 %v4282
    %v4436 = vpop.f32.mrf.mxu0
    %v4437 = vadd.f32 0.0, %v4436
    %v4438 = vpop.f32.mrf.mxu0
    %v4439 = vadd.f32 0.0, %v4438
    %4440 = vmatmul.bf16.gmra.mxu0 %v4283
    %v4441 = vpop.f32.mrf.mxu0
    %v4442 = vadd.f32 0.0, %v4441
    %v4443 = vpop.f32.mrf.mxu0
    %v4444 = vadd.f32 0.0, %v4443
    %4445 = vmatmul.bf16.gmra.mxu0 %v4284
    %v4446 = vpop.f32.mrf.mxu0
    %v4447 = vadd.f32 0.0, %v4446
    %v4448 = vpop.f32.mrf.mxu0
    %v4449 = vadd.f32 0.0, %v4448
    %4450 = vmatmul.bf16.gmra.mxu0 %v4285
    %v4451 = vpop.f32.mrf.mxu0
    %v4452 = vadd.f32 0.0, %v4451
    %v4453 = vpop.f32.mrf.mxu0
    %v4454 = vadd.f32 0.0, %v4453
    %4455 = vmatmul.bf16.gmra.mxu0 %v4286
    %v4456 = vpop.f32.mrf.mxu0
    %v4457 = vadd.f32 0.0, %v4456
    %v4458 = vpop.f32.mrf.mxu0
    %v4459 = vadd.f32 0.0, %v4458
    %4460 = vmatmul.bf16.gmra.mxu0 %v4287
    %v4461 = vpop.f32.mrf.mxu0
    %v4462 = vadd.f32 0.0, %v4461
    %v4463 = vpop.f32.mrf.mxu0
    %v4464 = vadd.f32 0.0, %v4463
    %4465 = vmatmul.bf16.gmra.mxu0 %v4288
    %v4466 = vpop.f32.mrf.mxu0
    %v4467 = vadd.f32 0.0, %v4466
    %v4468 = vpop.f32.mrf.mxu0
    %v4469 = vadd.f32 0.0, %v4468
    %4470 = vmatmul.bf16.gmra.mxu0 %v4289
    %v4471 = vpop.f32.mrf.mxu0
    %v4472 = vadd.f32 0.0, %v4471
    %v4473 = vpop.f32.mrf.mxu0
    %v4474 = vadd.f32 0.0, %v4473
    %4475 = vmatmul.bf16.gmra.mxu0 %v4290
    %v4476 = vpop.f32.mrf.mxu0
    %v4477 = vadd.f32 0.0, %v4476
    %v4478 = vpop.f32.mrf.mxu0
    %v4479 = vadd.f32 0.0, %v4478
    %4480 = vmatmul.bf16.gmra.mxu0 %v4291
    %v4481 = vpop.f32.mrf.mxu0
    %v4482 = vadd.f32 0.0, %v4481
    %v4483 = vpop.f32.mrf.mxu0
    %v4484 = vadd.f32 0.0, %v4483
    %4485 = vmatmul.bf16.gmra.mxu0 %v4292
    %v4486 = vpop.f32.mrf.mxu0
    %v4487 = vadd.f32 0.0, %v4486
    %v4488 = vpop.f32.mrf.mxu0
    %v4489 = vadd.f32 0.0, %v4488
    %4490 = vmatmul.bf16.gmra.mxu0 %v4293
    %v4491 = vpop.f32.mrf.mxu0
    %v4492 = vadd.f32 0.0, %v4491
    %v4493 = vpop.f32.mrf.mxu0
    %v4494 = vadd.f32 0.0, %v4493
    %4495 = vmatmul.bf16.gmra.mxu0 %v4294
    %v4496 = vpop.f32.mrf.mxu0
    %v4497 = vadd.f32 0.0, %v4496
    %v4498 = vpop.f32.mrf.mxu0
    %v4499 = vadd.f32 0.0, %v4498
    %4500 = vmatmul.bf16.gmra.mxu0 %v4295
    %v4501 = vpop.f32.mrf.mxu0
    %v4502 = vadd.f32 0.0, %v4501
    %v4503 = vpop.f32.mrf.mxu0
    %v4504 = vadd.f32 0.0, %v4503
    %4505 = vmatmul.bf16.gmra.mxu0 %v4296
    %v4506 = vpop.f32.mrf.mxu0
    %v4507 = vadd.f32 0.0, %v4506
    %v4508 = vpop.f32.mrf.mxu0
    %v4509 = vadd.f32 0.0, %v4508
    %4510 = vmatmul.bf16.gmra.mxu0 %v4297
    %v4511 = vpop.f32.mrf.mxu0
    %v4512 = vadd.f32 0.0, %v4511
    %v4513 = vpop.f32.mrf.mxu0
    %v4514 = vadd.f32 0.0, %v4513
    %4515 = vmatmul.bf16.gmra.mxu0 %v4298
    %v4516 = vpop.f32.mrf.mxu0
    %v4517 = vadd.f32 0.0, %v4516
    %v4518 = vpop.f32.mrf.mxu0
    %v4519 = vadd.f32 0.0, %v4518
    %4520 = vmatmul.bf16.gmra.mxu0 %v4299
    %v4521 = vpop.f32.mrf.mxu0
    %v4522 = vadd.f32 0.0, %v4521
    %v4523 = vpop.f32.mrf.mxu0
    %v4524 = vadd.f32 0.0, %v4523
    %4525 = vmatmul.bf16.gmra.mxu0 %v4300
    %v4526 = vpop.f32.mrf.mxu0
    %v4527 = vadd.f32 0.0, %v4526
    %v4528 = vpop.f32.mrf.mxu0
    %v4529 = vadd.f32 0.0, %v4528
    %4530 = vmatmul.bf16.gmra.mxu0 %v4301
    %v4531 = vpop.f32.mrf.mxu0
    %v4532 = vadd.f32 0.0, %v4531
    %v4533 = vpop.f32.mrf.mxu0
    %v4534 = vadd.f32 0.0, %v4533
    %4535 = vdwg.mxu0
    %v4536 = vadd.f32 %v4142, %v4377
    %v4537 = vadd.f32 %v4143, %v4379
    %v4538 = vadd.f32 %v4144, %v4382
    %v4539 = vadd.f32 %v4145, %v4384
    %v4540 = vadd.f32 %v4146, %v4387
    %v4541 = vadd.f32 %v4147, %v4389
    %v4542 = vadd.f32 %v4148, %v4392
    %v4543 = vadd.f32 %v4149, %v4394
    %v4544 = vadd.f32 %v4150, %v4397
    %v4545 = vadd.f32 %v4151, %v4399
    %v4546 = vadd.f32 %v4152, %v4402
    %v4547 = vadd.f32 %v4153, %v4404
    %v4548 = vadd.f32 %v4154, %v4407
    %v4549 = vadd.f32 %v4155, %v4409
    %v4550 = vadd.f32 %v4156, %v4412
    %v4551 = vadd.f32 %v4157, %v4414
    %v4552 = vadd.f32 %v4158, %v4417
    %v4553 = vadd.f32 %v4159, %v4419
    %v4554 = vadd.f32 %v4160, %v4422
    %v4555 = vadd.f32 %v4161, %v4424
    %v4556 = vadd.f32 %v4162, %v4427
    %v4557 = vadd.f32 %v4163, %v4429
    %v4558 = vadd.f32 %v4164, %v4432
    %v4559 = vadd.f32 %v4165, %v4434
    %v4560 = vadd.f32 %v4166, %v4437
    %v4561 = vadd.f32 %v4167, %v4439
    %v4562 = vadd.f32 %v4168, %v4442
    %v4563 = vadd.f32 %v4169, %v4444
    %v4564 = vadd.f32 %v4170, %v4447
    %v4565 = vadd.f32 %v4171, %v4449
    %v4566 = vadd.f32 %v4172, %v4452
    %v4567 = vadd.f32 %v4173, %v4454
    %v4568 = vadd.f32 %v4174, %v4457
    %v4569 = vadd.f32 %v4175, %v4459
    %v4570 = vadd.f32 %v4176, %v4462
    %v4571 = vadd.f32 %v4177, %v4464
    %v4572 = vadd.f32 %v4178, %v4467
    %v4573 = vadd.f32 %v4179, %v4469
    %v4574 = vadd.f32 %v4180, %v4472
    %v4575 = vadd.f32 %v4181, %v4474
    %v4576 = vadd.f32 %v4182, %v4477
    %v4577 = vadd.f32 %v4183, %v4479
    %v4578 = vadd.f32 %v4184, %v4482
    %v4579 = vadd.f32 %v4185, %v4484
    %v4580 = vadd.f32 %v4186, %v4487
    %v4581 = vadd.f32 %v4187, %v4489
    %v4582 = vadd.f32 %v4188, %v4492
    %v4583 = vadd.f32 %v4189, %v4494
    %v4584 = vadd.f32 %v4190, %v4497
    %v4585 = vadd.f32 %v4191, %v4499
    %v4586 = vadd.f32 %v4192, %v4502
    %v4587 = vadd.f32 %v4193, %v4504
    %v4588 = vadd.f32 %v4194, %v4507
    %v4589 = vadd.f32 %v4195, %v4509
    %v4590 = vadd.f32 %v4196, %v4512
    %v4591 = vadd.f32 %v4197, %v4514
    %v4592 = vadd.f32 %v4198, %v4517
    %v4593 = vadd.f32 %v4199, %v4519
    %v4594 = vadd.f32 %v4200, %v4522
    %v4595 = vadd.f32 %v4201, %v4524
    %v4596 = vadd.f32 %v4202, %v4527
    %v4597 = vadd.f32 %v4203, %v4529
    %v4598 = vadd.f32 %v4204, %v4532
    %v4599 = vadd.f32 %v4205, %v4534
    %s4600 = scalar_lea.vmem [#allocation2], 48
    %v4601 = vld [vmem:[%s4600] sm:$0xff]
    %v4602 = vld [vmem:[%s4600 + $0x8] sm:$0xff]
    %v4603 = vld [vmem:[%s4600 + $0x18] sm:$0xff]
    %v4604 = vld [vmem:[%s4600 + $0x20] sm:$0xff]
    %v4605 = vld [vmem:[%s4600 + $0x30] sm:$0xff]
    %v4606 = vld [vmem:[%s4600 + $0x38] sm:$0xff]
    %v4607 = vld [vmem:[%s4600 + $0x48] sm:$0xff]
    %v4608 = vld [vmem:[%s4600 + $0x50] sm:$0xff]
    %v4609 = vld [vmem:[%s4600 + $0x60] sm:$0xff]
    %v4610 = vld [vmem:[%s4600 + $0x68] sm:$0xff]
    %v4611 = vld [vmem:[%s4600 + $0x78] sm:$0xff]
    %v4612 = vld [vmem:[%s4600 + $0x80] sm:$0xff]
    %v4613 = vld [vmem:[%s4600 + $0x90] sm:$0xff]
    %v4614 = vld [vmem:[%s4600 + $0x98] sm:$0xff]
    %v4615 = vld [vmem:[%s4600 + $0xa8] sm:$0xff]
    %v4616 = vld [vmem:[%s4600 + $0xb0] sm:$0xff]
    %v4617 = vld [vmem:[%s4600 + $0xc0] sm:$0xff]
    %v4618 = vld [vmem:[%s4600 + $0xc8] sm:$0xff]
    %v4619 = vld [vmem:[%s4600 + $0xd8] sm:$0xff]
    %v4620 = vld [vmem:[%s4600 + $0xe0] sm:$0xff]
    %v4621 = vld [vmem:[%s4600 + $0xf0] sm:$0xff]
    %v4622 = vld [vmem:[%s4600 + $0xf8] sm:$0xff]
    %v4623 = vld [vmem:[%s4600 + $0x108] sm:$0xff]
    %v4624 = vld [vmem:[%s4600 + $0x110] sm:$0xff]
    %v4625 = vld [vmem:[%s4600 + $0x120] sm:$0xff]
    %v4626 = vld [vmem:[%s4600 + $0x128] sm:$0xff]
    %v4627 = vld [vmem:[%s4600 + $0x138] sm:$0xff]
    %v4628 = vld [vmem:[%s4600 + $0x140] sm:$0xff]
    %v4629 = vld [vmem:[%s4600 + $0x150] sm:$0xff]
    %v4630 = vld [vmem:[%s4600 + $0x158] sm:$0xff]
    %v4631 = vld [vmem:[%s4600 + $0x168] sm:$0xff]
    %v4632 = vld [vmem:[%s4600 + $0x170] sm:$0xff]
    %v4633 = vld [vmem:[%s4600 + $0x1b0] sm:$0xff]
    %v4634 = vld [vmem:[%s4600 + $0x1b8] sm:$0xff]
    %v4635 = vld [vmem:[%s4600 + $0x1c8] sm:$0xff]
    %v4636 = vld [vmem:[%s4600 + $0x1d0] sm:$0xff]
    %v4637 = vld [vmem:[%s4600 + $0x1e0] sm:$0xff]
    %v4638 = vld [vmem:[%s4600 + $0x1e8] sm:$0xff]
    %v4639 = vld [vmem:[%s4600 + $0x1f8] sm:$0xff]
    %v4640 = vld [vmem:[%s4600 + $0x200] sm:$0xff]
    %v4641 = vld [vmem:[%s4600 + $0x210] sm:$0xff]
    %v4642 = vld [vmem:[%s4600 + $0x218] sm:$0xff]
    %v4643 = vld [vmem:[%s4600 + $0x228] sm:$0xff]
    %v4644 = vld [vmem:[%s4600 + $0x230] sm:$0xff]
    %v4645 = vld [vmem:[%s4600 + $0x240] sm:$0xff]
    %v4646 = vld [vmem:[%s4600 + $0x248] sm:$0xff]
    %v4647 = vld [vmem:[%s4600 + $0x258] sm:$0xff]
    %v4648 = vld [vmem:[%s4600 + $0x260] sm:$0xff]
    %v4649 = vld [vmem:[%s4600 + $0x270] sm:$0xff]
    %v4650 = vld [vmem:[%s4600 + $0x278] sm:$0xff]
    %v4651 = vld [vmem:[%s4600 + $0x288] sm:$0xff]
    %v4652 = vld [vmem:[%s4600 + $0x290] sm:$0xff]
    %v4653 = vld [vmem:[%s4600 + $0x2a0] sm:$0xff]
    %v4654 = vld [vmem:[%s4600 + $0x2a8] sm:$0xff]
    %v4655 = vld [vmem:[%s4600 + $0x2b8] sm:$0xff]
    %v4656 = vld [vmem:[%s4600 + $0x2c0] sm:$0xff]
    %v4657 = vld [vmem:[%s4600 + $0x2d0] sm:$0xff]
    %v4658 = vld [vmem:[%s4600 + $0x2d8] sm:$0xff]
    %v4659 = vld [vmem:[%s4600 + $0x2e8] sm:$0xff]
    %v4660 = vld [vmem:[%s4600 + $0x2f0] sm:$0xff]
    %v4661 = vld [vmem:[%s4600 + $0x300] sm:$0xff]
    %v4662 = vld [vmem:[%s4600 + $0x308] sm:$0xff]
    %v4663 = vld [vmem:[%s4600 + $0x318] sm:$0xff]
    %v4664 = vld [vmem:[%s4600 + $0x320] sm:$0xff]
    %v4665 = vpack.c.bf16 %v4602, %v4601
    %v4666 = vpack.c.bf16 %v4604, %v4603
    %v4667 = vpack.c.bf16 %v4606, %v4605
    %v4668 = vpack.c.bf16 %v4608, %v4607
    %v4669 = vpack.c.bf16 %v4610, %v4609
    %v4670 = vpack.c.bf16 %v4612, %v4611
    %v4671 = vpack.c.bf16 %v4614, %v4613
    %v4672 = vpack.c.bf16 %v4616, %v4615
    %v4673 = vpack.c.bf16 %v4618, %v4617
    %v4674 = vpack.c.bf16 %v4620, %v4619
    %v4675 = vpack.c.bf16 %v4622, %v4621
    %v4676 = vpack.c.bf16 %v4624, %v4623
    %v4677 = vpack.c.bf16 %v4626, %v4625
    %v4678 = vpack.c.bf16 %v4628, %v4627
    %v4679 = vpack.c.bf16 %v4630, %v4629
    %v4680 = vpack.c.bf16 %v4632, %v4631
    %v4681 = vpack.c.bf16 %v4634, %v4633
    %v4682 = vpack.c.bf16 %v4636, %v4635
    %v4683 = vpack.c.bf16 %v4638, %v4637
    %v4684 = vpack.c.bf16 %v4640, %v4639
    %v4685 = vpack.c.bf16 %v4642, %v4641
    %v4686 = vpack.c.bf16 %v4644, %v4643
    %v4687 = vpack.c.bf16 %v4646, %v4645
    %v4688 = vpack.c.bf16 %v4648, %v4647
    %v4689 = vpack.c.bf16 %v4650, %v4649
    %v4690 = vpack.c.bf16 %v4652, %v4651
    %v4691 = vpack.c.bf16 %v4654, %v4653
    %v4692 = vpack.c.bf16 %v4656, %v4655
    %v4693 = vpack.c.bf16 %v4658, %v4657
    %v4694 = vpack.c.bf16 %v4660, %v4659
    %v4695 = vpack.c.bf16 %v4662, %v4661
    %v4696 = vpack.c.bf16 %v4664, %v4663
    %s4697 = scalar_lea.vmem [#allocation9], 384
    %v4698 = vld [vmem:[%s4697] sm:$0xf]
    %v4699 = vld [vmem:[%s4697 + $0x4] sm:$0xf]
    %v4700 = vld [vmem:[%s4697 + $0x8] sm:$0xf]
    %v4701 = vld [vmem:[%s4697 + $0xc] sm:$0xf]
    %v4702 = vld [vmem:[%s4697 + $0x10] sm:$0xf]
    %v4703 = vld [vmem:[%s4697 + $0x14] sm:$0xf]
    %v4704 = vld [vmem:[%s4697 + $0x18] sm:$0xf]
    %v4705 = vld [vmem:[%s4697 + $0x1c] sm:$0xf]
    %v4706 = vld [vmem:[%s4697 + $0x20] sm:$0xf]
    %v4707 = vld [vmem:[%s4697 + $0x24] sm:$0xf]
    %v4708 = vld [vmem:[%s4697 + $0x28] sm:$0xf]
    %v4709 = vld [vmem:[%s4697 + $0x2c] sm:$0xf]
    %v4710 = vld [vmem:[%s4697 + $0x30] sm:$0xf]
    %v4711 = vld [vmem:[%s4697 + $0x34] sm:$0xf]
    %v4712 = vld [vmem:[%s4697 + $0x38] sm:$0xf]
    %v4713 = vld [vmem:[%s4697 + $0x3c] sm:$0xf]
    %v4730 = vunpack.c.l.b16 %v4698
    %v4731 = vunpack.c.l.b16 %v4699
    %v4732 = vunpack.c.l.b16 %v4700
    %v4733 = vunpack.c.l.b16 %v4701
    %v4734 = vunpack.c.l.b16 %v4702
    %v4735 = vunpack.c.l.b16 %v4703
    %v4736 = vunpack.c.l.b16 %v4704
    %v4737 = vunpack.c.l.b16 %v4705
    %v4738 = vunpack.c.l.b16 %v4706
    %v4739 = vunpack.c.l.b16 %v4707
    %v4740 = vunpack.c.l.b16 %v4708
    %v4741 = vunpack.c.l.b16 %v4709
    %v4742 = vunpack.c.l.b16 %v4710
    %v4743 = vunpack.c.l.b16 %v4711
    %v4744 = vunpack.c.l.b16 %v4712
    %v4745 = vunpack.c.l.b16 %v4713
    %v4746 = vpack.c.b16 %v4731, %v4730
    %v4747 = vpack.c.b16 %v4733, %v4732
    %v4748 = vpack.c.b16 %v4735, %v4734
    %v4749 = vpack.c.b16 %v4737, %v4736
    %v4750 = vpack.c.b16 %v4739, %v4738
    %v4751 = vpack.c.b16 %v4741, %v4740
    %v4752 = vpack.c.b16 %v4743, %v4742
    %v4753 = vpack.c.b16 %v4745, %v4744
    %4762 = vmatpush.bf16.msra.mxu0 %v4753
    %4763 = vmatpush.bf16.msra.mxu0 %v4752
    %4764 = vmatpush.bf16.msra.mxu0 %v4751
    %4765 = vmatpush.bf16.msra.mxu0 %v4750
    %4766 = vmatpush.bf16.msra.mxu0 %v4749
    %4767 = vmatpush.bf16.msra.mxu0 %v4748
    %4768 = vmatpush.bf16.msra.mxu0 %v4747
    %4769 = vmatpush.bf16.msra.mxu0 %v4746
    %4770 = vmatmul.bf16.gmra.mxu0 %v4665
    %v4771 = vpop.f32.mrf.mxu0
    %v4772 = vadd.f32 0.0, %v4771
    %v4773 = vpop.f32.mrf.mxu0
    %v4774 = vadd.f32 0.0, %v4773
    %4775 = vmatmul.bf16.gmra.mxu0 %v4666
    %v4776 = vpop.f32.mrf.mxu0
    %v4777 = vadd.f32 0.0, %v4776
    %v4778 = vpop.f32.mrf.mxu0
    %v4779 = vadd.f32 0.0, %v4778
    %4780 = vmatmul.bf16.gmra.mxu0 %v4667
    %v4781 = vpop.f32.mrf.mxu0
    %v4782 = vadd.f32 0.0, %v4781
    %v4783 = vpop.f32.mrf.mxu0
    %v4784 = vadd.f32 0.0, %v4783
    %4785 = vmatmul.bf16.gmra.mxu0 %v4668
    %v4786 = vpop.f32.mrf.mxu0
    %v4787 = vadd.f32 0.0, %v4786
    %v4788 = vpop.f32.mrf.mxu0
    %v4789 = vadd.f32 0.0, %v4788
    %4790 = vmatmul.bf16.gmra.mxu0 %v4669
    %v4791 = vpop.f32.mrf.mxu0
    %v4792 = vadd.f32 0.0, %v4791
    %v4793 = vpop.f32.mrf.mxu0
    %v4794 = vadd.f32 0.0, %v4793
    %4795 = vmatmul.bf16.gmra.mxu0 %v4670
    %v4796 = vpop.f32.mrf.mxu0
    %v4797 = vadd.f32 0.0, %v4796
    %v4798 = vpop.f32.mrf.mxu0
    %v4799 = vadd.f32 0.0, %v4798
    %4800 = vmatmul.bf16.gmra.mxu0 %v4671
    %v4801 = vpop.f32.mrf.mxu0
    %v4802 = vadd.f32 0.0, %v4801
    %v4803 = vpop.f32.mrf.mxu0
    %v4804 = vadd.f32 0.0, %v4803
    %4805 = vmatmul.bf16.gmra.mxu0 %v4672
    %v4806 = vpop.f32.mrf.mxu0
    %v4807 = vadd.f32 0.0, %v4806
    %v4808 = vpop.f32.mrf.mxu0
    %v4809 = vadd.f32 0.0, %v4808
    %4810 = vmatmul.bf16.gmra.mxu0 %v4673
    %v4811 = vpop.f32.mrf.mxu0
    %v4812 = vadd.f32 0.0, %v4811
    %v4813 = vpop.f32.mrf.mxu0
    %v4814 = vadd.f32 0.0, %v4813
    %4815 = vmatmul.bf16.gmra.mxu0 %v4674
    %v4816 = vpop.f32.mrf.mxu0
    %v4817 = vadd.f32 0.0, %v4816
    %v4818 = vpop.f32.mrf.mxu0
    %v4819 = vadd.f32 0.0, %v4818
    %4820 = vmatmul.bf16.gmra.mxu0 %v4675
    %v4821 = vpop.f32.mrf.mxu0
    %v4822 = vadd.f32 0.0, %v4821
    %v4823 = vpop.f32.mrf.mxu0
    %v4824 = vadd.f32 0.0, %v4823
    %4825 = vmatmul.bf16.gmra.mxu0 %v4676
    %v4826 = vpop.f32.mrf.mxu0
    %v4827 = vadd.f32 0.0, %v4826
    %v4828 = vpop.f32.mrf.mxu0
    %v4829 = vadd.f32 0.0, %v4828
    %4830 = vmatmul.bf16.gmra.mxu0 %v4677
    %v4831 = vpop.f32.mrf.mxu0
    %v4832 = vadd.f32 0.0, %v4831
    %v4833 = vpop.f32.mrf.mxu0
    %v4834 = vadd.f32 0.0, %v4833
    %4835 = vmatmul.bf16.gmra.mxu0 %v4678
    %v4836 = vpop.f32.mrf.mxu0
    %v4837 = vadd.f32 0.0, %v4836
    %v4838 = vpop.f32.mrf.mxu0
    %v4839 = vadd.f32 0.0, %v4838
    %4840 = vmatmul.bf16.gmra.mxu0 %v4679
    %v4841 = vpop.f32.mrf.mxu0
    %v4842 = vadd.f32 0.0, %v4841
    %v4843 = vpop.f32.mrf.mxu0
    %v4844 = vadd.f32 0.0, %v4843
    %4845 = vmatmul.bf16.gmra.mxu0 %v4680
    %v4846 = vpop.f32.mrf.mxu0
    %v4847 = vadd.f32 0.0, %v4846
    %v4848 = vpop.f32.mrf.mxu0
    %v4849 = vadd.f32 0.0, %v4848
    %4850 = vmatmul.bf16.gmra.mxu0 %v4681
    %v4851 = vpop.f32.mrf.mxu0
    %v4852 = vadd.f32 0.0, %v4851
    %v4853 = vpop.f32.mrf.mxu0
    %v4854 = vadd.f32 0.0, %v4853
    %4855 = vmatmul.bf16.gmra.mxu0 %v4682
    %v4856 = vpop.f32.mrf.mxu0
    %v4857 = vadd.f32 0.0, %v4856
    %v4858 = vpop.f32.mrf.mxu0
    %v4859 = vadd.f32 0.0, %v4858
    %4860 = vmatmul.bf16.gmra.mxu0 %v4683
    %v4861 = vpop.f32.mrf.mxu0
    %v4862 = vadd.f32 0.0, %v4861
    %v4863 = vpop.f32.mrf.mxu0
    %v4864 = vadd.f32 0.0, %v4863
    %4865 = vmatmul.bf16.gmra.mxu0 %v4684
    %v4866 = vpop.f32.mrf.mxu0
    %v4867 = vadd.f32 0.0, %v4866
    %v4868 = vpop.f32.mrf.mxu0
    %v4869 = vadd.f32 0.0, %v4868
    %4870 = vmatmul.bf16.gmra.mxu0 %v4685
    %v4871 = vpop.f32.mrf.mxu0
    %v4872 = vadd.f32 0.0, %v4871
    %v4873 = vpop.f32.mrf.mxu0
    %v4874 = vadd.f32 0.0, %v4873
    %4875 = vmatmul.bf16.gmra.mxu0 %v4686
    %v4876 = vpop.f32.mrf.mxu0
    %v4877 = vadd.f32 0.0, %v4876
    %v4878 = vpop.f32.mrf.mxu0
    %v4879 = vadd.f32 0.0, %v4878
    %4880 = vmatmul.bf16.gmra.mxu0 %v4687
    %v4881 = vpop.f32.mrf.mxu0
    %v4882 = vadd.f32 0.0, %v4881
    %v4883 = vpop.f32.mrf.mxu0
    %v4884 = vadd.f32 0.0, %v4883
    %4885 = vmatmul.bf16.gmra.mxu0 %v4688
    %v4886 = vpop.f32.mrf.mxu0
    %v4887 = vadd.f32 0.0, %v4886
    %v4888 = vpop.f32.mrf.mxu0
    %v4889 = vadd.f32 0.0, %v4888
    %4890 = vmatmul.bf16.gmra.mxu0 %v4689
    %v4891 = vpop.f32.mrf.mxu0
    %v4892 = vadd.f32 0.0, %v4891
    %v4893 = vpop.f32.mrf.mxu0
    %v4894 = vadd.f32 0.0, %v4893
    %4895 = vmatmul.bf16.gmra.mxu0 %v4690
    %v4896 = vpop.f32.mrf.mxu0
    %v4897 = vadd.f32 0.0, %v4896
    %v4898 = vpop.f32.mrf.mxu0
    %v4899 = vadd.f32 0.0, %v4898
    %4900 = vmatmul.bf16.gmra.mxu0 %v4691
    %v4901 = vpop.f32.mrf.mxu0
    %v4902 = vadd.f32 0.0, %v4901
    %v4903 = vpop.f32.mrf.mxu0
    %v4904 = vadd.f32 0.0, %v4903
    %4905 = vmatmul.bf16.gmra.mxu0 %v4692
    %v4906 = vpop.f32.mrf.mxu0
    %v4907 = vadd.f32 0.0, %v4906
    %v4908 = vpop.f32.mrf.mxu0
    %v4909 = vadd.f32 0.0, %v4908
    %4910 = vmatmul.bf16.gmra.mxu0 %v4693
    %v4911 = vpop.f32.mrf.mxu0
    %v4912 = vadd.f32 0.0, %v4911
    %v4913 = vpop.f32.mrf.mxu0
    %v4914 = vadd.f32 0.0, %v4913
    %4915 = vmatmul.bf16.gmra.mxu0 %v4694
    %v4916 = vpop.f32.mrf.mxu0
    %v4917 = vadd.f32 0.0, %v4916
    %v4918 = vpop.f32.mrf.mxu0
    %v4919 = vadd.f32 0.0, %v4918
    %4920 = vmatmul.bf16.gmra.mxu0 %v4695
    %v4921 = vpop.f32.mrf.mxu0
    %v4922 = vadd.f32 0.0, %v4921
    %v4923 = vpop.f32.mrf.mxu0
    %v4924 = vadd.f32 0.0, %v4923
    %4925 = vmatmul.bf16.gmra.mxu0 %v4696
    %v4926 = vpop.f32.mrf.mxu0
    %v4927 = vadd.f32 0.0, %v4926
    %v4928 = vpop.f32.mrf.mxu0
    %v4929 = vadd.f32 0.0, %v4928
    %4930 = vdwg.mxu0
    %v4931 = vadd.f32 %v4536, %v4772
    %v4932 = vadd.f32 %v4537, %v4774
    %v4933 = vadd.f32 %v4538, %v4777
    %v4934 = vadd.f32 %v4539, %v4779
    %v4935 = vadd.f32 %v4540, %v4782
    %v4936 = vadd.f32 %v4541, %v4784
    %v4937 = vadd.f32 %v4542, %v4787
    %v4938 = vadd.f32 %v4543, %v4789
    %v4939 = vadd.f32 %v4544, %v4792
    %v4940 = vadd.f32 %v4545, %v4794
    %v4941 = vadd.f32 %v4546, %v4797
    %v4942 = vadd.f32 %v4547, %v4799
    %v4943 = vadd.f32 %v4548, %v4802
    %v4944 = vadd.f32 %v4549, %v4804
    %v4945 = vadd.f32 %v4550, %v4807
    %v4946 = vadd.f32 %v4551, %v4809
    %v4947 = vadd.f32 %v4552, %v4812
    %v4948 = vadd.f32 %v4553, %v4814
    %v4949 = vadd.f32 %v4554, %v4817
    %v4950 = vadd.f32 %v4555, %v4819
    %v4951 = vadd.f32 %v4556, %v4822
    %v4952 = vadd.f32 %v4557, %v4824
    %v4953 = vadd.f32 %v4558, %v4827
    %v4954 = vadd.f32 %v4559, %v4829
    %v4955 = vadd.f32 %v4560, %v4832
    %v4956 = vadd.f32 %v4561, %v4834
    %v4957 = vadd.f32 %v4562, %v4837
    %v4958 = vadd.f32 %v4563, %v4839
    %v4959 = vadd.f32 %v4564, %v4842
    %v4960 = vadd.f32 %v4565, %v4844
    %v4961 = vadd.f32 %v4566, %v4847
    %v4962 = vadd.f32 %v4567, %v4849
    %v4963 = vadd.f32 %v4568, %v4852
    %v4964 = vadd.f32 %v4569, %v4854
    %v4965 = vadd.f32 %v4570, %v4857
    %v4966 = vadd.f32 %v4571, %v4859
    %v4967 = vadd.f32 %v4572, %v4862
    %v4968 = vadd.f32 %v4573, %v4864
    %v4969 = vadd.f32 %v4574, %v4867
    %v4970 = vadd.f32 %v4575, %v4869
    %v4971 = vadd.f32 %v4576, %v4872
    %v4972 = vadd.f32 %v4577, %v4874
    %v4973 = vadd.f32 %v4578, %v4877
    %v4974 = vadd.f32 %v4579, %v4879
    %v4975 = vadd.f32 %v4580, %v4882
    %v4976 = vadd.f32 %v4581, %v4884
    %v4977 = vadd.f32 %v4582, %v4887
    %v4978 = vadd.f32 %v4583, %v4889
    %v4979 = vadd.f32 %v4584, %v4892
    %v4980 = vadd.f32 %v4585, %v4894
    %v4981 = vadd.f32 %v4586, %v4897
    %v4982 = vadd.f32 %v4587, %v4899
    %v4983 = vadd.f32 %v4588, %v4902
    %v4984 = vadd.f32 %v4589, %v4904
    %v4985 = vadd.f32 %v4590, %v4907
    %v4986 = vadd.f32 %v4591, %v4909
    %v4987 = vadd.f32 %v4592, %v4912
    %v4988 = vadd.f32 %v4593, %v4914
    %v4989 = vadd.f32 %v4594, %v4917
    %v4990 = vadd.f32 %v4595, %v4919
    %v4991 = vadd.f32 %v4596, %v4922
    %v4992 = vadd.f32 %v4597, %v4924
    %v4993 = vadd.f32 %v4598, %v4927
    %v4994 = vadd.f32 %v4599, %v4929
    %v4995 = vld [vmem:[%s4600 + $0x1] sm:$0xff]
    %v4996 = vld [vmem:[%s4600 + $0x9] sm:$0xff]
    %v4997 = vld [vmem:[%s4600 + $0x19] sm:$0xff]
    %v4998 = vld [vmem:[%s4600 + $0x21] sm:$0xff]
    %v4999 = vld [vmem:[%s4600 + $0x31] sm:$0xff]
    %v5000 = vld [vmem:[%s4600 + $0x39] sm:$0xff]
    %v5001 = vld [vmem:[%s4600 + $0x49] sm:$0xff]
    %v5002 = vld [vmem:[%s4600 + $0x51] sm:$0xff]
    %v5003 = vld [vmem:[%s4600 + $0x61] sm:$0xff]
    %v5004 = vld [vmem:[%s4600 + $0x69] sm:$0xff]
    %v5005 = vld [vmem:[%s4600 + $0x79] sm:$0xff]
    %v5006 = vld [vmem:[%s4600 + $0x81] sm:$0xff]
    %v5007 = vld [vmem:[%s4600 + $0x91] sm:$0xff]
    %v5008 = vld [vmem:[%s4600 + $0x99] sm:$0xff]
    %v5009 = vld [vmem:[%s4600 + $0xa9] sm:$0xff]
    %v5010 = vld [vmem:[%s4600 + $0xb1] sm:$0xff]
    %v5011 = vld [vmem:[%s4600 + $0xc1] sm:$0xff]
    %v5012 = vld [vmem:[%s4600 + $0xc9] sm:$0xff]
    %v5013 = vld [vmem:[%s4600 + $0xd9] sm:$0xff]
    %v5014 = vld [vmem:[%s4600 + $0xe1] sm:$0xff]
    %v5015 = vld [vmem:[%s4600 + $0xf1] sm:$0xff]
    %v5016 = vld [vmem:[%s4600 + $0xf9] sm:$0xff]
    %v5017 = vld [vmem:[%s4600 + $0x109] sm:$0xff]
    %v5018 = vld [vmem:[%s4600 + $0x111] sm:$0xff]
    %v5019 = vld [vmem:[%s4600 + $0x121] sm:$0xff]
    %v5020 = vld [vmem:[%s4600 + $0x129] sm:$0xff]
    %v5021 = vld [vmem:[%s4600 + $0x139] sm:$0xff]
    %v5022 = vld [vmem:[%s4600 + $0x141] sm:$0xff]
    %v5023 = vld [vmem:[%s4600 + $0x151] sm:$0xff]
    %v5024 = vld [vmem:[%s4600 + $0x159] sm:$0xff]
    %v5025 = vld [vmem:[%s4600 + $0x169] sm:$0xff]
    %v5026 = vld [vmem:[%s4600 + $0x171] sm:$0xff]
    %v5027 = vld [vmem:[%s4600 + $0x1b1] sm:$0xff]
    %v5028 = vld [vmem:[%s4600 + $0x1b9] sm:$0xff]
    %v5029 = vld [vmem:[%s4600 + $0x1c9] sm:$0xff]
    %v5030 = vld [vmem:[%s4600 + $0x1d1] sm:$0xff]
    %v5031 = vld [vmem:[%s4600 + $0x1e1] sm:$0xff]
    %v5032 = vld [vmem:[%s4600 + $0x1e9] sm:$0xff]
    %v5033 = vld [vmem:[%s4600 + $0x1f9] sm:$0xff]
    %v5034 = vld [vmem:[%s4600 + $0x201] sm:$0xff]
    %v5035 = vld [vmem:[%s4600 + $0x211] sm:$0xff]
    %v5036 = vld [vmem:[%s4600 + $0x219] sm:$0xff]
    %v5037 = vld [vmem:[%s4600 + $0x229] sm:$0xff]
    %v5038 = vld [vmem:[%s4600 + $0x231] sm:$0xff]
    %v5039 = vld [vmem:[%s4600 + $0x241] sm:$0xff]
    %v5040 = vld [vmem:[%s4600 + $0x249] sm:$0xff]
    %v5041 = vld [vmem:[%s4600 + $0x259] sm:$0xff]
    %v5042 = vld [vmem:[%s4600 + $0x261] sm:$0xff]
    %v5043 = vld [vmem:[%s4600 + $0x271] sm:$0xff]
    %v5044 = vld [vmem:[%s4600 + $0x279] sm:$0xff]
    %v5045 = vld [vmem:[%s4600 + $0x289] sm:$0xff]
    %v5046 = vld [vmem:[%s4600 + $0x291] sm:$0xff]
    %v5047 = vld [vmem:[%s4600 + $0x2a1] sm:$0xff]
    %v5048 = vld [vmem:[%s4600 + $0x2a9] sm:$0xff]
    %v5049 = vld [vmem:[%s4600 + $0x2b9] sm:$0xff]
    %v5050 = vld [vmem:[%s4600 + $0x2c1] sm:$0xff]
    %v5051 = vld [vmem:[%s4600 + $0x2d1] sm:$0xff]
    %v5052 = vld [vmem:[%s4600 + $0x2d9] sm:$0xff]
    %v5053 = vld [vmem:[%s4600 + $0x2e9] sm:$0xff]
    %v5054 = vld [vmem:[%s4600 + $0x2f1] sm:$0xff]
    %v5055 = vld [vmem:[%s4600 + $0x301] sm:$0xff]
    %v5056 = vld [vmem:[%s4600 + $0x309] sm:$0xff]
    %v5057 = vld [vmem:[%s4600 + $0x319] sm:$0xff]
    %v5058 = vld [vmem:[%s4600 + $0x321] sm:$0xff]
    %v5059 = vpack.c.bf16 %v4996, %v4995
    %v5060 = vpack.c.bf16 %v4998, %v4997
    %v5061 = vpack.c.bf16 %v5000, %v4999
    %v5062 = vpack.c.bf16 %v5002, %v5001
    %v5063 = vpack.c.bf16 %v5004, %v5003
    %v5064 = vpack.c.bf16 %v5006, %v5005
    %v5065 = vpack.c.bf16 %v5008, %v5007
    %v5066 = vpack.c.bf16 %v5010, %v5009
    %v5067 = vpack.c.bf16 %v5012, %v5011
    %v5068 = vpack.c.bf16 %v5014, %v5013
    %v5069 = vpack.c.bf16 %v5016, %v5015
    %v5070 = vpack.c.bf16 %v5018, %v5017
    %v5071 = vpack.c.bf16 %v5020, %v5019
    %v5072 = vpack.c.bf16 %v5022, %v5021
    %v5073 = vpack.c.bf16 %v5024, %v5023
    %v5074 = vpack.c.bf16 %v5026, %v5025
    %v5075 = vpack.c.bf16 %v5028, %v5027
    %v5076 = vpack.c.bf16 %v5030, %v5029
    %v5077 = vpack.c.bf16 %v5032, %v5031
    %v5078 = vpack.c.bf16 %v5034, %v5033
    %v5079 = vpack.c.bf16 %v5036, %v5035
    %v5080 = vpack.c.bf16 %v5038, %v5037
    %v5081 = vpack.c.bf16 %v5040, %v5039
    %v5082 = vpack.c.bf16 %v5042, %v5041
    %v5083 = vpack.c.bf16 %v5044, %v5043
    %v5084 = vpack.c.bf16 %v5046, %v5045
    %v5085 = vpack.c.bf16 %v5048, %v5047
    %v5086 = vpack.c.bf16 %v5050, %v5049
    %v5087 = vpack.c.bf16 %v5052, %v5051
    %v5088 = vpack.c.bf16 %v5054, %v5053
    %v5089 = vpack.c.bf16 %v5056, %v5055
    %v5090 = vpack.c.bf16 %v5058, %v5057
    %s5091 = scalar_lea.vmem [#allocation9], 448
    %v5092 = vld [vmem:[%s5091] sm:$0xf]
    %v5093 = vld [vmem:[%s5091 + $0x4] sm:$0xf]
    %v5094 = vld [vmem:[%s5091 + $0x8] sm:$0xf]
    %v5095 = vld [vmem:[%s5091 + $0xc] sm:$0xf]
    %v5096 = vld [vmem:[%s5091 + $0x10] sm:$0xf]
    %v5097 = vld [vmem:[%s5091 + $0x14] sm:$0xf]
    %v5098 = vld [vmem:[%s5091 + $0x18] sm:$0xf]
    %v5099 = vld [vmem:[%s5091 + $0x1c] sm:$0xf]
    %v5100 = vld [vmem:[%s5091 + $0x20] sm:$0xf]
    %v5101 = vld [vmem:[%s5091 + $0x24] sm:$0xf]
    %v5102 = vld [vmem:[%s5091 + $0x28] sm:$0xf]
    %v5103 = vld [vmem:[%s5091 + $0x2c] sm:$0xf]
    %v5104 = vld [vmem:[%s5091 + $0x30] sm:$0xf]
    %v5105 = vld [vmem:[%s5091 + $0x34] sm:$0xf]
    %v5106 = vld [vmem:[%s5091 + $0x38] sm:$0xf]
    %v5107 = vld [vmem:[%s5091 + $0x3c] sm:$0xf]
    %v5124 = vunpack.c.l.b16 %v5092
    %v5125 = vunpack.c.l.b16 %v5093
    %v5126 = vunpack.c.l.b16 %v5094
    %v5127 = vunpack.c.l.b16 %v5095
    %v5128 = vunpack.c.l.b16 %v5096
    %v5129 = vunpack.c.l.b16 %v5097
    %v5130 = vunpack.c.l.b16 %v5098
    %v5131 = vunpack.c.l.b16 %v5099
    %v5132 = vunpack.c.l.b16 %v5100
    %v5133 = vunpack.c.l.b16 %v5101
    %v5134 = vunpack.c.l.b16 %v5102
    %v5135 = vunpack.c.l.b16 %v5103
    %v5136 = vunpack.c.l.b16 %v5104
    %v5137 = vunpack.c.l.b16 %v5105
    %v5138 = vunpack.c.l.b16 %v5106
    %v5139 = vunpack.c.l.b16 %v5107
    %v5140 = vpack.c.b16 %v5125, %v5124
    %v5141 = vpack.c.b16 %v5127, %v5126
    %v5142 = vpack.c.b16 %v5129, %v5128
    %v5143 = vpack.c.b16 %v5131, %v5130
    %v5144 = vpack.c.b16 %v5133, %v5132
    %v5145 = vpack.c.b16 %v5135, %v5134
    %v5146 = vpack.c.b16 %v5137, %v5136
    %v5147 = vpack.c.b16 %v5139, %v5138
    %5156 = vmatpush.bf16.msra.mxu0 %v5147
    %5157 = vmatpush.bf16.msra.mxu0 %v5146
    %5158 = vmatpush.bf16.msra.mxu0 %v5145
    %5159 = vmatpush.bf16.msra.mxu0 %v5144
    %5160 = vmatpush.bf16.msra.mxu0 %v5143
    %5161 = vmatpush.bf16.msra.mxu0 %v5142
    %5162 = vmatpush.bf16.msra.mxu0 %v5141
    %5163 = vmatpush.bf16.msra.mxu0 %v5140
    %5164 = vmatmul.bf16.gmra.mxu0 %v5059
    %v5165 = vpop.f32.mrf.mxu0
    %v5166 = vadd.f32 0.0, %v5165
    %v5167 = vpop.f32.mrf.mxu0
    %v5168 = vadd.f32 0.0, %v5167
    %5169 = vmatmul.bf16.gmra.mxu0 %v5060
    %v5170 = vpop.f32.mrf.mxu0
    %v5171 = vadd.f32 0.0, %v5170
    %v5172 = vpop.f32.mrf.mxu0
    %v5173 = vadd.f32 0.0, %v5172
    %5174 = vmatmul.bf16.gmra.mxu0 %v5061
    %v5175 = vpop.f32.mrf.mxu0
    %v5176 = vadd.f32 0.0, %v5175
    %v5177 = vpop.f32.mrf.mxu0
    %v5178 = vadd.f32 0.0, %v5177
    %5179 = vmatmul.bf16.gmra.mxu0 %v5062
    %v5180 = vpop.f32.mrf.mxu0
    %v5181 = vadd.f32 0.0, %v5180
    %v5182 = vpop.f32.mrf.mxu0
    %v5183 = vadd.f32 0.0, %v5182
    %5184 = vmatmul.bf16.gmra.mxu0 %v5063
    %v5185 = vpop.f32.mrf.mxu0
    %v5186 = vadd.f32 0.0, %v5185
    %v5187 = vpop.f32.mrf.mxu0
    %v5188 = vadd.f32 0.0, %v5187
    %5189 = vmatmul.bf16.gmra.mxu0 %v5064
    %v5190 = vpop.f32.mrf.mxu0
    %v5191 = vadd.f32 0.0, %v5190
    %v5192 = vpop.f32.mrf.mxu0
    %v5193 = vadd.f32 0.0, %v5192
    %5194 = vmatmul.bf16.gmra.mxu0 %v5065
    %v5195 = vpop.f32.mrf.mxu0
    %v5196 = vadd.f32 0.0, %v5195
    %v5197 = vpop.f32.mrf.mxu0
    %v5198 = vadd.f32 0.0, %v5197
    %5199 = vmatmul.bf16.gmra.mxu0 %v5066
    %v5200 = vpop.f32.mrf.mxu0
    %v5201 = vadd.f32 0.0, %v5200
    %v5202 = vpop.f32.mrf.mxu0
    %v5203 = vadd.f32 0.0, %v5202
    %5204 = vmatmul.bf16.gmra.mxu0 %v5067
    %v5205 = vpop.f32.mrf.mxu0
    %v5206 = vadd.f32 0.0, %v5205
    %v5207 = vpop.f32.mrf.mxu0
    %v5208 = vadd.f32 0.0, %v5207
    %5209 = vmatmul.bf16.gmra.mxu0 %v5068
    %v5210 = vpop.f32.mrf.mxu0
    %v5211 = vadd.f32 0.0, %v5210
    %v5212 = vpop.f32.mrf.mxu0
    %v5213 = vadd.f32 0.0, %v5212
    %5214 = vmatmul.bf16.gmra.mxu0 %v5069
    %v5215 = vpop.f32.mrf.mxu0
    %v5216 = vadd.f32 0.0, %v5215
    %v5217 = vpop.f32.mrf.mxu0
    %v5218 = vadd.f32 0.0, %v5217
    %5219 = vmatmul.bf16.gmra.mxu0 %v5070
    %v5220 = vpop.f32.mrf.mxu0
    %v5221 = vadd.f32 0.0, %v5220
    %v5222 = vpop.f32.mrf.mxu0
    %v5223 = vadd.f32 0.0, %v5222
    %5224 = vmatmul.bf16.gmra.mxu0 %v5071
    %v5225 = vpop.f32.mrf.mxu0
    %v5226 = vadd.f32 0.0, %v5225
    %v5227 = vpop.f32.mrf.mxu0
    %v5228 = vadd.f32 0.0, %v5227
    %5229 = vmatmul.bf16.gmra.mxu0 %v5072
    %v5230 = vpop.f32.mrf.mxu0
    %v5231 = vadd.f32 0.0, %v5230
    %v5232 = vpop.f32.mrf.mxu0
    %v5233 = vadd.f32 0.0, %v5232
    %5234 = vmatmul.bf16.gmra.mxu0 %v5073
    %v5235 = vpop.f32.mrf.mxu0
    %v5236 = vadd.f32 0.0, %v5235
    %v5237 = vpop.f32.mrf.mxu0
    %v5238 = vadd.f32 0.0, %v5237
    %5239 = vmatmul.bf16.gmra.mxu0 %v5074
    %v5240 = vpop.f32.mrf.mxu0
    %v5241 = vadd.f32 0.0, %v5240
    %v5242 = vpop.f32.mrf.mxu0
    %v5243 = vadd.f32 0.0, %v5242
    %5244 = vmatmul.bf16.gmra.mxu0 %v5075
    %v5245 = vpop.f32.mrf.mxu0
    %v5246 = vadd.f32 0.0, %v5245
    %v5247 = vpop.f32.mrf.mxu0
    %v5248 = vadd.f32 0.0, %v5247
    %5249 = vmatmul.bf16.gmra.mxu0 %v5076
    %v5250 = vpop.f32.mrf.mxu0
    %v5251 = vadd.f32 0.0, %v5250
    %v5252 = vpop.f32.mrf.mxu0
    %v5253 = vadd.f32 0.0, %v5252
    %5254 = vmatmul.bf16.gmra.mxu0 %v5077
    %v5255 = vpop.f32.mrf.mxu0
    %v5256 = vadd.f32 0.0, %v5255
    %v5257 = vpop.f32.mrf.mxu0
    %v5258 = vadd.f32 0.0, %v5257
    %5259 = vmatmul.bf16.gmra.mxu0 %v5078
    %v5260 = vpop.f32.mrf.mxu0
    %v5261 = vadd.f32 0.0, %v5260
    %v5262 = vpop.f32.mrf.mxu0
    %v5263 = vadd.f32 0.0, %v5262
    %5264 = vmatmul.bf16.gmra.mxu0 %v5079
    %v5265 = vpop.f32.mrf.mxu0
    %v5266 = vadd.f32 0.0, %v5265
    %v5267 = vpop.f32.mrf.mxu0
    %v5268 = vadd.f32 0.0, %v5267
    %5269 = vmatmul.bf16.gmra.mxu0 %v5080
    %v5270 = vpop.f32.mrf.mxu0
    %v5271 = vadd.f32 0.0, %v5270
    %v5272 = vpop.f32.mrf.mxu0
    %v5273 = vadd.f32 0.0, %v5272
    %5274 = vmatmul.bf16.gmra.mxu0 %v5081
    %v5275 = vpop.f32.mrf.mxu0
    %v5276 = vadd.f32 0.0, %v5275
    %v5277 = vpop.f32.mrf.mxu0
    %v5278 = vadd.f32 0.0, %v5277
    %5279 = vmatmul.bf16.gmra.mxu0 %v5082
    %v5280 = vpop.f32.mrf.mxu0
    %v5281 = vadd.f32 0.0, %v5280
    %v5282 = vpop.f32.mrf.mxu0
    %v5283 = vadd.f32 0.0, %v5282
    %5284 = vmatmul.bf16.gmra.mxu0 %v5083
    %v5285 = vpop.f32.mrf.mxu0
    %v5286 = vadd.f32 0.0, %v5285
    %v5287 = vpop.f32.mrf.mxu0
    %v5288 = vadd.f32 0.0, %v5287
    %5289 = vmatmul.bf16.gmra.mxu0 %v5084
    %v5290 = vpop.f32.mrf.mxu0
    %v5291 = vadd.f32 0.0, %v5290
    %v5292 = vpop.f32.mrf.mxu0
    %v5293 = vadd.f32 0.0, %v5292
    %5294 = vmatmul.bf16.gmra.mxu0 %v5085
    %v5295 = vpop.f32.mrf.mxu0
    %v5296 = vadd.f32 0.0, %v5295
    %v5297 = vpop.f32.mrf.mxu0
    %v5298 = vadd.f32 0.0, %v5297
    %5299 = vmatmul.bf16.gmra.mxu0 %v5086
    %v5300 = vpop.f32.mrf.mxu0
    %v5301 = vadd.f32 0.0, %v5300
    %v5302 = vpop.f32.mrf.mxu0
    %v5303 = vadd.f32 0.0, %v5302
    %5304 = vmatmul.bf16.gmra.mxu0 %v5087
    %v5305 = vpop.f32.mrf.mxu0
    %v5306 = vadd.f32 0.0, %v5305
    %v5307 = vpop.f32.mrf.mxu0
    %v5308 = vadd.f32 0.0, %v5307
    %5309 = vmatmul.bf16.gmra.mxu0 %v5088
    %v5310 = vpop.f32.mrf.mxu0
    %v5311 = vadd.f32 0.0, %v5310
    %v5312 = vpop.f32.mrf.mxu0
    %v5313 = vadd.f32 0.0, %v5312
    %5314 = vmatmul.bf16.gmra.mxu0 %v5089
    %v5315 = vpop.f32.mrf.mxu0
    %v5316 = vadd.f32 0.0, %v5315
    %v5317 = vpop.f32.mrf.mxu0
    %v5318 = vadd.f32 0.0, %v5317
    %5319 = vmatmul.bf16.gmra.mxu0 %v5090
    %v5320 = vpop.f32.mrf.mxu0
    %v5321 = vadd.f32 0.0, %v5320
    %v5322 = vpop.f32.mrf.mxu0
    %v5323 = vadd.f32 0.0, %v5322
    %5324 = vdwg.mxu0
    %v5325 = vadd.f32 %v4931, %v5166
    %v5326 = vadd.f32 %v4932, %v5168
    %v5327 = vadd.f32 %v4933, %v5171
    %v5328 = vadd.f32 %v4934, %v5173
    %v5329 = vadd.f32 %v4935, %v5176
    %v5330 = vadd.f32 %v4936, %v5178
    %v5331 = vadd.f32 %v4937, %v5181
    %v5332 = vadd.f32 %v4938, %v5183
    %v5333 = vadd.f32 %v4939, %v5186
    %v5334 = vadd.f32 %v4940, %v5188
    %v5335 = vadd.f32 %v4941, %v5191
    %v5336 = vadd.f32 %v4942, %v5193
    %v5337 = vadd.f32 %v4943, %v5196
    %v5338 = vadd.f32 %v4944, %v5198
    %v5339 = vadd.f32 %v4945, %v5201
    %v5340 = vadd.f32 %v4946, %v5203
    %v5341 = vadd.f32 %v4947, %v5206
    %v5342 = vadd.f32 %v4948, %v5208
    %v5343 = vadd.f32 %v4949, %v5211
    %v5344 = vadd.f32 %v4950, %v5213
    %v5345 = vadd.f32 %v4951, %v5216
    %v5346 = vadd.f32 %v4952, %v5218
    %v5347 = vadd.f32 %v4953, %v5221
    %v5348 = vadd.f32 %v4954, %v5223
    %v5349 = vadd.f32 %v4955, %v5226
    %v5350 = vadd.f32 %v4956, %v5228
    %v5351 = vadd.f32 %v4957, %v5231
    %v5352 = vadd.f32 %v4958, %v5233
    %v5353 = vadd.f32 %v4959, %v5236
    %v5354 = vadd.f32 %v4960, %v5238
    %v5355 = vadd.f32 %v4961, %v5241
    %v5356 = vadd.f32 %v4962, %v5243
    %v5357 = vadd.f32 %v4963, %v5246
    %v5358 = vadd.f32 %v4964, %v5248
    %v5359 = vadd.f32 %v4965, %v5251
    %v5360 = vadd.f32 %v4966, %v5253
    %v5361 = vadd.f32 %v4967, %v5256
    %v5362 = vadd.f32 %v4968, %v5258
    %v5363 = vadd.f32 %v4969, %v5261
    %v5364 = vadd.f32 %v4970, %v5263
    %v5365 = vadd.f32 %v4971, %v5266
    %v5366 = vadd.f32 %v4972, %v5268
    %v5367 = vadd.f32 %v4973, %v5271
    %v5368 = vadd.f32 %v4974, %v5273
    %v5369 = vadd.f32 %v4975, %v5276
    %v5370 = vadd.f32 %v4976, %v5278
    %v5371 = vadd.f32 %v4977, %v5281
    %v5372 = vadd.f32 %v4978, %v5283
    %v5373 = vadd.f32 %v4979, %v5286
    %v5374 = vadd.f32 %v4980, %v5288
    %v5375 = vadd.f32 %v4981, %v5291
    %v5376 = vadd.f32 %v4982, %v5293
    %v5377 = vadd.f32 %v4983, %v5296
    %v5378 = vadd.f32 %v4984, %v5298
    %v5379 = vadd.f32 %v4985, %v5301
    %v5380 = vadd.f32 %v4986, %v5303
    %v5381 = vadd.f32 %v4987, %v5306
    %v5382 = vadd.f32 %v4988, %v5308
    %v5383 = vadd.f32 %v4989, %v5311
    %v5384 = vadd.f32 %v4990, %v5313
    %v5385 = vadd.f32 %v4991, %v5316
    %v5386 = vadd.f32 %v4992, %v5318
    %v5387 = vadd.f32 %v4993, %v5321
    %v5388 = vadd.f32 %v4994, %v5323
    %v5389 = vld [vmem:[%s4600 + $0x2] sm:$0xff]
    %v5390 = vld [vmem:[%s4600 + $0xa] sm:$0xff]
    %v5391 = vld [vmem:[%s4600 + $0x1a] sm:$0xff]
    %v5392 = vld [vmem:[%s4600 + $0x22] sm:$0xff]
    %v5393 = vld [vmem:[%s4600 + $0x32] sm:$0xff]
    %v5394 = vld [vmem:[%s4600 + $0x3a] sm:$0xff]
    %v5395 = vld [vmem:[%s4600 + $0x4a] sm:$0xff]
    %v5396 = vld [vmem:[%s4600 + $0x52] sm:$0xff]
    %v5397 = vld [vmem:[%s4600 + $0x62] sm:$0xff]
    %v5398 = vld [vmem:[%s4600 + $0x6a] sm:$0xff]
    %v5399 = vld [vmem:[%s4600 + $0x7a] sm:$0xff]
    %v5400 = vld [vmem:[%s4600 + $0x82] sm:$0xff]
    %v5401 = vld [vmem:[%s4600 + $0x92] sm:$0xff]
    %v5402 = vld [vmem:[%s4600 + $0x9a] sm:$0xff]
    %v5403 = vld [vmem:[%s4600 + $0xaa] sm:$0xff]
    %v5404 = vld [vmem:[%s4600 + $0xb2] sm:$0xff]
    %v5405 = vld [vmem:[%s4600 + $0xc2] sm:$0xff]
    %v5406 = vld [vmem:[%s4600 + $0xca] sm:$0xff]
    %v5407 = vld [vmem:[%s4600 + $0xda] sm:$0xff]
    %v5408 = vld [vmem:[%s4600 + $0xe2] sm:$0xff]
    %v5409 = vld [vmem:[%s4600 + $0xf2] sm:$0xff]
    %v5410 = vld [vmem:[%s4600 + $0xfa] sm:$0xff]
    %v5411 = vld [vmem:[%s4600 + $0x10a] sm:$0xff]
    %v5412 = vld [vmem:[%s4600 + $0x112] sm:$0xff]
    %v5413 = vld [vmem:[%s4600 + $0x122] sm:$0xff]
    %v5414 = vld [vmem:[%s4600 + $0x12a] sm:$0xff]
    %v5415 = vld [vmem:[%s4600 + $0x13a] sm:$0xff]
    %v5416 = vld [vmem:[%s4600 + $0x142] sm:$0xff]
    %v5417 = vld [vmem:[%s4600 + $0x152] sm:$0xff]
    %v5418 = vld [vmem:[%s4600 + $0x15a] sm:$0xff]
    %v5419 = vld [vmem:[%s4600 + $0x16a] sm:$0xff]
    %v5420 = vld [vmem:[%s4600 + $0x172] sm:$0xff]
    %v5421 = vld [vmem:[%s4600 + $0x1b2] sm:$0xff]
    %v5422 = vld [vmem:[%s4600 + $0x1ba] sm:$0xff]
    %v5423 = vld [vmem:[%s4600 + $0x1ca] sm:$0xff]
    %v5424 = vld [vmem:[%s4600 + $0x1d2] sm:$0xff]
    %v5425 = vld [vmem:[%s4600 + $0x1e2] sm:$0xff]
    %v5426 = vld [vmem:[%s4600 + $0x1ea] sm:$0xff]
    %v5427 = vld [vmem:[%s4600 + $0x1fa] sm:$0xff]
    %v5428 = vld [vmem:[%s4600 + $0x202] sm:$0xff]
    %v5429 = vld [vmem:[%s4600 + $0x212] sm:$0xff]
    %v5430 = vld [vmem:[%s4600 + $0x21a] sm:$0xff]
    %v5431 = vld [vmem:[%s4600 + $0x22a] sm:$0xff]
    %v5432 = vld [vmem:[%s4600 + $0x232] sm:$0xff]
    %v5433 = vld [vmem:[%s4600 + $0x242] sm:$0xff]
    %v5434 = vld [vmem:[%s4600 + $0x24a] sm:$0xff]
    %v5435 = vld [vmem:[%s4600 + $0x25a] sm:$0xff]
    %v5436 = vld [vmem:[%s4600 + $0x262] sm:$0xff]
    %v5437 = vld [vmem:[%s4600 + $0x272] sm:$0xff]
    %v5438 = vld [vmem:[%s4600 + $0x27a] sm:$0xff]
    %v5439 = vld [vmem:[%s4600 + $0x28a] sm:$0xff]
    %v5440 = vld [vmem:[%s4600 + $0x292] sm:$0xff]
    %v5441 = vld [vmem:[%s4600 + $0x2a2] sm:$0xff]
    %v5442 = vld [vmem:[%s4600 + $0x2aa] sm:$0xff]
    %v5443 = vld [vmem:[%s4600 + $0x2ba] sm:$0xff]
    %v5444 = vld [vmem:[%s4600 + $0x2c2] sm:$0xff]
    %v5445 = vld [vmem:[%s4600 + $0x2d2] sm:$0xff]
    %v5446 = vld [vmem:[%s4600 + $0x2da] sm:$0xff]
    %v5447 = vld [vmem:[%s4600 + $0x2ea] sm:$0xff]
    %v5448 = vld [vmem:[%s4600 + $0x2f2] sm:$0xff]
    %v5449 = vld [vmem:[%s4600 + $0x302] sm:$0xff]
    %v5450 = vld [vmem:[%s4600 + $0x30a] sm:$0xff]
    %v5451 = vld [vmem:[%s4600 + $0x31a] sm:$0xff]
    %v5452 = vld [vmem:[%s4600 + $0x322] sm:$0xff]
    %v5453 = vpack.c.bf16 %v5390, %v5389
    %v5454 = vpack.c.bf16 %v5392, %v5391
    %v5455 = vpack.c.bf16 %v5394, %v5393
    %v5456 = vpack.c.bf16 %v5396, %v5395
    %v5457 = vpack.c.bf16 %v5398, %v5397
    %v5458 = vpack.c.bf16 %v5400, %v5399
    %v5459 = vpack.c.bf16 %v5402, %v5401
    %v5460 = vpack.c.bf16 %v5404, %v5403
    %v5461 = vpack.c.bf16 %v5406, %v5405
    %v5462 = vpack.c.bf16 %v5408, %v5407
    %v5463 = vpack.c.bf16 %v5410, %v5409
    %v5464 = vpack.c.bf16 %v5412, %v5411
    %v5465 = vpack.c.bf16 %v5414, %v5413
    %v5466 = vpack.c.bf16 %v5416, %v5415
    %v5467 = vpack.c.bf16 %v5418, %v5417
    %v5468 = vpack.c.bf16 %v5420, %v5419
    %v5469 = vpack.c.bf16 %v5422, %v5421
    %v5470 = vpack.c.bf16 %v5424, %v5423
    %v5471 = vpack.c.bf16 %v5426, %v5425
    %v5472 = vpack.c.bf16 %v5428, %v5427
    %v5473 = vpack.c.bf16 %v5430, %v5429
    %v5474 = vpack.c.bf16 %v5432, %v5431
    %v5475 = vpack.c.bf16 %v5434, %v5433
    %v5476 = vpack.c.bf16 %v5436, %v5435
    %v5477 = vpack.c.bf16 %v5438, %v5437
    %v5478 = vpack.c.bf16 %v5440, %v5439
    %v5479 = vpack.c.bf16 %v5442, %v5441
    %v5480 = vpack.c.bf16 %v5444, %v5443
    %v5481 = vpack.c.bf16 %v5446, %v5445
    %v5482 = vpack.c.bf16 %v5448, %v5447
    %v5483 = vpack.c.bf16 %v5450, %v5449
    %v5484 = vpack.c.bf16 %v5452, %v5451
    %s5485 = scalar_lea.vmem [#allocation9], 512
    %v5486 = vld [vmem:[%s5485] sm:$0xf]
    %v5487 = vld [vmem:[%s5485 + $0x4] sm:$0xf]
    %v5488 = vld [vmem:[%s5485 + $0x8] sm:$0xf]
    %v5489 = vld [vmem:[%s5485 + $0xc] sm:$0xf]
    %v5490 = vld [vmem:[%s5485 + $0x10] sm:$0xf]
    %v5491 = vld [vmem:[%s5485 + $0x14] sm:$0xf]
    %v5492 = vld [vmem:[%s5485 + $0x18] sm:$0xf]
    %v5493 = vld [vmem:[%s5485 + $0x1c] sm:$0xf]
    %v5494 = vld [vmem:[%s5485 + $0x20] sm:$0xf]
    %v5495 = vld [vmem:[%s5485 + $0x24] sm:$0xf]
    %v5496 = vld [vmem:[%s5485 + $0x28] sm:$0xf]
    %v5497 = vld [vmem:[%s5485 + $0x2c] sm:$0xf]
    %v5498 = vld [vmem:[%s5485 + $0x30] sm:$0xf]
    %v5499 = vld [vmem:[%s5485 + $0x34] sm:$0xf]
    %v5500 = vld [vmem:[%s5485 + $0x38] sm:$0xf]
    %v5501 = vld [vmem:[%s5485 + $0x3c] sm:$0xf]
    %v5518 = vunpack.c.l.b16 %v5486
    %v5519 = vunpack.c.l.b16 %v5487
    %v5520 = vunpack.c.l.b16 %v5488
    %v5521 = vunpack.c.l.b16 %v5489
    %v5522 = vunpack.c.l.b16 %v5490
    %v5523 = vunpack.c.l.b16 %v5491
    %v5524 = vunpack.c.l.b16 %v5492
    %v5525 = vunpack.c.l.b16 %v5493
    %v5526 = vunpack.c.l.b16 %v5494
    %v5527 = vunpack.c.l.b16 %v5495
    %v5528 = vunpack.c.l.b16 %v5496
    %v5529 = vunpack.c.l.b16 %v5497
    %v5530 = vunpack.c.l.b16 %v5498
    %v5531 = vunpack.c.l.b16 %v5499
    %v5532 = vunpack.c.l.b16 %v5500
    %v5533 = vunpack.c.l.b16 %v5501
    %v5534 = vpack.c.b16 %v5519, %v5518
    %v5535 = vpack.c.b16 %v5521, %v5520
    %v5536 = vpack.c.b16 %v5523, %v5522
    %v5537 = vpack.c.b16 %v5525, %v5524
    %v5538 = vpack.c.b16 %v5527, %v5526
    %v5539 = vpack.c.b16 %v5529, %v5528
    %v5540 = vpack.c.b16 %v5531, %v5530
    %v5541 = vpack.c.b16 %v5533, %v5532
    %5550 = vmatpush.bf16.msra.mxu0 %v5541
    %5551 = vmatpush.bf16.msra.mxu0 %v5540
    %5552 = vmatpush.bf16.msra.mxu0 %v5539
    %5553 = vmatpush.bf16.msra.mxu0 %v5538
    %5554 = vmatpush.bf16.msra.mxu0 %v5537
    %5555 = vmatpush.bf16.msra.mxu0 %v5536
    %5556 = vmatpush.bf16.msra.mxu0 %v5535
    %5557 = vmatpush.bf16.msra.mxu0 %v5534
    %5558 = vmatmul.bf16.gmra.mxu0 %v5453
    %v5559 = vpop.f32.mrf.mxu0
    %v5560 = vadd.f32 0.0, %v5559
    %v5561 = vpop.f32.mrf.mxu0
    %v5562 = vadd.f32 0.0, %v5561
    %5563 = vmatmul.bf16.gmra.mxu0 %v5454
    %v5564 = vpop.f32.mrf.mxu0
    %v5565 = vadd.f32 0.0, %v5564
    %v5566 = vpop.f32.mrf.mxu0
    %v5567 = vadd.f32 0.0, %v5566
    %5568 = vmatmul.bf16.gmra.mxu0 %v5455
    %v5569 = vpop.f32.mrf.mxu0
    %v5570 = vadd.f32 0.0, %v5569
    %v5571 = vpop.f32.mrf.mxu0
    %v5572 = vadd.f32 0.0, %v5571
    %5573 = vmatmul.bf16.gmra.mxu0 %v5456
    %v5574 = vpop.f32.mrf.mxu0
    %v5575 = vadd.f32 0.0, %v5574
    %v5576 = vpop.f32.mrf.mxu0
    %v5577 = vadd.f32 0.0, %v5576
    %5578 = vmatmul.bf16.gmra.mxu0 %v5457
    %v5579 = vpop.f32.mrf.mxu0
    %v5580 = vadd.f32 0.0, %v5579
    %v5581 = vpop.f32.mrf.mxu0
    %v5582 = vadd.f32 0.0, %v5581
    %5583 = vmatmul.bf16.gmra.mxu0 %v5458
    %v5584 = vpop.f32.mrf.mxu0
    %v5585 = vadd.f32 0.0, %v5584
    %v5586 = vpop.f32.mrf.mxu0
    %v5587 = vadd.f32 0.0, %v5586
    %5588 = vmatmul.bf16.gmra.mxu0 %v5459
    %v5589 = vpop.f32.mrf.mxu0
    %v5590 = vadd.f32 0.0, %v5589
    %v5591 = vpop.f32.mrf.mxu0
    %v5592 = vadd.f32 0.0, %v5591
    %5593 = vmatmul.bf16.gmra.mxu0 %v5460
    %v5594 = vpop.f32.mrf.mxu0
    %v5595 = vadd.f32 0.0, %v5594
    %v5596 = vpop.f32.mrf.mxu0
    %v5597 = vadd.f32 0.0, %v5596
    %5598 = vmatmul.bf16.gmra.mxu0 %v5461
    %v5599 = vpop.f32.mrf.mxu0
    %v5600 = vadd.f32 0.0, %v5599
    %v5601 = vpop.f32.mrf.mxu0
    %v5602 = vadd.f32 0.0, %v5601
    %5603 = vmatmul.bf16.gmra.mxu0 %v5462
    %v5604 = vpop.f32.mrf.mxu0
    %v5605 = vadd.f32 0.0, %v5604
    %v5606 = vpop.f32.mrf.mxu0
    %v5607 = vadd.f32 0.0, %v5606
    %5608 = vmatmul.bf16.gmra.mxu0 %v5463
    %v5609 = vpop.f32.mrf.mxu0
    %v5610 = vadd.f32 0.0, %v5609
    %v5611 = vpop.f32.mrf.mxu0
    %v5612 = vadd.f32 0.0, %v5611
    %5613 = vmatmul.bf16.gmra.mxu0 %v5464
    %v5614 = vpop.f32.mrf.mxu0
    %v5615 = vadd.f32 0.0, %v5614
    %v5616 = vpop.f32.mrf.mxu0
    %v5617 = vadd.f32 0.0, %v5616
    %5618 = vmatmul.bf16.gmra.mxu0 %v5465
    %v5619 = vpop.f32.mrf.mxu0
    %v5620 = vadd.f32 0.0, %v5619
    %v5621 = vpop.f32.mrf.mxu0
    %v5622 = vadd.f32 0.0, %v5621
    %5623 = vmatmul.bf16.gmra.mxu0 %v5466
    %v5624 = vpop.f32.mrf.mxu0
    %v5625 = vadd.f32 0.0, %v5624
    %v5626 = vpop.f32.mrf.mxu0
    %v5627 = vadd.f32 0.0, %v5626
    %5628 = vmatmul.bf16.gmra.mxu0 %v5467
    %v5629 = vpop.f32.mrf.mxu0
    %v5630 = vadd.f32 0.0, %v5629
    %v5631 = vpop.f32.mrf.mxu0
    %v5632 = vadd.f32 0.0, %v5631
    %5633 = vmatmul.bf16.gmra.mxu0 %v5468
    %v5634 = vpop.f32.mrf.mxu0
    %v5635 = vadd.f32 0.0, %v5634
    %v5636 = vpop.f32.mrf.mxu0
    %v5637 = vadd.f32 0.0, %v5636
    %5638 = vmatmul.bf16.gmra.mxu0 %v5469
    %v5639 = vpop.f32.mrf.mxu0
    %v5640 = vadd.f32 0.0, %v5639
    %v5641 = vpop.f32.mrf.mxu0
    %v5642 = vadd.f32 0.0, %v5641
    %5643 = vmatmul.bf16.gmra.mxu0 %v5470
    %v5644 = vpop.f32.mrf.mxu0
    %v5645 = vadd.f32 0.0, %v5644
    %v5646 = vpop.f32.mrf.mxu0
    %v5647 = vadd.f32 0.0, %v5646
    %5648 = vmatmul.bf16.gmra.mxu0 %v5471
    %v5649 = vpop.f32.mrf.mxu0
    %v5650 = vadd.f32 0.0, %v5649
    %v5651 = vpop.f32.mrf.mxu0
    %v5652 = vadd.f32 0.0, %v5651
    %5653 = vmatmul.bf16.gmra.mxu0 %v5472
    %v5654 = vpop.f32.mrf.mxu0
    %v5655 = vadd.f32 0.0, %v5654
    %v5656 = vpop.f32.mrf.mxu0
    %v5657 = vadd.f32 0.0, %v5656
    %5658 = vmatmul.bf16.gmra.mxu0 %v5473
    %v5659 = vpop.f32.mrf.mxu0
    %v5660 = vadd.f32 0.0, %v5659
    %v5661 = vpop.f32.mrf.mxu0
    %v5662 = vadd.f32 0.0, %v5661
    %5663 = vmatmul.bf16.gmra.mxu0 %v5474
    %v5664 = vpop.f32.mrf.mxu0
    %v5665 = vadd.f32 0.0, %v5664
    %v5666 = vpop.f32.mrf.mxu0
    %v5667 = vadd.f32 0.0, %v5666
    %5668 = vmatmul.bf16.gmra.mxu0 %v5475
    %v5669 = vpop.f32.mrf.mxu0
    %v5670 = vadd.f32 0.0, %v5669
    %v5671 = vpop.f32.mrf.mxu0
    %v5672 = vadd.f32 0.0, %v5671
    %5673 = vmatmul.bf16.gmra.mxu0 %v5476
    %v5674 = vpop.f32.mrf.mxu0
    %v5675 = vadd.f32 0.0, %v5674
    %v5676 = vpop.f32.mrf.mxu0
    %v5677 = vadd.f32 0.0, %v5676
    %5678 = vmatmul.bf16.gmra.mxu0 %v5477
    %v5679 = vpop.f32.mrf.mxu0
    %v5680 = vadd.f32 0.0, %v5679
    %v5681 = vpop.f32.mrf.mxu0
    %v5682 = vadd.f32 0.0, %v5681
    %5683 = vmatmul.bf16.gmra.mxu0 %v5478
    %v5684 = vpop.f32.mrf.mxu0
    %v5685 = vadd.f32 0.0, %v5684
    %v5686 = vpop.f32.mrf.mxu0
    %v5687 = vadd.f32 0.0, %v5686
    %5688 = vmatmul.bf16.gmra.mxu0 %v5479
    %v5689 = vpop.f32.mrf.mxu0
    %v5690 = vadd.f32 0.0, %v5689
    %v5691 = vpop.f32.mrf.mxu0
    %v5692 = vadd.f32 0.0, %v5691
    %5693 = vmatmul.bf16.gmra.mxu0 %v5480
    %v5694 = vpop.f32.mrf.mxu0
    %v5695 = vadd.f32 0.0, %v5694
    %v5696 = vpop.f32.mrf.mxu0
    %v5697 = vadd.f32 0.0, %v5696
    %5698 = vmatmul.bf16.gmra.mxu0 %v5481
    %v5699 = vpop.f32.mrf.mxu0
    %v5700 = vadd.f32 0.0, %v5699
    %v5701 = vpop.f32.mrf.mxu0
    %v5702 = vadd.f32 0.0, %v5701
    %5703 = vmatmul.bf16.gmra.mxu0 %v5482
    %v5704 = vpop.f32.mrf.mxu0
    %v5705 = vadd.f32 0.0, %v5704
    %v5706 = vpop.f32.mrf.mxu0
    %v5707 = vadd.f32 0.0, %v5706
    %5708 = vmatmul.bf16.gmra.mxu0 %v5483
    %v5709 = vpop.f32.mrf.mxu0
    %v5710 = vadd.f32 0.0, %v5709
    %v5711 = vpop.f32.mrf.mxu0
    %v5712 = vadd.f32 0.0, %v5711
    %5713 = vmatmul.bf16.gmra.mxu0 %v5484
    %v5714 = vpop.f32.mrf.mxu0
    %v5715 = vadd.f32 0.0, %v5714
    %v5716 = vpop.f32.mrf.mxu0
    %v5717 = vadd.f32 0.0, %v5716
    %5718 = vdwg.mxu0
    %v5719 = vadd.f32 %v5325, %v5560
    %v5720 = vadd.f32 %v5326, %v5562
    %v5721 = vadd.f32 %v5327, %v5565
    %v5722 = vadd.f32 %v5328, %v5567
    %v5723 = vadd.f32 %v5329, %v5570
    %v5724 = vadd.f32 %v5330, %v5572
    %v5725 = vadd.f32 %v5331, %v5575
    %v5726 = vadd.f32 %v5332, %v5577
    %v5727 = vadd.f32 %v5333, %v5580
    %v5728 = vadd.f32 %v5334, %v5582
    %v5729 = vadd.f32 %v5335, %v5585
    %v5730 = vadd.f32 %v5336, %v5587
    %v5731 = vadd.f32 %v5337, %v5590
    %v5732 = vadd.f32 %v5338, %v5592
    %v5733 = vadd.f32 %v5339, %v5595
    %v5734 = vadd.f32 %v5340, %v5597
    %v5735 = vadd.f32 %v5341, %v5600
    %v5736 = vadd.f32 %v5342, %v5602
    %v5737 = vadd.f32 %v5343, %v5605
    %v5738 = vadd.f32 %v5344, %v5607
    %v5739 = vadd.f32 %v5345, %v5610
    %v5740 = vadd.f32 %v5346, %v5612
    %v5741 = vadd.f32 %v5347, %v5615
    %v5742 = vadd.f32 %v5348, %v5617
    %v5743 = vadd.f32 %v5349, %v5620
    %v5744 = vadd.f32 %v5350, %v5622
    %v5745 = vadd.f32 %v5351, %v5625
    %v5746 = vadd.f32 %v5352, %v5627
    %v5747 = vadd.f32 %v5353, %v5630
    %v5748 = vadd.f32 %v5354, %v5632
    %v5749 = vadd.f32 %v5355, %v5635
    %v5750 = vadd.f32 %v5356, %v5637
    %v5751 = vadd.f32 %v5357, %v5640
    %v5752 = vadd.f32 %v5358, %v5642
    %v5753 = vadd.f32 %v5359, %v5645
    %v5754 = vadd.f32 %v5360, %v5647
    %v5755 = vadd.f32 %v5361, %v5650
    %v5756 = vadd.f32 %v5362, %v5652
    %v5757 = vadd.f32 %v5363, %v5655
    %v5758 = vadd.f32 %v5364, %v5657
    %v5759 = vadd.f32 %v5365, %v5660
    %v5760 = vadd.f32 %v5366, %v5662
    %v5761 = vadd.f32 %v5367, %v5665
    %v5762 = vadd.f32 %v5368, %v5667
    %v5763 = vadd.f32 %v5369, %v5670
    %v5764 = vadd.f32 %v5370, %v5672
    %v5765 = vadd.f32 %v5371, %v5675
    %v5766 = vadd.f32 %v5372, %v5677
    %v5767 = vadd.f32 %v5373, %v5680
    %v5768 = vadd.f32 %v5374, %v5682
    %v5769 = vadd.f32 %v5375, %v5685
    %v5770 = vadd.f32 %v5376, %v5687
    %v5771 = vadd.f32 %v5377, %v5690
    %v5772 = vadd.f32 %v5378, %v5692
    %v5773 = vadd.f32 %v5379, %v5695
    %v5774 = vadd.f32 %v5380, %v5697
    %v5775 = vadd.f32 %v5381, %v5700
    %v5776 = vadd.f32 %v5382, %v5702
    %v5777 = vadd.f32 %v5383, %v5705
    %v5778 = vadd.f32 %v5384, %v5707
    %v5779 = vadd.f32 %v5385, %v5710
    %v5780 = vadd.f32 %v5386, %v5712
    %v5781 = vadd.f32 %v5387, %v5715
    %v5782 = vadd.f32 %v5388, %v5717
    %v5783 = vld [vmem:[#allocation12] sm:$0x1]
    %v5784 = vperm.slane %v5783, 0
    %v5785 = vadd.f32 %v5719, %v5784
    %v5786 = vadd.f32 %v5720, %v5784
    %v5787 = vadd.f32 %v5721, %v5784
    %v5788 = vadd.f32 %v5722, %v5784
    %v5789 = vadd.f32 %v5723, %v5784
    %v5790 = vadd.f32 %v5724, %v5784
    %v5791 = vadd.f32 %v5725, %v5784
    %v5792 = vadd.f32 %v5726, %v5784
    %v5793 = vadd.f32 %v5727, %v5784
    %v5794 = vadd.f32 %v5728, %v5784
    %v5795 = vadd.f32 %v5729, %v5784
    %v5796 = vadd.f32 %v5730, %v5784
    %v5797 = vadd.f32 %v5731, %v5784
    %v5798 = vadd.f32 %v5732, %v5784
    %v5799 = vadd.f32 %v5733, %v5784
    %v5800 = vadd.f32 %v5734, %v5784
    %v5801 = vadd.f32 %v5735, %v5784
    %v5802 = vadd.f32 %v5736, %v5784
    %v5803 = vadd.f32 %v5737, %v5784
    %v5804 = vadd.f32 %v5738, %v5784
    %v5805 = vadd.f32 %v5739, %v5784
    %v5806 = vadd.f32 %v5740, %v5784
    %v5807 = vadd.f32 %v5741, %v5784
    %v5808 = vadd.f32 %v5742, %v5784
    %v5809 = vadd.f32 %v5743, %v5784
    %v5810 = vadd.f32 %v5744, %v5784
    %v5811 = vadd.f32 %v5745, %v5784
    %v5812 = vadd.f32 %v5746, %v5784
    %v5813 = vadd.f32 %v5747, %v5784
    %v5814 = vadd.f32 %v5748, %v5784
    %v5815 = vadd.f32 %v5749, %v5784
    %v5816 = vadd.f32 %v5750, %v5784
    %v5817 = vadd.f32 %v5751, %v5784
    %v5818 = vadd.f32 %v5752, %v5784
    %v5819 = vadd.f32 %v5753, %v5784
    %v5820 = vadd.f32 %v5754, %v5784
    %v5821 = vadd.f32 %v5755, %v5784
    %v5822 = vadd.f32 %v5756, %v5784
    %v5823 = vadd.f32 %v5757, %v5784
    %v5824 = vadd.f32 %v5758, %v5784
    %v5825 = vadd.f32 %v5759, %v5784
    %v5826 = vadd.f32 %v5760, %v5784
    %v5827 = vadd.f32 %v5761, %v5784
    %v5828 = vadd.f32 %v5762, %v5784
    %v5829 = vadd.f32 %v5763, %v5784
    %v5830 = vadd.f32 %v5764, %v5784
    %v5831 = vadd.f32 %v5765, %v5784
    %v5832 = vadd.f32 %v5766, %v5784
    %v5833 = vadd.f32 %v5767, %v5784
    %v5834 = vadd.f32 %v5768, %v5784
    %v5835 = vadd.f32 %v5769, %v5784
    %v5836 = vadd.f32 %v5770, %v5784
    %v5837 = vadd.f32 %v5771, %v5784
    %v5838 = vadd.f32 %v5772, %v5784
    %v5839 = vadd.f32 %v5773, %v5784
    %v5840 = vadd.f32 %v5774, %v5784
    %v5841 = vadd.f32 %v5775, %v5784
    %v5842 = vadd.f32 %v5776, %v5784
    %v5843 = vadd.f32 %v5777, %v5784
    %v5844 = vadd.f32 %v5778, %v5784
    %v5845 = vadd.f32 %v5779, %v5784
    %v5846 = vadd.f32 %v5780, %v5784
    %v5847 = vadd.f32 %v5781, %v5784
    %v5848 = vadd.f32 %v5782, %v5784
    %v5849 = vadd.f32 %v5785, %v5786
    %v5850 = vadd.f32 %v5849, %v5787
    %v5851 = vadd.f32 %v5850, %v5788
    %v5852 = vadd.f32 %v5851, %v5789
    %v5853 = vadd.f32 %v5852, %v5790
    %v5854 = vadd.f32 %v5853, %v5791
    %v5855 = vadd.f32 %v5854, %v5792
    %v5856 = vadd.f32 %v5855, %v5793
    %v5857 = vadd.f32 %v5856, %v5794
    %v5858 = vadd.f32 %v5857, %v5795
    %v5859 = vadd.f32 %v5858, %v5796
    %v5860 = vadd.f32 %v5859, %v5797
    %v5861 = vadd.f32 %v5860, %v5798
    %v5862 = vadd.f32 %v5861, %v5799
    %v5863 = vadd.f32 %v5862, %v5800
    %v5864 = vadd.f32 %v5863, %v5801
    %v5865 = vadd.f32 %v5864, %v5802
    %v5866 = vadd.f32 %v5865, %v5803
    %v5867 = vadd.f32 %v5866, %v5804
    %v5868 = vadd.f32 %v5867, %v5805
    %v5869 = vadd.f32 %v5868, %v5806
    %v5870 = vadd.f32 %v5869, %v5807
    %v5871 = vadd.f32 %v5870, %v5808
    %v5872 = vadd.f32 %v5871, %v5809
    %v5873 = vadd.f32 %v5872, %v5810
    %v5874 = vadd.f32 %v5873, %v5811
    %v5875 = vadd.f32 %v5874, %v5812
    %v5876 = vadd.f32 %v5875, %v5813
    %v5877 = vadd.f32 %v5876, %v5814
    %v5878 = vadd.f32 %v5877, %v5815
    %v5879 = vadd.f32 %v5878, %v5816
    %v5880 = vadd.f32 %v5879, %v5817
    %v5881 = vadd.f32 %v5880, %v5818
    %v5882 = vadd.f32 %v5881, %v5819
    %v5883 = vadd.f32 %v5882, %v5820
    %v5884 = vadd.f32 %v5883, %v5821
    %v5885 = vadd.f32 %v5884, %v5822
    %v5886 = vadd.f32 %v5885, %v5823
    %v5887 = vadd.f32 %v5886, %v5824
    %v5888 = vadd.f32 %v5887, %v5825
    %v5889 = vadd.f32 %v5888, %v5826
    %v5890 = vadd.f32 %v5889, %v5827
    %v5891 = vadd.f32 %v5890, %v5828
    %v5892 = vadd.f32 %v5891, %v5829
    %v5893 = vadd.f32 %v5892, %v5830
    %v5894 = vadd.f32 %v5893, %v5831
    %v5895 = vadd.f32 %v5894, %v5832
    %v5896 = vadd.f32 %v5895, %v5833
    %v5897 = vadd.f32 %v5896, %v5834
    %v5898 = vadd.f32 %v5897, %v5835
    %v5899 = vadd.f32 %v5898, %v5836
    %v5900 = vadd.f32 %v5899, %v5837
    %v5901 = vadd.f32 %v5900, %v5838
    %v5902 = vadd.f32 %v5901, %v5839
    %v5903 = vadd.f32 %v5902, %v5840
    %v5904 = vadd.f32 %v5903, %v5841
    %v5905 = vadd.f32 %v5904, %v5842
    %v5906 = vadd.f32 %v5905, %v5843
    %v5907 = vadd.f32 %v5906, %v5844
    %v5908 = vadd.f32 %v5907, %v5845
    %v5909 = vadd.f32 %v5908, %v5846
    %v5910 = vadd.f32 %v5909, %v5847
    %v5911 = vadd.f32 %v5910, %v5848
    %v5912 = vrot.slane %v5911, 4
    %v5913 = vadd.f32 %v5911, %v5912
    %v5914 = vrot.slane %v5913, 2
    %v5915 = vadd.f32 %v5913, %v5914
    %v5916 = vrot.slane %v5915, 1
    %v5917 = vadd.f32 %v5915, %v5916
    %v5918 = vmul.f32 %v5917, %v760
    %v5919 = vmul.f32 %v5785, %v5785
    %v5920 = vmul.f32 %v5786, %v5786
    %v5921 = vmul.f32 %v5787, %v5787
    %v5922 = vmul.f32 %v5788, %v5788
    %v5923 = vmul.f32 %v5789, %v5789
    %v5924 = vmul.f32 %v5790, %v5790
    %v5925 = vmul.f32 %v5791, %v5791
    %v5926 = vmul.f32 %v5792, %v5792
    %v5927 = vmul.f32 %v5793, %v5793
    %v5928 = vmul.f32 %v5794, %v5794
    %v5929 = vmul.f32 %v5795, %v5795
    %v5930 = vmul.f32 %v5796, %v5796
    %v5931 = vmul.f32 %v5797, %v5797
    %v5932 = vmul.f32 %v5798, %v5798
    %v5933 = vmul.f32 %v5799, %v5799
    %v5934 = vmul.f32 %v5800, %v5800
    %v5935 = vmul.f32 %v5801, %v5801
    %v5936 = vmul.f32 %v5802, %v5802
    %v5937 = vmul.f32 %v5803, %v5803
    %v5938 = vmul.f32 %v5804, %v5804
    %v5939 = vmul.f32 %v5805, %v5805
    %v5940 = vmul.f32 %v5806, %v5806
    %v5941 = vmul.f32 %v5807, %v5807
    %v5942 = vmul.f32 %v5808, %v5808
    %v5943 = vmul.f32 %v5809, %v5809
    %v5944 = vmul.f32 %v5810, %v5810
    %v5945 = vmul.f32 %v5811, %v5811
    %v5946 = vmul.f32 %v5812, %v5812
    %v5947 = vmul.f32 %v5813, %v5813
    %v5948 = vmul.f32 %v5814, %v5814
    %v5949 = vmul.f32 %v5815, %v5815
    %v5950 = vmul.f32 %v5816, %v5816
    %v5951 = vmul.f32 %v5817, %v5817
    %v5952 = vmul.f32 %v5818, %v5818
    %v5953 = vmul.f32 %v5819, %v5819
    %v5954 = vmul.f32 %v5820, %v5820
    %v5955 = vmul.f32 %v5821, %v5821
    %v5956 = vmul.f32 %v5822, %v5822
    %v5957 = vmul.f32 %v5823, %v5823
    %v5958 = vmul.f32 %v5824, %v5824
    %v5959 = vmul.f32 %v5825, %v5825
    %v5960 = vmul.f32 %v5826, %v5826
    %v5961 = vmul.f32 %v5827, %v5827
    %v5962 = vmul.f32 %v5828, %v5828
    %v5963 = vmul.f32 %v5829, %v5829
    %v5964 = vmul.f32 %v5830, %v5830
    %v5965 = vmul.f32 %v5831, %v5831
    %v5966 = vmul.f32 %v5832, %v5832
    %v5967 = vmul.f32 %v5833, %v5833
    %v5968 = vmul.f32 %v5834, %v5834
    %v5969 = vmul.f32 %v5835, %v5835
    %v5970 = vmul.f32 %v5836, %v5836
    %v5971 = vmul.f32 %v5837, %v5837
    %v5972 = vmul.f32 %v5838, %v5838
    %v5973 = vmul.f32 %v5839, %v5839
    %v5974 = vmul.f32 %v5840, %v5840
    %v5975 = vmul.f32 %v5841, %v5841
    %v5976 = vmul.f32 %v5842, %v5842
    %v5977 = vmul.f32 %v5843, %v5843
    %v5978 = vmul.f32 %v5844, %v5844
    %v5979 = vmul.f32 %v5845, %v5845
    %v5980 = vmul.f32 %v5846, %v5846
    %v5981 = vmul.f32 %v5847, %v5847
    %v5982 = vmul.f32 %v5848, %v5848
    %v5983 = vadd.f32 %v5919, %v5920
    %v5984 = vadd.f32 %v5983, %v5921
    %v5985 = vadd.f32 %v5984, %v5922
    %v5986 = vadd.f32 %v5985, %v5923
    %v5987 = vadd.f32 %v5986, %v5924
    %v5988 = vadd.f32 %v5987, %v5925
    %v5989 = vadd.f32 %v5988, %v5926
    %v5990 = vadd.f32 %v5989, %v5927
    %v5991 = vadd.f32 %v5990, %v5928
    %v5992 = vadd.f32 %v5991, %v5929
    %v5993 = vadd.f32 %v5992, %v5930
    %v5994 = vadd.f32 %v5993, %v5931
    %v5995 = vadd.f32 %v5994, %v5932
    %v5996 = vadd.f32 %v5995, %v5933
    %v5997 = vadd.f32 %v5996, %v5934
    %v5998 = vadd.f32 %v5997, %v5935
    %v5999 = vadd.f32 %v5998, %v5936
    %v6000 = vadd.f32 %v5999, %v5937
    %v6001 = vadd.f32 %v6000, %v5938
    %v6002 = vadd.f32 %v6001, %v5939
    %v6003 = vadd.f32 %v6002, %v5940
    %v6004 = vadd.f32 %v6003, %v5941
    %v6005 = vadd.f32 %v6004, %v5942
    %v6006 = vadd.f32 %v6005, %v5943
    %v6007 = vadd.f32 %v6006, %v5944
    %v6008 = vadd.f32 %v6007, %v5945
    %v6009 = vadd.f32 %v6008, %v5946
    %v6010 = vadd.f32 %v6009, %v5947
    %v6011 = vadd.f32 %v6010, %v5948
    %v6012 = vadd.f32 %v6011, %v5949
    %v6013 = vadd.f32 %v6012, %v5950
    %v6014 = vadd.f32 %v6013, %v5951
    %v6015 = vadd.f32 %v6014, %v5952
    %v6016 = vadd.f32 %v6015, %v5953
    %v6017 = vadd.f32 %v6016, %v5954
    %v6018 = vadd.f32 %v6017, %v5955
    %v6019 = vadd.f32 %v6018, %v5956
    %v6020 = vadd.f32 %v6019, %v5957
    %v6021 = vadd.f32 %v6020, %v5958
    %v6022 = vadd.f32 %v6021, %v5959
    %v6023 = vadd.f32 %v6022, %v5960
    %v6024 = vadd.f32 %v6023, %v5961
    %v6025 = vadd.f32 %v6024, %v5962
    %v6026 = vadd.f32 %v6025, %v5963
    %v6027 = vadd.f32 %v6026, %v5964
    %v6028 = vadd.f32 %v6027, %v5965
    %v6029 = vadd.f32 %v6028, %v5966
    %v6030 = vadd.f32 %v6029, %v5967
    %v6031 = vadd.f32 %v6030, %v5968
    %v6032 = vadd.f32 %v6031, %v5969
    %v6033 = vadd.f32 %v6032, %v5970
    %v6034 = vadd.f32 %v6033, %v5971
    %v6035 = vadd.f32 %v6034, %v5972
    %v6036 = vadd.f32 %v6035, %v5973
    %v6037 = vadd.f32 %v6036, %v5974
    %v6038 = vadd.f32 %v6037, %v5975
    %v6039 = vadd.f32 %v6038, %v5976
    %v6040 = vadd.f32 %v6039, %v5977
    %v6041 = vadd.f32 %v6040, %v5978
    %v6042 = vadd.f32 %v6041, %v5979
    %v6043 = vadd.f32 %v6042, %v5980
    %v6044 = vadd.f32 %v6043, %v5981
    %v6045 = vadd.f32 %v6044, %v5982
    %v6046 = vrot.slane %v6045, 4
    %v6047 = vadd.f32 %v6045, %v6046
    %v6048 = vrot.slane %v6047, 2
    %v6049 = vadd.f32 %v6047, %v6048
    %v6050 = vrot.slane %v6049, 1
    %v6051 = vadd.f32 %v6049, %v6050
    %v6052 = vmul.f32 %v6051, %v760
    %v6053 = vmul.f32 %v5918, %v5918
    %v6054 = vsub.f32 %v6052, %v6053
    %v6055 = vmax.f32 %v6054, 0.0
    %v6056 = vsub.f32 %v5785, %v5918
    %v6057 = vsub.f32 %v5786, %v5918
    %v6058 = vsub.f32 %v5787, %v5918
    %v6059 = vsub.f32 %v5788, %v5918
    %v6060 = vsub.f32 %v5789, %v5918
    %v6061 = vsub.f32 %v5790, %v5918
    %v6062 = vsub.f32 %v5791, %v5918
    %v6063 = vsub.f32 %v5792, %v5918
    %v6064 = vsub.f32 %v5793, %v5918
    %v6065 = vsub.f32 %v5794, %v5918
    %v6066 = vsub.f32 %v5795, %v5918
    %v6067 = vsub.f32 %v5796, %v5918
    %v6068 = vsub.f32 %v5797, %v5918
    %v6069 = vsub.f32 %v5798, %v5918
    %v6070 = vsub.f32 %v5799, %v5918
    %v6071 = vsub.f32 %v5800, %v5918
    %v6072 = vsub.f32 %v5801, %v5918
    %v6073 = vsub.f32 %v5802, %v5918
    %v6074 = vsub.f32 %v5803, %v5918
    %v6075 = vsub.f32 %v5804, %v5918
    %v6076 = vsub.f32 %v5805, %v5918
    %v6077 = vsub.f32 %v5806, %v5918
    %v6078 = vsub.f32 %v5807, %v5918
    %v6079 = vsub.f32 %v5808, %v5918
    %v6080 = vsub.f32 %v5809, %v5918
    %v6081 = vsub.f32 %v5810, %v5918
    %v6082 = vsub.f32 %v5811, %v5918
    %v6083 = vsub.f32 %v5812, %v5918
    %v6084 = vsub.f32 %v5813, %v5918
    %v6085 = vsub.f32 %v5814, %v5918
    %v6086 = vsub.f32 %v5815, %v5918
    %v6087 = vsub.f32 %v5816, %v5918
    %v6088 = vsub.f32 %v5817, %v5918
    %v6089 = vsub.f32 %v5818, %v5918
    %v6090 = vsub.f32 %v5819, %v5918
    %v6091 = vsub.f32 %v5820, %v5918
    %v6092 = vsub.f32 %v5821, %v5918
    %v6093 = vsub.f32 %v5822, %v5918
    %v6094 = vsub.f32 %v5823, %v5918
    %v6095 = vsub.f32 %v5824, %v5918
    %v6096 = vsub.f32 %v5825, %v5918
    %v6097 = vsub.f32 %v5826, %v5918
    %v6098 = vsub.f32 %v5827, %v5918
    %v6099 = vsub.f32 %v5828, %v5918
    %v6100 = vsub.f32 %v5829, %v5918
    %v6101 = vsub.f32 %v5830, %v5918
    %v6102 = vsub.f32 %v5831, %v5918
    %v6103 = vsub.f32 %v5832, %v5918
    %v6104 = vsub.f32 %v5833, %v5918
    %v6105 = vsub.f32 %v5834, %v5918
    %v6106 = vsub.f32 %v5835, %v5918
    %v6107 = vsub.f32 %v5836, %v5918
    %v6108 = vsub.f32 %v5837, %v5918
    %v6109 = vsub.f32 %v5838, %v5918
    %v6110 = vsub.f32 %v5839, %v5918
    %v6111 = vsub.f32 %v5840, %v5918
    %v6112 = vsub.f32 %v5841, %v5918
    %v6113 = vsub.f32 %v5842, %v5918
    %v6114 = vsub.f32 %v5843, %v5918
    %v6115 = vsub.f32 %v5844, %v5918
    %v6116 = vsub.f32 %v5845, %v5918
    %v6117 = vsub.f32 %v5846, %v5918
    %v6118 = vsub.f32 %v5847, %v5918
    %v6119 = vsub.f32 %v5848, %v5918
    %v6120 = vld [vmem:[#allocation12 + $0x1] sm:$0x1]
    %v6121 = vadd.f32 %v6055, 1e-05
    %v6122 = vrsqrt.pop %v6121
    %v6123 = vmul.f32 %v6122, %v6121
    %v6124 = vmul.f32 %v6123, %v6122
    %v6125 = vmul.f32 0.5, %v6124
    %v6126 = vsub.f32 1.5, %v6125
    %v6127 = vmul.f32 %v6122, %v6126
    %vm6128 = vweird.f32 %v6121
    %vm6129 = vweird.f32 %v6122
    %vm6130 = vmor %vm6128, %vm6129
    %v6131 = vsel %vm6130, %v6122, %v6127
    %v6132 = vmul.f32 %v6120, %v6131
    %v6133 = vperm.slane %v6132, 0
    %v6134 = vmul.f32 %v6056, %v6133
    %v6135 = vmul.f32 %v6057, %v6133
    %v6136 = vmul.f32 %v6058, %v6133
    %v6137 = vmul.f32 %v6059, %v6133
    %v6138 = vmul.f32 %v6060, %v6133
    %v6139 = vmul.f32 %v6061, %v6133
    %v6140 = vmul.f32 %v6062, %v6133
    %v6141 = vmul.f32 %v6063, %v6133
    %v6142 = vmul.f32 %v6064, %v6133
    %v6143 = vmul.f32 %v6065, %v6133
    %v6144 = vmul.f32 %v6066, %v6133
    %v6145 = vmul.f32 %v6067, %v6133
    %v6146 = vmul.f32 %v6068, %v6133
    %v6147 = vmul.f32 %v6069, %v6133
    %v6148 = vmul.f32 %v6070, %v6133
    %v6149 = vmul.f32 %v6071, %v6133
    %v6150 = vmul.f32 %v6072, %v6133
    %v6151 = vmul.f32 %v6073, %v6133
    %v6152 = vmul.f32 %v6074, %v6133
    %v6153 = vmul.f32 %v6075, %v6133
    %v6154 = vmul.f32 %v6076, %v6133
    %v6155 = vmul.f32 %v6077, %v6133
    %v6156 = vmul.f32 %v6078, %v6133
    %v6157 = vmul.f32 %v6079, %v6133
    %v6158 = vmul.f32 %v6080, %v6133
    %v6159 = vmul.f32 %v6081, %v6133
    %v6160 = vmul.f32 %v6082, %v6133
    %v6161 = vmul.f32 %v6083, %v6133
    %v6162 = vmul.f32 %v6084, %v6133
    %v6163 = vmul.f32 %v6085, %v6133
    %v6164 = vmul.f32 %v6086, %v6133
    %v6165 = vmul.f32 %v6087, %v6133
    %v6166 = vmul.f32 %v6088, %v6133
    %v6167 = vmul.f32 %v6089, %v6133
    %v6168 = vmul.f32 %v6090, %v6133
    %v6169 = vmul.f32 %v6091, %v6133
    %v6170 = vmul.f32 %v6092, %v6133
    %v6171 = vmul.f32 %v6093, %v6133
    %v6172 = vmul.f32 %v6094, %v6133
    %v6173 = vmul.f32 %v6095, %v6133
    %v6174 = vmul.f32 %v6096, %v6133
    %v6175 = vmul.f32 %v6097, %v6133
    %v6176 = vmul.f32 %v6098, %v6133
    %v6177 = vmul.f32 %v6099, %v6133
    %v6178 = vmul.f32 %v6100, %v6133
    %v6179 = vmul.f32 %v6101, %v6133
    %v6180 = vmul.f32 %v6102, %v6133
    %v6181 = vmul.f32 %v6103, %v6133
    %v6182 = vmul.f32 %v6104, %v6133
    %v6183 = vmul.f32 %v6105, %v6133
    %v6184 = vmul.f32 %v6106, %v6133
    %v6185 = vmul.f32 %v6107, %v6133
    %v6186 = vmul.f32 %v6108, %v6133
    %v6187 = vmul.f32 %v6109, %v6133
    %v6188 = vmul.f32 %v6110, %v6133
    %v6189 = vmul.f32 %v6111, %v6133
    %v6190 = vmul.f32 %v6112, %v6133
    %v6191 = vmul.f32 %v6113, %v6133
    %v6192 = vmul.f32 %v6114, %v6133
    %v6193 = vmul.f32 %v6115, %v6133
    %v6194 = vmul.f32 %v6116, %v6133
    %v6195 = vmul.f32 %v6117, %v6133
    %v6196 = vmul.f32 %v6118, %v6133
    %v6197 = vmul.f32 %v6119, %v6133
    %v6198 = vld [vmem:[#allocation12 + $0x2] sm:$0x1]
    %v6199 = vperm.slane %v6198, 0
    %v6200 = vadd.f32 %v6134, %v6199
    %v6201 = vadd.f32 %v6135, %v6199
    %v6202 = vadd.f32 %v6136, %v6199
    %v6203 = vadd.f32 %v6137, %v6199
    %v6204 = vadd.f32 %v6138, %v6199
    %v6205 = vadd.f32 %v6139, %v6199
    %v6206 = vadd.f32 %v6140, %v6199
    %v6207 = vadd.f32 %v6141, %v6199
    %v6208 = vadd.f32 %v6142, %v6199
    %v6209 = vadd.f32 %v6143, %v6199
    %v6210 = vadd.f32 %v6144, %v6199
    %v6211 = vadd.f32 %v6145, %v6199
    %v6212 = vadd.f32 %v6146, %v6199
    %v6213 = vadd.f32 %v6147, %v6199
    %v6214 = vadd.f32 %v6148, %v6199
    %v6215 = vadd.f32 %v6149, %v6199
    %v6216 = vadd.f32 %v6150, %v6199
    %v6217 = vadd.f32 %v6151, %v6199
    %v6218 = vadd.f32 %v6152, %v6199
    %v6219 = vadd.f32 %v6153, %v6199
    %v6220 = vadd.f32 %v6154, %v6199
    %v6221 = vadd.f32 %v6155, %v6199
    %v6222 = vadd.f32 %v6156, %v6199
    %v6223 = vadd.f32 %v6157, %v6199
    %v6224 = vadd.f32 %v6158, %v6199
    %v6225 = vadd.f32 %v6159, %v6199
    %v6226 = vadd.f32 %v6160, %v6199
    %v6227 = vadd.f32 %v6161, %v6199
    %v6228 = vadd.f32 %v6162, %v6199
    %v6229 = vadd.f32 %v6163, %v6199
    %v6230 = vadd.f32 %v6164, %v6199
    %v6231 = vadd.f32 %v6165, %v6199
    %v6232 = vadd.f32 %v6166, %v6199
    %v6233 = vadd.f32 %v6167, %v6199
    %v6234 = vadd.f32 %v6168, %v6199
    %v6235 = vadd.f32 %v6169, %v6199
    %v6236 = vadd.f32 %v6170, %v6199
    %v6237 = vadd.f32 %v6171, %v6199
    %v6238 = vadd.f32 %v6172, %v6199
    %v6239 = vadd.f32 %v6173, %v6199
    %v6240 = vadd.f32 %v6174, %v6199
    %v6241 = vadd.f32 %v6175, %v6199
    %v6242 = vadd.f32 %v6176, %v6199
    %v6243 = vadd.f32 %v6177, %v6199
    %v6244 = vadd.f32 %v6178, %v6199
    %v6245 = vadd.f32 %v6179, %v6199
    %v6246 = vadd.f32 %v6180, %v6199
    %v6247 = vadd.f32 %v6181, %v6199
    %v6248 = vadd.f32 %v6182, %v6199
    %v6249 = vadd.f32 %v6183, %v6199
    %v6250 = vadd.f32 %v6184, %v6199
    %v6251 = vadd.f32 %v6185, %v6199
    %v6252 = vadd.f32 %v6186, %v6199
    %v6253 = vadd.f32 %v6187, %v6199
    %v6254 = vadd.f32 %v6188, %v6199
    %v6255 = vadd.f32 %v6189, %v6199
    %v6256 = vadd.f32 %v6190, %v6199
    %v6257 = vadd.f32 %v6191, %v6199
    %v6258 = vadd.f32 %v6192, %v6199
    %v6259 = vadd.f32 %v6193, %v6199
    %v6260 = vadd.f32 %v6194, %v6199
    %v6261 = vadd.f32 %v6195, %v6199
    %v6262 = vadd.f32 %v6196, %v6199
    %v6263 = vadd.f32 %v6197, %v6199
    %vm6264 = vcmp.gt.f32.partialorder %v6200, 0.0
    %vm6265 = vcmp.gt.f32.partialorder %v6201, 0.0
    %vm6266 = vcmp.gt.f32.partialorder %v6202, 0.0
    %vm6267 = vcmp.gt.f32.partialorder %v6203, 0.0
    %vm6268 = vcmp.gt.f32.partialorder %v6204, 0.0
    %vm6269 = vcmp.gt.f32.partialorder %v6205, 0.0
    %vm6270 = vcmp.gt.f32.partialorder %v6206, 0.0
    %vm6271 = vcmp.gt.f32.partialorder %v6207, 0.0
    %vm6272 = vcmp.gt.f32.partialorder %v6208, 0.0
    %vm6273 = vcmp.gt.f32.partialorder %v6209, 0.0
    %vm6274 = vcmp.gt.f32.partialorder %v6210, 0.0
    %vm6275 = vcmp.gt.f32.partialorder %v6211, 0.0
    %vm6276 = vcmp.gt.f32.partialorder %v6212, 0.0
    %vm6277 = vcmp.gt.f32.partialorder %v6213, 0.0
    %vm6278 = vcmp.gt.f32.partialorder %v6214, 0.0
    %vm6279 = vcmp.gt.f32.partialorder %v6215, 0.0
    %vm6280 = vcmp.gt.f32.partialorder %v6216, 0.0
    %vm6281 = vcmp.gt.f32.partialorder %v6217, 0.0
    %vm6282 = vcmp.gt.f32.partialorder %v6218, 0.0
    %vm6283 = vcmp.gt.f32.partialorder %v6219, 0.0
    %vm6284 = vcmp.gt.f32.partialorder %v6220, 0.0
    %vm6285 = vcmp.gt.f32.partialorder %v6221, 0.0
    %vm6286 = vcmp.gt.f32.partialorder %v6222, 0.0
    %vm6287 = vcmp.gt.f32.partialorder %v6223, 0.0
    %vm6288 = vcmp.gt.f32.partialorder %v6224, 0.0
    %vm6289 = vcmp.gt.f32.partialorder %v6225, 0.0
    %vm6290 = vcmp.gt.f32.partialorder %v6226, 0.0
    %vm6291 = vcmp.gt.f32.partialorder %v6227, 0.0
    %vm6292 = vcmp.gt.f32.partialorder %v6228, 0.0
    %vm6293 = vcmp.gt.f32.partialorder %v6229, 0.0
    %vm6294 = vcmp.gt.f32.partialorder %v6230, 0.0
    %vm6295 = vcmp.gt.f32.partialorder %v6231, 0.0
    %vm6296 = vcmp.gt.f32.partialorder %v6232, 0.0
    %vm6297 = vcmp.gt.f32.partialorder %v6233, 0.0
    %vm6298 = vcmp.gt.f32.partialorder %v6234, 0.0
    %vm6299 = vcmp.gt.f32.partialorder %v6235, 0.0
    %vm6300 = vcmp.gt.f32.partialorder %v6236, 0.0
    %vm6301 = vcmp.gt.f32.partialorder %v6237, 0.0
    %vm6302 = vcmp.gt.f32.partialorder %v6238, 0.0
    %vm6303 = vcmp.gt.f32.partialorder %v6239, 0.0
    %vm6304 = vcmp.gt.f32.partialorder %v6240, 0.0
    %vm6305 = vcmp.gt.f32.partialorder %v6241, 0.0
    %vm6306 = vcmp.gt.f32.partialorder %v6242, 0.0
    %vm6307 = vcmp.gt.f32.partialorder %v6243, 0.0
    %vm6308 = vcmp.gt.f32.partialorder %v6244, 0.0
    %vm6309 = vcmp.gt.f32.partialorder %v6245, 0.0
    %vm6310 = vcmp.gt.f32.partialorder %v6246, 0.0
    %vm6311 = vcmp.gt.f32.partialorder %v6247, 0.0
    %vm6312 = vcmp.gt.f32.partialorder %v6248, 0.0
    %vm6313 = vcmp.gt.f32.partialorder %v6249, 0.0
    %vm6314 = vcmp.gt.f32.partialorder %v6250, 0.0
    %vm6315 = vcmp.gt.f32.partialorder %v6251, 0.0
    %vm6316 = vcmp.gt.f32.partialorder %v6252, 0.0
    %vm6317 = vcmp.gt.f32.partialorder %v6253, 0.0
    %vm6318 = vcmp.gt.f32.partialorder %v6254, 0.0
    %vm6319 = vcmp.gt.f32.partialorder %v6255, 0.0
    %vm6320 = vcmp.gt.f32.partialorder %v6256, 0.0
    %vm6321 = vcmp.gt.f32.partialorder %v6257, 0.0
    %vm6322 = vcmp.gt.f32.partialorder %v6258, 0.0
    %vm6323 = vcmp.gt.f32.partialorder %v6259, 0.0
    %vm6324 = vcmp.gt.f32.partialorder %v6260, 0.0
    %vm6325 = vcmp.gt.f32.partialorder %v6261, 0.0
    %vm6326 = vcmp.gt.f32.partialorder %v6262, 0.0
    %vm6327 = vcmp.gt.f32.partialorder %v6263, 0.0
    %v6328 = vmul.f32 %v6200, 0.1
    %v6329 = vmul.f32 %v6201, 0.1
    %v6330 = vmul.f32 %v6202, 0.1
    %v6331 = vmul.f32 %v6203, 0.1
    %v6332 = vmul.f32 %v6204, 0.1
    %v6333 = vmul.f32 %v6205, 0.1
    %v6334 = vmul.f32 %v6206, 0.1
    %v6335 = vmul.f32 %v6207, 0.1
    %v6336 = vmul.f32 %v6208, 0.1
    %v6337 = vmul.f32 %v6209, 0.1
    %v6338 = vmul.f32 %v6210, 0.1
    %v6339 = vmul.f32 %v6211, 0.1
    %v6340 = vmul.f32 %v6212, 0.1
    %v6341 = vmul.f32 %v6213, 0.1
    %v6342 = vmul.f32 %v6214, 0.1
    %v6343 = vmul.f32 %v6215, 0.1
    %v6344 = vmul.f32 %v6216, 0.1
    %v6345 = vmul.f32 %v6217, 0.1
    %v6346 = vmul.f32 %v6218, 0.1
    %v6347 = vmul.f32 %v6219, 0.1
    %v6348 = vmul.f32 %v6220, 0.1
    %v6349 = vmul.f32 %v6221, 0.1
    %v6350 = vmul.f32 %v6222, 0.1
    %v6351 = vmul.f32 %v6223, 0.1
    %v6352 = vmul.f32 %v6224, 0.1
    %v6353 = vmul.f32 %v6225, 0.1
    %v6354 = vmul.f32 %v6226, 0.1
    %v6355 = vmul.f32 %v6227, 0.1
    %v6356 = vmul.f32 %v6228, 0.1
    %v6357 = vmul.f32 %v6229, 0.1
    %v6358 = vmul.f32 %v6230, 0.1
    %v6359 = vmul.f32 %v6231, 0.1
    %v6360 = vmul.f32 %v6232, 0.1
    %v6361 = vmul.f32 %v6233, 0.1
    %v6362 = vmul.f32 %v6234, 0.1
    %v6363 = vmul.f32 %v6235, 0.1
    %v6364 = vmul.f32 %v6236, 0.1
    %v6365 = vmul.f32 %v6237, 0.1
    %v6366 = vmul.f32 %v6238, 0.1
    %v6367 = vmul.f32 %v6239, 0.1
    %v6368 = vmul.f32 %v6240, 0.1
    %v6369 = vmul.f32 %v6241, 0.1
    %v6370 = vmul.f32 %v6242, 0.1
    %v6371 = vmul.f32 %v6243, 0.1
    %v6372 = vmul.f32 %v6244, 0.1
    %v6373 = vmul.f32 %v6245, 0.1
    %v6374 = vmul.f32 %v6246, 0.1
    %v6375 = vmul.f32 %v6247, 0.1
    %v6376 = vmul.f32 %v6248, 0.1
    %v6377 = vmul.f32 %v6249, 0.1
    %v6378 = vmul.f32 %v6250, 0.1
    %v6379 = vmul.f32 %v6251, 0.1
    %v6380 = vmul.f32 %v6252, 0.1
    %v6381 = vmul.f32 %v6253, 0.1
    %v6382 = vmul.f32 %v6254, 0.1
    %v6383 = vmul.f32 %v6255, 0.1
    %v6384 = vmul.f32 %v6256, 0.1
    %v6385 = vmul.f32 %v6257, 0.1
    %v6386 = vmul.f32 %v6258, 0.1
    %v6387 = vmul.f32 %v6259, 0.1
    %v6388 = vmul.f32 %v6260, 0.1
    %v6389 = vmul.f32 %v6261, 0.1
    %v6390 = vmul.f32 %v6262, 0.1
    %v6391 = vmul.f32 %v6263, 0.1
    %v6392 = vsel %vm6264, %v6200, %v6328
    %v6393 = vsel %vm6265, %v6201, %v6329
    %v6394 = vsel %vm6266, %v6202, %v6330
    %v6395 = vsel %vm6267, %v6203, %v6331
    %v6396 = vsel %vm6268, %v6204, %v6332
    %v6397 = vsel %vm6269, %v6205, %v6333
    %v6398 = vsel %vm6270, %v6206, %v6334
    %v6399 = vsel %vm6271, %v6207, %v6335
    %v6400 = vsel %vm6272, %v6208, %v6336
    %v6401 = vsel %vm6273, %v6209, %v6337
    %v6402 = vsel %vm6274, %v6210, %v6338
    %v6403 = vsel %vm6275, %v6211, %v6339
    %v6404 = vsel %vm6276, %v6212, %v6340
    %v6405 = vsel %vm6277, %v6213, %v6341
    %v6406 = vsel %vm6278, %v6214, %v6342
    %v6407 = vsel %vm6279, %v6215, %v6343
    %v6408 = vsel %vm6280, %v6216, %v6344
    %v6409 = vsel %vm6281, %v6217, %v6345
    %v6410 = vsel %vm6282, %v6218, %v6346
    %v6411 = vsel %vm6283, %v6219, %v6347
    %v6412 = vsel %vm6284, %v6220, %v6348
    %v6413 = vsel %vm6285, %v6221, %v6349
    %v6414 = vsel %vm6286, %v6222, %v6350
    %v6415 = vsel %vm6287, %v6223, %v6351
    %v6416 = vsel %vm6288, %v6224, %v6352
    %v6417 = vsel %vm6289, %v6225, %v6353
    %v6418 = vsel %vm6290, %v6226, %v6354
    %v6419 = vsel %vm6291, %v6227, %v6355
    %v6420 = vsel %vm6292, %v6228, %v6356
    %v6421 = vsel %vm6293, %v6229, %v6357
    %v6422 = vsel %vm6294, %v6230, %v6358
    %v6423 = vsel %vm6295, %v6231, %v6359
    %v6424 = vsel %vm6296, %v6232, %v6360
    %v6425 = vsel %vm6297, %v6233, %v6361
    %v6426 = vsel %vm6298, %v6234, %v6362
    %v6427 = vsel %vm6299, %v6235, %v6363
    %v6428 = vsel %vm6300, %v6236, %v6364
    %v6429 = vsel %vm6301, %v6237, %v6365
    %v6430 = vsel %vm6302, %v6238, %v6366
    %v6431 = vsel %vm6303, %v6239, %v6367
    %v6432 = vsel %vm6304, %v6240, %v6368
    %v6433 = vsel %vm6305, %v6241, %v6369
    %v6434 = vsel %vm6306, %v6242, %v6370
    %v6435 = vsel %vm6307, %v6243, %v6371
    %v6436 = vsel %vm6308, %v6244, %v6372
    %v6437 = vsel %vm6309, %v6245, %v6373
    %v6438 = vsel %vm6310, %v6246, %v6374
    %v6439 = vsel %vm6311, %v6247, %v6375
    %v6440 = vsel %vm6312, %v6248, %v6376
    %v6441 = vsel %vm6313, %v6249, %v6377
    %v6442 = vsel %vm6314, %v6250, %v6378
    %v6443 = vsel %vm6315, %v6251, %v6379
    %v6444 = vsel %vm6316, %v6252, %v6380
    %v6445 = vsel %vm6317, %v6253, %v6381
    %v6446 = vsel %vm6318, %v6254, %v6382
    %v6447 = vsel %vm6319, %v6255, %v6383
    %v6448 = vsel %vm6320, %v6256, %v6384
    %v6449 = vsel %vm6321, %v6257, %v6385
    %v6450 = vsel %vm6322, %v6258, %v6386
    %v6451 = vsel %vm6323, %v6259, %v6387
    %v6452 = vsel %vm6324, %v6260, %v6388
    %v6453 = vsel %vm6325, %v6261, %v6389
    %v6454 = vsel %vm6326, %v6262, %v6390
    %v6455 = vsel %vm6327, %v6263, %v6391
    %6456 = vst [vmem:[#allocation14] sm:$0xff] %v6392
    %6457 = vst [vmem:[#allocation14 + $0x8] sm:$0xff] %v6393
    %6458 = vst [vmem:[#allocation14 + $0x10] sm:$0xff] %v6394
    %6459 = vst [vmem:[#allocation14 + $0x18] sm:$0xff] %v6395
    %6460 = vst [vmem:[#allocation14 + $0x20] sm:$0xff] %v6396
    %6461 = vst [vmem:[#allocation14 + $0x28] sm:$0xff] %v6397
    %6462 = vst [vmem:[#allocation14 + $0x30] sm:$0xff] %v6398
    %6463 = vst [vmem:[#allocation14 + $0x38] sm:$0xff] %v6399
    %6464 = vst [vmem:[#allocation14 + $0x40] sm:$0xff] %v6400
    %6465 = vst [vmem:[#allocation14 + $0x48] sm:$0xff] %v6401
    %6466 = vst [vmem:[#allocation14 + $0x50] sm:$0xff] %v6402
    %6467 = vst [vmem:[#allocation14 + $0x58] sm:$0xff] %v6403
    %6468 = vst [vmem:[#allocation14 + $0x60] sm:$0xff] %v6404
    %6469 = vst [vmem:[#allocation14 + $0x68] sm:$0xff] %v6405
    %6470 = vst [vmem:[#allocation14 + $0x70] sm:$0xff] %v6406
    %6471 = vst [vmem:[#allocation14 + $0x78] sm:$0xff] %v6407
    %6472 = vst [vmem:[#allocation14 + $0x80] sm:$0xff] %v6408
    %6473 = vst [vmem:[#allocation14 + $0x88] sm:$0xff] %v6409
    %6474 = vst [vmem:[#allocation14 + $0x90] sm:$0xff] %v6410
    %6475 = vst [vmem:[#allocation14 + $0x98] sm:$0xff] %v6411
    %6476 = vst [vmem:[#allocation14 + $0xa0] sm:$0xff] %v6412
    %6477 = vst [vmem:[#allocation14 + $0xa8] sm:$0xff] %v6413
    %6478 = vst [vmem:[#allocation14 + $0xb0] sm:$0xff] %v6414
    %6479 = vst [vmem:[#allocation14 + $0xb8] sm:$0xff] %v6415
    %6480 = vst [vmem:[#allocation14 + $0xc0] sm:$0xff] %v6416
    %6481 = vst [vmem:[#allocation14 + $0xc8] sm:$0xff] %v6417
    %6482 = vst [vmem:[#allocation14 + $0xd0] sm:$0xff] %v6418
    %6483 = vst [vmem:[#allocation14 + $0xd8] sm:$0xff] %v6419
    %6484 = vst [vmem:[#allocation14 + $0xe0] sm:$0xff] %v6420
    %6485 = vst [vmem:[#allocation14 + $0xe8] sm:$0xff] %v6421
    %6486 = vst [vmem:[#allocation14 + $0xf0] sm:$0xff] %v6422
    %6487 = vst [vmem:[#allocation14 + $0xf8] sm:$0xff] %v6423
    %6488 = vst [vmem:[#allocation14 + $0x100] sm:$0xff] %v6424
    %6489 = vst [vmem:[#allocation14 + $0x108] sm:$0xff] %v6425
    %6490 = vst [vmem:[#allocation14 + $0x110] sm:$0xff] %v6426
    %6491 = vst [vmem:[#allocation14 + $0x118] sm:$0xff] %v6427
    %6492 = vst [vmem:[#allocation14 + $0x120] sm:$0xff] %v6428
    %6493 = vst [vmem:[#allocation14 + $0x128] sm:$0xff] %v6429
    %6494 = vst [vmem:[#allocation14 + $0x130] sm:$0xff] %v6430
    %6495 = vst [vmem:[#allocation14 + $0x138] sm:$0xff] %v6431
    %6496 = vst [vmem:[#allocation14 + $0x140] sm:$0xff] %v6432
    %6497 = vst [vmem:[#allocation14 + $0x148] sm:$0xff] %v6433
    %6498 = vst [vmem:[#allocation14 + $0x150] sm:$0xff] %v6434
    %6499 = vst [vmem:[#allocation14 + $0x158] sm:$0xff] %v6435
    %6500 = vst [vmem:[#allocation14 + $0x160] sm:$0xff] %v6436
    %6501 = vst [vmem:[#allocation14 + $0x168] sm:$0xff] %v6437
    %6502 = vst [vmem:[#allocation14 + $0x170] sm:$0xff] %v6438
    %6503 = vst [vmem:[#allocation14 + $0x178] sm:$0xff] %v6439
    %6504 = vst [vmem:[#allocation14 + $0x180] sm:$0xff] %v6440
    %6505 = vst [vmem:[#allocation14 + $0x188] sm:$0xff] %v6441
    %6506 = vst [vmem:[#allocation14 + $0x190] sm:$0xff] %v6442
    %6507 = vst [vmem:[#allocation14 + $0x198] sm:$0xff] %v6443
    %6508 = vst [vmem:[#allocation14 + $0x1a0] sm:$0xff] %v6444
    %6509 = vst [vmem:[#allocation14 + $0x1a8] sm:$0xff] %v6445
    %6510 = vst [vmem:[#allocation14 + $0x1b0] sm:$0xff] %v6446
    %6511 = vst [vmem:[#allocation14 + $0x1b8] sm:$0xff] %v6447
    %6512 = vst [vmem:[#allocation14 + $0x1c0] sm:$0xff] %v6448
    %6513 = vst [vmem:[#allocation14 + $0x1c8] sm:$0xff] %v6449
    %6514 = vst [vmem:[#allocation14 + $0x1d0] sm:$0xff] %v6450
    %6515 = vst [vmem:[#allocation14 + $0x1d8] sm:$0xff] %v6451
    %6516 = vst [vmem:[#allocation14 + $0x1e0] sm:$0xff] %v6452
    %6517 = vst [vmem:[#allocation14 + $0x1e8] sm:$0xff] %v6453
    %6518 = vst [vmem:[#allocation14 + $0x1f0] sm:$0xff] %v6454
    %6519 = vst [vmem:[#allocation14 + $0x1f8] sm:$0xff] %v6455
    // Predicated region
    $region54: #{tpu_custom_call.1} parent=1 // pred_check
      _
    $region55: #{tpu_custom_call.1} parent=1 // pred_check_branch
      %6521 = sbr.rel (0) target = $region57
    $region56: #{tpu_custom_call.1} parent=1 // pred_region
      %6523 = vsyncadd [#allocation5], 0
      %s6524 = sshll.u32 [#allocation14], 4
      %s6525 = int_to_ptr.vmem [resolvable:$true] %s6524
      %s6526 = sshll.u32 %s7, 4
      %s6527 = int_to_ptr.hbm [resolvable:$true] %s6526
      %6532 = dma.vmem_to_hbm [thread:$0]  %s6525, 8192, %s6527, [#allocation5], 128, 128, 8
    $region57: #{tpu_custom_call.1} parent=1 // pred_fallthru
      _
    // Predicated region
    $region58: #{tpu_custom_call.1} parent=1 // pred_check
      _
    $region59: #{tpu_custom_call.1} parent=1 // pred_check_branch
      %6534 = sbr.rel (0) target = $region61
    $region60: #{tpu_custom_call.1} parent=1 // pred_region
      %6536 = dma.done [#allocation5], 8192
    $region61: #{tpu_custom_call.1} parent=1 // pred_fallthru
      _
    %6537 = vsyncpa [#allocation4], 1
    %6538 = vsyncpa [#allocation7], 1
    %6539 = vsyncpa [#allocation10], 1
    %6540 = vsyncpa [#allocation13], 1
    %6541 = vsyncpa [#allocation5], 1

</llo_original>
